<compile_context>
chip_gen: v7x
topology: tpu7x:2x2x1
jax: 0.10.0
libtpu: 0.0.40
codegen_flags: <defaults>
</compile_context>

<pallas_src>
import functools
import math

import jax
import jax.numpy as jnp
from jax import lax
from jax.experimental import pallas as pl
from jax.experimental.pallas import tpu as pltpu


def _pick_tile_h(out_h, out_w, target_rows=512):
    """Largest divisor of out_h whose row-strip has <= target_rows matmul rows."""
    tile = 1
    for t in range(1, out_h + 1):
        if out_h % t == 0 and t * out_w <= target_rows:
            tile = t
    return tile


def _down_wt_fused_kernel(x4_ref, w1_ref, b1_ref, w2_ref, b2_ref, o_ref,
                          xpad_ref, hpad_ref, xfold1_ref, xfold2_ref, *,
                          cin, ks, out_h, out_w, tile_h, s_valid):
    pad = ks // 2
    n1 = w1_ref.shape[-1]
    n2 = w2_ref.shape[-1]
    hp = out_h + 2 * pad
    wp = out_w + 2 * pad
    n_strips = out_h // tile_h
    strip_s = tile_h * out_w
    inv_sqrt2 = 1.0 / math.sqrt(2.0)

    # ---- Phase 0: zero only the halo borders of the padded scratches (interiors are
    # fully overwritten below; re-zeroed every step so megacore batch-sharding is safe).
    if pad > 0:
        for ref in (xpad_ref, hpad_ref):
            c = ref.shape[-1]
            ref[0:pad, :, :] = jnp.zeros((pad, wp, c), ref.dtype)
            ref[pad + out_h:hp, :, :] = jnp.zeros((pad, wp, c), ref.dtype)
            ref[pad:pad + out_h, 0:pad, :] = jnp.zeros((out_h, pad, c), ref.dtype)
            ref[pad:pad + out_h, pad + out_w:wp, :] = jnp.zeros((out_h, pad, c), ref.dtype)
    # Zero the lane-padding tail of the output block (sliced off by the wrapper).
    if o_ref.shape[-1] > s_valid:
        o_ref[:, s_valid:] = jnp.zeros((n2, o_ref.shape[-1] - s_valid), o_ref.dtype)

    # ---- Phase 1: Haar DWT (mode='zero') -> band-concat image into xpad interior -----
    xb = x4_ref[...].astype(jnp.float32)              # (out_h, out_w, 4*cin)
    pa = xb[:, :, 0 * cin:1 * cin]                    # x[2i,   2j  ]
    pb = xb[:, :, 1 * cin:2 * cin]                    # x[2i,   2j+1]
    pc = xb[:, :, 2 * cin:3 * cin]                    # x[2i+1, 2j  ]
    pd = xb[:, :, 3 * cin:4 * cin]                    # x[2i+1, 2j+1]
    dt = xpad_ref.dtype
    # Haar analysis (pytorch_wavelets 'haar'); band-major channel order matches
    # torch.cat([yL, yH0, yH1, yH2], dim=1).
    xpad_ref[pad:pad + out_h, pad:pad + out_w, 0 * cin:1 * cin] = (0.5 * (pa + pb + pc + pd)).astype(dt)
    xpad_ref[pad:pad + out_h, pad:pad + out_w, 1 * cin:2 * cin] = (0.5 * (pa + pb - pc - pd)).astype(dt)
    xpad_ref[pad:pad + out_h, pad:pad + out_w, 2 * cin:3 * cin] = (0.5 * (pa - pb + pc - pd)).astype(dt)
    xpad_ref[pad:pad + out_h, pad:pad + out_w, 3 * cin:4 * cin] = (0.5 * (pa - pb - pc + pd)).astype(dt)

    # ---- helpers ---------------------------------------------------------------------
    def build_fold(src_ref, fold_ref, c):
        # fold_ref[h, x, kx*c + ch] = src_ref[h, x + kx, ch]
        # Hoists the kx half of the im2col out of the ky/strip loops (done once per
        # activation instead of once per tap), so the conv loop is pure load + matmul.
        for kx in range(ks):
            fold_ref[:, :, kx * c:(kx + 1) * c] = src_ref[:, kx:kx + out_w, :]

    def conv_strip(fold_ref, w_ref, row0, rows):
        # Implicit GEMM for `rows` output rows: ks matmuls with the kx taps folded into
        # the contraction dim (K = ks*c_in); f32 accumulation stays in-register.
        kfold = fold_ref.shape[-1]
        n_out = w_ref.shape[-1]
        acc = jnp.zeros((rows * out_w, n_out), jnp.float32)
        for ky in range(ks):                                   # short static loop (11)
            win = fold_ref[pl.ds(row0 + ky, rows), :, :]       # (rows, out_w, kfold)
            acc = acc + jnp.dot(win.reshape(rows * out_w, kfold), w_ref[ky],
                                preferred_element_type=jnp.float32)
        return acc

    def for_each_strip(body):
        if n_strips <= 8:                    # small static trip count: unroll
            for i in range(n_strips):
                body(i)
        else:                                # keep a visible loop otherwise
            pl.loop(0, n_strips)(body)

    b1v = b1_ref[...].astype(jnp.float32)    # (1, n1)
    b2v = b2_ref[...].astype(jnp.float32)    # (1, n2)

    # ---- Phase 2: Inception block 1 + exact GELU -> hpad interior (bf16, pre-padded) --
    build_fold(xpad_ref, xfold1_ref, 4 * cin)

    def conv1_strip(s_idx):
        row0 = s_idx * tile_h
        if not isinstance(row0, int):
            row0 = pl.multiple_of(row0, tile_h)
        acc = conv_strip(xfold1_ref, w1_ref, row0, tile_h) + b1v
        acc = 0.5 * acc * (1.0 + lax.erf(acc * inv_sqrt2))      # exact (erf) GELU
        hpad_ref[pl.ds(pad + row0, tile_h), pad:pad + out_w, :] = (
            acc.astype(hpad_ref.dtype).reshape(tile_h, out_w, n1))

    for_each_strip(conv1_strip)

    # ---- Phase 3: Inception block 2 -> (n2, S_pad) lane-dense output ------------------
    build_fold(hpad_ref, xfold2_ref, n1)

    def conv2_strip(s_idx):
        row0 = s_idx * tile_h
        col0 = s_idx * strip_s
        if not isinstance(row0, int):
            row0 = pl.multiple_of(row0, tile_h)
            col0 = pl.multiple_of(col0, strip_s)
        acc = conv_strip(xfold2_ref, w2_ref, row0, tile_h) + b2v
        # (strip_S, n2) -> (n2, strip_S): dense store along the spatial lane axis.
        o_ref[:, pl.ds(col0, strip_s)] = jnp.transpose(acc, (1, 0)).astype(o_ref.dtype)

    for_each_strip(conv2_strip)


def down_wt_forward(x_nchw, params):
    """Down_wt.forward: Haar DWT (J=1, zero) -> cat bands -> Inception -> GELU ->
    Inception -> reshape to (B, out_ch, (H/2)*(W/2))."""
    B, C, H, W = x_nchw.shape
    assert H % 2 == 0 and W % 2 == 0, "haar J=1 with mode='zero' assumes even H, W"
    Hh, Wh = H // 2, W // 2

    w1, b1 = params["block1"]            # (KS, KS*4C, N1) bf16, (1, N1) f32
    w2, b2 = params["block2"]            # (KS, KS*N1, N2) bf16, (1, N2) f32
    KS = w1.shape[0]
    P = KS // 2
    FourC = 4 * C
    N1, N2 = w1.shape[-1], w2.shape[-1]
    assert w1.shape[1] == KS * FourC and w2.shape[1] == KS * N1
    Hp, Wp = Hh + 2 * P, Wh + 2 * P
    S = Hh * Wh
    S_pad = ((S + 127) // 128) * 128     # lane-dense (unmasked) final stores

    # Single layout pass: NCHW -> polyphase-grouped NHWC (B, Hh, Wh, 4C) in bf16; the
    # last dim is [row-parity, col-parity, channel].  One transpose replaces the
    # NCHW->NHWC transpose AND the four strided polyphase gathers; bf16 halves the HBM
    # read and the double-buffered VMEM footprint of the largest input block.
    x4 = jnp.transpose(
        x_nchw.reshape(B, C, Hh, 2, Wh, 2),
        (0, 2, 4, 3, 5, 1)).reshape(B, Hh, Wh, FourC).astype(jnp.bfloat16)

    tile_h = _pick_tile_h(Hh, Wh)
    assert Hh % tile_h == 0

    kernel = functools.partial(
        _down_wt_fused_kernel, cin=C, ks=KS, out_h=Hh, out_w=Wh,
        tile_h=tile_h, s_valid=S)

    out_p = pl.pallas_call(
        kernel,
        out_shape=jax.ShapeDtypeStruct((B, N2, S_pad), jnp.float32),
        grid=(B,),
        in_specs=[
            pl.BlockSpec((None, Hh, Wh, FourC), lambda b: (b, 0, 0, 0)),
            pl.BlockSpec((KS, KS * FourC, N1), lambda b: (0, 0, 0)),
            pl.BlockSpec((1, N1), lambda b: (0, 0)),
            pl.BlockSpec((KS, KS * N1, N2), lambda b: (0, 0, 0)),
            pl.BlockSpec((1, N2), lambda b: (0, 0)),
        ],
        out_specs=pl.BlockSpec((None, N2, S_pad), lambda b: (b, 0, 0)),
        scratch_shapes=[
            pltpu.VMEM((Hp, Wp, FourC), jnp.bfloat16),       # zero-padded DWT bands
            pltpu.VMEM((Hp, Wp, N1), jnp.bfloat16),          # zero-padded GELU(conv1)
            pltpu.VMEM((Hp, Wh, KS * FourC), jnp.bfloat16),  # kx-folded bands
            pltpu.VMEM((Hp, Wh, KS * N1), jnp.bfloat16),     # kx-folded GELU(conv1)
        ],
        compiler_params=pltpu.CompilerParams(
            dimension_semantics=("parallel",),               # megacore batch sharding
            vmem_limit_bytes=48 * 1024 * 1024,               # stay under v7x's 64 MiB
        ),
    )(x4, w1, b1, w2, b2)

    return out_p[:, :, :S] if S_pad != S else out_p


# --------------------------------------------------------------------------------------
# Deterministic synthetic parameters for Inception_Block_V1 (mean of 6 centred kernels).
# --------------------------------------------------------------------------------------
def init_inception_params(key, in_ch, out_ch, num_kernels=6):
    KS = 2 * (num_kernels - 1) + 1      # 11 for 6 kernels
    w_comb = jnp.zeros((out_ch, in_ch, KS, KS), jnp.float32)
    b_comb = jnp.zeros((out_ch,), jnp.float32)
    for i in range(num_kernels):
        s = 2 * i + 1
        key, kw, kb = jax.random.split(key, 3)
        fan_in = in_ch * s * s
        w_i = jax.random.normal(kw, (out_ch, in_ch, s, s), jnp.float32) * math.sqrt(2.0 / fan_in)
        b_i = jax.random.normal(kb, (out_ch,), jnp.float32) * 0.02
        p = (KS - s) // 2
        w_comb = w_comb + jnp.pad(w_i, ((0, 0), (0, 0), (p, p), (p, p)))
        b_comb = b_comb + b_i
    return w_comb / num_kernels, b_comb / num_kernels


def pack_inception_params(w_comb, b_comb):
    """(out, in, KS, KS) torch layout -> kx-folded (KS, KS*in, out) bf16 weight (row
    index = kx*in + in_channel, matching the kernel's folded operand) + (1, out) f32."""
    out_ch, in_ch, KS, _ = w_comb.shape
    w = jnp.transpose(w_comb, (2, 3, 1, 0)).reshape(KS, KS * in_ch, out_ch)
    return w.astype(jnp.bfloat16), b_comb.reshape(1, out_ch).astype(jnp.float32)


def reference_forward(x_nchw, w1c, b1c, w2c, b2c):
    """Plain-JAX reference of the same forward pass, used for a numerical parity check."""
    x = x_nchw.astype(jnp.bfloat16).astype(jnp.float32)   # match the kernel's input cast
    B, C, H, W = x.shape
    a = x[:, :, 0::2, 0::2]
    b = x[:, :, 0::2, 1::2]
    c = x[:, :, 1::2, 0::2]
    d = x[:, :, 1::2, 1::2]
    bands = jnp.concatenate([0.5 * (a + b + c + d), 0.5 * (a + b - c - d),
                             0.5 * (a - b + c - d), 0.5 * (a - b - c + d)], axis=1)

    def conv_same(t, w, bias):
        w = w.astype(jnp.bfloat16).astype(jnp.float32)    # match bf16 weight quantization
        y = lax.conv_general_dilated(t, w, (1, 1), "SAME",
                                     dimension_numbers=("NCHW", "OIHW", "NCHW"),
                                     precision=lax.Precision.HIGHEST)
        return y + bias.reshape(1, -1, 1, 1)

    h = conv_same(bands, w1c, b1c)
    h = 0.5 * h * (1.0 + lax.erf(h / math.sqrt(2.0)))     # exact GELU
    y = conv_same(h, w2c, b2c)
    return y.reshape(B, y.shape[1], -1)


if __name__ == "__main__":
    in_ch, out_ch = 4, 8
    B, H, W = 2, 16, 16

    key = jax.random.PRNGKey(0)
    kx_, k1, k2 = jax.random.split(key, 3)
    x = jax.random.normal(kx_, (B, in_ch, H, W), jnp.float32)

    w1c, b1c = init_inception_params(k1, 4 * in_ch, out_ch, num_kernels=6)
    w2c, b2c = init_inception_params(k2, out_ch, out_ch, num_kernels=6)
    params = {"block1": pack_inception_params(w1c, b1c),
              "block2": pack_inception_params(w2c, b2c)}

    out = jax.jit(down_wt_forward)(x, params)
    out = jax.block_until_ready(out)

    assert out.shape == (B, out_ch, (H // 2) * (W // 2)), out.shape
    assert bool(jnp.all(jnp.isfinite(out)))

    # Numerical parity against a plain-JAX (XLA) reference of the same math.
    ref = reference_forward(x, w1c, b1c, w2c, b2c)
    max_err = float(jnp.max(jnp.abs(out - ref)))
    assert bool(jnp.allclose(out, ref, atol=5e-2, rtol=5e-2)), max_err
    print("KERNEL_OK")
</pallas_src>

<mosaic_0001>
module attributes {stable_mosaic.version = 11 : i64} {
  func.func @_down_wt_fused_kernel(%arg0: i32, %arg1: memref<1x8x8x16xbf16, #tpu.memory_space<vmem>>, %arg2: memref<11x176x8xbf16, #tpu.memory_space<vmem>>, %arg3: memref<1x8xf32, #tpu.memory_space<vmem>>, %arg4: memref<11x88x8xbf16, #tpu.memory_space<vmem>>, %arg5: memref<1x8xf32, #tpu.memory_space<vmem>>, %arg6: memref<1x8x128xf32, #tpu.memory_space<vmem>>, %arg7: memref<18x18x16xbf16, #tpu.memory_space<vmem>>, %arg8: memref<18x18x8xbf16, #tpu.memory_space<vmem>>, %arg9: memref<18x8x176xbf16, #tpu.memory_space<vmem>>, %arg10: memref<18x8x88xbf16, #tpu.memory_space<vmem>>) attributes {dimension_semantics = [#tpu.dimension_semantics<parallel>], iteration_bounds = array<i64: 2>, scalar_prefetch = 0 : i64, scratch_operands = 4 : i64, tpu.core_type = #tpu.core_type<tc>, window_params = [{transform_indices = @transform_0, window_bounds = array<i64: 1, 8, 8, 16>}, {pipeline_mode = #tpu.pipeline_mode<synchronous>, transform_indices = @transform_1, window_bounds = array<i64: 11, 176, 8>}, {pipeline_mode = #tpu.pipeline_mode<synchronous>, transform_indices = @transform_2, window_bounds = array<i64: 1, 8>}, {pipeline_mode = #tpu.pipeline_mode<synchronous>, transform_indices = @transform_3, window_bounds = array<i64: 11, 88, 8>}, {pipeline_mode = #tpu.pipeline_mode<synchronous>, transform_indices = @transform_4, window_bounds = array<i64: 1, 8>}, {transform_indices = @transform_5, window_bounds = array<i64: 1, 8, 128>}]} {
    %cst = arith.constant 0.000000e+00 : bf16
    %0 = vector.broadcast %cst : bf16 to vector<5x18x16xbf16>
    %c0 = arith.constant 0 : index
    %c0_0 = arith.constant 0 : index
    %c0_1 = arith.constant 0 : index
    %1 = vector.load %arg7[%c0, %c0_0, %c0_1] : memref<18x18x16xbf16, #tpu.memory_space<vmem>>, vector<5x18x16xbf16>
    tpu.vector_store %arg7[%c0, %c0_0, %c0_1], %0 {strides = array<i32>} : memref<18x18x16xbf16, #tpu.memory_space<vmem>>, vector<5x18x16xbf16>,
    %cst_2 = arith.constant 0.000000e+00 : bf16
    %2 = vector.broadcast %cst_2 : bf16 to vector<5x18x16xbf16>
    %c13 = arith.constant 13 : index
    %c0_3 = arith.constant 0 : index
    %c0_4 = arith.constant 0 : index
    %3 = vector.load %arg7[%c13, %c0_3, %c0_4] : memref<18x18x16xbf16, #tpu.memory_space<vmem>>, vector<5x18x16xbf16>
    tpu.vector_store %arg7[%c13, %c0_3, %c0_4], %2 {strides = array<i32>} : memref<18x18x16xbf16, #tpu.memory_space<vmem>>, vector<5x18x16xbf16>,
    %cst_5 = arith.constant 0.000000e+00 : bf16
    %4 = vector.broadcast %cst_5 : bf16 to vector<8x5x16xbf16>
    %c5 = arith.constant 5 : index
    %c0_6 = arith.constant 0 : index
    %c0_7 = arith.constant 0 : index
    %5 = vector.load %arg7[%c5, %c0_6, %c0_7] : memref<18x18x16xbf16, #tpu.memory_space<vmem>>, vector<8x5x16xbf16>
    tpu.vector_store %arg7[%c5, %c0_6, %c0_7], %4 {strides = array<i32>} : memref<18x18x16xbf16, #tpu.memory_space<vmem>>, vector<8x5x16xbf16>,
    %cst_8 = arith.constant 0.000000e+00 : bf16
    %6 = vector.broadcast %cst_8 : bf16 to vector<8x5x16xbf16>
    %c5_9 = arith.constant 5 : index
    %c13_10 = arith.constant 13 : index
    %c0_11 = arith.constant 0 : index
    %7 = vector.load %arg7[%c5_9, %c13_10, %c0_11] : memref<18x18x16xbf16, #tpu.memory_space<vmem>>, vector<8x5x16xbf16>
    tpu.vector_store %arg7[%c5_9, %c13_10, %c0_11], %6 {strides = array<i32>} : memref<18x18x16xbf16, #tpu.memory_space<vmem>>, vector<8x5x16xbf16>,
    %cst_12 = arith.constant 0.000000e+00 : bf16
    %8 = vector.broadcast %cst_12 : bf16 to vector<5x18x8xbf16>
    %c0_13 = arith.constant 0 : index
    %c0_14 = arith.constant 0 : index
    %c0_15 = arith.constant 0 : index
    %9 = vector.load %arg8[%c0_13, %c0_14, %c0_15] : memref<18x18x8xbf16, #tpu.memory_space<vmem>>, vector<5x18x8xbf16>
    tpu.vector_store %arg8[%c0_13, %c0_14, %c0_15], %8 {strides = array<i32>} : memref<18x18x8xbf16, #tpu.memory_space<vmem>>, vector<5x18x8xbf16>,
    %cst_16 = arith.constant 0.000000e+00 : bf16
    %10 = vector.broadcast %cst_16 : bf16 to vector<5x18x8xbf16>
    %c13_17 = arith.constant 13 : index
    %c0_18 = arith.constant 0 : index
    %c0_19 = arith.constant 0 : index
    %11 = vector.load %arg8[%c13_17, %c0_18, %c0_19] : memref<18x18x8xbf16, #tpu.memory_space<vmem>>, vector<5x18x8xbf16>
    tpu.vector_store %arg8[%c13_17, %c0_18, %c0_19], %10 {strides = array<i32>} : memref<18x18x8xbf16, #tpu.memory_space<vmem>>, vector<5x18x8xbf16>,
    %cst_20 = arith.constant 0.000000e+00 : bf16
    %12 = vector.broadcast %cst_20 : bf16 to vector<8x5x8xbf16>
    %c5_21 = arith.constant 5 : index
    %c0_22 = arith.constant 0 : index
    %c0_23 = arith.constant 0 : index
    %13 = vector.load %arg8[%c5_21, %c0_22, %c0_23] : memref<18x18x8xbf16, #tpu.memory_space<vmem>>, vector<8x5x8xbf16>
    tpu.vector_store %arg8[%c5_21, %c0_22, %c0_23], %12 {strides = array<i32>} : memref<18x18x8xbf16, #tpu.memory_space<vmem>>, vector<8x5x8xbf16>,
    %cst_24 = arith.constant 0.000000e+00 : bf16
    %14 = vector.broadcast %cst_24 : bf16 to vector<8x5x8xbf16>
    %c5_25 = arith.constant 5 : index
    %c13_26 = arith.constant 13 : index
    %c0_27 = arith.constant 0 : index
    %15 = vector.load %arg8[%c5_25, %c13_26, %c0_27] : memref<18x18x8xbf16, #tpu.memory_space<vmem>>, vector<8x5x8xbf16>
    tpu.vector_store %arg8[%c5_25, %c13_26, %c0_27], %14 {strides = array<i32>} : memref<18x18x8xbf16, #tpu.memory_space<vmem>>, vector<8x5x8xbf16>,
    %cst_28 = arith.constant 0.000000e+00 : f32
    %16 = vector.broadcast %cst_28 : f32 to vector<8x64xf32>
    %c0_29 = arith.constant 0 : index
    %c0_30 = arith.constant 0 : index
    %c64 = arith.constant 64 : index
    %17 = vector.load %arg6[%c0_29, %c0_30, %c64] : memref<1x8x128xf32, #tpu.memory_space<vmem>>, vector<1x8x64xf32>
    %18 = vector.shape_cast %17 : vector<1x8x64xf32> to vector<8x64xf32>
    %19 = vector.shape_cast %16 : vector<8x64xf32> to vector<1x8x64xf32>
    tpu.vector_store %arg6[%c0_29, %c0_30, %c64], %19 {strides = array<i32>} : memref<1x8x128xf32, #tpu.memory_space<vmem>>, vector<1x8x64xf32>,
    %c0_31 = arith.constant 0 : index
    %c0_32 = arith.constant 0 : index
    %c0_33 = arith.constant 0 : index
    %c0_34 = arith.constant 0 : index
    %20 = vector.load %arg1[%c0_31, %c0_32, %c0_33, %c0_34] : memref<1x8x8x16xbf16, #tpu.memory_space<vmem>>, vector<1x8x8x16xbf16>
    %21 = vector.shape_cast %20 : vector<1x8x8x16xbf16> to vector<8x8x16xbf16>
    %22 = arith.extf %21 : vector<8x8x16xbf16> to vector<8x8x16xf32>
    %23 = vector.extract_strided_slice %22 {offsets = [0, 0, 0], sizes = [8, 8, 4], strides = [1, 1, 1]} : vector<8x8x16xf32> to vector<8x8x4xf32>
    %24 = vector.extract_strided_slice %22 {offsets = [0, 0, 4], sizes = [8, 8, 4], strides = [1, 1, 1]} : vector<8x8x16xf32> to vector<8x8x4xf32>
    %25 = vector.extract_strided_slice %22 {offsets = [0, 0, 8], sizes = [8, 8, 4], strides = [1, 1, 1]} : vector<8x8x16xf32> to vector<8x8x4xf32>
    %26 = vector.extract_strided_slice %22 {offsets = [0, 0, 12], sizes = [8, 8, 4], strides = [1, 1, 1]} : vector<8x8x16xf32> to vector<8x8x4xf32>
    %27 = arith.addf %23, %24 : vector<8x8x4xf32>
    %28 = arith.addf %27, %25 : vector<8x8x4xf32>
    %29 = arith.addf %28, %26 : vector<8x8x4xf32>
    %cst_35 = arith.constant 5.000000e-01 : f32
    %30 = vector.broadcast %cst_35 : f32 to vector<8x8x4xf32>
    %31 = arith.mulf %30, %29 : vector<8x8x4xf32>
    %32 = arith.truncf %31 : vector<8x8x4xf32> to vector<8x8x4xbf16>
    %c5_36 = arith.constant 5 : index
    %c5_37 = arith.constant 5 : index
    %c0_38 = arith.constant 0 : index
    %33 = vector.load %arg7[%c5_36, %c5_37, %c0_38] : memref<18x18x16xbf16, #tpu.memory_space<vmem>>, vector<8x8x4xbf16>
    tpu.vector_store %arg7[%c5_36, %c5_37, %c0_38], %32 {strides = array<i32>} : memref<18x18x16xbf16, #tpu.memory_space<vmem>>, vector<8x8x4xbf16>,
    %34 = arith.addf %23, %24 : vector<8x8x4xf32>
    %35 = arith.subf %34, %25 : vector<8x8x4xf32>
    %36 = arith.subf %35, %26 : vector<8x8x4xf32>
    %cst_39 = arith.constant 5.000000e-01 : f32
    %37 = vector.broadcast %cst_39 : f32 to vector<8x8x4xf32>
    %38 = arith.mulf %37, %36 : vector<8x8x4xf32>
    %39 = arith.truncf %38 : vector<8x8x4xf32> to vector<8x8x4xbf16>
    %c5_40 = arith.constant 5 : index
    %c5_41 = arith.constant 5 : index
    %c4 = arith.constant 4 : index
    %40 = vector.load %arg7[%c5_40, %c5_41, %c4] : memref<18x18x16xbf16, #tpu.memory_space<vmem>>, vector<8x8x4xbf16>
    tpu.vector_store %arg7[%c5_40, %c5_41, %c4], %39 {strides = array<i32>} : memref<18x18x16xbf16, #tpu.memory_space<vmem>>, vector<8x8x4xbf16>,
    %41 = arith.subf %23, %24 : vector<8x8x4xf32>
    %42 = arith.addf %41, %25 : vector<8x8x4xf32>
    %43 = arith.subf %42, %26 : vector<8x8x4xf32>
    %cst_42 = arith.constant 5.000000e-01 : f32
    %44 = vector.broadcast %cst_42 : f32 to vector<8x8x4xf32>
    %45 = arith.mulf %44, %43 : vector<8x8x4xf32>
    %46 = arith.truncf %45 : vector<8x8x4xf32> to vector<8x8x4xbf16>
    %c5_43 = arith.constant 5 : index
    %c5_44 = arith.constant 5 : index
    %c8 = arith.constant 8 : index
    %47 = vector.load %arg7[%c5_43, %c5_44, %c8] : memref<18x18x16xbf16, #tpu.memory_space<vmem>>, vector<8x8x4xbf16>
    tpu.vector_store %arg7[%c5_43, %c5_44, %c8], %46 {strides = array<i32>} : memref<18x18x16xbf16, #tpu.memory_space<vmem>>, vector<8x8x4xbf16>,
    %48 = arith.subf %23, %24 : vector<8x8x4xf32>
    %49 = arith.subf %48, %25 : vector<8x8x4xf32>
    %50 = arith.addf %49, %26 : vector<8x8x4xf32>
    %cst_45 = arith.constant 5.000000e-01 : f32
    %51 = vector.broadcast %cst_45 : f32 to vector<8x8x4xf32>
    %52 = arith.mulf %51, %50 : vector<8x8x4xf32>
    %53 = arith.truncf %52 : vector<8x8x4xf32> to vector<8x8x4xbf16>
    %c5_46 = arith.constant 5 : index
    %c5_47 = arith.constant 5 : index
    %c12 = arith.constant 12 : index
    %54 = vector.load %arg7[%c5_46, %c5_47, %c12] : memref<18x18x16xbf16, #tpu.memory_space<vmem>>, vector<8x8x4xbf16>
    tpu.vector_store %arg7[%c5_46, %c5_47, %c12], %53 {strides = array<i32>} : memref<18x18x16xbf16, #tpu.memory_space<vmem>>, vector<8x8x4xbf16>,
    %c0_48 = arith.constant 0 : index
    %c0_49 = arith.constant 0 : index
    %55 = vector.load %arg3[%c0_48, %c0_49] : memref<1x8xf32, #tpu.memory_space<vmem>>, vector<1x8xf32>
    %c0_50 = arith.constant 0 : index
    %c0_51 = arith.constant 0 : index
    %56 = vector.load %arg5[%c0_50, %c0_51] : memref<1x8xf32, #tpu.memory_space<vmem>>, vector<1x8xf32>
    %c0_52 = arith.constant 0 : index
    %c0_53 = arith.constant 0 : index
    %c0_54 = arith.constant 0 : index
    %57 = vector.load %arg7[%c0_52, %c0_53, %c0_54] : memref<18x18x16xbf16, #tpu.memory_space<vmem>>, vector<18x8x16xbf16>
    %c0_55 = arith.constant 0 : index
    %c0_56 = arith.constant 0 : index
    %c0_57 = arith.constant 0 : index
    %58 = vector.load %arg9[%c0_55, %c0_56, %c0_57] : memref<18x8x176xbf16, #tpu.memory_space<vmem>>, vector<18x8x16xbf16>
    tpu.vector_store %arg9[%c0_55, %c0_56, %c0_57], %57 {strides = array<i32>} : memref<18x8x176xbf16, #tpu.memory_space<vmem>>, vector<18x8x16xbf16>,
    %c0_58 = arith.constant 0 : index
    %c1 = arith.constant 1 : index
    %c0_59 = arith.constant 0 : index
    %59 = vector.load %arg7[%c0_58, %c1, %c0_59] : memref<18x18x16xbf16, #tpu.memory_space<vmem>>, vector<18x8x16xbf16>
    %c0_60 = arith.constant 0 : index
    %c0_61 = arith.constant 0 : index
    %c16 = arith.constant 16 : index
    %60 = vector.load %arg9[%c0_60, %c0_61, %c16] : memref<18x8x176xbf16, #tpu.memory_space<vmem>>, vector<18x8x16xbf16>
    tpu.vector_store %arg9[%c0_60, %c0_61, %c16], %59 {strides = array<i32>} : memref<18x8x176xbf16, #tpu.memory_space<vmem>>, vector<18x8x16xbf16>,
    %c0_62 = arith.constant 0 : index
    %c2 = arith.constant 2 : index
    %c0_63 = arith.constant 0 : index
    %61 = vector.load %arg7[%c0_62, %c2, %c0_63] : memref<18x18x16xbf16, #tpu.memory_space<vmem>>, vector<18x8x16xbf16>
    %c0_64 = arith.constant 0 : index
    %c0_65 = arith.constant 0 : index
    %c32 = arith.constant 32 : index
    %62 = vector.load %arg9[%c0_64, %c0_65, %c32] : memref<18x8x176xbf16, #tpu.memory_space<vmem>>, vector<18x8x16xbf16>
    tpu.vector_store %arg9[%c0_64, %c0_65, %c32], %61 {strides = array<i32>} : memref<18x8x176xbf16, #tpu.memory_space<vmem>>, vector<18x8x16xbf16>,
    %c0_66 = arith.constant 0 : index
    %c3 = arith.constant 3 : index
    %c0_67 = arith.constant 0 : index
    %63 = vector.load %arg7[%c0_66, %c3, %c0_67] : memref<18x18x16xbf16, #tpu.memory_space<vmem>>, vector<18x8x16xbf16>
    %c0_68 = arith.constant 0 : index
    %c0_69 = arith.constant 0 : index
    %c48 = arith.constant 48 : index
    %64 = vector.load %arg9[%c0_68, %c0_69, %c48] : memref<18x8x176xbf16, #tpu.memory_space<vmem>>, vector<18x8x16xbf16>
    tpu.vector_store %arg9[%c0_68, %c0_69, %c48], %63 {strides = array<i32>} : memref<18x8x176xbf16, #tpu.memory_space<vmem>>, vector<18x8x16xbf16>,
    %c0_70 = arith.constant 0 : index
    %c4_71 = arith.constant 4 : index
    %c0_72 = arith.constant 0 : index
    %65 = vector.load %arg7[%c0_70, %c4_71, %c0_72] : memref<18x18x16xbf16, #tpu.memory_space<vmem>>, vector<18x8x16xbf16>
    %c0_73 = arith.constant 0 : index
    %c0_74 = arith.constant 0 : index
    %c64_75 = arith.constant 64 : index
    %66 = vector.load %arg9[%c0_73, %c0_74, %c64_75] : memref<18x8x176xbf16, #tpu.memory_space<vmem>>, vector<18x8x16xbf16>
    tpu.vector_store %arg9[%c0_73, %c0_74, %c64_75], %65 {strides = array<i32>} : memref<18x8x176xbf16, #tpu.memory_space<vmem>>, vector<18x8x16xbf16>,
    %c0_76 = arith.constant 0 : index
    %c5_77 = arith.constant 5 : index
    %c0_78 = arith.constant 0 : index
    %67 = vector.load %arg7[%c0_76, %c5_77, %c0_78] : memref<18x18x16xbf16, #tpu.memory_space<vmem>>, vector<18x8x16xbf16>
    %c0_79 = arith.constant 0 : index
    %c0_80 = arith.constant 0 : index
    %c80 = arith.constant 80 : index
    %68 = vector.load %arg9[%c0_79, %c0_80, %c80] : memref<18x8x176xbf16, #tpu.memory_space<vmem>>, vector<18x8x16xbf16>
    tpu.vector_store %arg9[%c0_79, %c0_80, %c80], %67 {strides = array<i32>} : memref<18x8x176xbf16, #tpu.memory_space<vmem>>, vector<18x8x16xbf16>,
    %c0_81 = arith.constant 0 : index
    %c6 = arith.constant 6 : index
    %c0_82 = arith.constant 0 : index
    %69 = vector.load %arg7[%c0_81, %c6, %c0_82] : memref<18x18x16xbf16, #tpu.memory_space<vmem>>, vector<18x8x16xbf16>
    %c0_83 = arith.constant 0 : index
    %c0_84 = arith.constant 0 : index
    %c96 = arith.constant 96 : index
    %70 = vector.load %arg9[%c0_83, %c0_84, %c96] : memref<18x8x176xbf16, #tpu.memory_space<vmem>>, vector<18x8x16xbf16>
    tpu.vector_store %arg9[%c0_83, %c0_84, %c96], %69 {strides = array<i32>} : memref<18x8x176xbf16, #tpu.memory_space<vmem>>, vector<18x8x16xbf16>,
    %c0_85 = arith.constant 0 : index
    %c7 = arith.constant 7 : index
    %c0_86 = arith.constant 0 : index
    %71 = vector.load %arg7[%c0_85, %c7, %c0_86] : memref<18x18x16xbf16, #tpu.memory_space<vmem>>, vector<18x8x16xbf16>
    %c0_87 = arith.constant 0 : index
    %c0_88 = arith.constant 0 : index
    %c112 = arith.constant 112 : index
    %72 = vector.load %arg9[%c0_87, %c0_88, %c112] : memref<18x8x176xbf16, #tpu.memory_space<vmem>>, vector<18x8x16xbf16>
    tpu.vector_store %arg9[%c0_87, %c0_88, %c112], %71 {strides = array<i32>} : memref<18x8x176xbf16, #tpu.memory_space<vmem>>, vector<18x8x16xbf16>,
    %c0_89 = arith.constant 0 : index
    %c8_90 = arith.constant 8 : index
    %c0_91 = arith.constant 0 : index
    %73 = vector.load %arg7[%c0_89, %c8_90, %c0_91] : memref<18x18x16xbf16, #tpu.memory_space<vmem>>, vector<18x8x16xbf16>
    %c0_92 = arith.constant 0 : index
    %c0_93 = arith.constant 0 : index
    %c128 = arith.constant 128 : index
    %74 = vector.load %arg9[%c0_92, %c0_93, %c128] : memref<18x8x176xbf16, #tpu.memory_space<vmem>>, vector<18x8x16xbf16>
    tpu.vector_store %arg9[%c0_92, %c0_93, %c128], %73 {strides = array<i32>} : memref<18x8x176xbf16, #tpu.memory_space<vmem>>, vector<18x8x16xbf16>,
    %c0_94 = arith.constant 0 : index
    %c9 = arith.constant 9 : index
    %c0_95 = arith.constant 0 : index
    %75 = vector.load %arg7[%c0_94, %c9, %c0_95] : memref<18x18x16xbf16, #tpu.memory_space<vmem>>, vector<18x8x16xbf16>
    %c0_96 = arith.constant 0 : index
    %c0_97 = arith.constant 0 : index
    %c144 = arith.constant 144 : index
    %76 = vector.load %arg9[%c0_96, %c0_97, %c144] : memref<18x8x176xbf16, #tpu.memory_space<vmem>>, vector<18x8x16xbf16>
    tpu.vector_store %arg9[%c0_96, %c0_97, %c144], %75 {strides = array<i32>} : memref<18x8x176xbf16, #tpu.memory_space<vmem>>, vector<18x8x16xbf16>,
    %c0_98 = arith.constant 0 : index
    %c10 = arith.constant 10 : index
    %c0_99 = arith.constant 0 : index
    %77 = vector.load %arg7[%c0_98, %c10, %c0_99] : memref<18x18x16xbf16, #tpu.memory_space<vmem>>, vector<18x8x16xbf16>
    %c0_100 = arith.constant 0 : index
    %c0_101 = arith.constant 0 : index
    %c160 = arith.constant 160 : index
    %78 = vector.load %arg9[%c0_100, %c0_101, %c160] : memref<18x8x176xbf16, #tpu.memory_space<vmem>>, vector<18x8x16xbf16>
    tpu.vector_store %arg9[%c0_100, %c0_101, %c160], %77 {strides = array<i32>} : memref<18x8x176xbf16, #tpu.memory_space<vmem>>, vector<18x8x16xbf16>,
    %cst_102 = arith.constant 0.000000e+00 : f32
    %79 = vector.broadcast %cst_102 : f32 to vector<64x8xf32>
    %c0_103 = arith.constant 0 : index
    %c0_104 = arith.constant 0 : index
    %c0_105 = arith.constant 0 : index
    %80 = vector.load %arg9[%c0_103, %c0_104, %c0_105] : memref<18x8x176xbf16, #tpu.memory_space<vmem>>, vector<8x8x176xbf16>
    %81 = vector.shape_cast %80 : vector<8x8x176xbf16> to vector<64x176xbf16>
    %c0_106 = arith.constant 0 : index
    %c0_107 = arith.constant 0 : index
    %c0_108 = arith.constant 0 : index
    %82 = vector.load %arg2[%c0_106, %c0_107, %c0_108] : memref<11x176x8xbf16, #tpu.memory_space<vmem>>, vector<1x176x8xbf16>
    %83 = vector.shape_cast %82 : vector<1x176x8xbf16> to vector<176x8xbf16>
    %cst_109 = arith.constant dense<0.000000e+00> : vector<64x8xf32>
    %84 = tpu.matmul %81, %83, %cst_109 {dimension_numbers = #tpu.dot_dimension_numbers<[1], [0], [0], [1], [0, 0, 1, 1], [], []>} : vector<64x176xbf16>, vector<176x8xbf16>, vector<64x8xf32> -> vector<64x8xf32>
    %85 = arith.addf %79, %84 : vector<64x8xf32>
    %c1_110 = arith.constant 1 : index
    %c0_111 = arith.constant 0 : index
    %c0_112 = arith.constant 0 : index
    %86 = vector.load %arg9[%c1_110, %c0_111, %c0_112] : memref<18x8x176xbf16, #tpu.memory_space<vmem>>, vector<8x8x176xbf16>
    %87 = vector.shape_cast %86 : vector<8x8x176xbf16> to vector<64x176xbf16>
    %c1_113 = arith.constant 1 : index
    %c0_114 = arith.constant 0 : index
    %c0_115 = arith.constant 0 : index
    %88 = vector.load %arg2[%c1_113, %c0_114, %c0_115] : memref<11x176x8xbf16, #tpu.memory_space<vmem>>, vector<1x176x8xbf16>
    %89 = vector.shape_cast %88 : vector<1x176x8xbf16> to vector<176x8xbf16>
    %cst_116 = arith.constant dense<0.000000e+00> : vector<64x8xf32>
    %90 = tpu.matmul %87, %89, %cst_116 {dimension_numbers = #tpu.dot_dimension_numbers<[1], [0], [0], [1], [0, 0, 1, 1], [], []>} : vector<64x176xbf16>, vector<176x8xbf16>, vector<64x8xf32> -> vector<64x8xf32>
    %91 = arith.addf %85, %90 : vector<64x8xf32>
    %c2_117 = arith.constant 2 : index
    %c0_118 = arith.constant 0 : index
    %c0_119 = arith.constant 0 : index
    %92 = vector.load %arg9[%c2_117, %c0_118, %c0_119] : memref<18x8x176xbf16, #tpu.memory_space<vmem>>, vector<8x8x176xbf16>
    %93 = vector.shape_cast %92 : vector<8x8x176xbf16> to vector<64x176xbf16>
    %c2_120 = arith.constant 2 : index
    %c0_121 = arith.constant 0 : index
    %c0_122 = arith.constant 0 : index
    %94 = vector.load %arg2[%c2_120, %c0_121, %c0_122] : memref<11x176x8xbf16, #tpu.memory_space<vmem>>, vector<1x176x8xbf16>
    %95 = vector.shape_cast %94 : vector<1x176x8xbf16> to vector<176x8xbf16>
    %cst_123 = arith.constant dense<0.000000e+00> : vector<64x8xf32>
    %96 = tpu.matmul %93, %95, %cst_123 {dimension_numbers = #tpu.dot_dimension_numbers<[1], [0], [0], [1], [0, 0, 1, 1], [], []>} : vector<64x176xbf16>, vector<176x8xbf16>, vector<64x8xf32> -> vector<64x8xf32>
    %97 = arith.addf %91, %96 : vector<64x8xf32>
    %c3_124 = arith.constant 3 : index
    %c0_125 = arith.constant 0 : index
    %c0_126 = arith.constant 0 : index
    %98 = vector.load %arg9[%c3_124, %c0_125, %c0_126] : memref<18x8x176xbf16, #tpu.memory_space<vmem>>, vector<8x8x176xbf16>
    %99 = vector.shape_cast %98 : vector<8x8x176xbf16> to vector<64x176xbf16>
    %c3_127 = arith.constant 3 : index
    %c0_128 = arith.constant 0 : index
    %c0_129 = arith.constant 0 : index
    %100 = vector.load %arg2[%c3_127, %c0_128, %c0_129] : memref<11x176x8xbf16, #tpu.memory_space<vmem>>, vector<1x176x8xbf16>
    %101 = vector.shape_cast %100 : vector<1x176x8xbf16> to vector<176x8xbf16>
    %cst_130 = arith.constant dense<0.000000e+00> : vector<64x8xf32>
    %102 = tpu.matmul %99, %101, %cst_130 {dimension_numbers = #tpu.dot_dimension_numbers<[1], [0], [0], [1], [0, 0, 1, 1], [], []>} : vector<64x176xbf16>, vector<176x8xbf16>, vector<64x8xf32> -> vector<64x8xf32>
    %103 = arith.addf %97, %102 : vector<64x8xf32>
    %c4_131 = arith.constant 4 : index
    %c0_132 = arith.constant 0 : index
    %c0_133 = arith.constant 0 : index
    %104 = vector.load %arg9[%c4_131, %c0_132, %c0_133] : memref<18x8x176xbf16, #tpu.memory_space<vmem>>, vector<8x8x176xbf16>
    %105 = vector.shape_cast %104 : vector<8x8x176xbf16> to vector<64x176xbf16>
    %c4_134 = arith.constant 4 : index
    %c0_135 = arith.constant 0 : index
    %c0_136 = arith.constant 0 : index
    %106 = vector.load %arg2[%c4_134, %c0_135, %c0_136] : memref<11x176x8xbf16, #tpu.memory_space<vmem>>, vector<1x176x8xbf16>
    %107 = vector.shape_cast %106 : vector<1x176x8xbf16> to vector<176x8xbf16>
    %cst_137 = arith.constant dense<0.000000e+00> : vector<64x8xf32>
    %108 = tpu.matmul %105, %107, %cst_137 {dimension_numbers = #tpu.dot_dimension_numbers<[1], [0], [0], [1], [0, 0, 1, 1], [], []>} : vector<64x176xbf16>, vector<176x8xbf16>, vector<64x8xf32> -> vector<64x8xf32>
    %109 = arith.addf %103, %108 : vector<64x8xf32>
    %c5_138 = arith.constant 5 : index
    %c0_139 = arith.constant 0 : index
    %c0_140 = arith.constant 0 : index
    %110 = vector.load %arg9[%c5_138, %c0_139, %c0_140] : memref<18x8x176xbf16, #tpu.memory_space<vmem>>, vector<8x8x176xbf16>
    %111 = vector.shape_cast %110 : vector<8x8x176xbf16> to vector<64x176xbf16>
    %c5_141 = arith.constant 5 : index
    %c0_142 = arith.constant 0 : index
    %c0_143 = arith.constant 0 : index
    %112 = vector.load %arg2[%c5_141, %c0_142, %c0_143] : memref<11x176x8xbf16, #tpu.memory_space<vmem>>, vector<1x176x8xbf16>
    %113 = vector.shape_cast %112 : vector<1x176x8xbf16> to vector<176x8xbf16>
    %cst_144 = arith.constant dense<0.000000e+00> : vector<64x8xf32>
    %114 = tpu.matmul %111, %113, %cst_144 {dimension_numbers = #tpu.dot_dimension_numbers<[1], [0], [0], [1], [0, 0, 1, 1], [], []>} : vector<64x176xbf16>, vector<176x8xbf16>, vector<64x8xf32> -> vector<64x8xf32>
    %115 = arith.addf %109, %114 : vector<64x8xf32>
    %c6_145 = arith.constant 6 : index
    %c0_146 = arith.constant 0 : index
    %c0_147 = arith.constant 0 : index
    %116 = vector.load %arg9[%c6_145, %c0_146, %c0_147] : memref<18x8x176xbf16, #tpu.memory_space<vmem>>, vector<8x8x176xbf16>
    %117 = vector.shape_cast %116 : vector<8x8x176xbf16> to vector<64x176xbf16>
    %c6_148 = arith.constant 6 : index
    %c0_149 = arith.constant 0 : index
    %c0_150 = arith.constant 0 : index
    %118 = vector.load %arg2[%c6_148, %c0_149, %c0_150] : memref<11x176x8xbf16, #tpu.memory_space<vmem>>, vector<1x176x8xbf16>
    %119 = vector.shape_cast %118 : vector<1x176x8xbf16> to vector<176x8xbf16>
    %cst_151 = arith.constant dense<0.000000e+00> : vector<64x8xf32>
    %120 = tpu.matmul %117, %119, %cst_151 {dimension_numbers = #tpu.dot_dimension_numbers<[1], [0], [0], [1], [0, 0, 1, 1], [], []>} : vector<64x176xbf16>, vector<176x8xbf16>, vector<64x8xf32> -> vector<64x8xf32>
    %121 = arith.addf %115, %120 : vector<64x8xf32>
    %c7_152 = arith.constant 7 : index
    %c0_153 = arith.constant 0 : index
    %c0_154 = arith.constant 0 : index
    %122 = vector.load %arg9[%c7_152, %c0_153, %c0_154] : memref<18x8x176xbf16, #tpu.memory_space<vmem>>, vector<8x8x176xbf16>
    %123 = vector.shape_cast %122 : vector<8x8x176xbf16> to vector<64x176xbf16>
    %c7_155 = arith.constant 7 : index
    %c0_156 = arith.constant 0 : index
    %c0_157 = arith.constant 0 : index
    %124 = vector.load %arg2[%c7_155, %c0_156, %c0_157] : memref<11x176x8xbf16, #tpu.memory_space<vmem>>, vector<1x176x8xbf16>
    %125 = vector.shape_cast %124 : vector<1x176x8xbf16> to vector<176x8xbf16>
    %cst_158 = arith.constant dense<0.000000e+00> : vector<64x8xf32>
    %126 = tpu.matmul %123, %125, %cst_158 {dimension_numbers = #tpu.dot_dimension_numbers<[1], [0], [0], [1], [0, 0, 1, 1], [], []>} : vector<64x176xbf16>, vector<176x8xbf16>, vector<64x8xf32> -> vector<64x8xf32>
    %127 = arith.addf %121, %126 : vector<64x8xf32>
    %c8_159 = arith.constant 8 : index
    %c0_160 = arith.constant 0 : index
    %c0_161 = arith.constant 0 : index
    %128 = vector.load %arg9[%c8_159, %c0_160, %c0_161] : memref<18x8x176xbf16, #tpu.memory_space<vmem>>, vector<8x8x176xbf16>
    %129 = vector.shape_cast %128 : vector<8x8x176xbf16> to vector<64x176xbf16>
    %c8_162 = arith.constant 8 : index
    %c0_163 = arith.constant 0 : index
    %c0_164 = arith.constant 0 : index
    %130 = vector.load %arg2[%c8_162, %c0_163, %c0_164] : memref<11x176x8xbf16, #tpu.memory_space<vmem>>, vector<1x176x8xbf16>
    %131 = vector.shape_cast %130 : vector<1x176x8xbf16> to vector<176x8xbf16>
    %cst_165 = arith.constant dense<0.000000e+00> : vector<64x8xf32>
    %132 = tpu.matmul %129, %131, %cst_165 {dimension_numbers = #tpu.dot_dimension_numbers<[1], [0], [0], [1], [0, 0, 1, 1], [], []>} : vector<64x176xbf16>, vector<176x8xbf16>, vector<64x8xf32> -> vector<64x8xf32>
    %133 = arith.addf %127, %132 : vector<64x8xf32>
    %c9_166 = arith.constant 9 : index
    %c0_167 = arith.constant 0 : index
    %c0_168 = arith.constant 0 : index
    %134 = vector.load %arg9[%c9_166, %c0_167, %c0_168] : memref<18x8x176xbf16, #tpu.memory_space<vmem>>, vector<8x8x176xbf16>
    %135 = vector.shape_cast %134 : vector<8x8x176xbf16> to vector<64x176xbf16>
    %c9_169 = arith.constant 9 : index
    %c0_170 = arith.constant 0 : index
    %c0_171 = arith.constant 0 : index
    %136 = vector.load %arg2[%c9_169, %c0_170, %c0_171] : memref<11x176x8xbf16, #tpu.memory_space<vmem>>, vector<1x176x8xbf16>
    %137 = vector.shape_cast %136 : vector<1x176x8xbf16> to vector<176x8xbf16>
    %cst_172 = arith.constant dense<0.000000e+00> : vector<64x8xf32>
    %138 = tpu.matmul %135, %137, %cst_172 {dimension_numbers = #tpu.dot_dimension_numbers<[1], [0], [0], [1], [0, 0, 1, 1], [], []>} : vector<64x176xbf16>, vector<176x8xbf16>, vector<64x8xf32> -> vector<64x8xf32>
    %139 = arith.addf %133, %138 : vector<64x8xf32>
    %c10_173 = arith.constant 10 : index
    %c0_174 = arith.constant 0 : index
    %c0_175 = arith.constant 0 : index
    %140 = vector.load %arg9[%c10_173, %c0_174, %c0_175] : memref<18x8x176xbf16, #tpu.memory_space<vmem>>, vector<8x8x176xbf16>
    %141 = vector.shape_cast %140 : vector<8x8x176xbf16> to vector<64x176xbf16>
    %c10_176 = arith.constant 10 : index
    %c0_177 = arith.constant 0 : index
    %c0_178 = arith.constant 0 : index
    %142 = vector.load %arg2[%c10_176, %c0_177, %c0_178] : memref<11x176x8xbf16, #tpu.memory_space<vmem>>, vector<1x176x8xbf16>
    %143 = vector.shape_cast %142 : vector<1x176x8xbf16> to vector<176x8xbf16>
    %cst_179 = arith.constant dense<0.000000e+00> : vector<64x8xf32>
    %144 = tpu.matmul %141, %143, %cst_179 {dimension_numbers = #tpu.dot_dimension_numbers<[1], [0], [0], [1], [0, 0, 1, 1], [], []>} : vector<64x176xbf16>, vector<176x8xbf16>, vector<64x8xf32> -> vector<64x8xf32>
    %145 = arith.addf %139, %144 : vector<64x8xf32>
    %146 = vector.broadcast %55 : vector<1x8xf32> to vector<64x8xf32>
    %147 = arith.addf %145, %146 : vector<64x8xf32>
    %cst_180 = arith.constant 5.000000e-01 : f32
    %148 = vector.broadcast %cst_180 : f32 to vector<64x8xf32>
    %149 = arith.mulf %148, %147 : vector<64x8xf32>
    %cst_181 = arith.constant 0.707106769 : f32
    %150 = vector.broadcast %cst_181 : f32 to vector<64x8xf32>
    %151 = arith.mulf %147, %150 : vector<64x8xf32>
    %152 = math.erf %151 : vector<64x8xf32>
    %cst_182 = arith.constant 1.000000e+00 : f32
    %153 = vector.broadcast %cst_182 : f32 to vector<64x8xf32>
    %154 = arith.addf %153, %152 : vector<64x8xf32>
    %155 = arith.mulf %149, %154 : vector<64x8xf32>
    %156 = arith.truncf %155 : vector<64x8xf32> to vector<64x8xbf16>
    %157 = vector.shape_cast %156 : vector<64x8xbf16> to vector<8x8x8xbf16>
    %c5_183 = arith.constant 5 : index
    %c5_184 = arith.constant 5 : index
    %c0_185 = arith.constant 0 : index
    %158 = vector.load %arg8[%c5_183, %c5_184, %c0_185] : memref<18x18x8xbf16, #tpu.memory_space<vmem>>, vector<8x8x8xbf16>
    tpu.vector_store %arg8[%c5_183, %c5_184, %c0_185], %157 {strides = array<i32>} : memref<18x18x8xbf16, #tpu.memory_space<vmem>>, vector<8x8x8xbf16>,
    %c0_186 = arith.constant 0 : index
    %c0_187 = arith.constant 0 : index
    %c0_188 = arith.constant 0 : index
    %159 = vector.load %arg8[%c0_186, %c0_187, %c0_188] : memref<18x18x8xbf16, #tpu.memory_space<vmem>>, vector<18x8x8xbf16>
    %c0_189 = arith.constant 0 : index
    %c0_190 = arith.constant 0 : index
    %c0_191 = arith.constant 0 : index
    %160 = vector.load %arg10[%c0_189, %c0_190, %c0_191] : memref<18x8x88xbf16, #tpu.memory_space<vmem>>, vector<18x8x8xbf16>
    tpu.vector_store %arg10[%c0_189, %c0_190, %c0_191], %159 {strides = array<i32>} : memref<18x8x88xbf16, #tpu.memory_space<vmem>>, vector<18x8x8xbf16>,
    %c0_192 = arith.constant 0 : index
    %c1_193 = arith.constant 1 : index
    %c0_194 = arith.constant 0 : index
    %161 = vector.load %arg8[%c0_192, %c1_193, %c0_194] : memref<18x18x8xbf16, #tpu.memory_space<vmem>>, vector<18x8x8xbf16>
    %c0_195 = arith.constant 0 : index
    %c0_196 = arith.constant 0 : index
    %c8_197 = arith.constant 8 : index
    %162 = vector.load %arg10[%c0_195, %c0_196, %c8_197] : memref<18x8x88xbf16, #tpu.memory_space<vmem>>, vector<18x8x8xbf16>
    tpu.vector_store %arg10[%c0_195, %c0_196, %c8_197], %161 {strides = array<i32>} : memref<18x8x88xbf16, #tpu.memory_space<vmem>>, vector<18x8x8xbf16>,
    %c0_198 = arith.constant 0 : index
    %c2_199 = arith.constant 2 : index
    %c0_200 = arith.constant 0 : index
    %163 = vector.load %arg8[%c0_198, %c2_199, %c0_200] : memref<18x18x8xbf16, #tpu.memory_space<vmem>>, vector<18x8x8xbf16>
    %c0_201 = arith.constant 0 : index
    %c0_202 = arith.constant 0 : index
    %c16_203 = arith.constant 16 : index
    %164 = vector.load %arg10[%c0_201, %c0_202, %c16_203] : memref<18x8x88xbf16, #tpu.memory_space<vmem>>, vector<18x8x8xbf16>
    tpu.vector_store %arg10[%c0_201, %c0_202, %c16_203], %163 {strides = array<i32>} : memref<18x8x88xbf16, #tpu.memory_space<vmem>>, vector<18x8x8xbf16>,
    %c0_204 = arith.constant 0 : index
    %c3_205 = arith.constant 3 : index
    %c0_206 = arith.constant 0 : index
    %165 = vector.load %arg8[%c0_204, %c3_205, %c0_206] : memref<18x18x8xbf16, #tpu.memory_space<vmem>>, vector<18x8x8xbf16>
    %c0_207 = arith.constant 0 : index
    %c0_208 = arith.constant 0 : index
    %c24 = arith.constant 24 : index
    %166 = vector.load %arg10[%c0_207, %c0_208, %c24] : memref<18x8x88xbf16, #tpu.memory_space<vmem>>, vector<18x8x8xbf16>
    tpu.vector_store %arg10[%c0_207, %c0_208, %c24], %165 {strides = array<i32>} : memref<18x8x88xbf16, #tpu.memory_space<vmem>>, vector<18x8x8xbf16>,
    %c0_209 = arith.constant 0 : index
    %c4_210 = arith.constant 4 : index
    %c0_211 = arith.constant 0 : index
    %167 = vector.load %arg8[%c0_209, %c4_210, %c0_211] : memref<18x18x8xbf16, #tpu.memory_space<vmem>>, vector<18x8x8xbf16>
    %c0_212 = arith.constant 0 : index
    %c0_213 = arith.constant 0 : index
    %c32_214 = arith.constant 32 : index
    %168 = vector.load %arg10[%c0_212, %c0_213, %c32_214] : memref<18x8x88xbf16, #tpu.memory_space<vmem>>, vector<18x8x8xbf16>
    tpu.vector_store %arg10[%c0_212, %c0_213, %c32_214], %167 {strides = array<i32>} : memref<18x8x88xbf16, #tpu.memory_space<vmem>>, vector<18x8x8xbf16>,
    %c0_215 = arith.constant 0 : index
    %c5_216 = arith.constant 5 : index
    %c0_217 = arith.constant 0 : index
    %169 = vector.load %arg8[%c0_215, %c5_216, %c0_217] : memref<18x18x8xbf16, #tpu.memory_space<vmem>>, vector<18x8x8xbf16>
    %c0_218 = arith.constant 0 : index
    %c0_219 = arith.constant 0 : index
    %c40 = arith.constant 40 : index
    %170 = vector.load %arg10[%c0_218, %c0_219, %c40] : memref<18x8x88xbf16, #tpu.memory_space<vmem>>, vector<18x8x8xbf16>
    tpu.vector_store %arg10[%c0_218, %c0_219, %c40], %169 {strides = array<i32>} : memref<18x8x88xbf16, #tpu.memory_space<vmem>>, vector<18x8x8xbf16>,
    %c0_220 = arith.constant 0 : index
    %c6_221 = arith.constant 6 : index
    %c0_222 = arith.constant 0 : index
    %171 = vector.load %arg8[%c0_220, %c6_221, %c0_222] : memref<18x18x8xbf16, #tpu.memory_space<vmem>>, vector<18x8x8xbf16>
    %c0_223 = arith.constant 0 : index
    %c0_224 = arith.constant 0 : index
    %c48_225 = arith.constant 48 : index
    %172 = vector.load %arg10[%c0_223, %c0_224, %c48_225] : memref<18x8x88xbf16, #tpu.memory_space<vmem>>, vector<18x8x8xbf16>
    tpu.vector_store %arg10[%c0_223, %c0_224, %c48_225], %171 {strides = array<i32>} : memref<18x8x88xbf16, #tpu.memory_space<vmem>>, vector<18x8x8xbf16>,
    %c0_226 = arith.constant 0 : index
    %c7_227 = arith.constant 7 : index
    %c0_228 = arith.constant 0 : index
    %173 = vector.load %arg8[%c0_226, %c7_227, %c0_228] : memref<18x18x8xbf16, #tpu.memory_space<vmem>>, vector<18x8x8xbf16>
    %c0_229 = arith.constant 0 : index
    %c0_230 = arith.constant 0 : index
    %c56 = arith.constant 56 : index
    %174 = vector.load %arg10[%c0_229, %c0_230, %c56] : memref<18x8x88xbf16, #tpu.memory_space<vmem>>, vector<18x8x8xbf16>
    tpu.vector_store %arg10[%c0_229, %c0_230, %c56], %173 {strides = array<i32>} : memref<18x8x88xbf16, #tpu.memory_space<vmem>>, vector<18x8x8xbf16>,
    %c0_231 = arith.constant 0 : index
    %c8_232 = arith.constant 8 : index
    %c0_233 = arith.constant 0 : index
    %175 = vector.load %arg8[%c0_231, %c8_232, %c0_233] : memref<18x18x8xbf16, #tpu.memory_space<vmem>>, vector<18x8x8xbf16>
    %c0_234 = arith.constant 0 : index
    %c0_235 = arith.constant 0 : index
    %c64_236 = arith.constant 64 : index
    %176 = vector.load %arg10[%c0_234, %c0_235, %c64_236] : memref<18x8x88xbf16, #tpu.memory_space<vmem>>, vector<18x8x8xbf16>
    tpu.vector_store %arg10[%c0_234, %c0_235, %c64_236], %175 {strides = array<i32>} : memref<18x8x88xbf16, #tpu.memory_space<vmem>>, vector<18x8x8xbf16>,
    %c0_237 = arith.constant 0 : index
    %c9_238 = arith.constant 9 : index
    %c0_239 = arith.constant 0 : index
    %177 = vector.load %arg8[%c0_237, %c9_238, %c0_239] : memref<18x18x8xbf16, #tpu.memory_space<vmem>>, vector<18x8x8xbf16>
    %c0_240 = arith.constant 0 : index
    %c0_241 = arith.constant 0 : index
    %c72 = arith.constant 72 : index
    %178 = vector.load %arg10[%c0_240, %c0_241, %c72] : memref<18x8x88xbf16, #tpu.memory_space<vmem>>, vector<18x8x8xbf16>
    tpu.vector_store %arg10[%c0_240, %c0_241, %c72], %177 {strides = array<i32>} : memref<18x8x88xbf16, #tpu.memory_space<vmem>>, vector<18x8x8xbf16>,
    %c0_242 = arith.constant 0 : index
    %c10_243 = arith.constant 10 : index
    %c0_244 = arith.constant 0 : index
    %179 = vector.load %arg8[%c0_242, %c10_243, %c0_244] : memref<18x18x8xbf16, #tpu.memory_space<vmem>>, vector<18x8x8xbf16>
    %c0_245 = arith.constant 0 : index
    %c0_246 = arith.constant 0 : index
    %c80_247 = arith.constant 80 : index
    %180 = vector.load %arg10[%c0_245, %c0_246, %c80_247] : memref<18x8x88xbf16, #tpu.memory_space<vmem>>, vector<18x8x8xbf16>
    tpu.vector_store %arg10[%c0_245, %c0_246, %c80_247], %179 {strides = array<i32>} : memref<18x8x88xbf16, #tpu.memory_space<vmem>>, vector<18x8x8xbf16>,
    %cst_248 = arith.constant 0.000000e+00 : f32
    %181 = vector.broadcast %cst_248 : f32 to vector<64x8xf32>
    %c0_249 = arith.constant 0 : index
    %c0_250 = arith.constant 0 : index
    %c0_251 = arith.constant 0 : index
    %182 = vector.load %arg10[%c0_249, %c0_250, %c0_251] : memref<18x8x88xbf16, #tpu.memory_space<vmem>>, vector<8x8x88xbf16>
    %183 = vector.shape_cast %182 : vector<8x8x88xbf16> to vector<64x88xbf16>
    %c0_252 = arith.constant 0 : index
    %c0_253 = arith.constant 0 : index
    %c0_254 = arith.constant 0 : index
    %184 = vector.load %arg4[%c0_252, %c0_253, %c0_254] : memref<11x88x8xbf16, #tpu.memory_space<vmem>>, vector<1x88x8xbf16>
    %185 = vector.shape_cast %184 : vector<1x88x8xbf16> to vector<88x8xbf16>
    %cst_255 = arith.constant dense<0.000000e+00> : vector<64x8xf32>
    %186 = tpu.matmul %183, %185, %cst_255 {dimension_numbers = #tpu.dot_dimension_numbers<[1], [0], [0], [1], [0, 0, 1, 1], [], []>} : vector<64x88xbf16>, vector<88x8xbf16>, vector<64x8xf32> -> vector<64x8xf32>
    %187 = arith.addf %181, %186 : vector<64x8xf32>
    %c1_256 = arith.constant 1 : index
    %c0_257 = arith.constant 0 : index
    %c0_258 = arith.constant 0 : index
    %188 = vector.load %arg10[%c1_256, %c0_257, %c0_258] : memref<18x8x88xbf16, #tpu.memory_space<vmem>>, vector<8x8x88xbf16>
    %189 = vector.shape_cast %188 : vector<8x8x88xbf16> to vector<64x88xbf16>
    %c1_259 = arith.constant 1 : index
    %c0_260 = arith.constant 0 : index
    %c0_261 = arith.constant 0 : index
    %190 = vector.load %arg4[%c1_259, %c0_260, %c0_261] : memref<11x88x8xbf16, #tpu.memory_space<vmem>>, vector<1x88x8xbf16>
    %191 = vector.shape_cast %190 : vector<1x88x8xbf16> to vector<88x8xbf16>
    %cst_262 = arith.constant dense<0.000000e+00> : vector<64x8xf32>
    %192 = tpu.matmul %189, %191, %cst_262 {dimension_numbers = #tpu.dot_dimension_numbers<[1], [0], [0], [1], [0, 0, 1, 1], [], []>} : vector<64x88xbf16>, vector<88x8xbf16>, vector<64x8xf32> -> vector<64x8xf32>
    %193 = arith.addf %187, %192 : vector<64x8xf32>
    %c2_263 = arith.constant 2 : index
    %c0_264 = arith.constant 0 : index
    %c0_265 = arith.constant 0 : index
    %194 = vector.load %arg10[%c2_263, %c0_264, %c0_265] : memref<18x8x88xbf16, #tpu.memory_space<vmem>>, vector<8x8x88xbf16>
    %195 = vector.shape_cast %194 : vector<8x8x88xbf16> to vector<64x88xbf16>
    %c2_266 = arith.constant 2 : index
    %c0_267 = arith.constant 0 : index
    %c0_268 = arith.constant 0 : index
    %196 = vector.load %arg4[%c2_266, %c0_267, %c0_268] : memref<11x88x8xbf16, #tpu.memory_space<vmem>>, vector<1x88x8xbf16>
    %197 = vector.shape_cast %196 : vector<1x88x8xbf16> to vector<88x8xbf16>
    %cst_269 = arith.constant dense<0.000000e+00> : vector<64x8xf32>
    %198 = tpu.matmul %195, %197, %cst_269 {dimension_numbers = #tpu.dot_dimension_numbers<[1], [0], [0], [1], [0, 0, 1, 1], [], []>} : vector<64x88xbf16>, vector<88x8xbf16>, vector<64x8xf32> -> vector<64x8xf32>
    %199 = arith.addf %193, %198 : vector<64x8xf32>
    %c3_270 = arith.constant 3 : index
    %c0_271 = arith.constant 0 : index
    %c0_272 = arith.constant 0 : index
    %200 = vector.load %arg10[%c3_270, %c0_271, %c0_272] : memref<18x8x88xbf16, #tpu.memory_space<vmem>>, vector<8x8x88xbf16>
    %201 = vector.shape_cast %200 : vector<8x8x88xbf16> to vector<64x88xbf16>
    %c3_273 = arith.constant 3 : index
    %c0_274 = arith.constant 0 : index
    %c0_275 = arith.constant 0 : index
    %202 = vector.load %arg4[%c3_273, %c0_274, %c0_275] : memref<11x88x8xbf16, #tpu.memory_space<vmem>>, vector<1x88x8xbf16>
    %203 = vector.shape_cast %202 : vector<1x88x8xbf16> to vector<88x8xbf16>
    %cst_276 = arith.constant dense<0.000000e+00> : vector<64x8xf32>
    %204 = tpu.matmul %201, %203, %cst_276 {dimension_numbers = #tpu.dot_dimension_numbers<[1], [0], [0], [1], [0, 0, 1, 1], [], []>} : vector<64x88xbf16>, vector<88x8xbf16>, vector<64x8xf32> -> vector<64x8xf32>
    %205 = arith.addf %199, %204 : vector<64x8xf32>
    %c4_277 = arith.constant 4 : index
    %c0_278 = arith.constant 0 : index
    %c0_279 = arith.constant 0 : index
    %206 = vector.load %arg10[%c4_277, %c0_278, %c0_279] : memref<18x8x88xbf16, #tpu.memory_space<vmem>>, vector<8x8x88xbf16>
    %207 = vector.shape_cast %206 : vector<8x8x88xbf16> to vector<64x88xbf16>
    %c4_280 = arith.constant 4 : index
    %c0_281 = arith.constant 0 : index
    %c0_282 = arith.constant 0 : index
    %208 = vector.load %arg4[%c4_280, %c0_281, %c0_282] : memref<11x88x8xbf16, #tpu.memory_space<vmem>>, vector<1x88x8xbf16>
    %209 = vector.shape_cast %208 : vector<1x88x8xbf16> to vector<88x8xbf16>
    %cst_283 = arith.constant dense<0.000000e+00> : vector<64x8xf32>
    %210 = tpu.matmul %207, %209, %cst_283 {dimension_numbers = #tpu.dot_dimension_numbers<[1], [0], [0], [1], [0, 0, 1, 1], [], []>} : vector<64x88xbf16>, vector<88x8xbf16>, vector<64x8xf32> -> vector<64x8xf32>
    %211 = arith.addf %205, %210 : vector<64x8xf32>
    %c5_284 = arith.constant 5 : index
    %c0_285 = arith.constant 0 : index
    %c0_286 = arith.constant 0 : index
    %212 = vector.load %arg10[%c5_284, %c0_285, %c0_286] : memref<18x8x88xbf16, #tpu.memory_space<vmem>>, vector<8x8x88xbf16>
    %213 = vector.shape_cast %212 : vector<8x8x88xbf16> to vector<64x88xbf16>
    %c5_287 = arith.constant 5 : index
    %c0_288 = arith.constant 0 : index
    %c0_289 = arith.constant 0 : index
    %214 = vector.load %arg4[%c5_287, %c0_288, %c0_289] : memref<11x88x8xbf16, #tpu.memory_space<vmem>>, vector<1x88x8xbf16>
    %215 = vector.shape_cast %214 : vector<1x88x8xbf16> to vector<88x8xbf16>
    %cst_290 = arith.constant dense<0.000000e+00> : vector<64x8xf32>
    %216 = tpu.matmul %213, %215, %cst_290 {dimension_numbers = #tpu.dot_dimension_numbers<[1], [0], [0], [1], [0, 0, 1, 1], [], []>} : vector<64x88xbf16>, vector<88x8xbf16>, vector<64x8xf32> -> vector<64x8xf32>
    %217 = arith.addf %211, %216 : vector<64x8xf32>
    %c6_291 = arith.constant 6 : index
    %c0_292 = arith.constant 0 : index
    %c0_293 = arith.constant 0 : index
    %218 = vector.load %arg10[%c6_291, %c0_292, %c0_293] : memref<18x8x88xbf16, #tpu.memory_space<vmem>>, vector<8x8x88xbf16>
    %219 = vector.shape_cast %218 : vector<8x8x88xbf16> to vector<64x88xbf16>
    %c6_294 = arith.constant 6 : index
    %c0_295 = arith.constant 0 : index
    %c0_296 = arith.constant 0 : index
    %220 = vector.load %arg4[%c6_294, %c0_295, %c0_296] : memref<11x88x8xbf16, #tpu.memory_space<vmem>>, vector<1x88x8xbf16>
    %221 = vector.shape_cast %220 : vector<1x88x8xbf16> to vector<88x8xbf16>
    %cst_297 = arith.constant dense<0.000000e+00> : vector<64x8xf32>
    %222 = tpu.matmul %219, %221, %cst_297 {dimension_numbers = #tpu.dot_dimension_numbers<[1], [0], [0], [1], [0, 0, 1, 1], [], []>} : vector<64x88xbf16>, vector<88x8xbf16>, vector<64x8xf32> -> vector<64x8xf32>
    %223 = arith.addf %217, %222 : vector<64x8xf32>
    %c7_298 = arith.constant 7 : index
    %c0_299 = arith.constant 0 : index
    %c0_300 = arith.constant 0 : index
    %224 = vector.load %arg10[%c7_298, %c0_299, %c0_300] : memref<18x8x88xbf16, #tpu.memory_space<vmem>>, vector<8x8x88xbf16>
    %225 = vector.shape_cast %224 : vector<8x8x88xbf16> to vector<64x88xbf16>
    %c7_301 = arith.constant 7 : index
    %c0_302 = arith.constant 0 : index
    %c0_303 = arith.constant 0 : index
    %226 = vector.load %arg4[%c7_301, %c0_302, %c0_303] : memref<11x88x8xbf16, #tpu.memory_space<vmem>>, vector<1x88x8xbf16>
    %227 = vector.shape_cast %226 : vector<1x88x8xbf16> to vector<88x8xbf16>
    %cst_304 = arith.constant dense<0.000000e+00> : vector<64x8xf32>
    %228 = tpu.matmul %225, %227, %cst_304 {dimension_numbers = #tpu.dot_dimension_numbers<[1], [0], [0], [1], [0, 0, 1, 1], [], []>} : vector<64x88xbf16>, vector<88x8xbf16>, vector<64x8xf32> -> vector<64x8xf32>
    %229 = arith.addf %223, %228 : vector<64x8xf32>
    %c8_305 = arith.constant 8 : index
    %c0_306 = arith.constant 0 : index
    %c0_307 = arith.constant 0 : index
    %230 = vector.load %arg10[%c8_305, %c0_306, %c0_307] : memref<18x8x88xbf16, #tpu.memory_space<vmem>>, vector<8x8x88xbf16>
    %231 = vector.shape_cast %230 : vector<8x8x88xbf16> to vector<64x88xbf16>
    %c8_308 = arith.constant 8 : index
    %c0_309 = arith.constant 0 : index
    %c0_310 = arith.constant 0 : index
    %232 = vector.load %arg4[%c8_308, %c0_309, %c0_310] : memref<11x88x8xbf16, #tpu.memory_space<vmem>>, vector<1x88x8xbf16>
    %233 = vector.shape_cast %232 : vector<1x88x8xbf16> to vector<88x8xbf16>
    %cst_311 = arith.constant dense<0.000000e+00> : vector<64x8xf32>
    %234 = tpu.matmul %231, %233, %cst_311 {dimension_numbers = #tpu.dot_dimension_numbers<[1], [0], [0], [1], [0, 0, 1, 1], [], []>} : vector<64x88xbf16>, vector<88x8xbf16>, vector<64x8xf32> -> vector<64x8xf32>
    %235 = arith.addf %229, %234 : vector<64x8xf32>
    %c9_312 = arith.constant 9 : index
    %c0_313 = arith.constant 0 : index
    %c0_314 = arith.constant 0 : index
    %236 = vector.load %arg10[%c9_312, %c0_313, %c0_314] : memref<18x8x88xbf16, #tpu.memory_space<vmem>>, vector<8x8x88xbf16>
    %237 = vector.shape_cast %236 : vector<8x8x88xbf16> to vector<64x88xbf16>
    %c9_315 = arith.constant 9 : index
    %c0_316 = arith.constant 0 : index
    %c0_317 = arith.constant 0 : index
    %238 = vector.load %arg4[%c9_315, %c0_316, %c0_317] : memref<11x88x8xbf16, #tpu.memory_space<vmem>>, vector<1x88x8xbf16>
    %239 = vector.shape_cast %238 : vector<1x88x8xbf16> to vector<88x8xbf16>
    %cst_318 = arith.constant dense<0.000000e+00> : vector<64x8xf32>
    %240 = tpu.matmul %237, %239, %cst_318 {dimension_numbers = #tpu.dot_dimension_numbers<[1], [0], [0], [1], [0, 0, 1, 1], [], []>} : vector<64x88xbf16>, vector<88x8xbf16>, vector<64x8xf32> -> vector<64x8xf32>
    %241 = arith.addf %235, %240 : vector<64x8xf32>
    %c10_319 = arith.constant 10 : index
    %c0_320 = arith.constant 0 : index
    %c0_321 = arith.constant 0 : index
    %242 = vector.load %arg10[%c10_319, %c0_320, %c0_321] : memref<18x8x88xbf16, #tpu.memory_space<vmem>>, vector<8x8x88xbf16>
    %243 = vector.shape_cast %242 : vector<8x8x88xbf16> to vector<64x88xbf16>
    %c10_322 = arith.constant 10 : index
    %c0_323 = arith.constant 0 : index
    %c0_324 = arith.constant 0 : index
    %244 = vector.load %arg4[%c10_322, %c0_323, %c0_324] : memref<11x88x8xbf16, #tpu.memory_space<vmem>>, vector<1x88x8xbf16>
    %245 = vector.shape_cast %244 : vector<1x88x8xbf16> to vector<88x8xbf16>
    %cst_325 = arith.constant dense<0.000000e+00> : vector<64x8xf32>
    %246 = tpu.matmul %243, %245, %cst_325 {dimension_numbers = #tpu.dot_dimension_numbers<[1], [0], [0], [1], [0, 0, 1, 1], [], []>} : vector<64x88xbf16>, vector<88x8xbf16>, vector<64x8xf32> -> vector<64x8xf32>
    %247 = arith.addf %241, %246 : vector<64x8xf32>
    %248 = vector.broadcast %56 : vector<1x8xf32> to vector<64x8xf32>
    %249 = arith.addf %247, %248 : vector<64x8xf32>
    %250 = tpu.transpose %249, [1, 0] : vector<64x8xf32> -> vector<8x64xf32>
    %c0_326 = arith.constant 0 : index
    %c0_327 = arith.constant 0 : index
    %c0_328 = arith.constant 0 : index
    %251 = vector.load %arg6[%c0_326, %c0_327, %c0_328] : memref<1x8x128xf32, #tpu.memory_space<vmem>>, vector<1x8x64xf32>
    %252 = vector.shape_cast %251 : vector<1x8x64xf32> to vector<8x64xf32>
    %253 = vector.shape_cast %250 : vector<8x64xf32> to vector<1x8x64xf32>
    tpu.vector_store %arg6[%c0_326, %c0_327, %c0_328], %253 {strides = array<i32>} : memref<1x8x128xf32, #tpu.memory_space<vmem>>, vector<1x8x64xf32>,
    return
  }
  func.func @transform_0(%arg0: i32) -> (i32, i32, i32, i32) {
    %c0_i32 = arith.constant 0 : i32
    %c0_i32_0 = arith.constant 0 : i32
    %c0_i32_1 = arith.constant 0 : i32
    %c0_i32_2 = arith.constant 0 : i32
    return %arg0, %c0_i32, %c0_i32_0, %c0_i32_1 : i32, i32, i32, i32
  }
  func.func @transform_1(%arg0: i32) -> (i32, i32, i32) {
    %c0_i32 = arith.constant 0 : i32
    %c0_i32_0 = arith.constant 0 : i32
    %c0_i32_1 = arith.constant 0 : i32
    %c0_i32_2 = arith.constant 0 : i32
    return %c0_i32, %c0_i32_0, %c0_i32_1 : i32, i32, i32
  }
  func.func @transform_2(%arg0: i32) -> (i32, i32) {
    %c0_i32 = arith.constant 0 : i32
    %c0_i32_0 = arith.constant 0 : i32
    %c0_i32_1 = arith.constant 0 : i32
    return %c0_i32, %c0_i32_0 : i32, i32
  }
  func.func @transform_3(%arg0: i32) -> (i32, i32, i32) {
    %c0_i32 = arith.constant 0 : i32
    %c0_i32_0 = arith.constant 0 : i32
    %c0_i32_1 = arith.constant 0 : i32
    %c0_i32_2 = arith.constant 0 : i32
    return %c0_i32, %c0_i32_0, %c0_i32_1 : i32, i32, i32
  }
  func.func @transform_4(%arg0: i32) -> (i32, i32) {
    %c0_i32 = arith.constant 0 : i32
    %c0_i32_0 = arith.constant 0 : i32
    %c0_i32_1 = arith.constant 0 : i32
    return %c0_i32, %c0_i32_0 : i32, i32
  }
  func.func @transform_5(%arg0: i32) -> (i32, i32, i32) {
    %c0_i32 = arith.constant 0 : i32
    %c0_i32_0 = arith.constant 0 : i32
    %c0_i32_1 = arith.constant 0 : i32
    return %arg0, %c0_i32, %c0_i32_0 : i32, i32, i32
  }
}

</mosaic_0001>

<llo_original>
// kernel: down_wt_forward.1
$region0: #{down_wt_forward.1}
  #allocation0 [shape = 'u32[]', space=smem, size = 0x4, offset = 0x4, fixed_abs, tag = 'smem constant byte address 0x4 - core index']
  #allocation1 [shape = 'u32[144,128]{1,0:T(1,128)}', space=vmem, size = 0x12000, scoped, tag = 'internal scratch']
  #allocation2 [shape = 'bf16[18,18,16]{2,1,0:T(8,128)(2,1)}', space=vmem, size = 0x1b000, scoped, tag = 'scratch operand']
  #allocation3 [shape = 'bf16[18,18,8]{2,1,0:T(8,128)(2,1)}', space=vmem, size = 0x1b000, scoped, tag = 'scratch operand']
  #allocation4 [shape = 'bf16[18,8,176]{2,1,0:T(8,128)(2,1)}', space=vmem, size = 0x12000, scoped, tag = 'scratch operand']
  #allocation5 [shape = 'bf16[18,8,88]{2,1,0:T(8,128)(2,1)}', space=vmem, size = 0x9000, scoped, tag = 'scratch operand']
  %s0 = inlined_call_operand.vmem [shape: bf16[2,8,8,16], index: 0, kind: input, shape index: {}]
  %s1 = inlined_call_operand.vmem [shape: bf16[11,176,8], index: 1, kind: input, shape index: {}]
  %s2 = inlined_call_operand.vmem [shape: f32[1,8], index: 2, kind: input, shape index: {}]
  %s3 = inlined_call_operand.vmem [shape: bf16[11,88,8], index: 3, kind: input, shape index: {}]
  %s4 = inlined_call_operand.vmem [shape: f32[1,8], index: 4, kind: input, shape index: {}]
  %s5 = inlined_call_operand.hbm [shape: f32[2,8,128], index: 5, kind: output, shape index: {}]
  %s6 = sld [smem:[#allocation0]]
  $region53: #{down_wt_forward.1} parent=0
    _
  %s8 = ssub.s32 1, %s6
  %s9 = scalar_select 0, %s8, %s6
  $region1: #{down_wt_forward.1} parent=0
    #allocation6 [shape = 'u8[8192]{0}', space=vmem, size = 0x2000, scoped, tag = 'output window, operand 0']
    #allocation7 [shape = 's32[2]{0}', space=sflag, size = 0x8, scoped, tag = 'scoped memory for down_wt_forward.1']
    %10 = vsyncpa [#allocation7], 0
    %s11 = scalar_lea.sflag [#allocation7], 1
    %12 = vsyncpa %s11, 0
    loop: start=0, step=1, limit=4
    $region2: #{down_wt_forward.1} parent=1 // loop_pre_header
      _
    $region3: #{down_wt_forward.1} parent=1 // loop_header
      %s14 = sphi 0, %s18
      %p15 = scmp.ge.s32.totalorder %s14, 4
      %s24 = sphi 0, %s26
      %s27 = sphi 0, %s24
      %s28 = sphi 0, %s27
      %s44 = sphi 0, %s28
      %s48 = sphi 0, %s48
      %s50 = sphi 0, %s48
      %s51 = sphi 0, %s50
      %s65 = sphi 0, %s51
      %s69 = sphi 0, %s69
      %s71 = sphi 0, %s69
      %s72 = sphi 0, %s71
      %s86 = sphi 0, %s72
      %s90 = sphi 0, %s90
      %s92 = sphi 0, %s90
      %s93 = sphi 0, %s92
      %s107 = sphi 0, %s93
      %s111 = sphi 0, %s111
      %s113 = sphi 0, %s111
      %s114 = sphi 0, %s113
      %s128 = sphi 0, %s114
      %s134 = sphi 0, %s136
      %s137 = sphi 0, %s134
      %s138 = sphi 0, %s137
      %s154 = sphi 0, %s138
    $region4: #{down_wt_forward.1} parent=1 // loop_header_branch
      %17 = sbr.rel (%p15) target = $region8
    $region5: #{down_wt_forward.1} parent=1 // loop_body
      %s19 = ssub.s32 %s14, 1
      %s20 = ssub.s32 %s14, 2
      %s21 = sadd.s32 %s14, 1
      %s22 = ssub.s32 %s14, %s21
      %p23 = scmp.eq.s32.totalorder %s22, 0
      %s25 = sadd.s32 %s24, 1
      %s26 = scalar_select %p23, %s24, %s25
      %p29 = pneg %p23
      %p30 = scmp.eq.s32.totalorder %s14, 1
      %p31 = por %p29, %p30
      %p32 = scmp.ne.s32.totalorder %s24, %s27
      %p33 = scmp.eq.s32.totalorder %s14, 0
      %p34 = por %p32, %p33
      %p35 = scmp.ne.s32.totalorder %s24, %s27
      %p36 = scmp.eq.s32.totalorder %s19, 1
      %p37 = por %p35, %p36
      %p38 = scmp.ne.s32.totalorder %s27, %s28
      %p39 = scmp.eq.s32.totalorder %s19, 0
      %p40 = por %p38, %p39
      %p41 = scmp.ne.s32.totalorder %s27, %s28
      %p42 = scmp.eq.s32.totalorder %s20, 1
      %p43 = por %p41, %p42
      %p45 = scmp.ne.s32.totalorder %s28, %s44
      %p46 = scmp.eq.s32.totalorder %s20, 0
      %p47 = por %p45, %p46
      %s49 = sadd.s32 %s48, 1
      %p52 = scmp.eq.s32.totalorder %s14, 1
      %p53 = scmp.ne.s32.totalorder %s48, %s50
      %p54 = scmp.eq.s32.totalorder %s14, 0
      %p55 = por %p53, %p54
      %p56 = scmp.ne.s32.totalorder %s48, %s50
      %p57 = scmp.eq.s32.totalorder %s19, 1
      %p58 = por %p56, %p57
      %p59 = scmp.ne.s32.totalorder %s50, %s51
      %p60 = scmp.eq.s32.totalorder %s19, 0
      %p61 = por %p59, %p60
      %p62 = scmp.ne.s32.totalorder %s50, %s51
      %p63 = scmp.eq.s32.totalorder %s20, 1
      %p64 = por %p62, %p63
      %p66 = scmp.ne.s32.totalorder %s51, %s65
      %p67 = scmp.eq.s32.totalorder %s20, 0
      %p68 = por %p66, %p67
      %s70 = sadd.s32 %s69, 1
      %p73 = scmp.eq.s32.totalorder %s14, 1
      %p74 = scmp.ne.s32.totalorder %s69, %s71
      %p75 = scmp.eq.s32.totalorder %s14, 0
      %p76 = por %p74, %p75
      %p77 = scmp.ne.s32.totalorder %s69, %s71
      %p78 = scmp.eq.s32.totalorder %s19, 1
      %p79 = por %p77, %p78
      %p80 = scmp.ne.s32.totalorder %s71, %s72
      %p81 = scmp.eq.s32.totalorder %s19, 0
      %p82 = por %p80, %p81
      %p83 = scmp.ne.s32.totalorder %s71, %s72
      %p84 = scmp.eq.s32.totalorder %s20, 1
      %p85 = por %p83, %p84
      %p87 = scmp.ne.s32.totalorder %s72, %s86
      %p88 = scmp.eq.s32.totalorder %s20, 0
      %p89 = por %p87, %p88
      %s91 = sadd.s32 %s90, 1
      %p94 = scmp.eq.s32.totalorder %s14, 1
      %p95 = scmp.ne.s32.totalorder %s90, %s92
      %p96 = scmp.eq.s32.totalorder %s14, 0
      %p97 = por %p95, %p96
      %p98 = scmp.ne.s32.totalorder %s90, %s92
      %p99 = scmp.eq.s32.totalorder %s19, 1
      %p100 = por %p98, %p99
      %p101 = scmp.ne.s32.totalorder %s92, %s93
      %p102 = scmp.eq.s32.totalorder %s19, 0
      %p103 = por %p101, %p102
      %p104 = scmp.ne.s32.totalorder %s92, %s93
      %p105 = scmp.eq.s32.totalorder %s20, 1
      %p106 = por %p104, %p105
      %p108 = scmp.ne.s32.totalorder %s93, %s107
      %p109 = scmp.eq.s32.totalorder %s20, 0
      %p110 = por %p108, %p109
      %s112 = sadd.s32 %s111, 1
      %p115 = scmp.eq.s32.totalorder %s14, 1
      %p116 = scmp.ne.s32.totalorder %s111, %s113
      %p117 = scmp.eq.s32.totalorder %s14, 0
      %p118 = por %p116, %p117
      %p119 = scmp.ne.s32.totalorder %s111, %s113
      %p120 = scmp.eq.s32.totalorder %s19, 1
      %p121 = por %p119, %p120
      %p122 = scmp.ne.s32.totalorder %s113, %s114
      %p123 = scmp.eq.s32.totalorder %s19, 0
      %p124 = por %p122, %p123
      %p125 = scmp.ne.s32.totalorder %s113, %s114
      %p126 = scmp.eq.s32.totalorder %s20, 1
      %p127 = por %p125, %p126
      %p129 = scmp.ne.s32.totalorder %s114, %s128
      %p130 = scmp.eq.s32.totalorder %s20, 0
      %p131 = por %p129, %p130
      %s132 = ssub.s32 %s14, %s21
      %p133 = scmp.eq.s32.totalorder %s132, 0
      %s135 = sadd.s32 %s134, 1
      %s136 = scalar_select %p133, %s134, %s135
      %p139 = pneg %p133
      %p140 = scmp.eq.s32.totalorder %s14, 1
      %p141 = por %p139, %p140
      %p142 = scmp.ne.s32.totalorder %s134, %s137
      %p143 = scmp.eq.s32.totalorder %s14, 0
      %p144 = por %p142, %p143
      %p145 = scmp.ne.s32.totalorder %s134, %s137
      %p146 = scmp.eq.s32.totalorder %s19, 1
      %p147 = por %p145, %p146
      %p148 = scmp.ne.s32.totalorder %s137, %s138
      %p149 = scmp.eq.s32.totalorder %s19, 0
      %p150 = por %p148, %p149
      %p151 = scmp.ne.s32.totalorder %s137, %s138
      %p152 = scmp.eq.s32.totalorder %s20, 1
      %p153 = por %p151, %p152
      %p155 = scmp.ne.s32.totalorder %s138, %s154
      %p156 = scmp.eq.s32.totalorder %s20, 0
      %p157 = por %p155, %p156
      %p158 = scmp.le.s32.totalorder 1, %s14
      %p159 = scmp.lt.s32.totalorder %s14, 3
      %p160 = pnand %p158, %p159
      %p161 = pneg %p160
      // Predicated region
      $region9: #{down_wt_forward.1} parent=5 // pred_check
        _
      $region10: #{down_wt_forward.1} parent=5 // pred_check_branch
        %163 = sbr.rel (%p160) target = $region12
      $region11: #{down_wt_forward.1} parent=5 // pred_region
        %s164 = ssub.s32 %s14, 1
        // Predicated region
        $region13: #{down_wt_forward.1} parent=11 // pred_check
          %p165 = pneg %p61
        $region14: #{down_wt_forward.1} parent=11 // pred_check_branch
          %167 = sbr.rel (%p165) target = $region16
        $region15: #{down_wt_forward.1} parent=11 // pred_region
          _
        $region16: #{down_wt_forward.1} parent=11 // pred_fallthru
          _
        // Predicated region
        $region17: #{down_wt_forward.1} parent=11 // pred_check
          %p168 = pneg %p82
        $region18: #{down_wt_forward.1} parent=11 // pred_check_branch
          %170 = sbr.rel (%p168) target = $region20
        $region19: #{down_wt_forward.1} parent=11 // pred_region
          _
        $region20: #{down_wt_forward.1} parent=11 // pred_fallthru
          _
        // Predicated region
        $region21: #{down_wt_forward.1} parent=11 // pred_check
          %p171 = pneg %p103
        $region22: #{down_wt_forward.1} parent=11 // pred_check_branch
          %173 = sbr.rel (%p171) target = $region24
        $region23: #{down_wt_forward.1} parent=11 // pred_region
          _
        $region24: #{down_wt_forward.1} parent=11 // pred_fallthru
          _
        // Predicated region
        $region25: #{down_wt_forward.1} parent=11 // pred_check
          %p174 = pneg %p124
        $region26: #{down_wt_forward.1} parent=11 // pred_check_branch
          %176 = sbr.rel (%p174) target = $region28
        $region27: #{down_wt_forward.1} parent=11 // pred_region
          _
        $region28: #{down_wt_forward.1} parent=11 // pred_fallthru
          _
      $region12: #{down_wt_forward.1} parent=5 // pred_fallthru
        _
      %p177 = scmp.lt.s32.totalorder %s14, 2
      // Predicated region
      $region29: #{down_wt_forward.1} parent=5 // pred_check
        %p178 = pneg %p177
      $region30: #{down_wt_forward.1} parent=5 // pred_check_branch
        %180 = sbr.rel (%p178) target = $region32
      $region31: #{down_wt_forward.1} parent=5 // pred_region
        // Predicated region
        $region33: #{down_wt_forward.1} parent=31 // pred_check
          %p181 = pneg %p34
        $region34: #{down_wt_forward.1} parent=31 // pred_check_branch
          %183 = sbr.rel (%p181) target = $region36
        $region35: #{down_wt_forward.1} parent=31 // pred_region
          %p184 = scmp.lt.s32.totalorder %s14, 1
          %s185 = scalar_select %p184, %s14, 1
          %s186 = smul.addr %s185, 8
          %s187 = smul.addr %s186, 4
          %s188 = scalar_lea.vmem %s0, %s187
        $region36: #{down_wt_forward.1} parent=31 // pred_fallthru
          _
      $region32: #{down_wt_forward.1} parent=5 // pred_fallthru
        _
      %p189 = scmp.le.s32.totalorder 1, %s14
      %p190 = scmp.lt.s32.totalorder %s14, 3
      %p191 = pnand %p189, %p190
      %p192 = pneg %p191
      // Predicated region
      $region37: #{down_wt_forward.1} parent=5 // pred_check
        _
      $region38: #{down_wt_forward.1} parent=5 // pred_check_branch
        %194 = sbr.rel (%p191) target = $region40
      $region39: #{down_wt_forward.1} parent=5 // pred_region
        %s195 = ssub.s32 %s14, 1
        %p196 = scmp.lt.s32.totalorder %s19, 1
        %s197 = scalar_select %p196, %s19, 1
        %s198 = smul.addr %s197, 8
        %s199 = smul.addr %s198, 4
        %s200 = scalar_lea.vmem %s0, %s199
        %p201 = pneg %p40
        %p202 = pneg %p37
        %p203 = pneg %p61
        %p204 = pneg %p58
        %p205 = pneg %p82
        %p206 = pneg %p79
        %p207 = pneg %p103
        %p208 = pneg %p100
        %p209 = pneg %p124
        %p210 = pneg %p121
        %p211 = pneg %p150
        %p212 = pneg %p147
        %s213 = sand.u32 %s137, 1
        %s214 = scalar_lea.sflag [#allocation7], %s213
        %s215 = sand.u32 %s137, 1
        %s216 = smul.addr %s215, 8
        %s217 = scalar_lea.vmem [#allocation6], %s216
        %p218 = scmp.lt.s32.totalorder %s19, 1
        %s219 = scalar_select %p218, %s19, 1
        %s220 = smul.addr %s219, 8
        %s221 = smul.addr %s220, 4
        %s222 = scalar_lea.vmem %s0, %s221
        %vm224 = vcmask 125952
        %225 = vst.msk [vmem:[#allocation2] sm:$0xf] %vm224, 0
        %226 = vst.msk [vmem:[#allocation2 + $0x4] sm:$0xf] %vm224, 0
        %vm227 = vcmask 122880
        %228 = vst.msk [vmem:[#allocation2 + $0x8] sm:$0x1] %vm227, 0
        %229 = vst.msk [vmem:[#allocation2 + $0xc] sm:$0xf] %vm224, 0
        %230 = vst.msk [vmem:[#allocation2 + $0x10] sm:$0xf] %vm224, 0
        %231 = vst.msk [vmem:[#allocation2 + $0x14] sm:$0x1] %vm227, 0
        %232 = vst.msk [vmem:[#allocation2 + $0x18] sm:$0xf] %vm224, 0
        %233 = vst.msk [vmem:[#allocation2 + $0x1c] sm:$0xf] %vm224, 0
        %234 = vst.msk [vmem:[#allocation2 + $0x20] sm:$0x1] %vm227, 0
        %235 = vst.msk [vmem:[#allocation2 + $0x24] sm:$0xf] %vm224, 0
        %236 = vst.msk [vmem:[#allocation2 + $0x28] sm:$0xf] %vm224, 0
        %237 = vst.msk [vmem:[#allocation2 + $0x2c] sm:$0x1] %vm227, 0
        %238 = vst.msk [vmem:[#allocation2 + $0x30] sm:$0xf] %vm224, 0
        %239 = vst.msk [vmem:[#allocation2 + $0x34] sm:$0xf] %vm224, 0
        %240 = vst.msk [vmem:[#allocation2 + $0x38] sm:$0x1] %vm227, 0
        %s241 = scalar_lea.vmem [#allocation2], 156
        %242 = vst.msk [vmem:[%s241] sm:$0xf] %vm224, 0
        %243 = vst.msk [vmem:[%s241 + $0x4] sm:$0xf] %vm224, 0
        %244 = vst.msk [vmem:[%s241 + $0x8] sm:$0x1] %vm227, 0
        %245 = vst.msk [vmem:[%s241 + $0xc] sm:$0xf] %vm224, 0
        %246 = vst.msk [vmem:[%s241 + $0x10] sm:$0xf] %vm224, 0
        %247 = vst.msk [vmem:[%s241 + $0x14] sm:$0x1] %vm227, 0
        %248 = vst.msk [vmem:[%s241 + $0x18] sm:$0xf] %vm224, 0
        %249 = vst.msk [vmem:[%s241 + $0x1c] sm:$0xf] %vm224, 0
        %250 = vst.msk [vmem:[%s241 + $0x20] sm:$0x1] %vm227, 0
        %251 = vst.msk [vmem:[%s241 + $0x24] sm:$0xf] %vm224, 0
        %252 = vst.msk [vmem:[%s241 + $0x28] sm:$0xf] %vm224, 0
        %253 = vst.msk [vmem:[%s241 + $0x2c] sm:$0x1] %vm227, 0
        %254 = vst.msk [vmem:[%s241 + $0x30] sm:$0xf] %vm224, 0
        %255 = vst.msk [vmem:[%s241 + $0x34] sm:$0xf] %vm224, 0
        %256 = vst.msk [vmem:[%s241 + $0x38] sm:$0x1] %vm227, 0
        %s257 = scalar_lea.vmem [#allocation2], 60
        %vm258 = vcmask 124928
        %vm259 = vsmask.f32 2304
        %vm260 = vmand %vm258, %vm259
        %v261 = vld [vmem:[%s257] sm:$0x7]
        %v262 = vsel %vm260, 0, %v261
        %263 = vst [vmem:[%s257] sm:$0x7] %v262
        %v264 = vld [vmem:[%s257 + $0xc] sm:$0x7]
        %v265 = vsel %vm260, 0, %v264
        %266 = vst [vmem:[%s257 + $0xc] sm:$0x7] %v265
        %v267 = vld [vmem:[%s257 + $0x18] sm:$0x7]
        %v268 = vsel %vm260, 0, %v267
        %269 = vst [vmem:[%s257 + $0x18] sm:$0x7] %v268
        %v270 = vld [vmem:[%s257 + $0x24] sm:$0x7]
        %v271 = vsel %vm260, 0, %v270
        %272 = vst [vmem:[%s257 + $0x24] sm:$0x7] %v271
        %v273 = vld [vmem:[%s257 + $0x30] sm:$0x7]
        %v274 = vsel %vm260, 0, %v273
        %275 = vst [vmem:[%s257 + $0x30] sm:$0x7] %v274
        %v276 = vld [vmem:[%s257 + $0x3c] sm:$0x7]
        %v277 = vsel %vm260, 0, %v276
        %278 = vst [vmem:[%s257 + $0x3c] sm:$0x7] %v277
        %v279 = vld [vmem:[%s257 + $0x48] sm:$0x7]
        %v280 = vsel %vm260, 0, %v279
        %281 = vst [vmem:[%s257 + $0x48] sm:$0x7] %v280
        %v282 = vld [vmem:[%s257 + $0x54] sm:$0x7]
        %v283 = vsel %vm260, 0, %v282
        %284 = vst [vmem:[%s257 + $0x54] sm:$0x7] %v283
        %vm285 = vcmask 125954
        %vm286 = vsmask.f32 7946
        %vm287 = vmand %vm285, %vm286
        %v288 = vld [vmem:[%s257 + $0x4] sm:$0xc]
        %v289 = vsel %vm287, 0, %v288
        %290 = vst [vmem:[%s257 + $0x4] sm:$0xc] %v289
        %291 = vst.msk [vmem:[%s257 + $0x8] sm:$0x1] %vm227, 0
        %v292 = vld [vmem:[%s257 + $0x10] sm:$0xc]
        %v293 = vsel %vm287, 0, %v292
        %294 = vst [vmem:[%s257 + $0x10] sm:$0xc] %v293
        %295 = vst.msk [vmem:[%s257 + $0x14] sm:$0x1] %vm227, 0
        %v296 = vld [vmem:[%s257 + $0x1c] sm:$0xc]
        %v297 = vsel %vm287, 0, %v296
        %298 = vst [vmem:[%s257 + $0x1c] sm:$0xc] %v297
        %299 = vst.msk [vmem:[%s257 + $0x20] sm:$0x1] %vm227, 0
        %v300 = vld [vmem:[%s257 + $0x28] sm:$0xc]
        %v301 = vsel %vm287, 0, %v300
        %302 = vst [vmem:[%s257 + $0x28] sm:$0xc] %v301
        %303 = vst.msk [vmem:[%s257 + $0x2c] sm:$0x1] %vm227, 0
        %v304 = vld [vmem:[%s257 + $0x34] sm:$0xc]
        %v305 = vsel %vm287, 0, %v304
        %306 = vst [vmem:[%s257 + $0x34] sm:$0xc] %v305
        %307 = vst.msk [vmem:[%s257 + $0x38] sm:$0x1] %vm227, 0
        %v308 = vld [vmem:[%s257 + $0x40] sm:$0xc]
        %v309 = vsel %vm287, 0, %v308
        %310 = vst [vmem:[%s257 + $0x40] sm:$0xc] %v309
        %311 = vst.msk [vmem:[%s257 + $0x44] sm:$0x1] %vm227, 0
        %v312 = vld [vmem:[%s257 + $0x4c] sm:$0xc]
        %v313 = vsel %vm287, 0, %v312
        %314 = vst [vmem:[%s257 + $0x4c] sm:$0xc] %v313
        %315 = vst.msk [vmem:[%s257 + $0x50] sm:$0x1] %vm227, 0
        %v316 = vld [vmem:[%s257 + $0x58] sm:$0xc]
        %v317 = vsel %vm287, 0, %v316
        %318 = vst [vmem:[%s257 + $0x58] sm:$0xc] %v317
        %319 = vst.msk [vmem:[%s257 + $0x5c] sm:$0x1] %vm227, 0
        %vm320 = vcmask 60416
        %321 = vst.msk [vmem:[#allocation3] sm:$0xf] %vm320, 0
        %322 = vst.msk [vmem:[#allocation3 + $0x4] sm:$0xf] %vm320, 0
        %vm323 = vcmask 57344
        %324 = vst.msk [vmem:[#allocation3 + $0x8] sm:$0x1] %vm323, 0
        %325 = vst.msk [vmem:[#allocation3 + $0xc] sm:$0xf] %vm320, 0
        %326 = vst.msk [vmem:[#allocation3 + $0x10] sm:$0xf] %vm320, 0
        %327 = vst.msk [vmem:[#allocation3 + $0x14] sm:$0x1] %vm323, 0
        %328 = vst.msk [vmem:[#allocation3 + $0x18] sm:$0xf] %vm320, 0
        %329 = vst.msk [vmem:[#allocation3 + $0x1c] sm:$0xf] %vm320, 0
        %330 = vst.msk [vmem:[#allocation3 + $0x20] sm:$0x1] %vm323, 0
        %331 = vst.msk [vmem:[#allocation3 + $0x24] sm:$0xf] %vm320, 0
        %332 = vst.msk [vmem:[#allocation3 + $0x28] sm:$0xf] %vm320, 0
        %333 = vst.msk [vmem:[#allocation3 + $0x2c] sm:$0x1] %vm323, 0
        %334 = vst.msk [vmem:[#allocation3 + $0x30] sm:$0xf] %vm320, 0
        %335 = vst.msk [vmem:[#allocation3 + $0x34] sm:$0xf] %vm320, 0
        %336 = vst.msk [vmem:[#allocation3 + $0x38] sm:$0x1] %vm323, 0
        %s337 = scalar_lea.vmem [#allocation3], 156
        %338 = vst.msk [vmem:[%s337] sm:$0xf] %vm320, 0
        %339 = vst.msk [vmem:[%s337 + $0x4] sm:$0xf] %vm320, 0
        %340 = vst.msk [vmem:[%s337 + $0x8] sm:$0x1] %vm323, 0
        %341 = vst.msk [vmem:[%s337 + $0xc] sm:$0xf] %vm320, 0
        %342 = vst.msk [vmem:[%s337 + $0x10] sm:$0xf] %vm320, 0
        %343 = vst.msk [vmem:[%s337 + $0x14] sm:$0x1] %vm323, 0
        %344 = vst.msk [vmem:[%s337 + $0x18] sm:$0xf] %vm320, 0
        %345 = vst.msk [vmem:[%s337 + $0x1c] sm:$0xf] %vm320, 0
        %346 = vst.msk [vmem:[%s337 + $0x20] sm:$0x1] %vm323, 0
        %347 = vst.msk [vmem:[%s337 + $0x24] sm:$0xf] %vm320, 0
        %348 = vst.msk [vmem:[%s337 + $0x28] sm:$0xf] %vm320, 0
        %349 = vst.msk [vmem:[%s337 + $0x2c] sm:$0x1] %vm323, 0
        %350 = vst.msk [vmem:[%s337 + $0x30] sm:$0xf] %vm320, 0
        %351 = vst.msk [vmem:[%s337 + $0x34] sm:$0xf] %vm320, 0
        %352 = vst.msk [vmem:[%s337 + $0x38] sm:$0x1] %vm323, 0
        %s353 = scalar_lea.vmem [#allocation3], 60
        %vm354 = vcmask 59392
        %vm355 = vmand %vm354, %vm259
        %v356 = vld [vmem:[%s353] sm:$0x7]
        %v357 = vsel %vm355, 0, %v356
        %358 = vst [vmem:[%s353] sm:$0x7] %v357
        %v359 = vld [vmem:[%s353 + $0xc] sm:$0x7]
        %v360 = vsel %vm355, 0, %v359
        %361 = vst [vmem:[%s353 + $0xc] sm:$0x7] %v360
        %v362 = vld [vmem:[%s353 + $0x18] sm:$0x7]
        %v363 = vsel %vm355, 0, %v362
        %364 = vst [vmem:[%s353 + $0x18] sm:$0x7] %v363
        %v365 = vld [vmem:[%s353 + $0x24] sm:$0x7]
        %v366 = vsel %vm355, 0, %v365
        %367 = vst [vmem:[%s353 + $0x24] sm:$0x7] %v366
        %v368 = vld [vmem:[%s353 + $0x30] sm:$0x7]
        %v369 = vsel %vm355, 0, %v368
        %370 = vst [vmem:[%s353 + $0x30] sm:$0x7] %v369
        %v371 = vld [vmem:[%s353 + $0x3c] sm:$0x7]
        %v372 = vsel %vm355, 0, %v371
        %373 = vst [vmem:[%s353 + $0x3c] sm:$0x7] %v372
        %v374 = vld [vmem:[%s353 + $0x48] sm:$0x7]
        %v375 = vsel %vm355, 0, %v374
        %376 = vst [vmem:[%s353 + $0x48] sm:$0x7] %v375
        %v377 = vld [vmem:[%s353 + $0x54] sm:$0x7]
        %v378 = vsel %vm355, 0, %v377
        %379 = vst [vmem:[%s353 + $0x54] sm:$0x7] %v378
        %vm380 = vcmask 60418
        %vm381 = vmand %vm380, %vm286
        %v382 = vld [vmem:[%s353 + $0x4] sm:$0xc]
        %v383 = vsel %vm381, 0, %v382
        %384 = vst [vmem:[%s353 + $0x4] sm:$0xc] %v383
        %385 = vst.msk [vmem:[%s353 + $0x8] sm:$0x1] %vm323, 0
        %v386 = vld [vmem:[%s353 + $0x10] sm:$0xc]
        %v387 = vsel %vm381, 0, %v386
        %388 = vst [vmem:[%s353 + $0x10] sm:$0xc] %v387
        %389 = vst.msk [vmem:[%s353 + $0x14] sm:$0x1] %vm323, 0
        %v390 = vld [vmem:[%s353 + $0x1c] sm:$0xc]
        %v391 = vsel %vm381, 0, %v390
        %392 = vst [vmem:[%s353 + $0x1c] sm:$0xc] %v391
        %393 = vst.msk [vmem:[%s353 + $0x20] sm:$0x1] %vm323, 0
        %v394 = vld [vmem:[%s353 + $0x28] sm:$0xc]
        %v395 = vsel %vm381, 0, %v394
        %396 = vst [vmem:[%s353 + $0x28] sm:$0xc] %v395
        %397 = vst.msk [vmem:[%s353 + $0x2c] sm:$0x1] %vm323, 0
        %v398 = vld [vmem:[%s353 + $0x34] sm:$0xc]
        %v399 = vsel %vm381, 0, %v398
        %400 = vst [vmem:[%s353 + $0x34] sm:$0xc] %v399
        %401 = vst.msk [vmem:[%s353 + $0x38] sm:$0x1] %vm323, 0
        %v402 = vld [vmem:[%s353 + $0x40] sm:$0xc]
        %v403 = vsel %vm381, 0, %v402
        %404 = vst [vmem:[%s353 + $0x40] sm:$0xc] %v403
        %405 = vst.msk [vmem:[%s353 + $0x44] sm:$0x1] %vm323, 0
        %v406 = vld [vmem:[%s353 + $0x4c] sm:$0xc]
        %v407 = vsel %vm381, 0, %v406
        %408 = vst [vmem:[%s353 + $0x4c] sm:$0xc] %v407
        %409 = vst.msk [vmem:[%s353 + $0x50] sm:$0x1] %vm323, 0
        %v410 = vld [vmem:[%s353 + $0x58] sm:$0xc]
        %v411 = vsel %vm381, 0, %v410
        %412 = vst [vmem:[%s353 + $0x58] sm:$0xc] %v411
        %413 = vst.msk [vmem:[%s353 + $0x5c] sm:$0x1] %vm323, 0
        %vm414 = vcmask 1048064
        %415 = vst.msk [vmem:[%s217] sm:$0xff] %vm414, 0.0
        %v416 = vld [vmem:[%s222] sm:$0xf]
        %v417 = vld [vmem:[%s222 + $0x4] sm:$0xf]
        %v418 = vld [vmem:[%s222 + $0x8] sm:$0xf]
        %v419 = vld [vmem:[%s222 + $0xc] sm:$0xf]
        %v420 = vld [vmem:[%s222 + $0x10] sm:$0xf]
        %v421 = vld [vmem:[%s222 + $0x14] sm:$0xf]
        %v422 = vld [vmem:[%s222 + $0x18] sm:$0xf]
        %v423 = vld [vmem:[%s222 + $0x1c] sm:$0xf]
        %v424 = vunpack.c.l.bf16 %v416
        %v425 = vunpack.c.l.bf16 %v417
        %v426 = vunpack.c.l.bf16 %v418
        %v427 = vunpack.c.l.bf16 %v419
        %v428 = vunpack.c.l.bf16 %v420
        %v429 = vunpack.c.l.bf16 %v421
        %v430 = vunpack.c.l.bf16 %v422
        %v431 = vunpack.c.l.bf16 %v423
        %440 = vrot.lane.b32.xlu0 %v424, 124
        %v441 = vpop.permute.xlu0 %440
        %442 = vrot.lane.b32.xlu0 %v425, 124
        %v443 = vpop.permute.xlu0 %442
        %444 = vrot.lane.b32.xlu0 %v426, 124
        %v445 = vpop.permute.xlu0 %444
        %446 = vrot.lane.b32.xlu0 %v427, 124
        %v447 = vpop.permute.xlu0 %446
        %448 = vrot.lane.b32.xlu0 %v428, 124
        %v449 = vpop.permute.xlu0 %448
        %450 = vrot.lane.b32.xlu0 %v429, 124
        %v451 = vpop.permute.xlu0 %450
        %452 = vrot.lane.b32.xlu0 %v430, 124
        %v453 = vpop.permute.xlu0 %452
        %454 = vrot.lane.b32.xlu0 %v431, 124
        %v455 = vpop.permute.xlu0 %454
        %v464 = vadd.f32 %v424, %v441
        %v465 = vadd.f32 %v425, %v443
        %v466 = vadd.f32 %v426, %v445
        %v467 = vadd.f32 %v427, %v447
        %v468 = vadd.f32 %v428, %v449
        %v469 = vadd.f32 %v429, %v451
        %v470 = vadd.f32 %v430, %v453
        %v471 = vadd.f32 %v431, %v455
        %472 = vrot.lane.b32.xlu0 %v424, 120
        %v473 = vpop.permute.xlu0 %472
        %474 = vrot.lane.b32.xlu0 %v425, 120
        %v475 = vpop.permute.xlu0 %474
        %476 = vrot.lane.b32.xlu0 %v426, 120
        %v477 = vpop.permute.xlu0 %476
        %478 = vrot.lane.b32.xlu0 %v427, 120
        %v479 = vpop.permute.xlu0 %478
        %480 = vrot.lane.b32.xlu0 %v428, 120
        %v481 = vpop.permute.xlu0 %480
        %482 = vrot.lane.b32.xlu0 %v429, 120
        %v483 = vpop.permute.xlu0 %482
        %484 = vrot.lane.b32.xlu0 %v430, 120
        %v485 = vpop.permute.xlu0 %484
        %486 = vrot.lane.b32.xlu0 %v431, 120
        %v487 = vpop.permute.xlu0 %486
        %v496 = vadd.f32 %v464, %v473
        %v497 = vadd.f32 %v465, %v475
        %v498 = vadd.f32 %v466, %v477
        %v499 = vadd.f32 %v467, %v479
        %v500 = vadd.f32 %v468, %v481
        %v501 = vadd.f32 %v469, %v483
        %v502 = vadd.f32 %v470, %v485
        %v503 = vadd.f32 %v471, %v487
        %504 = vrot.lane.b32.xlu0 %v424, 116
        %v505 = vpop.permute.xlu0 %504
        %506 = vrot.lane.b32.xlu0 %v425, 116
        %v507 = vpop.permute.xlu0 %506
        %508 = vrot.lane.b32.xlu0 %v426, 116
        %v509 = vpop.permute.xlu0 %508
        %510 = vrot.lane.b32.xlu0 %v427, 116
        %v511 = vpop.permute.xlu0 %510
        %512 = vrot.lane.b32.xlu0 %v428, 116
        %v513 = vpop.permute.xlu0 %512
        %514 = vrot.lane.b32.xlu0 %v429, 116
        %v515 = vpop.permute.xlu0 %514
        %516 = vrot.lane.b32.xlu0 %v430, 116
        %v517 = vpop.permute.xlu0 %516
        %518 = vrot.lane.b32.xlu0 %v431, 116
        %v519 = vpop.permute.xlu0 %518
        %v528 = vadd.f32 %v496, %v505
        %v529 = vadd.f32 %v497, %v507
        %v530 = vadd.f32 %v498, %v509
        %v531 = vadd.f32 %v499, %v511
        %v532 = vadd.f32 %v500, %v513
        %v533 = vadd.f32 %v501, %v515
        %v534 = vadd.f32 %v502, %v517
        %v535 = vadd.f32 %v503, %v519
        %v536 = vmul.f32 %v528, 0.5
        %v537 = vmul.f32 %v529, 0.5
        %v538 = vmul.f32 %v530, 0.5
        %v539 = vmul.f32 %v531, 0.5
        %v540 = vmul.f32 %v532, 0.5
        %v541 = vmul.f32 %v533, 0.5
        %v542 = vmul.f32 %v534, 0.5
        %v543 = vmul.f32 %v535, 0.5
        %v544 = vpack.c.bf16 %v536, %v536
        %v545 = vpack.c.bf16 %v537, %v537
        %v546 = vpack.c.bf16 %v538, %v538
        %v547 = vpack.c.bf16 %v539, %v539
        %v548 = vpack.c.bf16 %v540, %v540
        %v549 = vpack.c.bf16 %v541, %v541
        %v550 = vpack.c.bf16 %v542, %v542
        %v551 = vpack.c.bf16 %v543, %v543
        %v560 = vunpack.c.l.b16 %v544
        %v561 = vunpack.c.l.b16 %v545
        %v562 = vunpack.c.l.b16 %v546
        %v563 = vunpack.c.l.b16 %v547
        %v564 = vunpack.c.l.b16 %v548
        %v565 = vunpack.c.l.b16 %v549
        %v566 = vunpack.c.l.b16 %v550
        %v567 = vunpack.c.l.b16 %v551
        %v568 = vpack.c.b16 %v560, %v560
        %v569 = vpack.c.b16 %v561, %v561
        %v570 = vpack.c.b16 %v562, %v562
        %v571 = vpack.c.b16 %v563, %v563
        %v572 = vpack.c.b16 %v564, %v564
        %v573 = vpack.c.b16 %v565, %v565
        %v574 = vpack.c.b16 %v566, %v566
        %v575 = vpack.c.b16 %v567, %v567
        %v577 = vshrl.u32 %v568, 16
        %v579 = vrot.slane %v577, 5
        %v580 = vshll.u32 %v568, 16
        %v582 = vrot.slane %v580, 6
        %v583 = vor.u32 %v579, %v582
        %v584 = vrot.slane %v583, 4
        %v586 = vshrl.u32 %v569, 16
        %v588 = vrot.slane %v586, 5
        %v589 = vshll.u32 %v569, 16
        %v591 = vrot.slane %v589, 6
        %v592 = vor.u32 %v588, %v591
        %v593 = vrot.slane %v592, 4
        %v595 = vshrl.u32 %v570, 16
        %v597 = vrot.slane %v595, 5
        %v598 = vshll.u32 %v570, 16
        %v600 = vrot.slane %v598, 6
        %v601 = vor.u32 %v597, %v600
        %v602 = vrot.slane %v601, 4
        %v604 = vshrl.u32 %v571, 16
        %v606 = vrot.slane %v604, 5
        %v607 = vshll.u32 %v571, 16
        %v609 = vrot.slane %v607, 6
        %v610 = vor.u32 %v606, %v609
        %v611 = vrot.slane %v610, 4
        %v613 = vshrl.u32 %v572, 16
        %v615 = vrot.slane %v613, 5
        %v616 = vshll.u32 %v572, 16
        %v618 = vrot.slane %v616, 6
        %v619 = vor.u32 %v615, %v618
        %v620 = vrot.slane %v619, 4
        %v622 = vshrl.u32 %v573, 16
        %v624 = vrot.slane %v622, 5
        %v625 = vshll.u32 %v573, 16
        %v627 = vrot.slane %v625, 6
        %v628 = vor.u32 %v624, %v627
        %v629 = vrot.slane %v628, 4
        %v631 = vshrl.u32 %v574, 16
        %v633 = vrot.slane %v631, 5
        %v634 = vshll.u32 %v574, 16
        %v636 = vrot.slane %v634, 6
        %v637 = vor.u32 %v633, %v636
        %v638 = vrot.slane %v637, 4
        %v640 = vshrl.u32 %v575, 16
        %v642 = vrot.slane %v640, 5
        %v643 = vshll.u32 %v575, 16
        %v645 = vrot.slane %v643, 6
        %v646 = vor.u32 %v642, %v645
        %v647 = vrot.slane %v646, 4
        %vm664 = vcmask 27650
        %vm665 = vmand %vm664, %vm286
        %v666 = vld [vmem:[%s257] sm:$0xc]
        %v667 = vsel %vm665, %v583, %v666
        %668 = vst [vmem:[%s257] sm:$0xc] %v667
        %vm669 = vcmask 26624
        %vm670 = vmand %vm669, %vm259
        %v671 = vld [vmem:[%s257 + $0x4] sm:$0x7]
        %v672 = vsel %vm670, %v584, %v671
        %673 = vst [vmem:[%s257 + $0x4] sm:$0x7] %v672
        %v674 = vld [vmem:[%s257 + $0xc] sm:$0xc]
        %v675 = vsel %vm665, %v592, %v674
        %676 = vst [vmem:[%s257 + $0xc] sm:$0xc] %v675
        %v677 = vld [vmem:[%s257 + $0x10] sm:$0x7]
        %v678 = vsel %vm670, %v593, %v677
        %679 = vst [vmem:[%s257 + $0x10] sm:$0x7] %v678
        %v680 = vld [vmem:[%s257 + $0x18] sm:$0xc]
        %v681 = vsel %vm665, %v601, %v680
        %682 = vst [vmem:[%s257 + $0x18] sm:$0xc] %v681
        %v683 = vld [vmem:[%s257 + $0x1c] sm:$0x7]
        %v684 = vsel %vm670, %v602, %v683
        %685 = vst [vmem:[%s257 + $0x1c] sm:$0x7] %v684
        %v686 = vld [vmem:[%s257 + $0x24] sm:$0xc]
        %v687 = vsel %vm665, %v610, %v686
        %688 = vst [vmem:[%s257 + $0x24] sm:$0xc] %v687
        %v689 = vld [vmem:[%s257 + $0x28] sm:$0x7]
        %v690 = vsel %vm670, %v611, %v689
        %691 = vst [vmem:[%s257 + $0x28] sm:$0x7] %v690
        %v692 = vld [vmem:[%s257 + $0x30] sm:$0xc]
        %v693 = vsel %vm665, %v619, %v692
        %694 = vst [vmem:[%s257 + $0x30] sm:$0xc] %v693
        %v695 = vld [vmem:[%s257 + $0x34] sm:$0x7]
        %v696 = vsel %vm670, %v620, %v695
        %697 = vst [vmem:[%s257 + $0x34] sm:$0x7] %v696
        %v698 = vld [vmem:[%s257 + $0x3c] sm:$0xc]
        %v699 = vsel %vm665, %v628, %v698
        %700 = vst [vmem:[%s257 + $0x3c] sm:$0xc] %v699
        %v701 = vld [vmem:[%s257 + $0x40] sm:$0x7]
        %v702 = vsel %vm670, %v629, %v701
        %703 = vst [vmem:[%s257 + $0x40] sm:$0x7] %v702
        %v704 = vld [vmem:[%s257 + $0x48] sm:$0xc]
        %v705 = vsel %vm665, %v637, %v704
        %706 = vst [vmem:[%s257 + $0x48] sm:$0xc] %v705
        %v707 = vld [vmem:[%s257 + $0x4c] sm:$0x7]
        %v708 = vsel %vm670, %v638, %v707
        %709 = vst [vmem:[%s257 + $0x4c] sm:$0x7] %v708
        %v710 = vld [vmem:[%s257 + $0x54] sm:$0xc]
        %v711 = vsel %vm665, %v646, %v710
        %712 = vst [vmem:[%s257 + $0x54] sm:$0xc] %v711
        %v713 = vld [vmem:[%s257 + $0x58] sm:$0x7]
        %v714 = vsel %vm670, %v647, %v713
        %715 = vst [vmem:[%s257 + $0x58] sm:$0x7] %v714
        %v716 = vsub.f32 %v464, %v473
        %v717 = vsub.f32 %v465, %v475
        %v718 = vsub.f32 %v466, %v477
        %v719 = vsub.f32 %v467, %v479
        %v720 = vsub.f32 %v468, %v481
        %v721 = vsub.f32 %v469, %v483
        %v722 = vsub.f32 %v470, %v485
        %v723 = vsub.f32 %v471, %v487
        %v724 = vsub.f32 %v716, %v505
        %v725 = vsub.f32 %v717, %v507
        %v726 = vsub.f32 %v718, %v509
        %v727 = vsub.f32 %v719, %v511
        %v728 = vsub.f32 %v720, %v513
        %v729 = vsub.f32 %v721, %v515
        %v730 = vsub.f32 %v722, %v517
        %v731 = vsub.f32 %v723, %v519
        %v732 = vmul.f32 %v724, 0.5
        %v733 = vmul.f32 %v725, 0.5
        %v734 = vmul.f32 %v726, 0.5
        %v735 = vmul.f32 %v727, 0.5
        %v736 = vmul.f32 %v728, 0.5
        %v737 = vmul.f32 %v729, 0.5
        %v738 = vmul.f32 %v730, 0.5
        %v739 = vmul.f32 %v731, 0.5
        %v740 = vpack.c.bf16 %v732, %v732
        %v741 = vpack.c.bf16 %v733, %v733
        %v742 = vpack.c.bf16 %v734, %v734
        %v743 = vpack.c.bf16 %v735, %v735
        %v744 = vpack.c.bf16 %v736, %v736
        %v745 = vpack.c.bf16 %v737, %v737
        %v746 = vpack.c.bf16 %v738, %v738
        %v747 = vpack.c.bf16 %v739, %v739
        %v756 = vunpack.c.l.b16 %v740
        %v757 = vunpack.c.l.b16 %v741
        %v758 = vunpack.c.l.b16 %v742
        %v759 = vunpack.c.l.b16 %v743
        %v760 = vunpack.c.l.b16 %v744
        %v761 = vunpack.c.l.b16 %v745
        %v762 = vunpack.c.l.b16 %v746
        %v763 = vunpack.c.l.b16 %v747
        %v764 = vpack.c.b16 %v756, %v756
        %v765 = vpack.c.b16 %v757, %v757
        %v766 = vpack.c.b16 %v758, %v758
        %v767 = vpack.c.b16 %v759, %v759
        %v768 = vpack.c.b16 %v760, %v760
        %v769 = vpack.c.b16 %v761, %v761
        %v770 = vpack.c.b16 %v762, %v762
        %v771 = vpack.c.b16 %v763, %v763
        %v773 = vshrl.u32 %v764, 16
        %v775 = vrot.slane %v773, 5
        %v776 = vshll.u32 %v764, 16
        %v778 = vrot.slane %v776, 6
        %v779 = vor.u32 %v775, %v778
        %v780 = vrot.slane %v779, 4
        %v782 = vshrl.u32 %v765, 16
        %v784 = vrot.slane %v782, 5
        %v785 = vshll.u32 %v765, 16
        %v787 = vrot.slane %v785, 6
        %v788 = vor.u32 %v784, %v787
        %v789 = vrot.slane %v788, 4
        %v791 = vshrl.u32 %v766, 16
        %v793 = vrot.slane %v791, 5
        %v794 = vshll.u32 %v766, 16
        %v796 = vrot.slane %v794, 6
        %v797 = vor.u32 %v793, %v796
        %v798 = vrot.slane %v797, 4
        %v800 = vshrl.u32 %v767, 16
        %v802 = vrot.slane %v800, 5
        %v803 = vshll.u32 %v767, 16
        %v805 = vrot.slane %v803, 6
        %v806 = vor.u32 %v802, %v805
        %v807 = vrot.slane %v806, 4
        %v809 = vshrl.u32 %v768, 16
        %v811 = vrot.slane %v809, 5
        %v812 = vshll.u32 %v768, 16
        %v814 = vrot.slane %v812, 6
        %v815 = vor.u32 %v811, %v814
        %v816 = vrot.slane %v815, 4
        %v818 = vshrl.u32 %v769, 16
        %v820 = vrot.slane %v818, 5
        %v821 = vshll.u32 %v769, 16
        %v823 = vrot.slane %v821, 6
        %v824 = vor.u32 %v820, %v823
        %v825 = vrot.slane %v824, 4
        %v827 = vshrl.u32 %v770, 16
        %v829 = vrot.slane %v827, 5
        %v830 = vshll.u32 %v770, 16
        %v832 = vrot.slane %v830, 6
        %v833 = vor.u32 %v829, %v832
        %v834 = vrot.slane %v833, 4
        %v836 = vshrl.u32 %v771, 16
        %v838 = vrot.slane %v836, 5
        %v839 = vshll.u32 %v771, 16
        %v841 = vrot.slane %v839, 6
        %v842 = vor.u32 %v838, %v841
        %v843 = vrot.slane %v842, 4
        %844 = vrot.lane.b32.xlu0 %v779, 4
        %v845 = vpop.permute.xlu0 %844
        %846 = vrot.lane.b32.xlu0 %v780, 4
        %v847 = vpop.permute.xlu0 %846
        %848 = vrot.lane.b32.xlu0 %v788, 4
        %v849 = vpop.permute.xlu0 %848
        %850 = vrot.lane.b32.xlu0 %v789, 4
        %v851 = vpop.permute.xlu0 %850
        %852 = vrot.lane.b32.xlu0 %v797, 4
        %v853 = vpop.permute.xlu0 %852
        %854 = vrot.lane.b32.xlu0 %v798, 4
        %v855 = vpop.permute.xlu0 %854
        %856 = vrot.lane.b32.xlu0 %v806, 4
        %v857 = vpop.permute.xlu0 %856
        %858 = vrot.lane.b32.xlu0 %v807, 4
        %v859 = vpop.permute.xlu0 %858
        %860 = vrot.lane.b32.xlu0 %v815, 4
        %v861 = vpop.permute.xlu0 %860
        %862 = vrot.lane.b32.xlu0 %v816, 4
        %v863 = vpop.permute.xlu0 %862
        %864 = vrot.lane.b32.xlu0 %v824, 4
        %v865 = vpop.permute.xlu0 %864
        %866 = vrot.lane.b32.xlu0 %v825, 4
        %v867 = vpop.permute.xlu0 %866
        %868 = vrot.lane.b32.xlu0 %v833, 4
        %v869 = vpop.permute.xlu0 %868
        %870 = vrot.lane.b32.xlu0 %v834, 4
        %v871 = vpop.permute.xlu0 %870
        %872 = vrot.lane.b32.xlu0 %v842, 4
        %v873 = vpop.permute.xlu0 %872
        %874 = vrot.lane.b32.xlu0 %v843, 4
        %v875 = vpop.permute.xlu0 %874
        %vm892 = vcmask 60450
        %vm893 = vmand %vm892, %vm286
        %v894 = vld [vmem:[%s257] sm:$0xc]
        %v895 = vsel %vm893, %v845, %v894
        %896 = vst [vmem:[%s257] sm:$0xc] %v895
        %vm897 = vcmask 59424
        %vm898 = vmand %vm897, %vm259
        %v899 = vld [vmem:[%s257 + $0x4] sm:$0x7]
        %v900 = vsel %vm898, %v847, %v899
        %901 = vst [vmem:[%s257 + $0x4] sm:$0x7] %v900
        %v902 = vld [vmem:[%s257 + $0xc] sm:$0xc]
        %v903 = vsel %vm893, %v849, %v902
        %904 = vst [vmem:[%s257 + $0xc] sm:$0xc] %v903
        %v905 = vld [vmem:[%s257 + $0x10] sm:$0x7]
        %v906 = vsel %vm898, %v851, %v905
        %907 = vst [vmem:[%s257 + $0x10] sm:$0x7] %v906
        %v908 = vld [vmem:[%s257 + $0x18] sm:$0xc]
        %v909 = vsel %vm893, %v853, %v908
        %910 = vst [vmem:[%s257 + $0x18] sm:$0xc] %v909
        %v911 = vld [vmem:[%s257 + $0x1c] sm:$0x7]
        %v912 = vsel %vm898, %v855, %v911
        %913 = vst [vmem:[%s257 + $0x1c] sm:$0x7] %v912
        %v914 = vld [vmem:[%s257 + $0x24] sm:$0xc]
        %v915 = vsel %vm893, %v857, %v914
        %916 = vst [vmem:[%s257 + $0x24] sm:$0xc] %v915
        %v917 = vld [vmem:[%s257 + $0x28] sm:$0x7]
        %v918 = vsel %vm898, %v859, %v917
        %919 = vst [vmem:[%s257 + $0x28] sm:$0x7] %v918
        %v920 = vld [vmem:[%s257 + $0x30] sm:$0xc]
        %v921 = vsel %vm893, %v861, %v920
        %922 = vst [vmem:[%s257 + $0x30] sm:$0xc] %v921
        %v923 = vld [vmem:[%s257 + $0x34] sm:$0x7]
        %v924 = vsel %vm898, %v863, %v923
        %925 = vst [vmem:[%s257 + $0x34] sm:$0x7] %v924
        %v926 = vld [vmem:[%s257 + $0x3c] sm:$0xc]
        %v927 = vsel %vm893, %v865, %v926
        %928 = vst [vmem:[%s257 + $0x3c] sm:$0xc] %v927
        %v929 = vld [vmem:[%s257 + $0x40] sm:$0x7]
        %v930 = vsel %vm898, %v867, %v929
        %931 = vst [vmem:[%s257 + $0x40] sm:$0x7] %v930
        %v932 = vld [vmem:[%s257 + $0x48] sm:$0xc]
        %v933 = vsel %vm893, %v869, %v932
        %934 = vst [vmem:[%s257 + $0x48] sm:$0xc] %v933
        %v935 = vld [vmem:[%s257 + $0x4c] sm:$0x7]
        %v936 = vsel %vm898, %v871, %v935
        %937 = vst [vmem:[%s257 + $0x4c] sm:$0x7] %v936
        %v938 = vld [vmem:[%s257 + $0x54] sm:$0xc]
        %v939 = vsel %vm893, %v873, %v938
        %940 = vst [vmem:[%s257 + $0x54] sm:$0xc] %v939
        %v941 = vld [vmem:[%s257 + $0x58] sm:$0x7]
        %v942 = vsel %vm898, %v875, %v941
        %943 = vst [vmem:[%s257 + $0x58] sm:$0x7] %v942
        %v944 = vsub.f32 %v424, %v441
        %v945 = vsub.f32 %v425, %v443
        %v946 = vsub.f32 %v426, %v445
        %v947 = vsub.f32 %v427, %v447
        %v948 = vsub.f32 %v428, %v449
        %v949 = vsub.f32 %v429, %v451
        %v950 = vsub.f32 %v430, %v453
        %v951 = vsub.f32 %v431, %v455
        %v952 = vadd.f32 %v944, %v473
        %v953 = vadd.f32 %v945, %v475
        %v954 = vadd.f32 %v946, %v477
        %v955 = vadd.f32 %v947, %v479
        %v956 = vadd.f32 %v948, %v481
        %v957 = vadd.f32 %v949, %v483
        %v958 = vadd.f32 %v950, %v485
        %v959 = vadd.f32 %v951, %v487
        %v960 = vsub.f32 %v952, %v505
        %v961 = vsub.f32 %v953, %v507
        %v962 = vsub.f32 %v954, %v509
        %v963 = vsub.f32 %v955, %v511
        %v964 = vsub.f32 %v956, %v513
        %v965 = vsub.f32 %v957, %v515
        %v966 = vsub.f32 %v958, %v517
        %v967 = vsub.f32 %v959, %v519
        %v968 = vmul.f32 %v960, 0.5
        %v969 = vmul.f32 %v961, 0.5
        %v970 = vmul.f32 %v962, 0.5
        %v971 = vmul.f32 %v963, 0.5
        %v972 = vmul.f32 %v964, 0.5
        %v973 = vmul.f32 %v965, 0.5
        %v974 = vmul.f32 %v966, 0.5
        %v975 = vmul.f32 %v967, 0.5
        %v976 = vpack.c.bf16 %v968, %v968
        %v977 = vpack.c.bf16 %v969, %v969
        %v978 = vpack.c.bf16 %v970, %v970
        %v979 = vpack.c.bf16 %v971, %v971
        %v980 = vpack.c.bf16 %v972, %v972
        %v981 = vpack.c.bf16 %v973, %v973
        %v982 = vpack.c.bf16 %v974, %v974
        %v983 = vpack.c.bf16 %v975, %v975
        %v992 = vunpack.c.l.b16 %v976
        %v993 = vunpack.c.l.b16 %v977
        %v994 = vunpack.c.l.b16 %v978
        %v995 = vunpack.c.l.b16 %v979
        %v996 = vunpack.c.l.b16 %v980
        %v997 = vunpack.c.l.b16 %v981
        %v998 = vunpack.c.l.b16 %v982
        %v999 = vunpack.c.l.b16 %v983
        %v1000 = vpack.c.b16 %v992, %v992
        %v1001 = vpack.c.b16 %v993, %v993
        %v1002 = vpack.c.b16 %v994, %v994
        %v1003 = vpack.c.b16 %v995, %v995
        %v1004 = vpack.c.b16 %v996, %v996
        %v1005 = vpack.c.b16 %v997, %v997
        %v1006 = vpack.c.b16 %v998, %v998
        %v1007 = vpack.c.b16 %v999, %v999
        %v1009 = vshrl.u32 %v1000, 16
        %v1011 = vrot.slane %v1009, 5
        %v1012 = vshll.u32 %v1000, 16
        %v1014 = vrot.slane %v1012, 6
        %v1015 = vor.u32 %v1011, %v1014
        %v1016 = vrot.slane %v1015, 4
        %v1018 = vshrl.u32 %v1001, 16
        %v1020 = vrot.slane %v1018, 5
        %v1021 = vshll.u32 %v1001, 16
        %v1023 = vrot.slane %v1021, 6
        %v1024 = vor.u32 %v1020, %v1023
        %v1025 = vrot.slane %v1024, 4
        %v1027 = vshrl.u32 %v1002, 16
        %v1029 = vrot.slane %v1027, 5
        %v1030 = vshll.u32 %v1002, 16
        %v1032 = vrot.slane %v1030, 6
        %v1033 = vor.u32 %v1029, %v1032
        %v1034 = vrot.slane %v1033, 4
        %v1036 = vshrl.u32 %v1003, 16
        %v1038 = vrot.slane %v1036, 5
        %v1039 = vshll.u32 %v1003, 16
        %v1041 = vrot.slane %v1039, 6
        %v1042 = vor.u32 %v1038, %v1041
        %v1043 = vrot.slane %v1042, 4
        %v1045 = vshrl.u32 %v1004, 16
        %v1047 = vrot.slane %v1045, 5
        %v1048 = vshll.u32 %v1004, 16
        %v1050 = vrot.slane %v1048, 6
        %v1051 = vor.u32 %v1047, %v1050
        %v1052 = vrot.slane %v1051, 4
        %v1054 = vshrl.u32 %v1005, 16
        %v1056 = vrot.slane %v1054, 5
        %v1057 = vshll.u32 %v1005, 16
        %v1059 = vrot.slane %v1057, 6
        %v1060 = vor.u32 %v1056, %v1059
        %v1061 = vrot.slane %v1060, 4
        %v1063 = vshrl.u32 %v1006, 16
        %v1065 = vrot.slane %v1063, 5
        %v1066 = vshll.u32 %v1006, 16
        %v1068 = vrot.slane %v1066, 6
        %v1069 = vor.u32 %v1065, %v1068
        %v1070 = vrot.slane %v1069, 4
        %v1072 = vshrl.u32 %v1007, 16
        %v1074 = vrot.slane %v1072, 5
        %v1075 = vshll.u32 %v1007, 16
        %v1077 = vrot.slane %v1075, 6
        %v1078 = vor.u32 %v1074, %v1077
        %v1079 = vrot.slane %v1078, 4
        %1080 = vrot.lane.b32.xlu0 %v1015, 8
        %v1081 = vpop.permute.xlu0 %1080
        %1082 = vrot.lane.b32.xlu0 %v1016, 8
        %v1083 = vpop.permute.xlu0 %1082
        %1084 = vrot.lane.b32.xlu0 %v1024, 8
        %v1085 = vpop.permute.xlu0 %1084
        %1086 = vrot.lane.b32.xlu0 %v1025, 8
        %v1087 = vpop.permute.xlu0 %1086
        %1088 = vrot.lane.b32.xlu0 %v1033, 8
        %v1089 = vpop.permute.xlu0 %1088
        %1090 = vrot.lane.b32.xlu0 %v1034, 8
        %v1091 = vpop.permute.xlu0 %1090
        %1092 = vrot.lane.b32.xlu0 %v1042, 8
        %v1093 = vpop.permute.xlu0 %1092
        %1094 = vrot.lane.b32.xlu0 %v1043, 8
        %v1095 = vpop.permute.xlu0 %1094
        %1096 = vrot.lane.b32.xlu0 %v1051, 8
        %v1097 = vpop.permute.xlu0 %1096
        %1098 = vrot.lane.b32.xlu0 %v1052, 8
        %v1099 = vpop.permute.xlu0 %1098
        %1100 = vrot.lane.b32.xlu0 %v1060, 8
        %v1101 = vpop.permute.xlu0 %1100
        %1102 = vrot.lane.b32.xlu0 %v1061, 8
        %v1103 = vpop.permute.xlu0 %1102
        %1104 = vrot.lane.b32.xlu0 %v1069, 8
        %v1105 = vpop.permute.xlu0 %1104
        %1106 = vrot.lane.b32.xlu0 %v1070, 8
        %v1107 = vpop.permute.xlu0 %1106
        %1108 = vrot.lane.b32.xlu0 %v1078, 8
        %v1109 = vpop.permute.xlu0 %1108
        %1110 = vrot.lane.b32.xlu0 %v1079, 8
        %v1111 = vpop.permute.xlu0 %1110
        %vm1128 = vcmask 93250
        %vm1129 = vmand %vm1128, %vm286
        %v1130 = vld [vmem:[%s257] sm:$0xc]
        %v1131 = vsel %vm1129, %v1081, %v1130
        %1132 = vst [vmem:[%s257] sm:$0xc] %v1131
        %vm1133 = vcmask 92224
        %vm1134 = vmand %vm1133, %vm259
        %v1135 = vld [vmem:[%s257 + $0x4] sm:$0x7]
        %v1136 = vsel %vm1134, %v1083, %v1135
        %1137 = vst [vmem:[%s257 + $0x4] sm:$0x7] %v1136
        %v1138 = vld [vmem:[%s257 + $0xc] sm:$0xc]
        %v1139 = vsel %vm1129, %v1085, %v1138
        %1140 = vst [vmem:[%s257 + $0xc] sm:$0xc] %v1139
        %v1141 = vld [vmem:[%s257 + $0x10] sm:$0x7]
        %v1142 = vsel %vm1134, %v1087, %v1141
        %1143 = vst [vmem:[%s257 + $0x10] sm:$0x7] %v1142
        %v1144 = vld [vmem:[%s257 + $0x18] sm:$0xc]
        %v1145 = vsel %vm1129, %v1089, %v1144
        %1146 = vst [vmem:[%s257 + $0x18] sm:$0xc] %v1145
        %v1147 = vld [vmem:[%s257 + $0x1c] sm:$0x7]
        %v1148 = vsel %vm1134, %v1091, %v1147
        %1149 = vst [vmem:[%s257 + $0x1c] sm:$0x7] %v1148
        %v1150 = vld [vmem:[%s257 + $0x24] sm:$0xc]
        %v1151 = vsel %vm1129, %v1093, %v1150
        %1152 = vst [vmem:[%s257 + $0x24] sm:$0xc] %v1151
        %v1153 = vld [vmem:[%s257 + $0x28] sm:$0x7]
        %v1154 = vsel %vm1134, %v1095, %v1153
        %1155 = vst [vmem:[%s257 + $0x28] sm:$0x7] %v1154
        %v1156 = vld [vmem:[%s257 + $0x30] sm:$0xc]
        %v1157 = vsel %vm1129, %v1097, %v1156
        %1158 = vst [vmem:[%s257 + $0x30] sm:$0xc] %v1157
        %v1159 = vld [vmem:[%s257 + $0x34] sm:$0x7]
        %v1160 = vsel %vm1134, %v1099, %v1159
        %1161 = vst [vmem:[%s257 + $0x34] sm:$0x7] %v1160
        %v1162 = vld [vmem:[%s257 + $0x3c] sm:$0xc]
        %v1163 = vsel %vm1129, %v1101, %v1162
        %1164 = vst [vmem:[%s257 + $0x3c] sm:$0xc] %v1163
        %v1165 = vld [vmem:[%s257 + $0x40] sm:$0x7]
        %v1166 = vsel %vm1134, %v1103, %v1165
        %1167 = vst [vmem:[%s257 + $0x40] sm:$0x7] %v1166
        %v1168 = vld [vmem:[%s257 + $0x48] sm:$0xc]
        %v1169 = vsel %vm1129, %v1105, %v1168
        %1170 = vst [vmem:[%s257 + $0x48] sm:$0xc] %v1169
        %v1171 = vld [vmem:[%s257 + $0x4c] sm:$0x7]
        %v1172 = vsel %vm1134, %v1107, %v1171
        %1173 = vst [vmem:[%s257 + $0x4c] sm:$0x7] %v1172
        %v1174 = vld [vmem:[%s257 + $0x54] sm:$0xc]
        %v1175 = vsel %vm1129, %v1109, %v1174
        %1176 = vst [vmem:[%s257 + $0x54] sm:$0xc] %v1175
        %v1177 = vld [vmem:[%s257 + $0x58] sm:$0x7]
        %v1178 = vsel %vm1134, %v1111, %v1177
        %1179 = vst [vmem:[%s257 + $0x58] sm:$0x7] %v1178
        %v1180 = vsub.f32 %v944, %v473
        %v1181 = vsub.f32 %v945, %v475
        %v1182 = vsub.f32 %v946, %v477
        %v1183 = vsub.f32 %v947, %v479
        %v1184 = vsub.f32 %v948, %v481
        %v1185 = vsub.f32 %v949, %v483
        %v1186 = vsub.f32 %v950, %v485
        %v1187 = vsub.f32 %v951, %v487
        %v1188 = vadd.f32 %v1180, %v505
        %v1189 = vadd.f32 %v1181, %v507
        %v1190 = vadd.f32 %v1182, %v509
        %v1191 = vadd.f32 %v1183, %v511
        %v1192 = vadd.f32 %v1184, %v513
        %v1193 = vadd.f32 %v1185, %v515
        %v1194 = vadd.f32 %v1186, %v517
        %v1195 = vadd.f32 %v1187, %v519
        %v1196 = vmul.f32 %v1188, 0.5
        %v1197 = vmul.f32 %v1189, 0.5
        %v1198 = vmul.f32 %v1190, 0.5
        %v1199 = vmul.f32 %v1191, 0.5
        %v1200 = vmul.f32 %v1192, 0.5
        %v1201 = vmul.f32 %v1193, 0.5
        %v1202 = vmul.f32 %v1194, 0.5
        %v1203 = vmul.f32 %v1195, 0.5
        %v1204 = vpack.c.bf16 %v1196, %v1196
        %v1205 = vpack.c.bf16 %v1197, %v1197
        %v1206 = vpack.c.bf16 %v1198, %v1198
        %v1207 = vpack.c.bf16 %v1199, %v1199
        %v1208 = vpack.c.bf16 %v1200, %v1200
        %v1209 = vpack.c.bf16 %v1201, %v1201
        %v1210 = vpack.c.bf16 %v1202, %v1202
        %v1211 = vpack.c.bf16 %v1203, %v1203
        %v1220 = vunpack.c.l.b16 %v1204
        %v1221 = vunpack.c.l.b16 %v1205
        %v1222 = vunpack.c.l.b16 %v1206
        %v1223 = vunpack.c.l.b16 %v1207
        %v1224 = vunpack.c.l.b16 %v1208
        %v1225 = vunpack.c.l.b16 %v1209
        %v1226 = vunpack.c.l.b16 %v1210
        %v1227 = vunpack.c.l.b16 %v1211
        %v1228 = vpack.c.b16 %v1220, %v1220
        %v1229 = vpack.c.b16 %v1221, %v1221
        %v1230 = vpack.c.b16 %v1222, %v1222
        %v1231 = vpack.c.b16 %v1223, %v1223
        %v1232 = vpack.c.b16 %v1224, %v1224
        %v1233 = vpack.c.b16 %v1225, %v1225
        %v1234 = vpack.c.b16 %v1226, %v1226
        %v1235 = vpack.c.b16 %v1227, %v1227
        %v1237 = vshrl.u32 %v1228, 16
        %v1239 = vrot.slane %v1237, 5
        %v1240 = vshll.u32 %v1228, 16
        %v1242 = vrot.slane %v1240, 6
        %v1243 = vor.u32 %v1239, %v1242
        %v1244 = vrot.slane %v1243, 4
        %v1246 = vshrl.u32 %v1229, 16
        %v1248 = vrot.slane %v1246, 5
        %v1249 = vshll.u32 %v1229, 16
        %v1251 = vrot.slane %v1249, 6
        %v1252 = vor.u32 %v1248, %v1251
        %v1253 = vrot.slane %v1252, 4
        %v1255 = vshrl.u32 %v1230, 16
        %v1257 = vrot.slane %v1255, 5
        %v1258 = vshll.u32 %v1230, 16
        %v1260 = vrot.slane %v1258, 6
        %v1261 = vor.u32 %v1257, %v1260
        %v1262 = vrot.slane %v1261, 4
        %v1264 = vshrl.u32 %v1231, 16
        %v1266 = vrot.slane %v1264, 5
        %v1267 = vshll.u32 %v1231, 16
        %v1269 = vrot.slane %v1267, 6
        %v1270 = vor.u32 %v1266, %v1269
        %v1271 = vrot.slane %v1270, 4
        %v1273 = vshrl.u32 %v1232, 16
        %v1275 = vrot.slane %v1273, 5
        %v1276 = vshll.u32 %v1232, 16
        %v1278 = vrot.slane %v1276, 6
        %v1279 = vor.u32 %v1275, %v1278
        %v1280 = vrot.slane %v1279, 4
        %v1282 = vshrl.u32 %v1233, 16
        %v1284 = vrot.slane %v1282, 5
        %v1285 = vshll.u32 %v1233, 16
        %v1287 = vrot.slane %v1285, 6
        %v1288 = vor.u32 %v1284, %v1287
        %v1289 = vrot.slane %v1288, 4
        %v1291 = vshrl.u32 %v1234, 16
        %v1293 = vrot.slane %v1291, 5
        %v1294 = vshll.u32 %v1234, 16
        %v1296 = vrot.slane %v1294, 6
        %v1297 = vor.u32 %v1293, %v1296
        %v1298 = vrot.slane %v1297, 4
        %v1300 = vshrl.u32 %v1235, 16
        %v1302 = vrot.slane %v1300, 5
        %v1303 = vshll.u32 %v1235, 16
        %v1305 = vrot.slane %v1303, 6
        %v1306 = vor.u32 %v1302, %v1305
        %v1307 = vrot.slane %v1306, 4
        %1308 = vrot.lane.b32.xlu0 %v1243, 12
        %v1309 = vpop.permute.xlu0 %1308
        %1310 = vrot.lane.b32.xlu0 %v1244, 12
        %v1311 = vpop.permute.xlu0 %1310
        %1312 = vrot.lane.b32.xlu0 %v1252, 12
        %v1313 = vpop.permute.xlu0 %1312
        %1314 = vrot.lane.b32.xlu0 %v1253, 12
        %v1315 = vpop.permute.xlu0 %1314
        %1316 = vrot.lane.b32.xlu0 %v1261, 12
        %v1317 = vpop.permute.xlu0 %1316
        %1318 = vrot.lane.b32.xlu0 %v1262, 12
        %v1319 = vpop.permute.xlu0 %1318
        %1320 = vrot.lane.b32.xlu0 %v1270, 12
        %v1321 = vpop.permute.xlu0 %1320
        %1322 = vrot.lane.b32.xlu0 %v1271, 12
        %v1323 = vpop.permute.xlu0 %1322
        %1324 = vrot.lane.b32.xlu0 %v1279, 12
        %v1325 = vpop.permute.xlu0 %1324
        %1326 = vrot.lane.b32.xlu0 %v1280, 12
        %v1327 = vpop.permute.xlu0 %1326
        %1328 = vrot.lane.b32.xlu0 %v1288, 12
        %v1329 = vpop.permute.xlu0 %1328
        %1330 = vrot.lane.b32.xlu0 %v1289, 12
        %v1331 = vpop.permute.xlu0 %1330
        %1332 = vrot.lane.b32.xlu0 %v1297, 12
        %v1333 = vpop.permute.xlu0 %1332
        %1334 = vrot.lane.b32.xlu0 %v1298, 12
        %v1335 = vpop.permute.xlu0 %1334
        %1336 = vrot.lane.b32.xlu0 %v1306, 12
        %v1337 = vpop.permute.xlu0 %1336
        %1338 = vrot.lane.b32.xlu0 %v1307, 12
        %v1339 = vpop.permute.xlu0 %1338
        %vm1356 = vcmask 126050
        %vm1357 = vmand %vm1356, %vm286
        %v1358 = vld [vmem:[%s257] sm:$0xc]
        %v1359 = vsel %vm1357, %v1309, %v1358
        %1360 = vst [vmem:[%s257] sm:$0xc] %v1359
        %vm1361 = vcmask 125024
        %vm1362 = vmand %vm1361, %vm259
        %v1363 = vld [vmem:[%s257 + $0x4] sm:$0x7]
        %v1364 = vsel %vm1362, %v1311, %v1363
        %1365 = vst [vmem:[%s257 + $0x4] sm:$0x7] %v1364
        %v1366 = vld [vmem:[%s257 + $0xc] sm:$0xc]
        %v1367 = vsel %vm1357, %v1313, %v1366
        %1368 = vst [vmem:[%s257 + $0xc] sm:$0xc] %v1367
        %v1369 = vld [vmem:[%s257 + $0x10] sm:$0x7]
        %v1370 = vsel %vm1362, %v1315, %v1369
        %1371 = vst [vmem:[%s257 + $0x10] sm:$0x7] %v1370
        %v1372 = vld [vmem:[%s257 + $0x18] sm:$0xc]
        %v1373 = vsel %vm1357, %v1317, %v1372
        %1374 = vst [vmem:[%s257 + $0x18] sm:$0xc] %v1373
        %v1375 = vld [vmem:[%s257 + $0x1c] sm:$0x7]
        %v1376 = vsel %vm1362, %v1319, %v1375
        %1377 = vst [vmem:[%s257 + $0x1c] sm:$0x7] %v1376
        %v1378 = vld [vmem:[%s257 + $0x24] sm:$0xc]
        %v1379 = vsel %vm1357, %v1321, %v1378
        %1380 = vst [vmem:[%s257 + $0x24] sm:$0xc] %v1379
        %v1381 = vld [vmem:[%s257 + $0x28] sm:$0x7]
        %v1382 = vsel %vm1362, %v1323, %v1381
        %1383 = vst [vmem:[%s257 + $0x28] sm:$0x7] %v1382
        %v1384 = vld [vmem:[%s257 + $0x30] sm:$0xc]
        %v1385 = vsel %vm1357, %v1325, %v1384
        %1386 = vst [vmem:[%s257 + $0x30] sm:$0xc] %v1385
        %v1387 = vld [vmem:[%s257 + $0x34] sm:$0x7]
        %v1388 = vsel %vm1362, %v1327, %v1387
        %1389 = vst [vmem:[%s257 + $0x34] sm:$0x7] %v1388
        %v1390 = vld [vmem:[%s257 + $0x3c] sm:$0xc]
        %v1391 = vsel %vm1357, %v1329, %v1390
        %1392 = vst [vmem:[%s257 + $0x3c] sm:$0xc] %v1391
        %v1393 = vld [vmem:[%s257 + $0x40] sm:$0x7]
        %v1394 = vsel %vm1362, %v1331, %v1393
        %1395 = vst [vmem:[%s257 + $0x40] sm:$0x7] %v1394
        %v1396 = vld [vmem:[%s257 + $0x48] sm:$0xc]
        %v1397 = vsel %vm1357, %v1333, %v1396
        %1398 = vst [vmem:[%s257 + $0x48] sm:$0xc] %v1397
        %v1399 = vld [vmem:[%s257 + $0x4c] sm:$0x7]
        %v1400 = vsel %vm1362, %v1335, %v1399
        %1401 = vst [vmem:[%s257 + $0x4c] sm:$0x7] %v1400
        %v1402 = vld [vmem:[%s257 + $0x54] sm:$0xc]
        %v1403 = vsel %vm1357, %v1337, %v1402
        %1404 = vst [vmem:[%s257 + $0x54] sm:$0xc] %v1403
        %v1405 = vld [vmem:[%s257 + $0x58] sm:$0x7]
        %v1406 = vsel %vm1362, %v1339, %v1405
        %1407 = vst [vmem:[%s257 + $0x58] sm:$0x7] %v1406
        %v1408 = vld [vmem:[%s2] sm:$0x1]
        %v1409 = vld [vmem:[%s4] sm:$0x1]
        %v1410 = vld [vmem:[#allocation2] sm:$0xf]
        %v1411 = vld [vmem:[#allocation2 + $0xc] sm:$0xf]
        %v1412 = vld [vmem:[#allocation2 + $0x18] sm:$0xf]
        %v1413 = vld [vmem:[#allocation2 + $0x24] sm:$0xf]
        %v1414 = vld [vmem:[#allocation2 + $0x30] sm:$0xf]
        %v1415 = vld [vmem:[#allocation2 + $0x3c] sm:$0xf]
        %v1416 = vld [vmem:[#allocation2 + $0x48] sm:$0xf]
        %v1417 = vld [vmem:[#allocation2 + $0x54] sm:$0xf]
        %v1418 = vld [vmem:[#allocation2 + $0x60] sm:$0xf]
        %v1419 = vld [vmem:[#allocation2 + $0x6c] sm:$0xf]
        %v1420 = vld [vmem:[#allocation2 + $0x78] sm:$0xf]
        %v1421 = vld [vmem:[#allocation2 + $0x84] sm:$0xf]
        %v1422 = vld [vmem:[#allocation2 + $0x90] sm:$0xf]
        %v1423 = vld [vmem:[#allocation2 + $0x9c] sm:$0xf]
        %v1424 = vld [vmem:[#allocation2 + $0xa8] sm:$0xf]
        %v1425 = vld [vmem:[#allocation2 + $0xb4] sm:$0xf]
        %v1426 = vld [vmem:[#allocation2 + $0xc0] sm:$0xf]
        %v1427 = vld [vmem:[#allocation2 + $0xcc] sm:$0xf]
        %1428 = vst.msk [vmem:[#allocation4] sm:$0xf] %vm224, %v1410
        %1429 = vst.msk [vmem:[#allocation4 + $0x8] sm:$0xf] %vm224, %v1411
        %1430 = vst.msk [vmem:[#allocation4 + $0x10] sm:$0xf] %vm224, %v1412
        %1431 = vst.msk [vmem:[#allocation4 + $0x18] sm:$0xf] %vm224, %v1413
        %1432 = vst.msk [vmem:[#allocation4 + $0x20] sm:$0xf] %vm224, %v1414
        %1433 = vst.msk [vmem:[#allocation4 + $0x28] sm:$0xf] %vm224, %v1415
        %1434 = vst.msk [vmem:[#allocation4 + $0x30] sm:$0xf] %vm224, %v1416
        %1435 = vst.msk [vmem:[#allocation4 + $0x38] sm:$0xf] %vm224, %v1417
        %1436 = vst.msk [vmem:[#allocation4 + $0x40] sm:$0xf] %vm224, %v1418
        %1437 = vst.msk [vmem:[#allocation4 + $0x48] sm:$0xf] %vm224, %v1419
        %1438 = vst.msk [vmem:[#allocation4 + $0x50] sm:$0xf] %vm224, %v1420
        %1439 = vst.msk [vmem:[#allocation4 + $0x58] sm:$0xf] %vm224, %v1421
        %1440 = vst.msk [vmem:[#allocation4 + $0x60] sm:$0xf] %vm224, %v1422
        %1441 = vst.msk [vmem:[#allocation4 + $0x68] sm:$0xf] %vm224, %v1423
        %1442 = vst.msk [vmem:[#allocation4 + $0x70] sm:$0xf] %vm224, %v1424
        %1443 = vst.msk [vmem:[#allocation4 + $0x78] sm:$0xf] %vm224, %v1425
        %1444 = vst.msk [vmem:[#allocation4 + $0x80] sm:$0xf] %vm224, %v1426
        %1445 = vst.msk [vmem:[#allocation4 + $0x88] sm:$0xf] %vm224, %v1427
        %v1446 = vld [vmem:[#allocation2] sm:$0xf]
        %v1447 = vld [vmem:[#allocation2 + $0x4] sm:$0x1]
        %v1448 = vld [vmem:[#allocation2 + $0xc] sm:$0xf]
        %v1449 = vld [vmem:[#allocation2 + $0x10] sm:$0x1]
        %v1450 = vld [vmem:[#allocation2 + $0x18] sm:$0xf]
        %v1451 = vld [vmem:[#allocation2 + $0x1c] sm:$0x1]
        %v1452 = vld [vmem:[#allocation2 + $0x24] sm:$0xf]
        %v1453 = vld [vmem:[#allocation2 + $0x28] sm:$0x1]
        %v1454 = vld [vmem:[#allocation2 + $0x30] sm:$0xf]
        %v1455 = vld [vmem:[#allocation2 + $0x34] sm:$0x1]
        %v1456 = vld [vmem:[#allocation2 + $0x3c] sm:$0xf]
        %v1457 = vld [vmem:[#allocation2 + $0x40] sm:$0x1]
        %v1458 = vld [vmem:[#allocation2 + $0x48] sm:$0xf]
        %v1459 = vld [vmem:[#allocation2 + $0x4c] sm:$0x1]
        %v1460 = vld [vmem:[#allocation2 + $0x54] sm:$0xf]
        %v1461 = vld [vmem:[#allocation2 + $0x58] sm:$0x1]
        %v1462 = vld [vmem:[#allocation2 + $0x60] sm:$0xf]
        %v1463 = vld [vmem:[#allocation2 + $0x64] sm:$0x1]
        %v1464 = vld [vmem:[#allocation2 + $0x6c] sm:$0xf]
        %v1465 = vld [vmem:[#allocation2 + $0x70] sm:$0x1]
        %v1466 = vld [vmem:[#allocation2 + $0x78] sm:$0xf]
        %v1467 = vld [vmem:[#allocation2 + $0x7c] sm:$0x1]
        %v1468 = vld [vmem:[#allocation2 + $0x84] sm:$0xf]
        %v1469 = vld [vmem:[#allocation2 + $0x88] sm:$0x1]
        %v1470 = vld [vmem:[#allocation2 + $0x90] sm:$0xf]
        %v1471 = vld [vmem:[#allocation2 + $0x94] sm:$0x1]
        %v1472 = vld [vmem:[#allocation2 + $0x9c] sm:$0xf]
        %v1473 = vld [vmem:[#allocation2 + $0xa0] sm:$0x1]
        %v1474 = vld [vmem:[#allocation2 + $0xa8] sm:$0xf]
        %v1475 = vld [vmem:[#allocation2 + $0xac] sm:$0x1]
        %v1476 = vld [vmem:[#allocation2 + $0xb4] sm:$0xf]
        %v1477 = vld [vmem:[#allocation2 + $0xb8] sm:$0x1]
        %v1478 = vld [vmem:[#allocation2 + $0xc0] sm:$0xf]
        %v1479 = vld [vmem:[#allocation2 + $0xc4] sm:$0x1]
        %v1480 = vld [vmem:[#allocation2 + $0xcc] sm:$0xf]
        %v1481 = vld [vmem:[#allocation2 + $0xd0] sm:$0x1]
        %vm1482 = vsmask.f32 3328
        %vm1483 = vsmask.f32 7440
        %vm1484 = vmor %vm1482, %vm1483
        %v1486 = vshrl.u32 %v1446, 16
        %v1488 = vrot.slane %v1486, 4
        %v1489 = vshll.u32 %v1446, 16
        %v1491 = vrot.slane %v1489, 5
        %v1492 = vor.u32 %v1488, %v1491
        %v1493 = vrot.slane %v1492, 4
        %v1495 = vshll.u32 %v1447, 16
        %v1497 = vrot.slane %v1495, 5
        %v1498 = vsel %vm1484, %v1493, %v1497
        %v1500 = vshrl.u32 %v1448, 16
        %v1502 = vrot.slane %v1500, 4
        %v1503 = vshll.u32 %v1448, 16
        %v1505 = vrot.slane %v1503, 5
        %v1506 = vor.u32 %v1502, %v1505
        %v1507 = vrot.slane %v1506, 4
        %v1509 = vshll.u32 %v1449, 16
        %v1511 = vrot.slane %v1509, 5
        %v1512 = vsel %vm1484, %v1507, %v1511
        %v1514 = vshrl.u32 %v1450, 16
        %v1516 = vrot.slane %v1514, 4
        %v1517 = vshll.u32 %v1450, 16
        %v1519 = vrot.slane %v1517, 5
        %v1520 = vor.u32 %v1516, %v1519
        %v1521 = vrot.slane %v1520, 4
        %v1523 = vshll.u32 %v1451, 16
        %v1525 = vrot.slane %v1523, 5
        %v1526 = vsel %vm1484, %v1521, %v1525
        %v1528 = vshrl.u32 %v1452, 16
        %v1530 = vrot.slane %v1528, 4
        %v1531 = vshll.u32 %v1452, 16
        %v1533 = vrot.slane %v1531, 5
        %v1534 = vor.u32 %v1530, %v1533
        %v1535 = vrot.slane %v1534, 4
        %v1537 = vshll.u32 %v1453, 16
        %v1539 = vrot.slane %v1537, 5
        %v1540 = vsel %vm1484, %v1535, %v1539
        %v1542 = vshrl.u32 %v1454, 16
        %v1544 = vrot.slane %v1542, 4
        %v1545 = vshll.u32 %v1454, 16
        %v1547 = vrot.slane %v1545, 5
        %v1548 = vor.u32 %v1544, %v1547
        %v1549 = vrot.slane %v1548, 4
        %v1551 = vshll.u32 %v1455, 16
        %v1553 = vrot.slane %v1551, 5
        %v1554 = vsel %vm1484, %v1549, %v1553
        %v1556 = vshrl.u32 %v1456, 16
        %v1558 = vrot.slane %v1556, 4
        %v1559 = vshll.u32 %v1456, 16
        %v1561 = vrot.slane %v1559, 5
        %v1562 = vor.u32 %v1558, %v1561
        %v1563 = vrot.slane %v1562, 4
        %v1565 = vshll.u32 %v1457, 16
        %v1567 = vrot.slane %v1565, 5
        %v1568 = vsel %vm1484, %v1563, %v1567
        %v1570 = vshrl.u32 %v1458, 16
        %v1572 = vrot.slane %v1570, 4
        %v1573 = vshll.u32 %v1458, 16
        %v1575 = vrot.slane %v1573, 5
        %v1576 = vor.u32 %v1572, %v1575
        %v1577 = vrot.slane %v1576, 4
        %v1579 = vshll.u32 %v1459, 16
        %v1581 = vrot.slane %v1579, 5
        %v1582 = vsel %vm1484, %v1577, %v1581
        %v1584 = vshrl.u32 %v1460, 16
        %v1586 = vrot.slane %v1584, 4
        %v1587 = vshll.u32 %v1460, 16
        %v1589 = vrot.slane %v1587, 5
        %v1590 = vor.u32 %v1586, %v1589
        %v1591 = vrot.slane %v1590, 4
        %v1593 = vshll.u32 %v1461, 16
        %v1595 = vrot.slane %v1593, 5
        %v1596 = vsel %vm1484, %v1591, %v1595
        %v1598 = vshrl.u32 %v1462, 16
        %v1600 = vrot.slane %v1598, 4
        %v1601 = vshll.u32 %v1462, 16
        %v1603 = vrot.slane %v1601, 5
        %v1604 = vor.u32 %v1600, %v1603
        %v1605 = vrot.slane %v1604, 4
        %v1607 = vshll.u32 %v1463, 16
        %v1609 = vrot.slane %v1607, 5
        %v1610 = vsel %vm1484, %v1605, %v1609
        %v1612 = vshrl.u32 %v1464, 16
        %v1614 = vrot.slane %v1612, 4
        %v1615 = vshll.u32 %v1464, 16
        %v1617 = vrot.slane %v1615, 5
        %v1618 = vor.u32 %v1614, %v1617
        %v1619 = vrot.slane %v1618, 4
        %v1621 = vshll.u32 %v1465, 16
        %v1623 = vrot.slane %v1621, 5
        %v1624 = vsel %vm1484, %v1619, %v1623
        %v1626 = vshrl.u32 %v1466, 16
        %v1628 = vrot.slane %v1626, 4
        %v1629 = vshll.u32 %v1466, 16
        %v1631 = vrot.slane %v1629, 5
        %v1632 = vor.u32 %v1628, %v1631
        %v1633 = vrot.slane %v1632, 4
        %v1635 = vshll.u32 %v1467, 16
        %v1637 = vrot.slane %v1635, 5
        %v1638 = vsel %vm1484, %v1633, %v1637
        %v1640 = vshrl.u32 %v1468, 16
        %v1642 = vrot.slane %v1640, 4
        %v1643 = vshll.u32 %v1468, 16
        %v1645 = vrot.slane %v1643, 5
        %v1646 = vor.u32 %v1642, %v1645
        %v1647 = vrot.slane %v1646, 4
        %v1649 = vshll.u32 %v1469, 16
        %v1651 = vrot.slane %v1649, 5
        %v1652 = vsel %vm1484, %v1647, %v1651
        %v1654 = vshrl.u32 %v1470, 16
        %v1656 = vrot.slane %v1654, 4
        %v1657 = vshll.u32 %v1470, 16
        %v1659 = vrot.slane %v1657, 5
        %v1660 = vor.u32 %v1656, %v1659
        %v1661 = vrot.slane %v1660, 4
        %v1663 = vshll.u32 %v1471, 16
        %v1665 = vrot.slane %v1663, 5
        %v1666 = vsel %vm1484, %v1661, %v1665
        %v1668 = vshrl.u32 %v1472, 16
        %v1670 = vrot.slane %v1668, 4
        %v1671 = vshll.u32 %v1472, 16
        %v1673 = vrot.slane %v1671, 5
        %v1674 = vor.u32 %v1670, %v1673
        %v1675 = vrot.slane %v1674, 4
        %v1677 = vshll.u32 %v1473, 16
        %v1679 = vrot.slane %v1677, 5
        %v1680 = vsel %vm1484, %v1675, %v1679
        %v1682 = vshrl.u32 %v1474, 16
        %v1684 = vrot.slane %v1682, 4
        %v1685 = vshll.u32 %v1474, 16
        %v1687 = vrot.slane %v1685, 5
        %v1688 = vor.u32 %v1684, %v1687
        %v1689 = vrot.slane %v1688, 4
        %v1691 = vshll.u32 %v1475, 16
        %v1693 = vrot.slane %v1691, 5
        %v1694 = vsel %vm1484, %v1689, %v1693
        %v1696 = vshrl.u32 %v1476, 16
        %v1698 = vrot.slane %v1696, 4
        %v1699 = vshll.u32 %v1476, 16
        %v1701 = vrot.slane %v1699, 5
        %v1702 = vor.u32 %v1698, %v1701
        %v1703 = vrot.slane %v1702, 4
        %v1705 = vshll.u32 %v1477, 16
        %v1707 = vrot.slane %v1705, 5
        %v1708 = vsel %vm1484, %v1703, %v1707
        %v1710 = vshrl.u32 %v1478, 16
        %v1712 = vrot.slane %v1710, 4
        %v1713 = vshll.u32 %v1478, 16
        %v1715 = vrot.slane %v1713, 5
        %v1716 = vor.u32 %v1712, %v1715
        %v1717 = vrot.slane %v1716, 4
        %v1719 = vshll.u32 %v1479, 16
        %v1721 = vrot.slane %v1719, 5
        %v1722 = vsel %vm1484, %v1717, %v1721
        %v1724 = vshrl.u32 %v1480, 16
        %v1726 = vrot.slane %v1724, 4
        %v1727 = vshll.u32 %v1480, 16
        %v1729 = vrot.slane %v1727, 5
        %v1730 = vor.u32 %v1726, %v1729
        %v1731 = vrot.slane %v1730, 4
        %v1733 = vshll.u32 %v1481, 16
        %v1735 = vrot.slane %v1733, 5
        %v1736 = vsel %vm1484, %v1731, %v1735
        %1737 = vrot.lane.b32.xlu0 %v1498, 16
        %v1738 = vpop.permute.xlu0 %1737
        %1739 = vrot.lane.b32.xlu0 %v1512, 16
        %v1740 = vpop.permute.xlu0 %1739
        %1741 = vrot.lane.b32.xlu0 %v1526, 16
        %v1742 = vpop.permute.xlu0 %1741
        %1743 = vrot.lane.b32.xlu0 %v1540, 16
        %v1744 = vpop.permute.xlu0 %1743
        %1745 = vrot.lane.b32.xlu0 %v1554, 16
        %v1746 = vpop.permute.xlu0 %1745
        %1747 = vrot.lane.b32.xlu0 %v1568, 16
        %v1748 = vpop.permute.xlu0 %1747
        %1749 = vrot.lane.b32.xlu0 %v1582, 16
        %v1750 = vpop.permute.xlu0 %1749
        %1751 = vrot.lane.b32.xlu0 %v1596, 16
        %v1752 = vpop.permute.xlu0 %1751
        %1753 = vrot.lane.b32.xlu0 %v1610, 16
        %v1754 = vpop.permute.xlu0 %1753
        %1755 = vrot.lane.b32.xlu0 %v1624, 16
        %v1756 = vpop.permute.xlu0 %1755
        %1757 = vrot.lane.b32.xlu0 %v1638, 16
        %v1758 = vpop.permute.xlu0 %1757
        %1759 = vrot.lane.b32.xlu0 %v1652, 16
        %v1760 = vpop.permute.xlu0 %1759
        %1761 = vrot.lane.b32.xlu0 %v1666, 16
        %v1762 = vpop.permute.xlu0 %1761
        %1763 = vrot.lane.b32.xlu0 %v1680, 16
        %v1764 = vpop.permute.xlu0 %1763
        %1765 = vrot.lane.b32.xlu0 %v1694, 16
        %v1766 = vpop.permute.xlu0 %1765
        %1767 = vrot.lane.b32.xlu0 %v1708, 16
        %v1768 = vpop.permute.xlu0 %1767
        %1769 = vrot.lane.b32.xlu0 %v1722, 16
        %v1770 = vpop.permute.xlu0 %1769
        %1771 = vrot.lane.b32.xlu0 %v1736, 16
        %v1772 = vpop.permute.xlu0 %1771
        %vm1791 = vcmask 257152
        %1792 = vst.msk [vmem:[#allocation4] sm:$0xf] %vm1791, %v1738
        %1793 = vst.msk [vmem:[#allocation4 + $0x8] sm:$0xf] %vm1791, %v1740
        %1794 = vst.msk [vmem:[#allocation4 + $0x10] sm:$0xf] %vm1791, %v1742
        %1795 = vst.msk [vmem:[#allocation4 + $0x18] sm:$0xf] %vm1791, %v1744
        %1796 = vst.msk [vmem:[#allocation4 + $0x20] sm:$0xf] %vm1791, %v1746
        %1797 = vst.msk [vmem:[#allocation4 + $0x28] sm:$0xf] %vm1791, %v1748
        %1798 = vst.msk [vmem:[#allocation4 + $0x30] sm:$0xf] %vm1791, %v1750
        %1799 = vst.msk [vmem:[#allocation4 + $0x38] sm:$0xf] %vm1791, %v1752
        %1800 = vst.msk [vmem:[#allocation4 + $0x40] sm:$0xf] %vm1791, %v1754
        %1801 = vst.msk [vmem:[#allocation4 + $0x48] sm:$0xf] %vm1791, %v1756
        %1802 = vst.msk [vmem:[#allocation4 + $0x50] sm:$0xf] %vm1791, %v1758
        %1803 = vst.msk [vmem:[#allocation4 + $0x58] sm:$0xf] %vm1791, %v1760
        %1804 = vst.msk [vmem:[#allocation4 + $0x60] sm:$0xf] %vm1791, %v1762
        %1805 = vst.msk [vmem:[#allocation4 + $0x68] sm:$0xf] %vm1791, %v1764
        %1806 = vst.msk [vmem:[#allocation4 + $0x70] sm:$0xf] %vm1791, %v1766
        %1807 = vst.msk [vmem:[#allocation4 + $0x78] sm:$0xf] %vm1791, %v1768
        %1808 = vst.msk [vmem:[#allocation4 + $0x80] sm:$0xf] %vm1791, %v1770
        %1809 = vst.msk [vmem:[#allocation4 + $0x88] sm:$0xf] %vm1791, %v1772
        %v1810 = vld [vmem:[#allocation2] sm:$0xe]
        %v1811 = vld [vmem:[#allocation2 + $0x4] sm:$0x1]
        %v1812 = vld [vmem:[#allocation2 + $0xc] sm:$0xe]
        %v1813 = vld [vmem:[#allocation2 + $0x10] sm:$0x1]
        %v1814 = vld [vmem:[#allocation2 + $0x18] sm:$0xe]
        %v1815 = vld [vmem:[#allocation2 + $0x1c] sm:$0x1]
        %v1816 = vld [vmem:[#allocation2 + $0x24] sm:$0xe]
        %v1817 = vld [vmem:[#allocation2 + $0x28] sm:$0x1]
        %v1818 = vld [vmem:[#allocation2 + $0x30] sm:$0xe]
        %v1819 = vld [vmem:[#allocation2 + $0x34] sm:$0x1]
        %v1820 = vld [vmem:[#allocation2 + $0x3c] sm:$0xe]
        %v1821 = vld [vmem:[#allocation2 + $0x40] sm:$0x1]
        %v1822 = vld [vmem:[#allocation2 + $0x48] sm:$0xe]
        %v1823 = vld [vmem:[#allocation2 + $0x4c] sm:$0x1]
        %v1824 = vld [vmem:[#allocation2 + $0x54] sm:$0xe]
        %v1825 = vld [vmem:[#allocation2 + $0x58] sm:$0x1]
        %v1826 = vld [vmem:[#allocation2 + $0x60] sm:$0xe]
        %v1827 = vld [vmem:[#allocation2 + $0x64] sm:$0x1]
        %v1828 = vld [vmem:[#allocation2 + $0x6c] sm:$0xe]
        %v1829 = vld [vmem:[#allocation2 + $0x70] sm:$0x1]
        %v1830 = vld [vmem:[#allocation2 + $0x78] sm:$0xe]
        %v1831 = vld [vmem:[#allocation2 + $0x7c] sm:$0x1]
        %v1832 = vld [vmem:[#allocation2 + $0x84] sm:$0xe]
        %v1833 = vld [vmem:[#allocation2 + $0x88] sm:$0x1]
        %v1834 = vld [vmem:[#allocation2 + $0x90] sm:$0xe]
        %v1835 = vld [vmem:[#allocation2 + $0x94] sm:$0x1]
        %v1836 = vld [vmem:[#allocation2 + $0x9c] sm:$0xe]
        %v1837 = vld [vmem:[#allocation2 + $0xa0] sm:$0x1]
        %v1838 = vld [vmem:[#allocation2 + $0xa8] sm:$0xe]
        %v1839 = vld [vmem:[#allocation2 + $0xac] sm:$0x1]
        %v1840 = vld [vmem:[#allocation2 + $0xb4] sm:$0xe]
        %v1841 = vld [vmem:[#allocation2 + $0xb8] sm:$0x1]
        %v1842 = vld [vmem:[#allocation2 + $0xc0] sm:$0xe]
        %v1843 = vld [vmem:[#allocation2 + $0xc4] sm:$0x1]
        %v1844 = vld [vmem:[#allocation2 + $0xcc] sm:$0xe]
        %v1845 = vld [vmem:[#allocation2 + $0xd0] sm:$0x1]
        %vm1882 = vcmask 1042432
        %vm1883 = vcmask 1046532
        %vm1884 = vmor %vm1882, %vm1883
        %v1885 = vrot.slane %v1810, 5
        %v1886 = vrot.slane %v1885, 4
        %v1887 = vrot.slane %v1811, 5
        %v1888 = vsel %vm1884, %v1886, %v1887
        %v1889 = vrot.slane %v1812, 5
        %v1890 = vrot.slane %v1889, 4
        %v1891 = vrot.slane %v1813, 5
        %v1892 = vsel %vm1884, %v1890, %v1891
        %v1893 = vrot.slane %v1814, 5
        %v1894 = vrot.slane %v1893, 4
        %v1895 = vrot.slane %v1815, 5
        %v1896 = vsel %vm1884, %v1894, %v1895
        %v1897 = vrot.slane %v1816, 5
        %v1898 = vrot.slane %v1897, 4
        %v1899 = vrot.slane %v1817, 5
        %v1900 = vsel %vm1884, %v1898, %v1899
        %v1901 = vrot.slane %v1818, 5
        %v1902 = vrot.slane %v1901, 4
        %v1903 = vrot.slane %v1819, 5
        %v1904 = vsel %vm1884, %v1902, %v1903
        %v1905 = vrot.slane %v1820, 5
        %v1906 = vrot.slane %v1905, 4
        %v1907 = vrot.slane %v1821, 5
        %v1908 = vsel %vm1884, %v1906, %v1907
        %v1909 = vrot.slane %v1822, 5
        %v1910 = vrot.slane %v1909, 4
        %v1911 = vrot.slane %v1823, 5
        %v1912 = vsel %vm1884, %v1910, %v1911
        %v1913 = vrot.slane %v1824, 5
        %v1914 = vrot.slane %v1913, 4
        %v1915 = vrot.slane %v1825, 5
        %v1916 = vsel %vm1884, %v1914, %v1915
        %v1917 = vrot.slane %v1826, 5
        %v1918 = vrot.slane %v1917, 4
        %v1919 = vrot.slane %v1827, 5
        %v1920 = vsel %vm1884, %v1918, %v1919
        %v1921 = vrot.slane %v1828, 5
        %v1922 = vrot.slane %v1921, 4
        %v1923 = vrot.slane %v1829, 5
        %v1924 = vsel %vm1884, %v1922, %v1923
        %v1925 = vrot.slane %v1830, 5
        %v1926 = vrot.slane %v1925, 4
        %v1927 = vrot.slane %v1831, 5
        %v1928 = vsel %vm1884, %v1926, %v1927
        %v1929 = vrot.slane %v1832, 5
        %v1930 = vrot.slane %v1929, 4
        %v1931 = vrot.slane %v1833, 5
        %v1932 = vsel %vm1884, %v1930, %v1931
        %v1933 = vrot.slane %v1834, 5
        %v1934 = vrot.slane %v1933, 4
        %v1935 = vrot.slane %v1835, 5
        %v1936 = vsel %vm1884, %v1934, %v1935
        %v1937 = vrot.slane %v1836, 5
        %v1938 = vrot.slane %v1937, 4
        %v1939 = vrot.slane %v1837, 5
        %v1940 = vsel %vm1884, %v1938, %v1939
        %v1941 = vrot.slane %v1838, 5
        %v1942 = vrot.slane %v1941, 4
        %v1943 = vrot.slane %v1839, 5
        %v1944 = vsel %vm1884, %v1942, %v1943
        %v1945 = vrot.slane %v1840, 5
        %v1946 = vrot.slane %v1945, 4
        %v1947 = vrot.slane %v1841, 5
        %v1948 = vsel %vm1884, %v1946, %v1947
        %v1949 = vrot.slane %v1842, 5
        %v1950 = vrot.slane %v1949, 4
        %v1951 = vrot.slane %v1843, 5
        %v1952 = vsel %vm1884, %v1950, %v1951
        %v1953 = vrot.slane %v1844, 5
        %v1954 = vrot.slane %v1953, 4
        %v1955 = vrot.slane %v1845, 5
        %v1956 = vsel %vm1884, %v1954, %v1955
        %1957 = vrot.lane.b32.xlu0 %v1888, 32
        %v1958 = vpop.permute.xlu0 %1957
        %1959 = vrot.lane.b32.xlu0 %v1892, 32
        %v1960 = vpop.permute.xlu0 %1959
        %1961 = vrot.lane.b32.xlu0 %v1896, 32
        %v1962 = vpop.permute.xlu0 %1961
        %1963 = vrot.lane.b32.xlu0 %v1900, 32
        %v1964 = vpop.permute.xlu0 %1963
        %1965 = vrot.lane.b32.xlu0 %v1904, 32
        %v1966 = vpop.permute.xlu0 %1965
        %1967 = vrot.lane.b32.xlu0 %v1908, 32
        %v1968 = vpop.permute.xlu0 %1967
        %1969 = vrot.lane.b32.xlu0 %v1912, 32
        %v1970 = vpop.permute.xlu0 %1969
        %1971 = vrot.lane.b32.xlu0 %v1916, 32
        %v1972 = vpop.permute.xlu0 %1971
        %1973 = vrot.lane.b32.xlu0 %v1920, 32
        %v1974 = vpop.permute.xlu0 %1973
        %1975 = vrot.lane.b32.xlu0 %v1924, 32
        %v1976 = vpop.permute.xlu0 %1975
        %1977 = vrot.lane.b32.xlu0 %v1928, 32
        %v1978 = vpop.permute.xlu0 %1977
        %1979 = vrot.lane.b32.xlu0 %v1932, 32
        %v1980 = vpop.permute.xlu0 %1979
        %1981 = vrot.lane.b32.xlu0 %v1936, 32
        %v1982 = vpop.permute.xlu0 %1981
        %1983 = vrot.lane.b32.xlu0 %v1940, 32
        %v1984 = vpop.permute.xlu0 %1983
        %1985 = vrot.lane.b32.xlu0 %v1944, 32
        %v1986 = vpop.permute.xlu0 %1985
        %1987 = vrot.lane.b32.xlu0 %v1948, 32
        %v1988 = vpop.permute.xlu0 %1987
        %1989 = vrot.lane.b32.xlu0 %v1952, 32
        %v1990 = vpop.permute.xlu0 %1989
        %1991 = vrot.lane.b32.xlu0 %v1956, 32
        %v1992 = vpop.permute.xlu0 %1991
        %vm2011 = vcmask 388352
        %2012 = vst.msk [vmem:[#allocation4] sm:$0xf] %vm2011, %v1958
        %2013 = vst.msk [vmem:[#allocation4 + $0x8] sm:$0xf] %vm2011, %v1960
        %2014 = vst.msk [vmem:[#allocation4 + $0x10] sm:$0xf] %vm2011, %v1962
        %2015 = vst.msk [vmem:[#allocation4 + $0x18] sm:$0xf] %vm2011, %v1964
        %2016 = vst.msk [vmem:[#allocation4 + $0x20] sm:$0xf] %vm2011, %v1966
        %2017 = vst.msk [vmem:[#allocation4 + $0x28] sm:$0xf] %vm2011, %v1968
        %2018 = vst.msk [vmem:[#allocation4 + $0x30] sm:$0xf] %vm2011, %v1970
        %2019 = vst.msk [vmem:[#allocation4 + $0x38] sm:$0xf] %vm2011, %v1972
        %2020 = vst.msk [vmem:[#allocation4 + $0x40] sm:$0xf] %vm2011, %v1974
        %2021 = vst.msk [vmem:[#allocation4 + $0x48] sm:$0xf] %vm2011, %v1976
        %2022 = vst.msk [vmem:[#allocation4 + $0x50] sm:$0xf] %vm2011, %v1978
        %2023 = vst.msk [vmem:[#allocation4 + $0x58] sm:$0xf] %vm2011, %v1980
        %2024 = vst.msk [vmem:[#allocation4 + $0x60] sm:$0xf] %vm2011, %v1982
        %2025 = vst.msk [vmem:[#allocation4 + $0x68] sm:$0xf] %vm2011, %v1984
        %2026 = vst.msk [vmem:[#allocation4 + $0x70] sm:$0xf] %vm2011, %v1986
        %2027 = vst.msk [vmem:[#allocation4 + $0x78] sm:$0xf] %vm2011, %v1988
        %2028 = vst.msk [vmem:[#allocation4 + $0x80] sm:$0xf] %vm2011, %v1990
        %2029 = vst.msk [vmem:[#allocation4 + $0x88] sm:$0xf] %vm2011, %v1992
        %v2030 = vld [vmem:[#allocation2] sm:$0xe]
        %v2031 = vld [vmem:[#allocation2 + $0x4] sm:$0x3]
        %v2032 = vld [vmem:[#allocation2 + $0xc] sm:$0xe]
        %v2033 = vld [vmem:[#allocation2 + $0x10] sm:$0x3]
        %v2034 = vld [vmem:[#allocation2 + $0x18] sm:$0xe]
        %v2035 = vld [vmem:[#allocation2 + $0x1c] sm:$0x3]
        %v2036 = vld [vmem:[#allocation2 + $0x24] sm:$0xe]
        %v2037 = vld [vmem:[#allocation2 + $0x28] sm:$0x3]
        %v2038 = vld [vmem:[#allocation2 + $0x30] sm:$0xe]
        %v2039 = vld [vmem:[#allocation2 + $0x34] sm:$0x3]
        %v2040 = vld [vmem:[#allocation2 + $0x3c] sm:$0xe]
        %v2041 = vld [vmem:[#allocation2 + $0x40] sm:$0x3]
        %v2042 = vld [vmem:[#allocation2 + $0x48] sm:$0xe]
        %v2043 = vld [vmem:[#allocation2 + $0x4c] sm:$0x3]
        %v2044 = vld [vmem:[#allocation2 + $0x54] sm:$0xe]
        %v2045 = vld [vmem:[#allocation2 + $0x58] sm:$0x3]
        %v2046 = vld [vmem:[#allocation2 + $0x60] sm:$0xe]
        %v2047 = vld [vmem:[#allocation2 + $0x64] sm:$0x3]
        %v2048 = vld [vmem:[#allocation2 + $0x6c] sm:$0xe]
        %v2049 = vld [vmem:[#allocation2 + $0x70] sm:$0x3]
        %v2050 = vld [vmem:[#allocation2 + $0x78] sm:$0xe]
        %v2051 = vld [vmem:[#allocation2 + $0x7c] sm:$0x3]
        %v2052 = vld [vmem:[#allocation2 + $0x84] sm:$0xe]
        %v2053 = vld [vmem:[#allocation2 + $0x88] sm:$0x3]
        %v2054 = vld [vmem:[#allocation2 + $0x90] sm:$0xe]
        %v2055 = vld [vmem:[#allocation2 + $0x94] sm:$0x3]
        %v2056 = vld [vmem:[#allocation2 + $0x9c] sm:$0xe]
        %v2057 = vld [vmem:[#allocation2 + $0xa0] sm:$0x3]
        %v2058 = vld [vmem:[#allocation2 + $0xa8] sm:$0xe]
        %v2059 = vld [vmem:[#allocation2 + $0xac] sm:$0x3]
        %v2060 = vld [vmem:[#allocation2 + $0xb4] sm:$0xe]
        %v2061 = vld [vmem:[#allocation2 + $0xb8] sm:$0x3]
        %v2062 = vld [vmem:[#allocation2 + $0xc0] sm:$0xe]
        %v2063 = vld [vmem:[#allocation2 + $0xc4] sm:$0x3]
        %v2064 = vld [vmem:[#allocation2 + $0xcc] sm:$0xe]
        %v2065 = vld [vmem:[#allocation2 + $0xd0] sm:$0x3]
        %vm2066 = vsmask.f32 6416
        %vm2067 = vmor %vm259, %vm2066
        %v2069 = vshrl.u32 %v2030, 16
        %v2071 = vrot.slane %v2069, 5
        %v2072 = vshll.u32 %v2030, 16
        %v2074 = vrot.slane %v2072, 6
        %v2075 = vor.u32 %v2071, %v2074
        %v2076 = vrot.slane %v2075, 4
        %v2078 = vshrl.u32 %v2031, 16
        %v2080 = vrot.slane %v2078, 5
        %v2081 = vshll.u32 %v2031, 16
        %v2083 = vrot.slane %v2081, 6
        %v2084 = vor.u32 %v2080, %v2083
        %v2085 = vsel %vm2067, %v2076, %v2084
        %v2087 = vshrl.u32 %v2032, 16
        %v2089 = vrot.slane %v2087, 5
        %v2090 = vshll.u32 %v2032, 16
        %v2092 = vrot.slane %v2090, 6
        %v2093 = vor.u32 %v2089, %v2092
        %v2094 = vrot.slane %v2093, 4
        %v2096 = vshrl.u32 %v2033, 16
        %v2098 = vrot.slane %v2096, 5
        %v2099 = vshll.u32 %v2033, 16
        %v2101 = vrot.slane %v2099, 6
        %v2102 = vor.u32 %v2098, %v2101
        %v2103 = vsel %vm2067, %v2094, %v2102
        %v2105 = vshrl.u32 %v2034, 16
        %v2107 = vrot.slane %v2105, 5
        %v2108 = vshll.u32 %v2034, 16
        %v2110 = vrot.slane %v2108, 6
        %v2111 = vor.u32 %v2107, %v2110
        %v2112 = vrot.slane %v2111, 4
        %v2114 = vshrl.u32 %v2035, 16
        %v2116 = vrot.slane %v2114, 5
        %v2117 = vshll.u32 %v2035, 16
        %v2119 = vrot.slane %v2117, 6
        %v2120 = vor.u32 %v2116, %v2119
        %v2121 = vsel %vm2067, %v2112, %v2120
        %v2123 = vshrl.u32 %v2036, 16
        %v2125 = vrot.slane %v2123, 5
        %v2126 = vshll.u32 %v2036, 16
        %v2128 = vrot.slane %v2126, 6
        %v2129 = vor.u32 %v2125, %v2128
        %v2130 = vrot.slane %v2129, 4
        %v2132 = vshrl.u32 %v2037, 16
        %v2134 = vrot.slane %v2132, 5
        %v2135 = vshll.u32 %v2037, 16
        %v2137 = vrot.slane %v2135, 6
        %v2138 = vor.u32 %v2134, %v2137
        %v2139 = vsel %vm2067, %v2130, %v2138
        %v2141 = vshrl.u32 %v2038, 16
        %v2143 = vrot.slane %v2141, 5
        %v2144 = vshll.u32 %v2038, 16
        %v2146 = vrot.slane %v2144, 6
        %v2147 = vor.u32 %v2143, %v2146
        %v2148 = vrot.slane %v2147, 4
        %v2150 = vshrl.u32 %v2039, 16
        %v2152 = vrot.slane %v2150, 5
        %v2153 = vshll.u32 %v2039, 16
        %v2155 = vrot.slane %v2153, 6
        %v2156 = vor.u32 %v2152, %v2155
        %v2157 = vsel %vm2067, %v2148, %v2156
        %v2159 = vshrl.u32 %v2040, 16
        %v2161 = vrot.slane %v2159, 5
        %v2162 = vshll.u32 %v2040, 16
        %v2164 = vrot.slane %v2162, 6
        %v2165 = vor.u32 %v2161, %v2164
        %v2166 = vrot.slane %v2165, 4
        %v2168 = vshrl.u32 %v2041, 16
        %v2170 = vrot.slane %v2168, 5
        %v2171 = vshll.u32 %v2041, 16
        %v2173 = vrot.slane %v2171, 6
        %v2174 = vor.u32 %v2170, %v2173
        %v2175 = vsel %vm2067, %v2166, %v2174
        %v2177 = vshrl.u32 %v2042, 16
        %v2179 = vrot.slane %v2177, 5
        %v2180 = vshll.u32 %v2042, 16
        %v2182 = vrot.slane %v2180, 6
        %v2183 = vor.u32 %v2179, %v2182
        %v2184 = vrot.slane %v2183, 4
        %v2186 = vshrl.u32 %v2043, 16
        %v2188 = vrot.slane %v2186, 5
        %v2189 = vshll.u32 %v2043, 16
        %v2191 = vrot.slane %v2189, 6
        %v2192 = vor.u32 %v2188, %v2191
        %v2193 = vsel %vm2067, %v2184, %v2192
        %v2195 = vshrl.u32 %v2044, 16
        %v2197 = vrot.slane %v2195, 5
        %v2198 = vshll.u32 %v2044, 16
        %v2200 = vrot.slane %v2198, 6
        %v2201 = vor.u32 %v2197, %v2200
        %v2202 = vrot.slane %v2201, 4
        %v2204 = vshrl.u32 %v2045, 16
        %v2206 = vrot.slane %v2204, 5
        %v2207 = vshll.u32 %v2045, 16
        %v2209 = vrot.slane %v2207, 6
        %v2210 = vor.u32 %v2206, %v2209
        %v2211 = vsel %vm2067, %v2202, %v2210
        %v2213 = vshrl.u32 %v2046, 16
        %v2215 = vrot.slane %v2213, 5
        %v2216 = vshll.u32 %v2046, 16
        %v2218 = vrot.slane %v2216, 6
        %v2219 = vor.u32 %v2215, %v2218
        %v2220 = vrot.slane %v2219, 4
        %v2222 = vshrl.u32 %v2047, 16
        %v2224 = vrot.slane %v2222, 5
        %v2225 = vshll.u32 %v2047, 16
        %v2227 = vrot.slane %v2225, 6
        %v2228 = vor.u32 %v2224, %v2227
        %v2229 = vsel %vm2067, %v2220, %v2228
        %v2231 = vshrl.u32 %v2048, 16
        %v2233 = vrot.slane %v2231, 5
        %v2234 = vshll.u32 %v2048, 16
        %v2236 = vrot.slane %v2234, 6
        %v2237 = vor.u32 %v2233, %v2236
        %v2238 = vrot.slane %v2237, 4
        %v2240 = vshrl.u32 %v2049, 16
        %v2242 = vrot.slane %v2240, 5
        %v2243 = vshll.u32 %v2049, 16
        %v2245 = vrot.slane %v2243, 6
        %v2246 = vor.u32 %v2242, %v2245
        %v2247 = vsel %vm2067, %v2238, %v2246
        %v2249 = vshrl.u32 %v2050, 16
        %v2251 = vrot.slane %v2249, 5
        %v2252 = vshll.u32 %v2050, 16
        %v2254 = vrot.slane %v2252, 6
        %v2255 = vor.u32 %v2251, %v2254
        %v2256 = vrot.slane %v2255, 4
        %v2258 = vshrl.u32 %v2051, 16
        %v2260 = vrot.slane %v2258, 5
        %v2261 = vshll.u32 %v2051, 16
        %v2263 = vrot.slane %v2261, 6
        %v2264 = vor.u32 %v2260, %v2263
        %v2265 = vsel %vm2067, %v2256, %v2264
        %v2267 = vshrl.u32 %v2052, 16
        %v2269 = vrot.slane %v2267, 5
        %v2270 = vshll.u32 %v2052, 16
        %v2272 = vrot.slane %v2270, 6
        %v2273 = vor.u32 %v2269, %v2272
        %v2274 = vrot.slane %v2273, 4
        %v2276 = vshrl.u32 %v2053, 16
        %v2278 = vrot.slane %v2276, 5
        %v2279 = vshll.u32 %v2053, 16
        %v2281 = vrot.slane %v2279, 6
        %v2282 = vor.u32 %v2278, %v2281
        %v2283 = vsel %vm2067, %v2274, %v2282
        %v2285 = vshrl.u32 %v2054, 16
        %v2287 = vrot.slane %v2285, 5
        %v2288 = vshll.u32 %v2054, 16
        %v2290 = vrot.slane %v2288, 6
        %v2291 = vor.u32 %v2287, %v2290
        %v2292 = vrot.slane %v2291, 4
        %v2294 = vshrl.u32 %v2055, 16
        %v2296 = vrot.slane %v2294, 5
        %v2297 = vshll.u32 %v2055, 16
        %v2299 = vrot.slane %v2297, 6
        %v2300 = vor.u32 %v2296, %v2299
        %v2301 = vsel %vm2067, %v2292, %v2300
        %v2303 = vshrl.u32 %v2056, 16
        %v2305 = vrot.slane %v2303, 5
        %v2306 = vshll.u32 %v2056, 16
        %v2308 = vrot.slane %v2306, 6
        %v2309 = vor.u32 %v2305, %v2308
        %v2310 = vrot.slane %v2309, 4
        %v2312 = vshrl.u32 %v2057, 16
        %v2314 = vrot.slane %v2312, 5
        %v2315 = vshll.u32 %v2057, 16
        %v2317 = vrot.slane %v2315, 6
        %v2318 = vor.u32 %v2314, %v2317
        %v2319 = vsel %vm2067, %v2310, %v2318
        %v2321 = vshrl.u32 %v2058, 16
        %v2323 = vrot.slane %v2321, 5
        %v2324 = vshll.u32 %v2058, 16
        %v2326 = vrot.slane %v2324, 6
        %v2327 = vor.u32 %v2323, %v2326
        %v2328 = vrot.slane %v2327, 4
        %v2330 = vshrl.u32 %v2059, 16
        %v2332 = vrot.slane %v2330, 5
        %v2333 = vshll.u32 %v2059, 16
        %v2335 = vrot.slane %v2333, 6
        %v2336 = vor.u32 %v2332, %v2335
        %v2337 = vsel %vm2067, %v2328, %v2336
        %v2339 = vshrl.u32 %v2060, 16
        %v2341 = vrot.slane %v2339, 5
        %v2342 = vshll.u32 %v2060, 16
        %v2344 = vrot.slane %v2342, 6
        %v2345 = vor.u32 %v2341, %v2344
        %v2346 = vrot.slane %v2345, 4
        %v2348 = vshrl.u32 %v2061, 16
        %v2350 = vrot.slane %v2348, 5
        %v2351 = vshll.u32 %v2061, 16
        %v2353 = vrot.slane %v2351, 6
        %v2354 = vor.u32 %v2350, %v2353
        %v2355 = vsel %vm2067, %v2346, %v2354
        %v2357 = vshrl.u32 %v2062, 16
        %v2359 = vrot.slane %v2357, 5
        %v2360 = vshll.u32 %v2062, 16
        %v2362 = vrot.slane %v2360, 6
        %v2363 = vor.u32 %v2359, %v2362
        %v2364 = vrot.slane %v2363, 4
        %v2366 = vshrl.u32 %v2063, 16
        %v2368 = vrot.slane %v2366, 5
        %v2369 = vshll.u32 %v2063, 16
        %v2371 = vrot.slane %v2369, 6
        %v2372 = vor.u32 %v2368, %v2371
        %v2373 = vsel %vm2067, %v2364, %v2372
        %v2375 = vshrl.u32 %v2064, 16
        %v2377 = vrot.slane %v2375, 5
        %v2378 = vshll.u32 %v2064, 16
        %v2380 = vrot.slane %v2378, 6
        %v2381 = vor.u32 %v2377, %v2380
        %v2382 = vrot.slane %v2381, 4
        %v2384 = vshrl.u32 %v2065, 16
        %v2386 = vrot.slane %v2384, 5
        %v2387 = vshll.u32 %v2065, 16
        %v2389 = vrot.slane %v2387, 6
        %v2390 = vor.u32 %v2386, %v2389
        %v2391 = vsel %vm2067, %v2382, %v2390
        %2392 = vrot.lane.b32.xlu0 %v2085, 48
        %v2393 = vpop.permute.xlu0 %2392
        %2394 = vrot.lane.b32.xlu0 %v2103, 48
        %v2395 = vpop.permute.xlu0 %2394
        %2396 = vrot.lane.b32.xlu0 %v2121, 48
        %v2397 = vpop.permute.xlu0 %2396
        %2398 = vrot.lane.b32.xlu0 %v2139, 48
        %v2399 = vpop.permute.xlu0 %2398
        %2400 = vrot.lane.b32.xlu0 %v2157, 48
        %v2401 = vpop.permute.xlu0 %2400
        %2402 = vrot.lane.b32.xlu0 %v2175, 48
        %v2403 = vpop.permute.xlu0 %2402
        %2404 = vrot.lane.b32.xlu0 %v2193, 48
        %v2405 = vpop.permute.xlu0 %2404
        %2406 = vrot.lane.b32.xlu0 %v2211, 48
        %v2407 = vpop.permute.xlu0 %2406
        %2408 = vrot.lane.b32.xlu0 %v2229, 48
        %v2409 = vpop.permute.xlu0 %2408
        %2410 = vrot.lane.b32.xlu0 %v2247, 48
        %v2411 = vpop.permute.xlu0 %2410
        %2412 = vrot.lane.b32.xlu0 %v2265, 48
        %v2413 = vpop.permute.xlu0 %2412
        %2414 = vrot.lane.b32.xlu0 %v2283, 48
        %v2415 = vpop.permute.xlu0 %2414
        %2416 = vrot.lane.b32.xlu0 %v2301, 48
        %v2417 = vpop.permute.xlu0 %2416
        %2418 = vrot.lane.b32.xlu0 %v2319, 48
        %v2419 = vpop.permute.xlu0 %2418
        %2420 = vrot.lane.b32.xlu0 %v2337, 48
        %v2421 = vpop.permute.xlu0 %2420
        %2422 = vrot.lane.b32.xlu0 %v2355, 48
        %v2423 = vpop.permute.xlu0 %2422
        %2424 = vrot.lane.b32.xlu0 %v2373, 48
        %v2425 = vpop.permute.xlu0 %2424
        %2426 = vrot.lane.b32.xlu0 %v2391, 48
        %v2427 = vpop.permute.xlu0 %2426
        %vm2446 = vcmask 519552
        %2447 = vst.msk [vmem:[#allocation4] sm:$0xf] %vm2446, %v2393
        %2448 = vst.msk [vmem:[#allocation4 + $0x8] sm:$0xf] %vm2446, %v2395
        %2449 = vst.msk [vmem:[#allocation4 + $0x10] sm:$0xf] %vm2446, %v2397
        %2450 = vst.msk [vmem:[#allocation4 + $0x18] sm:$0xf] %vm2446, %v2399
        %2451 = vst.msk [vmem:[#allocation4 + $0x20] sm:$0xf] %vm2446, %v2401
        %2452 = vst.msk [vmem:[#allocation4 + $0x28] sm:$0xf] %vm2446, %v2403
        %2453 = vst.msk [vmem:[#allocation4 + $0x30] sm:$0xf] %vm2446, %v2405
        %2454 = vst.msk [vmem:[#allocation4 + $0x38] sm:$0xf] %vm2446, %v2407
        %2455 = vst.msk [vmem:[#allocation4 + $0x40] sm:$0xf] %vm2446, %v2409
        %2456 = vst.msk [vmem:[#allocation4 + $0x48] sm:$0xf] %vm2446, %v2411
        %2457 = vst.msk [vmem:[#allocation4 + $0x50] sm:$0xf] %vm2446, %v2413
        %2458 = vst.msk [vmem:[#allocation4 + $0x58] sm:$0xf] %vm2446, %v2415
        %2459 = vst.msk [vmem:[#allocation4 + $0x60] sm:$0xf] %vm2446, %v2417
        %2460 = vst.msk [vmem:[#allocation4 + $0x68] sm:$0xf] %vm2446, %v2419
        %2461 = vst.msk [vmem:[#allocation4 + $0x70] sm:$0xf] %vm2446, %v2421
        %2462 = vst.msk [vmem:[#allocation4 + $0x78] sm:$0xf] %vm2446, %v2423
        %2463 = vst.msk [vmem:[#allocation4 + $0x80] sm:$0xf] %vm2446, %v2425
        %2464 = vst.msk [vmem:[#allocation4 + $0x88] sm:$0xf] %vm2446, %v2427
        %v2465 = vld [vmem:[#allocation2] sm:$0xc]
        %v2466 = vld [vmem:[#allocation2 + $0x4] sm:$0x3]
        %v2467 = vld [vmem:[#allocation2 + $0xc] sm:$0xc]
        %v2468 = vld [vmem:[#allocation2 + $0x10] sm:$0x3]
        %v2469 = vld [vmem:[#allocation2 + $0x18] sm:$0xc]
        %v2470 = vld [vmem:[#allocation2 + $0x1c] sm:$0x3]
        %v2471 = vld [vmem:[#allocation2 + $0x24] sm:$0xc]
        %v2472 = vld [vmem:[#allocation2 + $0x28] sm:$0x3]
        %v2473 = vld [vmem:[#allocation2 + $0x30] sm:$0xc]
        %v2474 = vld [vmem:[#allocation2 + $0x34] sm:$0x3]
        %v2475 = vld [vmem:[#allocation2 + $0x3c] sm:$0xc]
        %v2476 = vld [vmem:[#allocation2 + $0x40] sm:$0x3]
        %v2477 = vld [vmem:[#allocation2 + $0x48] sm:$0xc]
        %v2478 = vld [vmem:[#allocation2 + $0x4c] sm:$0x3]
        %v2479 = vld [vmem:[#allocation2 + $0x54] sm:$0xc]
        %v2480 = vld [vmem:[#allocation2 + $0x58] sm:$0x3]
        %v2481 = vld [vmem:[#allocation2 + $0x60] sm:$0xc]
        %v2482 = vld [vmem:[#allocation2 + $0x64] sm:$0x3]
        %v2483 = vld [vmem:[#allocation2 + $0x6c] sm:$0xc]
        %v2484 = vld [vmem:[#allocation2 + $0x70] sm:$0x3]
        %v2485 = vld [vmem:[#allocation2 + $0x78] sm:$0xc]
        %v2486 = vld [vmem:[#allocation2 + $0x7c] sm:$0x3]
        %v2487 = vld [vmem:[#allocation2 + $0x84] sm:$0xc]
        %v2488 = vld [vmem:[#allocation2 + $0x88] sm:$0x3]
        %v2489 = vld [vmem:[#allocation2 + $0x90] sm:$0xc]
        %v2490 = vld [vmem:[#allocation2 + $0x94] sm:$0x3]
        %v2491 = vld [vmem:[#allocation2 + $0x9c] sm:$0xc]
        %v2492 = vld [vmem:[#allocation2 + $0xa0] sm:$0x3]
        %v2493 = vld [vmem:[#allocation2 + $0xa8] sm:$0xc]
        %v2494 = vld [vmem:[#allocation2 + $0xac] sm:$0x3]
        %v2495 = vld [vmem:[#allocation2 + $0xb4] sm:$0xc]
        %v2496 = vld [vmem:[#allocation2 + $0xb8] sm:$0x3]
        %v2497 = vld [vmem:[#allocation2 + $0xc0] sm:$0xc]
        %v2498 = vld [vmem:[#allocation2 + $0xc4] sm:$0x3]
        %v2499 = vld [vmem:[#allocation2 + $0xcc] sm:$0xc]
        %v2500 = vld [vmem:[#allocation2 + $0xd0] sm:$0x3]
        %vm2537 = vcmask 1041408
        %vm2538 = vcmask 1045508
        %vm2539 = vmor %vm2537, %vm2538
        %v2540 = vrot.slane %v2465, 6
        %v2541 = vrot.slane %v2540, 4
        %v2542 = vrot.slane %v2466, 6
        %v2543 = vsel %vm2539, %v2541, %v2542
        %v2544 = vrot.slane %v2467, 6
        %v2545 = vrot.slane %v2544, 4
        %v2546 = vrot.slane %v2468, 6
        %v2547 = vsel %vm2539, %v2545, %v2546
        %v2548 = vrot.slane %v2469, 6
        %v2549 = vrot.slane %v2548, 4
        %v2550 = vrot.slane %v2470, 6
        %v2551 = vsel %vm2539, %v2549, %v2550
        %v2552 = vrot.slane %v2471, 6
        %v2553 = vrot.slane %v2552, 4
        %v2554 = vrot.slane %v2472, 6
        %v2555 = vsel %vm2539, %v2553, %v2554
        %v2556 = vrot.slane %v2473, 6
        %v2557 = vrot.slane %v2556, 4
        %v2558 = vrot.slane %v2474, 6
        %v2559 = vsel %vm2539, %v2557, %v2558
        %v2560 = vrot.slane %v2475, 6
        %v2561 = vrot.slane %v2560, 4
        %v2562 = vrot.slane %v2476, 6
        %v2563 = vsel %vm2539, %v2561, %v2562
        %v2564 = vrot.slane %v2477, 6
        %v2565 = vrot.slane %v2564, 4
        %v2566 = vrot.slane %v2478, 6
        %v2567 = vsel %vm2539, %v2565, %v2566
        %v2568 = vrot.slane %v2479, 6
        %v2569 = vrot.slane %v2568, 4
        %v2570 = vrot.slane %v2480, 6
        %v2571 = vsel %vm2539, %v2569, %v2570
        %v2572 = vrot.slane %v2481, 6
        %v2573 = vrot.slane %v2572, 4
        %v2574 = vrot.slane %v2482, 6
        %v2575 = vsel %vm2539, %v2573, %v2574
        %v2576 = vrot.slane %v2483, 6
        %v2577 = vrot.slane %v2576, 4
        %v2578 = vrot.slane %v2484, 6
        %v2579 = vsel %vm2539, %v2577, %v2578
        %v2580 = vrot.slane %v2485, 6
        %v2581 = vrot.slane %v2580, 4
        %v2582 = vrot.slane %v2486, 6
        %v2583 = vsel %vm2539, %v2581, %v2582
        %v2584 = vrot.slane %v2487, 6
        %v2585 = vrot.slane %v2584, 4
        %v2586 = vrot.slane %v2488, 6
        %v2587 = vsel %vm2539, %v2585, %v2586
        %v2588 = vrot.slane %v2489, 6
        %v2589 = vrot.slane %v2588, 4
        %v2590 = vrot.slane %v2490, 6
        %v2591 = vsel %vm2539, %v2589, %v2590
        %v2592 = vrot.slane %v2491, 6
        %v2593 = vrot.slane %v2592, 4
        %v2594 = vrot.slane %v2492, 6
        %v2595 = vsel %vm2539, %v2593, %v2594
        %v2596 = vrot.slane %v2493, 6
        %v2597 = vrot.slane %v2596, 4
        %v2598 = vrot.slane %v2494, 6
        %v2599 = vsel %vm2539, %v2597, %v2598
        %v2600 = vrot.slane %v2495, 6
        %v2601 = vrot.slane %v2600, 4
        %v2602 = vrot.slane %v2496, 6
        %v2603 = vsel %vm2539, %v2601, %v2602
        %v2604 = vrot.slane %v2497, 6
        %v2605 = vrot.slane %v2604, 4
        %v2606 = vrot.slane %v2498, 6
        %v2607 = vsel %vm2539, %v2605, %v2606
        %v2608 = vrot.slane %v2499, 6
        %v2609 = vrot.slane %v2608, 4
        %v2610 = vrot.slane %v2500, 6
        %v2611 = vsel %vm2539, %v2609, %v2610
        %2612 = vrot.lane.b32.xlu0 %v2543, 64
        %v2613 = vpop.permute.xlu0 %2612
        %2614 = vrot.lane.b32.xlu0 %v2547, 64
        %v2615 = vpop.permute.xlu0 %2614
        %2616 = vrot.lane.b32.xlu0 %v2551, 64
        %v2617 = vpop.permute.xlu0 %2616
        %2618 = vrot.lane.b32.xlu0 %v2555, 64
        %v2619 = vpop.permute.xlu0 %2618
        %2620 = vrot.lane.b32.xlu0 %v2559, 64
        %v2621 = vpop.permute.xlu0 %2620
        %2622 = vrot.lane.b32.xlu0 %v2563, 64
        %v2623 = vpop.permute.xlu0 %2622
        %2624 = vrot.lane.b32.xlu0 %v2567, 64
        %v2625 = vpop.permute.xlu0 %2624
        %2626 = vrot.lane.b32.xlu0 %v2571, 64
        %v2627 = vpop.permute.xlu0 %2626
        %2628 = vrot.lane.b32.xlu0 %v2575, 64
        %v2629 = vpop.permute.xlu0 %2628
        %2630 = vrot.lane.b32.xlu0 %v2579, 64
        %v2631 = vpop.permute.xlu0 %2630
        %2632 = vrot.lane.b32.xlu0 %v2583, 64
        %v2633 = vpop.permute.xlu0 %2632
        %2634 = vrot.lane.b32.xlu0 %v2587, 64
        %v2635 = vpop.permute.xlu0 %2634
        %2636 = vrot.lane.b32.xlu0 %v2591, 64
        %v2637 = vpop.permute.xlu0 %2636
        %2638 = vrot.lane.b32.xlu0 %v2595, 64
        %v2639 = vpop.permute.xlu0 %2638
        %2640 = vrot.lane.b32.xlu0 %v2599, 64
        %v2641 = vpop.permute.xlu0 %2640
        %2642 = vrot.lane.b32.xlu0 %v2603, 64
        %v2643 = vpop.permute.xlu0 %2642
        %2644 = vrot.lane.b32.xlu0 %v2607, 64
        %v2645 = vpop.permute.xlu0 %2644
        %2646 = vrot.lane.b32.xlu0 %v2611, 64
        %v2647 = vpop.permute.xlu0 %2646
        %vm2666 = vcmask 650752
        %2667 = vst.msk [vmem:[#allocation4] sm:$0xf] %vm2666, %v2613
        %2668 = vst.msk [vmem:[#allocation4 + $0x8] sm:$0xf] %vm2666, %v2615
        %2669 = vst.msk [vmem:[#allocation4 + $0x10] sm:$0xf] %vm2666, %v2617
        %2670 = vst.msk [vmem:[#allocation4 + $0x18] sm:$0xf] %vm2666, %v2619
        %2671 = vst.msk [vmem:[#allocation4 + $0x20] sm:$0xf] %vm2666, %v2621
        %2672 = vst.msk [vmem:[#allocation4 + $0x28] sm:$0xf] %vm2666, %v2623
        %2673 = vst.msk [vmem:[#allocation4 + $0x30] sm:$0xf] %vm2666, %v2625
        %2674 = vst.msk [vmem:[#allocation4 + $0x38] sm:$0xf] %vm2666, %v2627
        %2675 = vst.msk [vmem:[#allocation4 + $0x40] sm:$0xf] %vm2666, %v2629
        %2676 = vst.msk [vmem:[#allocation4 + $0x48] sm:$0xf] %vm2666, %v2631
        %2677 = vst.msk [vmem:[#allocation4 + $0x50] sm:$0xf] %vm2666, %v2633
        %2678 = vst.msk [vmem:[#allocation4 + $0x58] sm:$0xf] %vm2666, %v2635
        %2679 = vst.msk [vmem:[#allocation4 + $0x60] sm:$0xf] %vm2666, %v2637
        %2680 = vst.msk [vmem:[#allocation4 + $0x68] sm:$0xf] %vm2666, %v2639
        %2681 = vst.msk [vmem:[#allocation4 + $0x70] sm:$0xf] %vm2666, %v2641
        %2682 = vst.msk [vmem:[#allocation4 + $0x78] sm:$0xf] %vm2666, %v2643
        %2683 = vst.msk [vmem:[#allocation4 + $0x80] sm:$0xf] %vm2666, %v2645
        %2684 = vst.msk [vmem:[#allocation4 + $0x88] sm:$0xf] %vm2666, %v2647
        %v2685 = vld [vmem:[#allocation2] sm:$0xc]
        %v2686 = vld [vmem:[#allocation2 + $0x4] sm:$0x7]
        %v2687 = vld [vmem:[#allocation2 + $0xc] sm:$0xc]
        %v2688 = vld [vmem:[#allocation2 + $0x10] sm:$0x7]
        %v2689 = vld [vmem:[#allocation2 + $0x18] sm:$0xc]
        %v2690 = vld [vmem:[#allocation2 + $0x1c] sm:$0x7]
        %v2691 = vld [vmem:[#allocation2 + $0x24] sm:$0xc]
        %v2692 = vld [vmem:[#allocation2 + $0x28] sm:$0x7]
        %v2693 = vld [vmem:[#allocation2 + $0x30] sm:$0xc]
        %v2694 = vld [vmem:[#allocation2 + $0x34] sm:$0x7]
        %v2695 = vld [vmem:[#allocation2 + $0x3c] sm:$0xc]
        %v2696 = vld [vmem:[#allocation2 + $0x40] sm:$0x7]
        %v2697 = vld [vmem:[#allocation2 + $0x48] sm:$0xc]
        %v2698 = vld [vmem:[#allocation2 + $0x4c] sm:$0x7]
        %v2699 = vld [vmem:[#allocation2 + $0x54] sm:$0xc]
        %v2700 = vld [vmem:[#allocation2 + $0x58] sm:$0x7]
        %v2701 = vld [vmem:[#allocation2 + $0x60] sm:$0xc]
        %v2702 = vld [vmem:[#allocation2 + $0x64] sm:$0x7]
        %v2703 = vld [vmem:[#allocation2 + $0x6c] sm:$0xc]
        %v2704 = vld [vmem:[#allocation2 + $0x70] sm:$0x7]
        %v2705 = vld [vmem:[#allocation2 + $0x78] sm:$0xc]
        %v2706 = vld [vmem:[#allocation2 + $0x7c] sm:$0x7]
        %v2707 = vld [vmem:[#allocation2 + $0x84] sm:$0xc]
        %v2708 = vld [vmem:[#allocation2 + $0x88] sm:$0x7]
        %v2709 = vld [vmem:[#allocation2 + $0x90] sm:$0xc]
        %v2710 = vld [vmem:[#allocation2 + $0x94] sm:$0x7]
        %v2711 = vld [vmem:[#allocation2 + $0x9c] sm:$0xc]
        %v2712 = vld [vmem:[#allocation2 + $0xa0] sm:$0x7]
        %v2713 = vld [vmem:[#allocation2 + $0xa8] sm:$0xc]
        %v2714 = vld [vmem:[#allocation2 + $0xac] sm:$0x7]
        %v2715 = vld [vmem:[#allocation2 + $0xb4] sm:$0xc]
        %v2716 = vld [vmem:[#allocation2 + $0xb8] sm:$0x7]
        %v2717 = vld [vmem:[#allocation2 + $0xc0] sm:$0xc]
        %v2718 = vld [vmem:[#allocation2 + $0xc4] sm:$0x7]
        %v2719 = vld [vmem:[#allocation2 + $0xcc] sm:$0xc]
        %v2720 = vld [vmem:[#allocation2 + $0xd0] sm:$0x7]
        %vm2721 = vsmask.f32 1280
        %vm2722 = vsmask.f32 5392
        %vm2723 = vmor %vm2721, %vm2722
        %v2725 = vshrl.u32 %v2685, 16
        %v2727 = vrot.slane %v2725, 6
        %v2728 = vshll.u32 %v2685, 16
        %v2730 = vrot.slane %v2728, 7
        %v2731 = vor.u32 %v2727, %v2730
        %v2732 = vrot.slane %v2731, 4
        %v2734 = vshrl.u32 %v2686, 16
        %v2736 = vrot.slane %v2734, 6
        %v2737 = vshll.u32 %v2686, 16
        %v2739 = vrot.slane %v2737, 7
        %v2740 = vor.u32 %v2736, %v2739
        %v2741 = vsel %vm2723, %v2732, %v2740
        %v2743 = vshrl.u32 %v2687, 16
        %v2745 = vrot.slane %v2743, 6
        %v2746 = vshll.u32 %v2687, 16
        %v2748 = vrot.slane %v2746, 7
        %v2749 = vor.u32 %v2745, %v2748
        %v2750 = vrot.slane %v2749, 4
        %v2752 = vshrl.u32 %v2688, 16
        %v2754 = vrot.slane %v2752, 6
        %v2755 = vshll.u32 %v2688, 16
        %v2757 = vrot.slane %v2755, 7
        %v2758 = vor.u32 %v2754, %v2757
        %v2759 = vsel %vm2723, %v2750, %v2758
        %v2761 = vshrl.u32 %v2689, 16
        %v2763 = vrot.slane %v2761, 6
        %v2764 = vshll.u32 %v2689, 16
        %v2766 = vrot.slane %v2764, 7
        %v2767 = vor.u32 %v2763, %v2766
        %v2768 = vrot.slane %v2767, 4
        %v2770 = vshrl.u32 %v2690, 16
        %v2772 = vrot.slane %v2770, 6
        %v2773 = vshll.u32 %v2690, 16
        %v2775 = vrot.slane %v2773, 7
        %v2776 = vor.u32 %v2772, %v2775
        %v2777 = vsel %vm2723, %v2768, %v2776
        %v2779 = vshrl.u32 %v2691, 16
        %v2781 = vrot.slane %v2779, 6
        %v2782 = vshll.u32 %v2691, 16
        %v2784 = vrot.slane %v2782, 7
        %v2785 = vor.u32 %v2781, %v2784
        %v2786 = vrot.slane %v2785, 4
        %v2788 = vshrl.u32 %v2692, 16
        %v2790 = vrot.slane %v2788, 6
        %v2791 = vshll.u32 %v2692, 16
        %v2793 = vrot.slane %v2791, 7
        %v2794 = vor.u32 %v2790, %v2793
        %v2795 = vsel %vm2723, %v2786, %v2794
        %v2797 = vshrl.u32 %v2693, 16
        %v2799 = vrot.slane %v2797, 6
        %v2800 = vshll.u32 %v2693, 16
        %v2802 = vrot.slane %v2800, 7
        %v2803 = vor.u32 %v2799, %v2802
        %v2804 = vrot.slane %v2803, 4
        %v2806 = vshrl.u32 %v2694, 16
        %v2808 = vrot.slane %v2806, 6
        %v2809 = vshll.u32 %v2694, 16
        %v2811 = vrot.slane %v2809, 7
        %v2812 = vor.u32 %v2808, %v2811
        %v2813 = vsel %vm2723, %v2804, %v2812
        %v2815 = vshrl.u32 %v2695, 16
        %v2817 = vrot.slane %v2815, 6
        %v2818 = vshll.u32 %v2695, 16
        %v2820 = vrot.slane %v2818, 7
        %v2821 = vor.u32 %v2817, %v2820
        %v2822 = vrot.slane %v2821, 4
        %v2824 = vshrl.u32 %v2696, 16
        %v2826 = vrot.slane %v2824, 6
        %v2827 = vshll.u32 %v2696, 16
        %v2829 = vrot.slane %v2827, 7
        %v2830 = vor.u32 %v2826, %v2829
        %v2831 = vsel %vm2723, %v2822, %v2830
        %v2833 = vshrl.u32 %v2697, 16
        %v2835 = vrot.slane %v2833, 6
        %v2836 = vshll.u32 %v2697, 16
        %v2838 = vrot.slane %v2836, 7
        %v2839 = vor.u32 %v2835, %v2838
        %v2840 = vrot.slane %v2839, 4
        %v2842 = vshrl.u32 %v2698, 16
        %v2844 = vrot.slane %v2842, 6
        %v2845 = vshll.u32 %v2698, 16
        %v2847 = vrot.slane %v2845, 7
        %v2848 = vor.u32 %v2844, %v2847
        %v2849 = vsel %vm2723, %v2840, %v2848
        %v2851 = vshrl.u32 %v2699, 16
        %v2853 = vrot.slane %v2851, 6
        %v2854 = vshll.u32 %v2699, 16
        %v2856 = vrot.slane %v2854, 7
        %v2857 = vor.u32 %v2853, %v2856
        %v2858 = vrot.slane %v2857, 4
        %v2860 = vshrl.u32 %v2700, 16
        %v2862 = vrot.slane %v2860, 6
        %v2863 = vshll.u32 %v2700, 16
        %v2865 = vrot.slane %v2863, 7
        %v2866 = vor.u32 %v2862, %v2865
        %v2867 = vsel %vm2723, %v2858, %v2866
        %v2869 = vshrl.u32 %v2701, 16
        %v2871 = vrot.slane %v2869, 6
        %v2872 = vshll.u32 %v2701, 16
        %v2874 = vrot.slane %v2872, 7
        %v2875 = vor.u32 %v2871, %v2874
        %v2876 = vrot.slane %v2875, 4
        %v2878 = vshrl.u32 %v2702, 16
        %v2880 = vrot.slane %v2878, 6
        %v2881 = vshll.u32 %v2702, 16
        %v2883 = vrot.slane %v2881, 7
        %v2884 = vor.u32 %v2880, %v2883
        %v2885 = vsel %vm2723, %v2876, %v2884
        %v2887 = vshrl.u32 %v2703, 16
        %v2889 = vrot.slane %v2887, 6
        %v2890 = vshll.u32 %v2703, 16
        %v2892 = vrot.slane %v2890, 7
        %v2893 = vor.u32 %v2889, %v2892
        %v2894 = vrot.slane %v2893, 4
        %v2896 = vshrl.u32 %v2704, 16
        %v2898 = vrot.slane %v2896, 6
        %v2899 = vshll.u32 %v2704, 16
        %v2901 = vrot.slane %v2899, 7
        %v2902 = vor.u32 %v2898, %v2901
        %v2903 = vsel %vm2723, %v2894, %v2902
        %v2905 = vshrl.u32 %v2705, 16
        %v2907 = vrot.slane %v2905, 6
        %v2908 = vshll.u32 %v2705, 16
        %v2910 = vrot.slane %v2908, 7
        %v2911 = vor.u32 %v2907, %v2910
        %v2912 = vrot.slane %v2911, 4
        %v2914 = vshrl.u32 %v2706, 16
        %v2916 = vrot.slane %v2914, 6
        %v2917 = vshll.u32 %v2706, 16
        %v2919 = vrot.slane %v2917, 7
        %v2920 = vor.u32 %v2916, %v2919
        %v2921 = vsel %vm2723, %v2912, %v2920
        %v2923 = vshrl.u32 %v2707, 16
        %v2925 = vrot.slane %v2923, 6
        %v2926 = vshll.u32 %v2707, 16
        %v2928 = vrot.slane %v2926, 7
        %v2929 = vor.u32 %v2925, %v2928
        %v2930 = vrot.slane %v2929, 4
        %v2932 = vshrl.u32 %v2708, 16
        %v2934 = vrot.slane %v2932, 6
        %v2935 = vshll.u32 %v2708, 16
        %v2937 = vrot.slane %v2935, 7
        %v2938 = vor.u32 %v2934, %v2937
        %v2939 = vsel %vm2723, %v2930, %v2938
        %v2941 = vshrl.u32 %v2709, 16
        %v2943 = vrot.slane %v2941, 6
        %v2944 = vshll.u32 %v2709, 16
        %v2946 = vrot.slane %v2944, 7
        %v2947 = vor.u32 %v2943, %v2946
        %v2948 = vrot.slane %v2947, 4
        %v2950 = vshrl.u32 %v2710, 16
        %v2952 = vrot.slane %v2950, 6
        %v2953 = vshll.u32 %v2710, 16
        %v2955 = vrot.slane %v2953, 7
        %v2956 = vor.u32 %v2952, %v2955
        %v2957 = vsel %vm2723, %v2948, %v2956
        %v2959 = vshrl.u32 %v2711, 16
        %v2961 = vrot.slane %v2959, 6
        %v2962 = vshll.u32 %v2711, 16
        %v2964 = vrot.slane %v2962, 7
        %v2965 = vor.u32 %v2961, %v2964
        %v2966 = vrot.slane %v2965, 4
        %v2968 = vshrl.u32 %v2712, 16
        %v2970 = vrot.slane %v2968, 6
        %v2971 = vshll.u32 %v2712, 16
        %v2973 = vrot.slane %v2971, 7
        %v2974 = vor.u32 %v2970, %v2973
        %v2975 = vsel %vm2723, %v2966, %v2974
        %v2977 = vshrl.u32 %v2713, 16
        %v2979 = vrot.slane %v2977, 6
        %v2980 = vshll.u32 %v2713, 16
        %v2982 = vrot.slane %v2980, 7
        %v2983 = vor.u32 %v2979, %v2982
        %v2984 = vrot.slane %v2983, 4
        %v2986 = vshrl.u32 %v2714, 16
        %v2988 = vrot.slane %v2986, 6
        %v2989 = vshll.u32 %v2714, 16
        %v2991 = vrot.slane %v2989, 7
        %v2992 = vor.u32 %v2988, %v2991
        %v2993 = vsel %vm2723, %v2984, %v2992
        %v2995 = vshrl.u32 %v2715, 16
        %v2997 = vrot.slane %v2995, 6
        %v2998 = vshll.u32 %v2715, 16
        %v3000 = vrot.slane %v2998, 7
        %v3001 = vor.u32 %v2997, %v3000
        %v3002 = vrot.slane %v3001, 4
        %v3004 = vshrl.u32 %v2716, 16
        %v3006 = vrot.slane %v3004, 6
        %v3007 = vshll.u32 %v2716, 16
        %v3009 = vrot.slane %v3007, 7
        %v3010 = vor.u32 %v3006, %v3009
        %v3011 = vsel %vm2723, %v3002, %v3010
        %v3013 = vshrl.u32 %v2717, 16
        %v3015 = vrot.slane %v3013, 6
        %v3016 = vshll.u32 %v2717, 16
        %v3018 = vrot.slane %v3016, 7
        %v3019 = vor.u32 %v3015, %v3018
        %v3020 = vrot.slane %v3019, 4
        %v3022 = vshrl.u32 %v2718, 16
        %v3024 = vrot.slane %v3022, 6
        %v3025 = vshll.u32 %v2718, 16
        %v3027 = vrot.slane %v3025, 7
        %v3028 = vor.u32 %v3024, %v3027
        %v3029 = vsel %vm2723, %v3020, %v3028
        %v3031 = vshrl.u32 %v2719, 16
        %v3033 = vrot.slane %v3031, 6
        %v3034 = vshll.u32 %v2719, 16
        %v3036 = vrot.slane %v3034, 7
        %v3037 = vor.u32 %v3033, %v3036
        %v3038 = vrot.slane %v3037, 4
        %v3040 = vshrl.u32 %v2720, 16
        %v3042 = vrot.slane %v3040, 6
        %v3043 = vshll.u32 %v2720, 16
        %v3045 = vrot.slane %v3043, 7
        %v3046 = vor.u32 %v3042, %v3045
        %v3047 = vsel %vm2723, %v3038, %v3046
        %3048 = vrot.lane.b32.xlu0 %v2741, 80
        %v3049 = vpop.permute.xlu0 %3048
        %3050 = vrot.lane.b32.xlu0 %v2759, 80
        %v3051 = vpop.permute.xlu0 %3050
        %3052 = vrot.lane.b32.xlu0 %v2777, 80
        %v3053 = vpop.permute.xlu0 %3052
        %3054 = vrot.lane.b32.xlu0 %v2795, 80
        %v3055 = vpop.permute.xlu0 %3054
        %3056 = vrot.lane.b32.xlu0 %v2813, 80
        %v3057 = vpop.permute.xlu0 %3056
        %3058 = vrot.lane.b32.xlu0 %v2831, 80
        %v3059 = vpop.permute.xlu0 %3058
        %3060 = vrot.lane.b32.xlu0 %v2849, 80
        %v3061 = vpop.permute.xlu0 %3060
        %3062 = vrot.lane.b32.xlu0 %v2867, 80
        %v3063 = vpop.permute.xlu0 %3062
        %3064 = vrot.lane.b32.xlu0 %v2885, 80
        %v3065 = vpop.permute.xlu0 %3064
        %3066 = vrot.lane.b32.xlu0 %v2903, 80
        %v3067 = vpop.permute.xlu0 %3066
        %3068 = vrot.lane.b32.xlu0 %v2921, 80
        %v3069 = vpop.permute.xlu0 %3068
        %3070 = vrot.lane.b32.xlu0 %v2939, 80
        %v3071 = vpop.permute.xlu0 %3070
        %3072 = vrot.lane.b32.xlu0 %v2957, 80
        %v3073 = vpop.permute.xlu0 %3072
        %3074 = vrot.lane.b32.xlu0 %v2975, 80
        %v3075 = vpop.permute.xlu0 %3074
        %3076 = vrot.lane.b32.xlu0 %v2993, 80
        %v3077 = vpop.permute.xlu0 %3076
        %3078 = vrot.lane.b32.xlu0 %v3011, 80
        %v3079 = vpop.permute.xlu0 %3078
        %3080 = vrot.lane.b32.xlu0 %v3029, 80
        %v3081 = vpop.permute.xlu0 %3080
        %3082 = vrot.lane.b32.xlu0 %v3047, 80
        %v3083 = vpop.permute.xlu0 %3082
        %vm3102 = vcmask 781952
        %3103 = vst.msk [vmem:[#allocation4] sm:$0xf] %vm3102, %v3049
        %3104 = vst.msk [vmem:[#allocation4 + $0x8] sm:$0xf] %vm3102, %v3051
        %3105 = vst.msk [vmem:[#allocation4 + $0x10] sm:$0xf] %vm3102, %v3053
        %3106 = vst.msk [vmem:[#allocation4 + $0x18] sm:$0xf] %vm3102, %v3055
        %3107 = vst.msk [vmem:[#allocation4 + $0x20] sm:$0xf] %vm3102, %v3057
        %3108 = vst.msk [vmem:[#allocation4 + $0x28] sm:$0xf] %vm3102, %v3059
        %3109 = vst.msk [vmem:[#allocation4 + $0x30] sm:$0xf] %vm3102, %v3061
        %3110 = vst.msk [vmem:[#allocation4 + $0x38] sm:$0xf] %vm3102, %v3063
        %3111 = vst.msk [vmem:[#allocation4 + $0x40] sm:$0xf] %vm3102, %v3065
        %3112 = vst.msk [vmem:[#allocation4 + $0x48] sm:$0xf] %vm3102, %v3067
        %3113 = vst.msk [vmem:[#allocation4 + $0x50] sm:$0xf] %vm3102, %v3069
        %3114 = vst.msk [vmem:[#allocation4 + $0x58] sm:$0xf] %vm3102, %v3071
        %3115 = vst.msk [vmem:[#allocation4 + $0x60] sm:$0xf] %vm3102, %v3073
        %3116 = vst.msk [vmem:[#allocation4 + $0x68] sm:$0xf] %vm3102, %v3075
        %3117 = vst.msk [vmem:[#allocation4 + $0x70] sm:$0xf] %vm3102, %v3077
        %3118 = vst.msk [vmem:[#allocation4 + $0x78] sm:$0xf] %vm3102, %v3079
        %3119 = vst.msk [vmem:[#allocation4 + $0x80] sm:$0xf] %vm3102, %v3081
        %3120 = vst.msk [vmem:[#allocation4 + $0x88] sm:$0xf] %vm3102, %v3083
        %v3121 = vld [vmem:[#allocation2] sm:$0x8]
        %v3122 = vld [vmem:[#allocation2 + $0x4] sm:$0x7]
        %v3123 = vld [vmem:[#allocation2 + $0xc] sm:$0x8]
        %v3124 = vld [vmem:[#allocation2 + $0x10] sm:$0x7]
        %v3125 = vld [vmem:[#allocation2 + $0x18] sm:$0x8]
        %v3126 = vld [vmem:[#allocation2 + $0x1c] sm:$0x7]
        %v3127 = vld [vmem:[#allocation2 + $0x24] sm:$0x8]
        %v3128 = vld [vmem:[#allocation2 + $0x28] sm:$0x7]
        %v3129 = vld [vmem:[#allocation2 + $0x30] sm:$0x8]
        %v3130 = vld [vmem:[#allocation2 + $0x34] sm:$0x7]
        %v3131 = vld [vmem:[#allocation2 + $0x3c] sm:$0x8]
        %v3132 = vld [vmem:[#allocation2 + $0x40] sm:$0x7]
        %v3133 = vld [vmem:[#allocation2 + $0x48] sm:$0x8]
        %v3134 = vld [vmem:[#allocation2 + $0x4c] sm:$0x7]
        %v3135 = vld [vmem:[#allocation2 + $0x54] sm:$0x8]
        %v3136 = vld [vmem:[#allocation2 + $0x58] sm:$0x7]
        %v3137 = vld [vmem:[#allocation2 + $0x60] sm:$0x8]
        %v3138 = vld [vmem:[#allocation2 + $0x64] sm:$0x7]
        %v3139 = vld [vmem:[#allocation2 + $0x6c] sm:$0x8]
        %v3140 = vld [vmem:[#allocation2 + $0x70] sm:$0x7]
        %v3141 = vld [vmem:[#allocation2 + $0x78] sm:$0x8]
        %v3142 = vld [vmem:[#allocation2 + $0x7c] sm:$0x7]
        %v3143 = vld [vmem:[#allocation2 + $0x84] sm:$0x8]
        %v3144 = vld [vmem:[#allocation2 + $0x88] sm:$0x7]
        %v3145 = vld [vmem:[#allocation2 + $0x90] sm:$0x8]
        %v3146 = vld [vmem:[#allocation2 + $0x94] sm:$0x7]
        %v3147 = vld [vmem:[#allocation2 + $0x9c] sm:$0x8]
        %v3148 = vld [vmem:[#allocation2 + $0xa0] sm:$0x7]
        %v3149 = vld [vmem:[#allocation2 + $0xa8] sm:$0x8]
        %v3150 = vld [vmem:[#allocation2 + $0xac] sm:$0x7]
        %v3151 = vld [vmem:[#allocation2 + $0xb4] sm:$0x8]
        %v3152 = vld [vmem:[#allocation2 + $0xb8] sm:$0x7]
        %v3153 = vld [vmem:[#allocation2 + $0xc0] sm:$0x8]
        %v3154 = vld [vmem:[#allocation2 + $0xc4] sm:$0x7]
        %v3155 = vld [vmem:[#allocation2 + $0xcc] sm:$0x8]
        %v3156 = vld [vmem:[#allocation2 + $0xd0] sm:$0x7]
        %vm3193 = vcmask 1040384
        %vm3194 = vcmask 1044484
        %vm3195 = vmor %vm3193, %vm3194
        %v3196 = vrot.slane %v3121, 7
        %v3197 = vrot.slane %v3196, 4
        %v3198 = vrot.slane %v3122, 7
        %v3199 = vsel %vm3195, %v3197, %v3198
        %v3200 = vrot.slane %v3123, 7
        %v3201 = vrot.slane %v3200, 4
        %v3202 = vrot.slane %v3124, 7
        %v3203 = vsel %vm3195, %v3201, %v3202
        %v3204 = vrot.slane %v3125, 7
        %v3205 = vrot.slane %v3204, 4
        %v3206 = vrot.slane %v3126, 7
        %v3207 = vsel %vm3195, %v3205, %v3206
        %v3208 = vrot.slane %v3127, 7
        %v3209 = vrot.slane %v3208, 4
        %v3210 = vrot.slane %v3128, 7
        %v3211 = vsel %vm3195, %v3209, %v3210
        %v3212 = vrot.slane %v3129, 7
        %v3213 = vrot.slane %v3212, 4
        %v3214 = vrot.slane %v3130, 7
        %v3215 = vsel %vm3195, %v3213, %v3214
        %v3216 = vrot.slane %v3131, 7
        %v3217 = vrot.slane %v3216, 4
        %v3218 = vrot.slane %v3132, 7
        %v3219 = vsel %vm3195, %v3217, %v3218
        %v3220 = vrot.slane %v3133, 7
        %v3221 = vrot.slane %v3220, 4
        %v3222 = vrot.slane %v3134, 7
        %v3223 = vsel %vm3195, %v3221, %v3222
        %v3224 = vrot.slane %v3135, 7
        %v3225 = vrot.slane %v3224, 4
        %v3226 = vrot.slane %v3136, 7
        %v3227 = vsel %vm3195, %v3225, %v3226
        %v3228 = vrot.slane %v3137, 7
        %v3229 = vrot.slane %v3228, 4
        %v3230 = vrot.slane %v3138, 7
        %v3231 = vsel %vm3195, %v3229, %v3230
        %v3232 = vrot.slane %v3139, 7
        %v3233 = vrot.slane %v3232, 4
        %v3234 = vrot.slane %v3140, 7
        %v3235 = vsel %vm3195, %v3233, %v3234
        %v3236 = vrot.slane %v3141, 7
        %v3237 = vrot.slane %v3236, 4
        %v3238 = vrot.slane %v3142, 7
        %v3239 = vsel %vm3195, %v3237, %v3238
        %v3240 = vrot.slane %v3143, 7
        %v3241 = vrot.slane %v3240, 4
        %v3242 = vrot.slane %v3144, 7
        %v3243 = vsel %vm3195, %v3241, %v3242
        %v3244 = vrot.slane %v3145, 7
        %v3245 = vrot.slane %v3244, 4
        %v3246 = vrot.slane %v3146, 7
        %v3247 = vsel %vm3195, %v3245, %v3246
        %v3248 = vrot.slane %v3147, 7
        %v3249 = vrot.slane %v3248, 4
        %v3250 = vrot.slane %v3148, 7
        %v3251 = vsel %vm3195, %v3249, %v3250
        %v3252 = vrot.slane %v3149, 7
        %v3253 = vrot.slane %v3252, 4
        %v3254 = vrot.slane %v3150, 7
        %v3255 = vsel %vm3195, %v3253, %v3254
        %v3256 = vrot.slane %v3151, 7
        %v3257 = vrot.slane %v3256, 4
        %v3258 = vrot.slane %v3152, 7
        %v3259 = vsel %vm3195, %v3257, %v3258
        %v3260 = vrot.slane %v3153, 7
        %v3261 = vrot.slane %v3260, 4
        %v3262 = vrot.slane %v3154, 7
        %v3263 = vsel %vm3195, %v3261, %v3262
        %v3264 = vrot.slane %v3155, 7
        %v3265 = vrot.slane %v3264, 4
        %v3266 = vrot.slane %v3156, 7
        %v3267 = vsel %vm3195, %v3265, %v3266
        %3268 = vrot.lane.b32.xlu0 %v3199, 96
        %v3269 = vpop.permute.xlu0 %3268
        %3270 = vrot.lane.b32.xlu0 %v3203, 96
        %v3271 = vpop.permute.xlu0 %3270
        %3272 = vrot.lane.b32.xlu0 %v3207, 96
        %v3273 = vpop.permute.xlu0 %3272
        %3274 = vrot.lane.b32.xlu0 %v3211, 96
        %v3275 = vpop.permute.xlu0 %3274
        %3276 = vrot.lane.b32.xlu0 %v3215, 96
        %v3277 = vpop.permute.xlu0 %3276
        %3278 = vrot.lane.b32.xlu0 %v3219, 96
        %v3279 = vpop.permute.xlu0 %3278
        %3280 = vrot.lane.b32.xlu0 %v3223, 96
        %v3281 = vpop.permute.xlu0 %3280
        %3282 = vrot.lane.b32.xlu0 %v3227, 96
        %v3283 = vpop.permute.xlu0 %3282
        %3284 = vrot.lane.b32.xlu0 %v3231, 96
        %v3285 = vpop.permute.xlu0 %3284
        %3286 = vrot.lane.b32.xlu0 %v3235, 96
        %v3287 = vpop.permute.xlu0 %3286
        %3288 = vrot.lane.b32.xlu0 %v3239, 96
        %v3289 = vpop.permute.xlu0 %3288
        %3290 = vrot.lane.b32.xlu0 %v3243, 96
        %v3291 = vpop.permute.xlu0 %3290
        %3292 = vrot.lane.b32.xlu0 %v3247, 96
        %v3293 = vpop.permute.xlu0 %3292
        %3294 = vrot.lane.b32.xlu0 %v3251, 96
        %v3295 = vpop.permute.xlu0 %3294
        %3296 = vrot.lane.b32.xlu0 %v3255, 96
        %v3297 = vpop.permute.xlu0 %3296
        %3298 = vrot.lane.b32.xlu0 %v3259, 96
        %v3299 = vpop.permute.xlu0 %3298
        %3300 = vrot.lane.b32.xlu0 %v3263, 96
        %v3301 = vpop.permute.xlu0 %3300
        %3302 = vrot.lane.b32.xlu0 %v3267, 96
        %v3303 = vpop.permute.xlu0 %3302
        %vm3322 = vcmask 913152
        %3323 = vst.msk [vmem:[#allocation4] sm:$0xf] %vm3322, %v3269
        %3324 = vst.msk [vmem:[#allocation4 + $0x8] sm:$0xf] %vm3322, %v3271
        %3325 = vst.msk [vmem:[#allocation4 + $0x10] sm:$0xf] %vm3322, %v3273
        %3326 = vst.msk [vmem:[#allocation4 + $0x18] sm:$0xf] %vm3322, %v3275
        %3327 = vst.msk [vmem:[#allocation4 + $0x20] sm:$0xf] %vm3322, %v3277
        %3328 = vst.msk [vmem:[#allocation4 + $0x28] sm:$0xf] %vm3322, %v3279
        %3329 = vst.msk [vmem:[#allocation4 + $0x30] sm:$0xf] %vm3322, %v3281
        %3330 = vst.msk [vmem:[#allocation4 + $0x38] sm:$0xf] %vm3322, %v3283
        %3331 = vst.msk [vmem:[#allocation4 + $0x40] sm:$0xf] %vm3322, %v3285
        %3332 = vst.msk [vmem:[#allocation4 + $0x48] sm:$0xf] %vm3322, %v3287
        %3333 = vst.msk [vmem:[#allocation4 + $0x50] sm:$0xf] %vm3322, %v3289
        %3334 = vst.msk [vmem:[#allocation4 + $0x58] sm:$0xf] %vm3322, %v3291
        %3335 = vst.msk [vmem:[#allocation4 + $0x60] sm:$0xf] %vm3322, %v3293
        %3336 = vst.msk [vmem:[#allocation4 + $0x68] sm:$0xf] %vm3322, %v3295
        %3337 = vst.msk [vmem:[#allocation4 + $0x70] sm:$0xf] %vm3322, %v3297
        %3338 = vst.msk [vmem:[#allocation4 + $0x78] sm:$0xf] %vm3322, %v3299
        %3339 = vst.msk [vmem:[#allocation4 + $0x80] sm:$0xf] %vm3322, %v3301
        %3340 = vst.msk [vmem:[#allocation4 + $0x88] sm:$0xf] %vm3322, %v3303
        %v3341 = vld [vmem:[#allocation2] sm:$0x8]
        %v3342 = vld [vmem:[#allocation2 + $0x4] sm:$0xf]
        %v3343 = vld [vmem:[#allocation2 + $0xc] sm:$0x8]
        %v3344 = vld [vmem:[#allocation2 + $0x10] sm:$0xf]
        %v3345 = vld [vmem:[#allocation2 + $0x18] sm:$0x8]
        %v3346 = vld [vmem:[#allocation2 + $0x1c] sm:$0xf]
        %v3347 = vld [vmem:[#allocation2 + $0x24] sm:$0x8]
        %v3348 = vld [vmem:[#allocation2 + $0x28] sm:$0xf]
        %v3349 = vld [vmem:[#allocation2 + $0x30] sm:$0x8]
        %v3350 = vld [vmem:[#allocation2 + $0x34] sm:$0xf]
        %v3351 = vld [vmem:[#allocation2 + $0x3c] sm:$0x8]
        %v3352 = vld [vmem:[#allocation2 + $0x40] sm:$0xf]
        %v3353 = vld [vmem:[#allocation2 + $0x48] sm:$0x8]
        %v3354 = vld [vmem:[#allocation2 + $0x4c] sm:$0xf]
        %v3355 = vld [vmem:[#allocation2 + $0x54] sm:$0x8]
        %v3356 = vld [vmem:[#allocation2 + $0x58] sm:$0xf]
        %v3357 = vld [vmem:[#allocation2 + $0x60] sm:$0x8]
        %v3358 = vld [vmem:[#allocation2 + $0x64] sm:$0xf]
        %v3359 = vld [vmem:[#allocation2 + $0x6c] sm:$0x8]
        %v3360 = vld [vmem:[#allocation2 + $0x70] sm:$0xf]
        %v3361 = vld [vmem:[#allocation2 + $0x78] sm:$0x8]
        %v3362 = vld [vmem:[#allocation2 + $0x7c] sm:$0xf]
        %v3363 = vld [vmem:[#allocation2 + $0x84] sm:$0x8]
        %v3364 = vld [vmem:[#allocation2 + $0x88] sm:$0xf]
        %v3365 = vld [vmem:[#allocation2 + $0x90] sm:$0x8]
        %v3366 = vld [vmem:[#allocation2 + $0x94] sm:$0xf]
        %v3367 = vld [vmem:[#allocation2 + $0x9c] sm:$0x8]
        %v3368 = vld [vmem:[#allocation2 + $0xa0] sm:$0xf]
        %v3369 = vld [vmem:[#allocation2 + $0xa8] sm:$0x8]
        %v3370 = vld [vmem:[#allocation2 + $0xac] sm:$0xf]
        %v3371 = vld [vmem:[#allocation2 + $0xb4] sm:$0x8]
        %v3372 = vld [vmem:[#allocation2 + $0xb8] sm:$0xf]
        %v3373 = vld [vmem:[#allocation2 + $0xc0] sm:$0x8]
        %v3374 = vld [vmem:[#allocation2 + $0xc4] sm:$0xf]
        %v3375 = vld [vmem:[#allocation2 + $0xcc] sm:$0x8]
        %v3376 = vld [vmem:[#allocation2 + $0xd0] sm:$0xf]
        %vm3377 = vsmask.f32 256
        %vm3378 = vsmask.f32 4368
        %vm3379 = vmor %vm3377, %vm3378
        %v3381 = vshrl.u32 %v3341, 16
        %v3383 = vrot.slane %v3381, 7
        %v3384 = vrot.slane %v3383, 4
        %v3386 = vshrl.u32 %v3342, 16
        %v3388 = vrot.slane %v3386, 7
        %v3389 = vshll.u32 %v3342, 16
        %v3391 = vor.u32 %v3388, %v3389
        %v3392 = vsel %vm3379, %v3384, %v3391
        %v3394 = vshrl.u32 %v3343, 16
        %v3396 = vrot.slane %v3394, 7
        %v3397 = vrot.slane %v3396, 4
        %v3399 = vshrl.u32 %v3344, 16
        %v3401 = vrot.slane %v3399, 7
        %v3402 = vshll.u32 %v3344, 16
        %v3404 = vor.u32 %v3401, %v3402
        %v3405 = vsel %vm3379, %v3397, %v3404
        %v3407 = vshrl.u32 %v3345, 16
        %v3409 = vrot.slane %v3407, 7
        %v3410 = vrot.slane %v3409, 4
        %v3412 = vshrl.u32 %v3346, 16
        %v3414 = vrot.slane %v3412, 7
        %v3415 = vshll.u32 %v3346, 16
        %v3417 = vor.u32 %v3414, %v3415
        %v3418 = vsel %vm3379, %v3410, %v3417
        %v3420 = vshrl.u32 %v3347, 16
        %v3422 = vrot.slane %v3420, 7
        %v3423 = vrot.slane %v3422, 4
        %v3425 = vshrl.u32 %v3348, 16
        %v3427 = vrot.slane %v3425, 7
        %v3428 = vshll.u32 %v3348, 16
        %v3430 = vor.u32 %v3427, %v3428
        %v3431 = vsel %vm3379, %v3423, %v3430
        %v3433 = vshrl.u32 %v3349, 16
        %v3435 = vrot.slane %v3433, 7
        %v3436 = vrot.slane %v3435, 4
        %v3438 = vshrl.u32 %v3350, 16
        %v3440 = vrot.slane %v3438, 7
        %v3441 = vshll.u32 %v3350, 16
        %v3443 = vor.u32 %v3440, %v3441
        %v3444 = vsel %vm3379, %v3436, %v3443
        %v3446 = vshrl.u32 %v3351, 16
        %v3448 = vrot.slane %v3446, 7
        %v3449 = vrot.slane %v3448, 4
        %v3451 = vshrl.u32 %v3352, 16
        %v3453 = vrot.slane %v3451, 7
        %v3454 = vshll.u32 %v3352, 16
        %v3456 = vor.u32 %v3453, %v3454
        %v3457 = vsel %vm3379, %v3449, %v3456
        %v3459 = vshrl.u32 %v3353, 16
        %v3461 = vrot.slane %v3459, 7
        %v3462 = vrot.slane %v3461, 4
        %v3464 = vshrl.u32 %v3354, 16
        %v3466 = vrot.slane %v3464, 7
        %v3467 = vshll.u32 %v3354, 16
        %v3469 = vor.u32 %v3466, %v3467
        %v3470 = vsel %vm3379, %v3462, %v3469
        %v3472 = vshrl.u32 %v3355, 16
        %v3474 = vrot.slane %v3472, 7
        %v3475 = vrot.slane %v3474, 4
        %v3477 = vshrl.u32 %v3356, 16
        %v3479 = vrot.slane %v3477, 7
        %v3480 = vshll.u32 %v3356, 16
        %v3482 = vor.u32 %v3479, %v3480
        %v3483 = vsel %vm3379, %v3475, %v3482
        %v3485 = vshrl.u32 %v3357, 16
        %v3487 = vrot.slane %v3485, 7
        %v3488 = vrot.slane %v3487, 4
        %v3490 = vshrl.u32 %v3358, 16
        %v3492 = vrot.slane %v3490, 7
        %v3493 = vshll.u32 %v3358, 16
        %v3495 = vor.u32 %v3492, %v3493
        %v3496 = vsel %vm3379, %v3488, %v3495
        %v3498 = vshrl.u32 %v3359, 16
        %v3500 = vrot.slane %v3498, 7
        %v3501 = vrot.slane %v3500, 4
        %v3503 = vshrl.u32 %v3360, 16
        %v3505 = vrot.slane %v3503, 7
        %v3506 = vshll.u32 %v3360, 16
        %v3508 = vor.u32 %v3505, %v3506
        %v3509 = vsel %vm3379, %v3501, %v3508
        %v3511 = vshrl.u32 %v3361, 16
        %v3513 = vrot.slane %v3511, 7
        %v3514 = vrot.slane %v3513, 4
        %v3516 = vshrl.u32 %v3362, 16
        %v3518 = vrot.slane %v3516, 7
        %v3519 = vshll.u32 %v3362, 16
        %v3521 = vor.u32 %v3518, %v3519
        %v3522 = vsel %vm3379, %v3514, %v3521
        %v3524 = vshrl.u32 %v3363, 16
        %v3526 = vrot.slane %v3524, 7
        %v3527 = vrot.slane %v3526, 4
        %v3529 = vshrl.u32 %v3364, 16
        %v3531 = vrot.slane %v3529, 7
        %v3532 = vshll.u32 %v3364, 16
        %v3534 = vor.u32 %v3531, %v3532
        %v3535 = vsel %vm3379, %v3527, %v3534
        %v3537 = vshrl.u32 %v3365, 16
        %v3539 = vrot.slane %v3537, 7
        %v3540 = vrot.slane %v3539, 4
        %v3542 = vshrl.u32 %v3366, 16
        %v3544 = vrot.slane %v3542, 7
        %v3545 = vshll.u32 %v3366, 16
        %v3547 = vor.u32 %v3544, %v3545
        %v3548 = vsel %vm3379, %v3540, %v3547
        %v3550 = vshrl.u32 %v3367, 16
        %v3552 = vrot.slane %v3550, 7
        %v3553 = vrot.slane %v3552, 4
        %v3555 = vshrl.u32 %v3368, 16
        %v3557 = vrot.slane %v3555, 7
        %v3558 = vshll.u32 %v3368, 16
        %v3560 = vor.u32 %v3557, %v3558
        %v3561 = vsel %vm3379, %v3553, %v3560
        %v3563 = vshrl.u32 %v3369, 16
        %v3565 = vrot.slane %v3563, 7
        %v3566 = vrot.slane %v3565, 4
        %v3568 = vshrl.u32 %v3370, 16
        %v3570 = vrot.slane %v3568, 7
        %v3571 = vshll.u32 %v3370, 16
        %v3573 = vor.u32 %v3570, %v3571
        %v3574 = vsel %vm3379, %v3566, %v3573
        %v3576 = vshrl.u32 %v3371, 16
        %v3578 = vrot.slane %v3576, 7
        %v3579 = vrot.slane %v3578, 4
        %v3581 = vshrl.u32 %v3372, 16
        %v3583 = vrot.slane %v3581, 7
        %v3584 = vshll.u32 %v3372, 16
        %v3586 = vor.u32 %v3583, %v3584
        %v3587 = vsel %vm3379, %v3579, %v3586
        %v3589 = vshrl.u32 %v3373, 16
        %v3591 = vrot.slane %v3589, 7
        %v3592 = vrot.slane %v3591, 4
        %v3594 = vshrl.u32 %v3374, 16
        %v3596 = vrot.slane %v3594, 7
        %v3597 = vshll.u32 %v3374, 16
        %v3599 = vor.u32 %v3596, %v3597
        %v3600 = vsel %vm3379, %v3592, %v3599
        %v3602 = vshrl.u32 %v3375, 16
        %v3604 = vrot.slane %v3602, 7
        %v3605 = vrot.slane %v3604, 4
        %v3607 = vshrl.u32 %v3376, 16
        %v3609 = vrot.slane %v3607, 7
        %v3610 = vshll.u32 %v3376, 16
        %v3612 = vor.u32 %v3609, %v3610
        %v3613 = vsel %vm3379, %v3605, %v3612
        %3614 = vrot.lane.b32.xlu0 %v3392, 112
        %v3615 = vpop.permute.xlu0 %3614
        %3616 = vrot.lane.b32.xlu0 %v3405, 112
        %v3617 = vpop.permute.xlu0 %3616
        %3618 = vrot.lane.b32.xlu0 %v3418, 112
        %v3619 = vpop.permute.xlu0 %3618
        %3620 = vrot.lane.b32.xlu0 %v3431, 112
        %v3621 = vpop.permute.xlu0 %3620
        %3622 = vrot.lane.b32.xlu0 %v3444, 112
        %v3623 = vpop.permute.xlu0 %3622
        %3624 = vrot.lane.b32.xlu0 %v3457, 112
        %v3625 = vpop.permute.xlu0 %3624
        %3626 = vrot.lane.b32.xlu0 %v3470, 112
        %v3627 = vpop.permute.xlu0 %3626
        %3628 = vrot.lane.b32.xlu0 %v3483, 112
        %v3629 = vpop.permute.xlu0 %3628
        %3630 = vrot.lane.b32.xlu0 %v3496, 112
        %v3631 = vpop.permute.xlu0 %3630
        %3632 = vrot.lane.b32.xlu0 %v3509, 112
        %v3633 = vpop.permute.xlu0 %3632
        %3634 = vrot.lane.b32.xlu0 %v3522, 112
        %v3635 = vpop.permute.xlu0 %3634
        %3636 = vrot.lane.b32.xlu0 %v3535, 112
        %v3637 = vpop.permute.xlu0 %3636
        %3638 = vrot.lane.b32.xlu0 %v3548, 112
        %v3639 = vpop.permute.xlu0 %3638
        %3640 = vrot.lane.b32.xlu0 %v3561, 112
        %v3641 = vpop.permute.xlu0 %3640
        %3642 = vrot.lane.b32.xlu0 %v3574, 112
        %v3643 = vpop.permute.xlu0 %3642
        %3644 = vrot.lane.b32.xlu0 %v3587, 112
        %v3645 = vpop.permute.xlu0 %3644
        %3646 = vrot.lane.b32.xlu0 %v3600, 112
        %v3647 = vpop.permute.xlu0 %3646
        %3648 = vrot.lane.b32.xlu0 %v3613, 112
        %v3649 = vpop.permute.xlu0 %3648
        %vm3668 = vcmask 1044352
        %3669 = vst.msk [vmem:[#allocation4] sm:$0xf] %vm3668, %v3615
        %3670 = vst.msk [vmem:[#allocation4 + $0x8] sm:$0xf] %vm3668, %v3617
        %3671 = vst.msk [vmem:[#allocation4 + $0x10] sm:$0xf] %vm3668, %v3619
        %3672 = vst.msk [vmem:[#allocation4 + $0x18] sm:$0xf] %vm3668, %v3621
        %3673 = vst.msk [vmem:[#allocation4 + $0x20] sm:$0xf] %vm3668, %v3623
        %3674 = vst.msk [vmem:[#allocation4 + $0x28] sm:$0xf] %vm3668, %v3625
        %3675 = vst.msk [vmem:[#allocation4 + $0x30] sm:$0xf] %vm3668, %v3627
        %3676 = vst.msk [vmem:[#allocation4 + $0x38] sm:$0xf] %vm3668, %v3629
        %3677 = vst.msk [vmem:[#allocation4 + $0x40] sm:$0xf] %vm3668, %v3631
        %3678 = vst.msk [vmem:[#allocation4 + $0x48] sm:$0xf] %vm3668, %v3633
        %3679 = vst.msk [vmem:[#allocation4 + $0x50] sm:$0xf] %vm3668, %v3635
        %3680 = vst.msk [vmem:[#allocation4 + $0x58] sm:$0xf] %vm3668, %v3637
        %3681 = vst.msk [vmem:[#allocation4 + $0x60] sm:$0xf] %vm3668, %v3639
        %3682 = vst.msk [vmem:[#allocation4 + $0x68] sm:$0xf] %vm3668, %v3641
        %3683 = vst.msk [vmem:[#allocation4 + $0x70] sm:$0xf] %vm3668, %v3643
        %3684 = vst.msk [vmem:[#allocation4 + $0x78] sm:$0xf] %vm3668, %v3645
        %3685 = vst.msk [vmem:[#allocation4 + $0x80] sm:$0xf] %vm3668, %v3647
        %3686 = vst.msk [vmem:[#allocation4 + $0x88] sm:$0xf] %vm3668, %v3649
        %v3687 = vld [vmem:[#allocation2 + $0x4] sm:$0xf]
        %v3688 = vld [vmem:[#allocation2 + $0x10] sm:$0xf]
        %v3689 = vld [vmem:[#allocation2 + $0x1c] sm:$0xf]
        %v3690 = vld [vmem:[#allocation2 + $0x28] sm:$0xf]
        %v3691 = vld [vmem:[#allocation2 + $0x34] sm:$0xf]
        %v3692 = vld [vmem:[#allocation2 + $0x40] sm:$0xf]
        %v3693 = vld [vmem:[#allocation2 + $0x4c] sm:$0xf]
        %v3694 = vld [vmem:[#allocation2 + $0x58] sm:$0xf]
        %v3695 = vld [vmem:[#allocation2 + $0x64] sm:$0xf]
        %v3696 = vld [vmem:[#allocation2 + $0x70] sm:$0xf]
        %v3697 = vld [vmem:[#allocation2 + $0x7c] sm:$0xf]
        %v3698 = vld [vmem:[#allocation2 + $0x88] sm:$0xf]
        %v3699 = vld [vmem:[#allocation2 + $0x94] sm:$0xf]
        %v3700 = vld [vmem:[#allocation2 + $0xa0] sm:$0xf]
        %v3701 = vld [vmem:[#allocation2 + $0xac] sm:$0xf]
        %v3702 = vld [vmem:[#allocation2 + $0xb8] sm:$0xf]
        %v3703 = vld [vmem:[#allocation2 + $0xc4] sm:$0xf]
        %v3704 = vld [vmem:[#allocation2 + $0xd0] sm:$0xf]
        %3705 = vst.msk [vmem:[#allocation4 + $0x4] sm:$0xf] %vm224, %v3687
        %3706 = vst.msk [vmem:[#allocation4 + $0xc] sm:$0xf] %vm224, %v3688
        %3707 = vst.msk [vmem:[#allocation4 + $0x14] sm:$0xf] %vm224, %v3689
        %3708 = vst.msk [vmem:[#allocation4 + $0x1c] sm:$0xf] %vm224, %v3690
        %3709 = vst.msk [vmem:[#allocation4 + $0x24] sm:$0xf] %vm224, %v3691
        %3710 = vst.msk [vmem:[#allocation4 + $0x2c] sm:$0xf] %vm224, %v3692
        %3711 = vst.msk [vmem:[#allocation4 + $0x34] sm:$0xf] %vm224, %v3693
        %3712 = vst.msk [vmem:[#allocation4 + $0x3c] sm:$0xf] %vm224, %v3694
        %3713 = vst.msk [vmem:[#allocation4 + $0x44] sm:$0xf] %vm224, %v3695
        %3714 = vst.msk [vmem:[#allocation4 + $0x4c] sm:$0xf] %vm224, %v3696
        %3715 = vst.msk [vmem:[#allocation4 + $0x54] sm:$0xf] %vm224, %v3697
        %3716 = vst.msk [vmem:[#allocation4 + $0x5c] sm:$0xf] %vm224, %v3698
        %3717 = vst.msk [vmem:[#allocation4 + $0x64] sm:$0xf] %vm224, %v3699
        %3718 = vst.msk [vmem:[#allocation4 + $0x6c] sm:$0xf] %vm224, %v3700
        %3719 = vst.msk [vmem:[#allocation4 + $0x74] sm:$0xf] %vm224, %v3701
        %3720 = vst.msk [vmem:[#allocation4 + $0x7c] sm:$0xf] %vm224, %v3702
        %3721 = vst.msk [vmem:[#allocation4 + $0x84] sm:$0xf] %vm224, %v3703
        %3722 = vst.msk [vmem:[#allocation4 + $0x8c] sm:$0xf] %vm224, %v3704
        %v3723 = vld [vmem:[#allocation2 + $0x4] sm:$0xf]
        %v3724 = vld [vmem:[#allocation2 + $0x8] sm:$0x1]
        %v3725 = vld [vmem:[#allocation2 + $0x10] sm:$0xf]
        %v3726 = vld [vmem:[#allocation2 + $0x14] sm:$0x1]
        %v3727 = vld [vmem:[#allocation2 + $0x1c] sm:$0xf]
        %v3728 = vld [vmem:[#allocation2 + $0x20] sm:$0x1]
        %v3729 = vld [vmem:[#allocation2 + $0x28] sm:$0xf]
        %v3730 = vld [vmem:[#allocation2 + $0x2c] sm:$0x1]
        %v3731 = vld [vmem:[#allocation2 + $0x34] sm:$0xf]
        %v3732 = vld [vmem:[#allocation2 + $0x38] sm:$0x1]
        %v3733 = vld [vmem:[#allocation2 + $0x40] sm:$0xf]
        %v3734 = vld [vmem:[#allocation2 + $0x44] sm:$0x1]
        %v3735 = vld [vmem:[#allocation2 + $0x4c] sm:$0xf]
        %v3736 = vld [vmem:[#allocation2 + $0x50] sm:$0x1]
        %v3737 = vld [vmem:[#allocation2 + $0x58] sm:$0xf]
        %v3738 = vld [vmem:[#allocation2 + $0x5c] sm:$0x1]
        %v3739 = vld [vmem:[#allocation2 + $0x64] sm:$0xf]
        %v3740 = vld [vmem:[#allocation2 + $0x68] sm:$0x1]
        %v3741 = vld [vmem:[#allocation2 + $0x70] sm:$0xf]
        %v3742 = vld [vmem:[#allocation2 + $0x74] sm:$0x1]
        %v3743 = vld [vmem:[#allocation2 + $0x7c] sm:$0xf]
        %v3744 = vld [vmem:[#allocation2 + $0x80] sm:$0x1]
        %v3745 = vld [vmem:[#allocation2 + $0x88] sm:$0xf]
        %v3746 = vld [vmem:[#allocation2 + $0x8c] sm:$0x1]
        %v3747 = vld [vmem:[#allocation2 + $0x94] sm:$0xf]
        %v3748 = vld [vmem:[#allocation2 + $0x98] sm:$0x1]
        %v3749 = vld [vmem:[#allocation2 + $0xa0] sm:$0xf]
        %v3750 = vld [vmem:[#allocation2 + $0xa4] sm:$0x1]
        %v3751 = vld [vmem:[#allocation2 + $0xac] sm:$0xf]
        %v3752 = vld [vmem:[#allocation2 + $0xb0] sm:$0x1]
        %v3753 = vld [vmem:[#allocation2 + $0xb8] sm:$0xf]
        %v3754 = vld [vmem:[#allocation2 + $0xbc] sm:$0x1]
        %v3755 = vld [vmem:[#allocation2 + $0xc4] sm:$0xf]
        %v3756 = vld [vmem:[#allocation2 + $0xc8] sm:$0x1]
        %v3757 = vld [vmem:[#allocation2 + $0xd0] sm:$0xf]
        %v3758 = vld [vmem:[#allocation2 + $0xd4] sm:$0x1]
        %v3760 = vshrl.u32 %v3723, 16
        %v3762 = vrot.slane %v3760, 4
        %v3763 = vshll.u32 %v3723, 16
        %v3765 = vrot.slane %v3763, 5
        %v3766 = vor.u32 %v3762, %v3765
        %v3767 = vrot.slane %v3766, 4
        %v3769 = vshll.u32 %v3724, 16
        %v3771 = vrot.slane %v3769, 5
        %v3772 = vsel %vm1484, %v3767, %v3771
        %v3774 = vshrl.u32 %v3725, 16
        %v3776 = vrot.slane %v3774, 4
        %v3777 = vshll.u32 %v3725, 16
        %v3779 = vrot.slane %v3777, 5
        %v3780 = vor.u32 %v3776, %v3779
        %v3781 = vrot.slane %v3780, 4
        %v3783 = vshll.u32 %v3726, 16
        %v3785 = vrot.slane %v3783, 5
        %v3786 = vsel %vm1484, %v3781, %v3785
        %v3788 = vshrl.u32 %v3727, 16
        %v3790 = vrot.slane %v3788, 4
        %v3791 = vshll.u32 %v3727, 16
        %v3793 = vrot.slane %v3791, 5
        %v3794 = vor.u32 %v3790, %v3793
        %v3795 = vrot.slane %v3794, 4
        %v3797 = vshll.u32 %v3728, 16
        %v3799 = vrot.slane %v3797, 5
        %v3800 = vsel %vm1484, %v3795, %v3799
        %v3802 = vshrl.u32 %v3729, 16
        %v3804 = vrot.slane %v3802, 4
        %v3805 = vshll.u32 %v3729, 16
        %v3807 = vrot.slane %v3805, 5
        %v3808 = vor.u32 %v3804, %v3807
        %v3809 = vrot.slane %v3808, 4
        %v3811 = vshll.u32 %v3730, 16
        %v3813 = vrot.slane %v3811, 5
        %v3814 = vsel %vm1484, %v3809, %v3813
        %v3816 = vshrl.u32 %v3731, 16
        %v3818 = vrot.slane %v3816, 4
        %v3819 = vshll.u32 %v3731, 16
        %v3821 = vrot.slane %v3819, 5
        %v3822 = vor.u32 %v3818, %v3821
        %v3823 = vrot.slane %v3822, 4
        %v3825 = vshll.u32 %v3732, 16
        %v3827 = vrot.slane %v3825, 5
        %v3828 = vsel %vm1484, %v3823, %v3827
        %v3830 = vshrl.u32 %v3733, 16
        %v3832 = vrot.slane %v3830, 4
        %v3833 = vshll.u32 %v3733, 16
        %v3835 = vrot.slane %v3833, 5
        %v3836 = vor.u32 %v3832, %v3835
        %v3837 = vrot.slane %v3836, 4
        %v3839 = vshll.u32 %v3734, 16
        %v3841 = vrot.slane %v3839, 5
        %v3842 = vsel %vm1484, %v3837, %v3841
        %v3844 = vshrl.u32 %v3735, 16
        %v3846 = vrot.slane %v3844, 4
        %v3847 = vshll.u32 %v3735, 16
        %v3849 = vrot.slane %v3847, 5
        %v3850 = vor.u32 %v3846, %v3849
        %v3851 = vrot.slane %v3850, 4
        %v3853 = vshll.u32 %v3736, 16
        %v3855 = vrot.slane %v3853, 5
        %v3856 = vsel %vm1484, %v3851, %v3855
        %v3858 = vshrl.u32 %v3737, 16
        %v3860 = vrot.slane %v3858, 4
        %v3861 = vshll.u32 %v3737, 16
        %v3863 = vrot.slane %v3861, 5
        %v3864 = vor.u32 %v3860, %v3863
        %v3865 = vrot.slane %v3864, 4
        %v3867 = vshll.u32 %v3738, 16
        %v3869 = vrot.slane %v3867, 5
        %v3870 = vsel %vm1484, %v3865, %v3869
        %v3872 = vshrl.u32 %v3739, 16
        %v3874 = vrot.slane %v3872, 4
        %v3875 = vshll.u32 %v3739, 16
        %v3877 = vrot.slane %v3875, 5
        %v3878 = vor.u32 %v3874, %v3877
        %v3879 = vrot.slane %v3878, 4
        %v3881 = vshll.u32 %v3740, 16
        %v3883 = vrot.slane %v3881, 5
        %v3884 = vsel %vm1484, %v3879, %v3883
        %v3886 = vshrl.u32 %v3741, 16
        %v3888 = vrot.slane %v3886, 4
        %v3889 = vshll.u32 %v3741, 16
        %v3891 = vrot.slane %v3889, 5
        %v3892 = vor.u32 %v3888, %v3891
        %v3893 = vrot.slane %v3892, 4
        %v3895 = vshll.u32 %v3742, 16
        %v3897 = vrot.slane %v3895, 5
        %v3898 = vsel %vm1484, %v3893, %v3897
        %v3900 = vshrl.u32 %v3743, 16
        %v3902 = vrot.slane %v3900, 4
        %v3903 = vshll.u32 %v3743, 16
        %v3905 = vrot.slane %v3903, 5
        %v3906 = vor.u32 %v3902, %v3905
        %v3907 = vrot.slane %v3906, 4
        %v3909 = vshll.u32 %v3744, 16
        %v3911 = vrot.slane %v3909, 5
        %v3912 = vsel %vm1484, %v3907, %v3911
        %v3914 = vshrl.u32 %v3745, 16
        %v3916 = vrot.slane %v3914, 4
        %v3917 = vshll.u32 %v3745, 16
        %v3919 = vrot.slane %v3917, 5
        %v3920 = vor.u32 %v3916, %v3919
        %v3921 = vrot.slane %v3920, 4
        %v3923 = vshll.u32 %v3746, 16
        %v3925 = vrot.slane %v3923, 5
        %v3926 = vsel %vm1484, %v3921, %v3925
        %v3928 = vshrl.u32 %v3747, 16
        %v3930 = vrot.slane %v3928, 4
        %v3931 = vshll.u32 %v3747, 16
        %v3933 = vrot.slane %v3931, 5
        %v3934 = vor.u32 %v3930, %v3933
        %v3935 = vrot.slane %v3934, 4
        %v3937 = vshll.u32 %v3748, 16
        %v3939 = vrot.slane %v3937, 5
        %v3940 = vsel %vm1484, %v3935, %v3939
        %v3942 = vshrl.u32 %v3749, 16
        %v3944 = vrot.slane %v3942, 4
        %v3945 = vshll.u32 %v3749, 16
        %v3947 = vrot.slane %v3945, 5
        %v3948 = vor.u32 %v3944, %v3947
        %v3949 = vrot.slane %v3948, 4
        %v3951 = vshll.u32 %v3750, 16
        %v3953 = vrot.slane %v3951, 5
        %v3954 = vsel %vm1484, %v3949, %v3953
        %v3956 = vshrl.u32 %v3751, 16
        %v3958 = vrot.slane %v3956, 4
        %v3959 = vshll.u32 %v3751, 16
        %v3961 = vrot.slane %v3959, 5
        %v3962 = vor.u32 %v3958, %v3961
        %v3963 = vrot.slane %v3962, 4
        %v3965 = vshll.u32 %v3752, 16
        %v3967 = vrot.slane %v3965, 5
        %v3968 = vsel %vm1484, %v3963, %v3967
        %v3970 = vshrl.u32 %v3753, 16
        %v3972 = vrot.slane %v3970, 4
        %v3973 = vshll.u32 %v3753, 16
        %v3975 = vrot.slane %v3973, 5
        %v3976 = vor.u32 %v3972, %v3975
        %v3977 = vrot.slane %v3976, 4
        %v3979 = vshll.u32 %v3754, 16
        %v3981 = vrot.slane %v3979, 5
        %v3982 = vsel %vm1484, %v3977, %v3981
        %v3984 = vshrl.u32 %v3755, 16
        %v3986 = vrot.slane %v3984, 4
        %v3987 = vshll.u32 %v3755, 16
        %v3989 = vrot.slane %v3987, 5
        %v3990 = vor.u32 %v3986, %v3989
        %v3991 = vrot.slane %v3990, 4
        %v3993 = vshll.u32 %v3756, 16
        %v3995 = vrot.slane %v3993, 5
        %v3996 = vsel %vm1484, %v3991, %v3995
        %v3998 = vshrl.u32 %v3757, 16
        %v4000 = vrot.slane %v3998, 4
        %v4001 = vshll.u32 %v3757, 16
        %v4003 = vrot.slane %v4001, 5
        %v4004 = vor.u32 %v4000, %v4003
        %v4005 = vrot.slane %v4004, 4
        %v4007 = vshll.u32 %v3758, 16
        %v4009 = vrot.slane %v4007, 5
        %v4010 = vsel %vm1484, %v4005, %v4009
        %4011 = vrot.lane.b32.xlu0 %v3772, 16
        %v4012 = vpop.permute.xlu0 %4011
        %4013 = vrot.lane.b32.xlu0 %v3786, 16
        %v4014 = vpop.permute.xlu0 %4013
        %4015 = vrot.lane.b32.xlu0 %v3800, 16
        %v4016 = vpop.permute.xlu0 %4015
        %4017 = vrot.lane.b32.xlu0 %v3814, 16
        %v4018 = vpop.permute.xlu0 %4017
        %4019 = vrot.lane.b32.xlu0 %v3828, 16
        %v4020 = vpop.permute.xlu0 %4019
        %4021 = vrot.lane.b32.xlu0 %v3842, 16
        %v4022 = vpop.permute.xlu0 %4021
        %4023 = vrot.lane.b32.xlu0 %v3856, 16
        %v4024 = vpop.permute.xlu0 %4023
        %4025 = vrot.lane.b32.xlu0 %v3870, 16
        %v4026 = vpop.permute.xlu0 %4025
        %4027 = vrot.lane.b32.xlu0 %v3884, 16
        %v4028 = vpop.permute.xlu0 %4027
        %4029 = vrot.lane.b32.xlu0 %v3898, 16
        %v4030 = vpop.permute.xlu0 %4029
        %4031 = vrot.lane.b32.xlu0 %v3912, 16
        %v4032 = vpop.permute.xlu0 %4031
        %4033 = vrot.lane.b32.xlu0 %v3926, 16
        %v4034 = vpop.permute.xlu0 %4033
        %4035 = vrot.lane.b32.xlu0 %v3940, 16
        %v4036 = vpop.permute.xlu0 %4035
        %4037 = vrot.lane.b32.xlu0 %v3954, 16
        %v4038 = vpop.permute.xlu0 %4037
        %4039 = vrot.lane.b32.xlu0 %v3968, 16
        %v4040 = vpop.permute.xlu0 %4039
        %4041 = vrot.lane.b32.xlu0 %v3982, 16
        %v4042 = vpop.permute.xlu0 %4041
        %4043 = vrot.lane.b32.xlu0 %v3996, 16
        %v4044 = vpop.permute.xlu0 %4043
        %4045 = vrot.lane.b32.xlu0 %v4010, 16
        %v4046 = vpop.permute.xlu0 %4045
        %4065 = vst.msk [vmem:[#allocation4 + $0x4] sm:$0xf] %vm1791, %v4012
        %4066 = vst.msk [vmem:[#allocation4 + $0xc] sm:$0xf] %vm1791, %v4014
        %4067 = vst.msk [vmem:[#allocation4 + $0x14] sm:$0xf] %vm1791, %v4016
        %4068 = vst.msk [vmem:[#allocation4 + $0x1c] sm:$0xf] %vm1791, %v4018
        %4069 = vst.msk [vmem:[#allocation4 + $0x24] sm:$0xf] %vm1791, %v4020
        %4070 = vst.msk [vmem:[#allocation4 + $0x2c] sm:$0xf] %vm1791, %v4022
        %4071 = vst.msk [vmem:[#allocation4 + $0x34] sm:$0xf] %vm1791, %v4024
        %4072 = vst.msk [vmem:[#allocation4 + $0x3c] sm:$0xf] %vm1791, %v4026
        %4073 = vst.msk [vmem:[#allocation4 + $0x44] sm:$0xf] %vm1791, %v4028
        %4074 = vst.msk [vmem:[#allocation4 + $0x4c] sm:$0xf] %vm1791, %v4030
        %4075 = vst.msk [vmem:[#allocation4 + $0x54] sm:$0xf] %vm1791, %v4032
        %4076 = vst.msk [vmem:[#allocation4 + $0x5c] sm:$0xf] %vm1791, %v4034
        %4077 = vst.msk [vmem:[#allocation4 + $0x64] sm:$0xf] %vm1791, %v4036
        %4078 = vst.msk [vmem:[#allocation4 + $0x6c] sm:$0xf] %vm1791, %v4038
        %4079 = vst.msk [vmem:[#allocation4 + $0x74] sm:$0xf] %vm1791, %v4040
        %4080 = vst.msk [vmem:[#allocation4 + $0x7c] sm:$0xf] %vm1791, %v4042
        %4081 = vst.msk [vmem:[#allocation4 + $0x84] sm:$0xf] %vm1791, %v4044
        %4082 = vst.msk [vmem:[#allocation4 + $0x8c] sm:$0xf] %vm1791, %v4046
        %v4083 = vld [vmem:[#allocation2 + $0x4] sm:$0xe]
        %v4084 = vld [vmem:[#allocation2 + $0x8] sm:$0x1]
        %v4085 = vld [vmem:[#allocation2 + $0x10] sm:$0xe]
        %v4086 = vld [vmem:[#allocation2 + $0x14] sm:$0x1]
        %v4087 = vld [vmem:[#allocation2 + $0x1c] sm:$0xe]
        %v4088 = vld [vmem:[#allocation2 + $0x20] sm:$0x1]
        %v4089 = vld [vmem:[#allocation2 + $0x28] sm:$0xe]
        %v4090 = vld [vmem:[#allocation2 + $0x2c] sm:$0x1]
        %v4091 = vld [vmem:[#allocation2 + $0x34] sm:$0xe]
        %v4092 = vld [vmem:[#allocation2 + $0x38] sm:$0x1]
        %v4093 = vld [vmem:[#allocation2 + $0x40] sm:$0xe]
        %v4094 = vld [vmem:[#allocation2 + $0x44] sm:$0x1]
        %v4095 = vld [vmem:[#allocation2 + $0x4c] sm:$0xe]
        %v4096 = vld [vmem:[#allocation2 + $0x50] sm:$0x1]
        %v4097 = vld [vmem:[#allocation2 + $0x58] sm:$0xe]
        %v4098 = vld [vmem:[#allocation2 + $0x5c] sm:$0x1]
        %v4099 = vld [vmem:[#allocation2 + $0x64] sm:$0xe]
        %v4100 = vld [vmem:[#allocation2 + $0x68] sm:$0x1]
        %v4101 = vld [vmem:[#allocation2 + $0x70] sm:$0xe]
        %v4102 = vld [vmem:[#allocation2 + $0x74] sm:$0x1]
        %v4103 = vld [vmem:[#allocation2 + $0x7c] sm:$0xe]
        %v4104 = vld [vmem:[#allocation2 + $0x80] sm:$0x1]
        %v4105 = vld [vmem:[#allocation2 + $0x88] sm:$0xe]
        %v4106 = vld [vmem:[#allocation2 + $0x8c] sm:$0x1]
        %v4107 = vld [vmem:[#allocation2 + $0x94] sm:$0xe]
        %v4108 = vld [vmem:[#allocation2 + $0x98] sm:$0x1]
        %v4109 = vld [vmem:[#allocation2 + $0xa0] sm:$0xe]
        %v4110 = vld [vmem:[#allocation2 + $0xa4] sm:$0x1]
        %v4111 = vld [vmem:[#allocation2 + $0xac] sm:$0xe]
        %v4112 = vld [vmem:[#allocation2 + $0xb0] sm:$0x1]
        %v4113 = vld [vmem:[#allocation2 + $0xb8] sm:$0xe]
        %v4114 = vld [vmem:[#allocation2 + $0xbc] sm:$0x1]
        %v4115 = vld [vmem:[#allocation2 + $0xc4] sm:$0xe]
        %v4116 = vld [vmem:[#allocation2 + $0xc8] sm:$0x1]
        %v4117 = vld [vmem:[#allocation2 + $0xd0] sm:$0xe]
        %v4118 = vld [vmem:[#allocation2 + $0xd4] sm:$0x1]
        %v4155 = vrot.slane %v4083, 5
        %v4156 = vrot.slane %v4155, 4
        %v4157 = vrot.slane %v4084, 5
        %v4158 = vsel %vm1884, %v4156, %v4157
        %v4159 = vrot.slane %v4085, 5
        %v4160 = vrot.slane %v4159, 4
        %v4161 = vrot.slane %v4086, 5
        %v4162 = vsel %vm1884, %v4160, %v4161
        %v4163 = vrot.slane %v4087, 5
        %v4164 = vrot.slane %v4163, 4
        %v4165 = vrot.slane %v4088, 5
        %v4166 = vsel %vm1884, %v4164, %v4165
        %v4167 = vrot.slane %v4089, 5
        %v4168 = vrot.slane %v4167, 4
        %v4169 = vrot.slane %v4090, 5
        %v4170 = vsel %vm1884, %v4168, %v4169
        %v4171 = vrot.slane %v4091, 5
        %v4172 = vrot.slane %v4171, 4
        %v4173 = vrot.slane %v4092, 5
        %v4174 = vsel %vm1884, %v4172, %v4173
        %v4175 = vrot.slane %v4093, 5
        %v4176 = vrot.slane %v4175, 4
        %v4177 = vrot.slane %v4094, 5
        %v4178 = vsel %vm1884, %v4176, %v4177
        %v4179 = vrot.slane %v4095, 5
        %v4180 = vrot.slane %v4179, 4
        %v4181 = vrot.slane %v4096, 5
        %v4182 = vsel %vm1884, %v4180, %v4181
        %v4183 = vrot.slane %v4097, 5
        %v4184 = vrot.slane %v4183, 4
        %v4185 = vrot.slane %v4098, 5
        %v4186 = vsel %vm1884, %v4184, %v4185
        %v4187 = vrot.slane %v4099, 5
        %v4188 = vrot.slane %v4187, 4
        %v4189 = vrot.slane %v4100, 5
        %v4190 = vsel %vm1884, %v4188, %v4189
        %v4191 = vrot.slane %v4101, 5
        %v4192 = vrot.slane %v4191, 4
        %v4193 = vrot.slane %v4102, 5
        %v4194 = vsel %vm1884, %v4192, %v4193
        %v4195 = vrot.slane %v4103, 5
        %v4196 = vrot.slane %v4195, 4
        %v4197 = vrot.slane %v4104, 5
        %v4198 = vsel %vm1884, %v4196, %v4197
        %v4199 = vrot.slane %v4105, 5
        %v4200 = vrot.slane %v4199, 4
        %v4201 = vrot.slane %v4106, 5
        %v4202 = vsel %vm1884, %v4200, %v4201
        %v4203 = vrot.slane %v4107, 5
        %v4204 = vrot.slane %v4203, 4
        %v4205 = vrot.slane %v4108, 5
        %v4206 = vsel %vm1884, %v4204, %v4205
        %v4207 = vrot.slane %v4109, 5
        %v4208 = vrot.slane %v4207, 4
        %v4209 = vrot.slane %v4110, 5
        %v4210 = vsel %vm1884, %v4208, %v4209
        %v4211 = vrot.slane %v4111, 5
        %v4212 = vrot.slane %v4211, 4
        %v4213 = vrot.slane %v4112, 5
        %v4214 = vsel %vm1884, %v4212, %v4213
        %v4215 = vrot.slane %v4113, 5
        %v4216 = vrot.slane %v4215, 4
        %v4217 = vrot.slane %v4114, 5
        %v4218 = vsel %vm1884, %v4216, %v4217
        %v4219 = vrot.slane %v4115, 5
        %v4220 = vrot.slane %v4219, 4
        %v4221 = vrot.slane %v4116, 5
        %v4222 = vsel %vm1884, %v4220, %v4221
        %v4223 = vrot.slane %v4117, 5
        %v4224 = vrot.slane %v4223, 4
        %v4225 = vrot.slane %v4118, 5
        %v4226 = vsel %vm1884, %v4224, %v4225
        %4227 = vrot.lane.b32.xlu0 %v4158, 32
        %v4228 = vpop.permute.xlu0 %4227
        %4229 = vrot.lane.b32.xlu0 %v4162, 32
        %v4230 = vpop.permute.xlu0 %4229
        %4231 = vrot.lane.b32.xlu0 %v4166, 32
        %v4232 = vpop.permute.xlu0 %4231
        %4233 = vrot.lane.b32.xlu0 %v4170, 32
        %v4234 = vpop.permute.xlu0 %4233
        %4235 = vrot.lane.b32.xlu0 %v4174, 32
        %v4236 = vpop.permute.xlu0 %4235
        %4237 = vrot.lane.b32.xlu0 %v4178, 32
        %v4238 = vpop.permute.xlu0 %4237
        %4239 = vrot.lane.b32.xlu0 %v4182, 32
        %v4240 = vpop.permute.xlu0 %4239
        %4241 = vrot.lane.b32.xlu0 %v4186, 32
        %v4242 = vpop.permute.xlu0 %4241
        %4243 = vrot.lane.b32.xlu0 %v4190, 32
        %v4244 = vpop.permute.xlu0 %4243
        %4245 = vrot.lane.b32.xlu0 %v4194, 32
        %v4246 = vpop.permute.xlu0 %4245
        %4247 = vrot.lane.b32.xlu0 %v4198, 32
        %v4248 = vpop.permute.xlu0 %4247
        %4249 = vrot.lane.b32.xlu0 %v4202, 32
        %v4250 = vpop.permute.xlu0 %4249
        %4251 = vrot.lane.b32.xlu0 %v4206, 32
        %v4252 = vpop.permute.xlu0 %4251
        %4253 = vrot.lane.b32.xlu0 %v4210, 32
        %v4254 = vpop.permute.xlu0 %4253
        %4255 = vrot.lane.b32.xlu0 %v4214, 32
        %v4256 = vpop.permute.xlu0 %4255
        %4257 = vrot.lane.b32.xlu0 %v4218, 32
        %v4258 = vpop.permute.xlu0 %4257
        %4259 = vrot.lane.b32.xlu0 %v4222, 32
        %v4260 = vpop.permute.xlu0 %4259
        %4261 = vrot.lane.b32.xlu0 %v4226, 32
        %v4262 = vpop.permute.xlu0 %4261
        %4281 = vst.msk [vmem:[#allocation4 + $0x4] sm:$0xf] %vm2011, %v4228
        %4282 = vst.msk [vmem:[#allocation4 + $0xc] sm:$0xf] %vm2011, %v4230
        %4283 = vst.msk [vmem:[#allocation4 + $0x14] sm:$0xf] %vm2011, %v4232
        %4284 = vst.msk [vmem:[#allocation4 + $0x1c] sm:$0xf] %vm2011, %v4234
        %4285 = vst.msk [vmem:[#allocation4 + $0x24] sm:$0xf] %vm2011, %v4236
        %4286 = vst.msk [vmem:[#allocation4 + $0x2c] sm:$0xf] %vm2011, %v4238
        %4287 = vst.msk [vmem:[#allocation4 + $0x34] sm:$0xf] %vm2011, %v4240
        %4288 = vst.msk [vmem:[#allocation4 + $0x3c] sm:$0xf] %vm2011, %v4242
        %4289 = vst.msk [vmem:[#allocation4 + $0x44] sm:$0xf] %vm2011, %v4244
        %4290 = vst.msk [vmem:[#allocation4 + $0x4c] sm:$0xf] %vm2011, %v4246
        %4291 = vst.msk [vmem:[#allocation4 + $0x54] sm:$0xf] %vm2011, %v4248
        %4292 = vst.msk [vmem:[#allocation4 + $0x5c] sm:$0xf] %vm2011, %v4250
        %4293 = vst.msk [vmem:[#allocation4 + $0x64] sm:$0xf] %vm2011, %v4252
        %4294 = vst.msk [vmem:[#allocation4 + $0x6c] sm:$0xf] %vm2011, %v4254
        %4295 = vst.msk [vmem:[#allocation4 + $0x74] sm:$0xf] %vm2011, %v4256
        %4296 = vst.msk [vmem:[#allocation4 + $0x7c] sm:$0xf] %vm2011, %v4258
        %4297 = vst.msk [vmem:[#allocation4 + $0x84] sm:$0xf] %vm2011, %v4260
        %4298 = vst.msk [vmem:[#allocation4 + $0x8c] sm:$0xf] %vm2011, %v4262
        %v4299 = vld [vmem:[#allocation4] sm:$0xff]
        %v4300 = vld [vmem:[#allocation4 + $0x8] sm:$0xff]
        %v4301 = vld [vmem:[#allocation4 + $0x10] sm:$0xff]
        %v4302 = vld [vmem:[#allocation4 + $0x18] sm:$0xff]
        %v4303 = vld [vmem:[#allocation4 + $0x20] sm:$0xff]
        %v4304 = vld [vmem:[#allocation4 + $0x28] sm:$0xff]
        %v4305 = vld [vmem:[#allocation4 + $0x30] sm:$0xff]
        %v4306 = vld [vmem:[#allocation4 + $0x38] sm:$0xff]
        %v4307 = vld [vmem:[%s1] sm:$0xf]
        %v4308 = vld [vmem:[%s1 + $0x4] sm:$0xf]
        %v4309 = vld [vmem:[%s1 + $0x8] sm:$0xf]
        %v4310 = vld [vmem:[%s1 + $0xc] sm:$0xf]
        %v4311 = vld [vmem:[%s1 + $0x10] sm:$0xf]
        %v4312 = vld [vmem:[%s1 + $0x14] sm:$0xf]
        %v4313 = vld [vmem:[%s1 + $0x18] sm:$0xf]
        %v4314 = vld [vmem:[%s1 + $0x1c] sm:$0xf]
        %v4315 = vld [vmem:[%s1 + $0x20] sm:$0xf]
        %v4316 = vld [vmem:[%s1 + $0x24] sm:$0xf]
        %v4317 = vld [vmem:[%s1 + $0x28] sm:$0xf]
        %v4318 = vld [vmem:[%s1 + $0x2c] sm:$0xf]
        %v4319 = vld [vmem:[%s1 + $0x30] sm:$0xf]
        %v4320 = vld [vmem:[%s1 + $0x34] sm:$0xf]
        %v4321 = vld [vmem:[%s1 + $0x38] sm:$0xf]
        %v4322 = vld [vmem:[%s1 + $0x3c] sm:$0xf]
        %v4323 = vld [vmem:[%s1 + $0x40] sm:$0xf]
        %v4324 = vld [vmem:[%s1 + $0x44] sm:$0xf]
        %v4325 = vld [vmem:[%s1 + $0x48] sm:$0xf]
        %v4326 = vld [vmem:[%s1 + $0x4c] sm:$0xf]
        %v4327 = vld [vmem:[%s1 + $0x50] sm:$0xf]
        %v4328 = vld [vmem:[%s1 + $0x54] sm:$0xf]
        %s4329 = scalar_lea.vmem [#allocation4], 8
        %v4330 = vld [vmem:[%s4329] sm:$0xff]
        %v4331 = vld [vmem:[%s4329 + $0x8] sm:$0xff]
        %v4332 = vld [vmem:[%s4329 + $0x10] sm:$0xff]
        %v4333 = vld [vmem:[%s4329 + $0x18] sm:$0xff]
        %v4334 = vld [vmem:[%s4329 + $0x20] sm:$0xff]
        %v4335 = vld [vmem:[%s4329 + $0x28] sm:$0xff]
        %v4336 = vld [vmem:[%s4329 + $0x30] sm:$0xff]
        %v4337 = vld [vmem:[%s4329 + $0x38] sm:$0xff]
        %s4338 = scalar_lea.vmem %s1, 88
        %v4339 = vld [vmem:[%s4338] sm:$0xf]
        %v4340 = vld [vmem:[%s4338 + $0x4] sm:$0xf]
        %v4341 = vld [vmem:[%s4338 + $0x8] sm:$0xf]
        %v4342 = vld [vmem:[%s4338 + $0xc] sm:$0xf]
        %v4343 = vld [vmem:[%s4338 + $0x10] sm:$0xf]
        %v4344 = vld [vmem:[%s4338 + $0x14] sm:$0xf]
        %v4345 = vld [vmem:[%s4338 + $0x18] sm:$0xf]
        %v4346 = vld [vmem:[%s4338 + $0x1c] sm:$0xf]
        %v4347 = vld [vmem:[%s4338 + $0x20] sm:$0xf]
        %v4348 = vld [vmem:[%s4338 + $0x24] sm:$0xf]
        %v4349 = vld [vmem:[%s4338 + $0x28] sm:$0xf]
        %v4350 = vld [vmem:[%s4338 + $0x2c] sm:$0xf]
        %v4351 = vld [vmem:[%s4338 + $0x30] sm:$0xf]
        %v4352 = vld [vmem:[%s4338 + $0x34] sm:$0xf]
        %v4353 = vld [vmem:[%s4338 + $0x38] sm:$0xf]
        %v4354 = vld [vmem:[%s4338 + $0x3c] sm:$0xf]
        %v4355 = vld [vmem:[%s4338 + $0x40] sm:$0xf]
        %v4356 = vld [vmem:[%s4338 + $0x44] sm:$0xf]
        %v4357 = vld [vmem:[%s4338 + $0x48] sm:$0xf]
        %v4358 = vld [vmem:[%s4338 + $0x4c] sm:$0xf]
        %v4359 = vld [vmem:[%s4338 + $0x50] sm:$0xf]
        %v4360 = vld [vmem:[%s4338 + $0x54] sm:$0xf]
        %v4369 = vunpack.c.l.b16 %v4330
        %v4370 = vunpack.c.h.b16 %v4330
        %v4371 = vunpack.c.l.b16 %v4331
        %v4372 = vunpack.c.h.b16 %v4331
        %v4373 = vunpack.c.l.b16 %v4332
        %v4374 = vunpack.c.h.b16 %v4332
        %v4375 = vunpack.c.l.b16 %v4333
        %v4376 = vunpack.c.h.b16 %v4333
        %v4377 = vunpack.c.l.b16 %v4334
        %v4378 = vunpack.c.h.b16 %v4334
        %v4379 = vunpack.c.l.b16 %v4335
        %v4380 = vunpack.c.h.b16 %v4335
        %v4381 = vunpack.c.l.b16 %v4336
        %v4382 = vunpack.c.h.b16 %v4336
        %v4383 = vunpack.c.l.b16 %v4337
        %v4384 = vunpack.c.h.b16 %v4337
        %v4385 = vpack.c.b16 %v4371, %v4369
        %v4386 = vpack.c.b16 %v4372, %v4370
        %v4387 = vpack.c.b16 %v4375, %v4373
        %v4388 = vpack.c.b16 %v4376, %v4374
        %v4389 = vpack.c.b16 %v4379, %v4377
        %v4390 = vpack.c.b16 %v4380, %v4378
        %v4391 = vpack.c.b16 %v4383, %v4381
        %v4392 = vpack.c.b16 %v4384, %v4382
        %v4419 = vunpack.c.l.b16 %v4339
        %v4420 = vunpack.c.l.b16 %v4340
        %v4421 = vunpack.c.l.b16 %v4341
        %v4422 = vunpack.c.l.b16 %v4342
        %v4423 = vunpack.c.l.b16 %v4343
        %v4424 = vunpack.c.l.b16 %v4344
        %v4425 = vunpack.c.l.b16 %v4345
        %v4426 = vunpack.c.l.b16 %v4346
        %v4427 = vunpack.c.l.b16 %v4347
        %v4428 = vunpack.c.l.b16 %v4348
        %v4429 = vunpack.c.l.b16 %v4349
        %v4430 = vunpack.c.l.b16 %v4350
        %v4431 = vunpack.c.l.b16 %v4351
        %v4432 = vunpack.c.l.b16 %v4352
        %v4433 = vunpack.c.l.b16 %v4353
        %v4434 = vunpack.c.l.b16 %v4354
        %v4435 = vunpack.c.l.b16 %v4355
        %v4436 = vunpack.c.l.b16 %v4356
        %v4437 = vunpack.c.l.b16 %v4357
        %v4438 = vunpack.c.l.b16 %v4358
        %v4439 = vunpack.c.l.b16 %v4359
        %v4440 = vunpack.c.l.b16 %v4360
        %v4441 = vpack.c.b16 %v4420, %v4419
        %v4442 = vpack.c.b16 %v4422, %v4421
        %v4443 = vpack.c.b16 %v4424, %v4423
        %v4444 = vpack.c.b16 %v4426, %v4425
        %v4445 = vpack.c.b16 %v4428, %v4427
        %v4446 = vpack.c.b16 %v4430, %v4429
        %v4447 = vpack.c.b16 %v4432, %v4431
        %v4448 = vpack.c.b16 %v4434, %v4433
        %v4449 = vpack.c.b16 %v4436, %v4435
        %v4450 = vpack.c.b16 %v4438, %v4437
        %v4451 = vpack.c.b16 %v4440, %v4439
        %vm4463 = vcmask 392192
        %v4465 = vsel %vm4463, %v4386, 0
        %v4468 = vsel %vm4463, %v4388, 0
        %v4471 = vsel %vm4463, %v4390, 0
        %v4474 = vsel %vm4463, %v4392, 0
        %4476 = vmatprep.subr.bf16.mxu0 0
        %4477 = vmatpush1.bf16.msra.mxu0 %v4441
        %4478 = vmatprep.subr.bf16.mxu0 0
        %4479 = vmatpush1.bf16.msra.mxu0 %v4442
        %4480 = vmatprep.subr.bf16.mxu0 0
        %4481 = vmatpush1.bf16.msra.mxu0 %v4443
        %4482 = vmatprep.subr.bf16.mxu0 0
        %4483 = vmatpush1.bf16.msra.mxu0 %v4444
        %4484 = vmatprep.subr.bf16.mxu0 0
        %4485 = vmatpush1.bf16.msra.mxu0 %v4445
        %4486 = vmatprep.subr.bf16.mxu0 0
        %4487 = vmatpush1.bf16.msra.mxu0 %v4446
        %4488 = vmatprep.subr.bf16.mxu0 0
        %4489 = vmatpush1.bf16.msra.mxu0 %v4447
        %4490 = vmatprep.subr.bf16.mxu0 0
        %4491 = vmatpush1.bf16.msra.mxu0 %v4448
        %4492 = vmatprep.subr.bf16.mxu0 0
        %4493 = vmatpush1.bf16.msra.mxu0 %v4449
        %4494 = vmatprep.subr.bf16.mxu0 0
        %4495 = vmatpush1.bf16.msra.mxu0 %v4450
        %4496 = vmatprep.subr.bf16.mxu0 0
        %4497 = vmatpush1.bf16.msra.mxu0 %v4451
        %4498 = vmatprep.subr.bf16.mxu0 0
        %4499 = vmatpush1.bf16.msra.mxu0 0
        %4500 = vmatprep.subr.bf16.mxu0 0
        %4501 = vmatpush1.bf16.msra.mxu0 0
        %4502 = vmatprep.subr.bf16.mxu0 0
        %4503 = vmatpush1.bf16.msra.mxu0 0
        %4504 = vmatprep.subr.bf16.mxu0 0
        %4505 = vmatpush1.bf16.msra.mxu0 0
        %4506 = vmatprep.subr.bf16.mxu0 0
        %4507 = vmatpush1.bf16.msra.mxu0 0
        %4508 = vmatprep.mubr.bf16.mxu0 %v4465
        %4509 = vmatmul.mubr.bf16.gmra.mrb[0].mxu0 %v4385
        %v4510 = vpop.f32.mrb[0].mxu0
        %v4511 = vadd.f32 0.0, %v4510
        %v4512 = vpop.f32.mrb[0].mxu0
        %v4513 = vpop.f32.mrb[0].mxu0
        %v4514 = vadd.f32 0.0, %v4513
        %v4515 = vpop.f32.mrb[0].mxu0
        %4516 = vmatprep.mubr.bf16.mxu0 %v4468
        %4517 = vmatmul.mubr.bf16.gmra.mrb[0].mxu0 %v4387
        %v4518 = vpop.f32.mrb[0].mxu0
        %v4519 = vadd.f32 0.0, %v4518
        %v4520 = vpop.f32.mrb[0].mxu0
        %v4521 = vpop.f32.mrb[0].mxu0
        %v4522 = vadd.f32 0.0, %v4521
        %v4523 = vpop.f32.mrb[0].mxu0
        %4524 = vmatprep.mubr.bf16.mxu0 %v4471
        %4525 = vmatmul.mubr.bf16.gmra.mrb[0].mxu0 %v4389
        %v4526 = vpop.f32.mrb[0].mxu0
        %v4527 = vadd.f32 0.0, %v4526
        %v4528 = vpop.f32.mrb[0].mxu0
        %v4529 = vpop.f32.mrb[0].mxu0
        %v4530 = vadd.f32 0.0, %v4529
        %v4531 = vpop.f32.mrb[0].mxu0
        %4532 = vmatprep.mubr.bf16.mxu0 %v4474
        %4533 = vmatmul.mubr.bf16.gmra.mrb[0].mxu0 %v4391
        %v4534 = vpop.f32.mrb[0].mxu0
        %v4535 = vadd.f32 0.0, %v4534
        %v4536 = vpop.f32.mrb[0].mxu0
        %v4537 = vpop.f32.mrb[0].mxu0
        %v4538 = vadd.f32 0.0, %v4537
        %v4539 = vpop.f32.mrb[0].mxu0
        %4540 = vdwg.mxu0
        %v4549 = vunpack.c.l.b16 %v4299
        %v4550 = vunpack.c.h.b16 %v4299
        %v4551 = vunpack.c.l.b16 %v4300
        %v4552 = vunpack.c.h.b16 %v4300
        %v4553 = vunpack.c.l.b16 %v4301
        %v4554 = vunpack.c.h.b16 %v4301
        %v4555 = vunpack.c.l.b16 %v4302
        %v4556 = vunpack.c.h.b16 %v4302
        %v4557 = vunpack.c.l.b16 %v4303
        %v4558 = vunpack.c.h.b16 %v4303
        %v4559 = vunpack.c.l.b16 %v4304
        %v4560 = vunpack.c.h.b16 %v4304
        %v4561 = vunpack.c.l.b16 %v4305
        %v4562 = vunpack.c.h.b16 %v4305
        %v4563 = vunpack.c.l.b16 %v4306
        %v4564 = vunpack.c.h.b16 %v4306
        %v4565 = vpack.c.b16 %v4551, %v4549
        %v4566 = vpack.c.b16 %v4552, %v4550
        %v4567 = vpack.c.b16 %v4555, %v4553
        %v4568 = vpack.c.b16 %v4556, %v4554
        %v4569 = vpack.c.b16 %v4559, %v4557
        %v4570 = vpack.c.b16 %v4560, %v4558
        %v4571 = vpack.c.b16 %v4563, %v4561
        %v4572 = vpack.c.b16 %v4564, %v4562
        %v4599 = vunpack.c.l.b16 %v4307
        %v4600 = vunpack.c.l.b16 %v4308
        %v4601 = vunpack.c.l.b16 %v4309
        %v4602 = vunpack.c.l.b16 %v4310
        %v4603 = vunpack.c.l.b16 %v4311
        %v4604 = vunpack.c.l.b16 %v4312
        %v4605 = vunpack.c.l.b16 %v4313
        %v4606 = vunpack.c.l.b16 %v4314
        %v4607 = vunpack.c.l.b16 %v4315
        %v4608 = vunpack.c.l.b16 %v4316
        %v4609 = vunpack.c.l.b16 %v4317
        %v4610 = vunpack.c.l.b16 %v4318
        %v4611 = vunpack.c.l.b16 %v4319
        %v4612 = vunpack.c.l.b16 %v4320
        %v4613 = vunpack.c.l.b16 %v4321
        %v4614 = vunpack.c.l.b16 %v4322
        %v4615 = vunpack.c.l.b16 %v4323
        %v4616 = vunpack.c.l.b16 %v4324
        %v4617 = vunpack.c.l.b16 %v4325
        %v4618 = vunpack.c.l.b16 %v4326
        %v4619 = vunpack.c.l.b16 %v4327
        %v4620 = vunpack.c.l.b16 %v4328
        %v4621 = vpack.c.b16 %v4600, %v4599
        %v4622 = vpack.c.b16 %v4602, %v4601
        %v4623 = vpack.c.b16 %v4604, %v4603
        %v4624 = vpack.c.b16 %v4606, %v4605
        %v4625 = vpack.c.b16 %v4608, %v4607
        %v4626 = vpack.c.b16 %v4610, %v4609
        %v4627 = vpack.c.b16 %v4612, %v4611
        %v4628 = vpack.c.b16 %v4614, %v4613
        %v4629 = vpack.c.b16 %v4616, %v4615
        %v4630 = vpack.c.b16 %v4618, %v4617
        %v4631 = vpack.c.b16 %v4620, %v4619
        %v4644 = vsel %vm4463, %v4566, 0
        %v4647 = vsel %vm4463, %v4568, 0
        %v4650 = vsel %vm4463, %v4570, 0
        %v4653 = vsel %vm4463, %v4572, 0
        %4655 = vmatprep.subr.bf16.mxu0 0
        %4656 = vmatpush1.bf16.msra.mxu0 %v4621
        %4657 = vmatprep.subr.bf16.mxu0 0
        %4658 = vmatpush1.bf16.msra.mxu0 %v4622
        %4659 = vmatprep.subr.bf16.mxu0 0
        %4660 = vmatpush1.bf16.msra.mxu0 %v4623
        %4661 = vmatprep.subr.bf16.mxu0 0
        %4662 = vmatpush1.bf16.msra.mxu0 %v4624
        %4663 = vmatprep.subr.bf16.mxu0 0
        %4664 = vmatpush1.bf16.msra.mxu0 %v4625
        %4665 = vmatprep.subr.bf16.mxu0 0
        %4666 = vmatpush1.bf16.msra.mxu0 %v4626
        %4667 = vmatprep.subr.bf16.mxu0 0
        %4668 = vmatpush1.bf16.msra.mxu0 %v4627
        %4669 = vmatprep.subr.bf16.mxu0 0
        %4670 = vmatpush1.bf16.msra.mxu0 %v4628
        %4671 = vmatprep.subr.bf16.mxu0 0
        %4672 = vmatpush1.bf16.msra.mxu0 %v4629
        %4673 = vmatprep.subr.bf16.mxu0 0
        %4674 = vmatpush1.bf16.msra.mxu0 %v4630
        %4675 = vmatprep.subr.bf16.mxu0 0
        %4676 = vmatpush1.bf16.msra.mxu0 %v4631
        %4677 = vmatprep.subr.bf16.mxu0 0
        %4678 = vmatpush1.bf16.msra.mxu0 0
        %4679 = vmatprep.subr.bf16.mxu0 0
        %4680 = vmatpush1.bf16.msra.mxu0 0
        %4681 = vmatprep.subr.bf16.mxu0 0
        %4682 = vmatpush1.bf16.msra.mxu0 0
        %4683 = vmatprep.subr.bf16.mxu0 0
        %4684 = vmatpush1.bf16.msra.mxu0 0
        %4685 = vmatprep.subr.bf16.mxu0 0
        %4686 = vmatpush1.bf16.msra.mxu0 0
        %4687 = vmatprep.mubr.bf16.mxu0 %v4644
        %4688 = vmatmul.mubr.bf16.gmra.mrb[0].mxu0 %v4565
        %v4689 = vpop.f32.mrb[0].mxu0
        %v4690 = vadd.f32 %v4511, %v4689
        %v4691 = vpop.f32.mrb[0].mxu0
        %v4692 = vpop.f32.mrb[0].mxu0
        %v4693 = vadd.f32 %v4514, %v4692
        %v4694 = vpop.f32.mrb[0].mxu0
        %4695 = vmatprep.mubr.bf16.mxu0 %v4647
        %4696 = vmatmul.mubr.bf16.gmra.mrb[0].mxu0 %v4567
        %v4697 = vpop.f32.mrb[0].mxu0
        %v4698 = vadd.f32 %v4519, %v4697
        %v4699 = vpop.f32.mrb[0].mxu0
        %v4700 = vpop.f32.mrb[0].mxu0
        %v4701 = vadd.f32 %v4522, %v4700
        %v4702 = vpop.f32.mrb[0].mxu0
        %4703 = vmatprep.mubr.bf16.mxu0 %v4650
        %4704 = vmatmul.mubr.bf16.gmra.mrb[0].mxu0 %v4569
        %v4705 = vpop.f32.mrb[0].mxu0
        %v4706 = vadd.f32 %v4527, %v4705
        %v4707 = vpop.f32.mrb[0].mxu0
        %v4708 = vpop.f32.mrb[0].mxu0
        %v4709 = vadd.f32 %v4530, %v4708
        %v4710 = vpop.f32.mrb[0].mxu0
        %4711 = vmatprep.mubr.bf16.mxu0 %v4653
        %4712 = vmatmul.mubr.bf16.gmra.mrb[0].mxu0 %v4571
        %v4713 = vpop.f32.mrb[0].mxu0
        %v4714 = vadd.f32 %v4535, %v4713
        %v4715 = vpop.f32.mrb[0].mxu0
        %v4716 = vpop.f32.mrb[0].mxu0
        %v4717 = vadd.f32 %v4538, %v4716
        %v4718 = vpop.f32.mrb[0].mxu0
        %4719 = vdwg.mxu0
        %s4720 = scalar_lea.vmem [#allocation4], 16
        %v4721 = vld [vmem:[%s4720] sm:$0xff]
        %v4722 = vld [vmem:[%s4720 + $0x8] sm:$0xff]
        %v4723 = vld [vmem:[%s4720 + $0x10] sm:$0xff]
        %v4724 = vld [vmem:[%s4720 + $0x18] sm:$0xff]
        %v4725 = vld [vmem:[%s4720 + $0x20] sm:$0xff]
        %v4726 = vld [vmem:[%s4720 + $0x28] sm:$0xff]
        %v4727 = vld [vmem:[%s4720 + $0x30] sm:$0xff]
        %v4728 = vld [vmem:[%s4720 + $0x38] sm:$0xff]
        %s4729 = scalar_lea.vmem %s1, 176
        %v4730 = vld [vmem:[%s4729] sm:$0xf]
        %v4731 = vld [vmem:[%s4729 + $0x4] sm:$0xf]
        %v4732 = vld [vmem:[%s4729 + $0x8] sm:$0xf]
        %v4733 = vld [vmem:[%s4729 + $0xc] sm:$0xf]
        %v4734 = vld [vmem:[%s4729 + $0x10] sm:$0xf]
        %v4735 = vld [vmem:[%s4729 + $0x14] sm:$0xf]
        %v4736 = vld [vmem:[%s4729 + $0x18] sm:$0xf]
        %v4737 = vld [vmem:[%s4729 + $0x1c] sm:$0xf]
        %v4738 = vld [vmem:[%s4729 + $0x20] sm:$0xf]
        %v4739 = vld [vmem:[%s4729 + $0x24] sm:$0xf]
        %v4740 = vld [vmem:[%s4729 + $0x28] sm:$0xf]
        %v4741 = vld [vmem:[%s4729 + $0x2c] sm:$0xf]
        %v4742 = vld [vmem:[%s4729 + $0x30] sm:$0xf]
        %v4743 = vld [vmem:[%s4729 + $0x34] sm:$0xf]
        %v4744 = vld [vmem:[%s4729 + $0x38] sm:$0xf]
        %v4745 = vld [vmem:[%s4729 + $0x3c] sm:$0xf]
        %v4746 = vld [vmem:[%s4729 + $0x40] sm:$0xf]
        %v4747 = vld [vmem:[%s4729 + $0x44] sm:$0xf]
        %v4748 = vld [vmem:[%s4729 + $0x48] sm:$0xf]
        %v4749 = vld [vmem:[%s4729 + $0x4c] sm:$0xf]
        %v4750 = vld [vmem:[%s4729 + $0x50] sm:$0xf]
        %v4751 = vld [vmem:[%s4729 + $0x54] sm:$0xf]
        %v4760 = vunpack.c.l.b16 %v4721
        %v4761 = vunpack.c.h.b16 %v4721
        %v4762 = vunpack.c.l.b16 %v4722
        %v4763 = vunpack.c.h.b16 %v4722
        %v4764 = vunpack.c.l.b16 %v4723
        %v4765 = vunpack.c.h.b16 %v4723
        %v4766 = vunpack.c.l.b16 %v4724
        %v4767 = vunpack.c.h.b16 %v4724
        %v4768 = vunpack.c.l.b16 %v4725
        %v4769 = vunpack.c.h.b16 %v4725
        %v4770 = vunpack.c.l.b16 %v4726
        %v4771 = vunpack.c.h.b16 %v4726
        %v4772 = vunpack.c.l.b16 %v4727
        %v4773 = vunpack.c.h.b16 %v4727
        %v4774 = vunpack.c.l.b16 %v4728
        %v4775 = vunpack.c.h.b16 %v4728
        %v4776 = vpack.c.b16 %v4762, %v4760
        %v4777 = vpack.c.b16 %v4763, %v4761
        %v4778 = vpack.c.b16 %v4766, %v4764
        %v4779 = vpack.c.b16 %v4767, %v4765
        %v4780 = vpack.c.b16 %v4770, %v4768
        %v4781 = vpack.c.b16 %v4771, %v4769
        %v4782 = vpack.c.b16 %v4774, %v4772
        %v4783 = vpack.c.b16 %v4775, %v4773
        %v4810 = vunpack.c.l.b16 %v4730
        %v4811 = vunpack.c.l.b16 %v4731
        %v4812 = vunpack.c.l.b16 %v4732
        %v4813 = vunpack.c.l.b16 %v4733
        %v4814 = vunpack.c.l.b16 %v4734
        %v4815 = vunpack.c.l.b16 %v4735
        %v4816 = vunpack.c.l.b16 %v4736
        %v4817 = vunpack.c.l.b16 %v4737
        %v4818 = vunpack.c.l.b16 %v4738
        %v4819 = vunpack.c.l.b16 %v4739
        %v4820 = vunpack.c.l.b16 %v4740
        %v4821 = vunpack.c.l.b16 %v4741
        %v4822 = vunpack.c.l.b16 %v4742
        %v4823 = vunpack.c.l.b16 %v4743
        %v4824 = vunpack.c.l.b16 %v4744
        %v4825 = vunpack.c.l.b16 %v4745
        %v4826 = vunpack.c.l.b16 %v4746
        %v4827 = vunpack.c.l.b16 %v4747
        %v4828 = vunpack.c.l.b16 %v4748
        %v4829 = vunpack.c.l.b16 %v4749
        %v4830 = vunpack.c.l.b16 %v4750
        %v4831 = vunpack.c.l.b16 %v4751
        %v4832 = vpack.c.b16 %v4811, %v4810
        %v4833 = vpack.c.b16 %v4813, %v4812
        %v4834 = vpack.c.b16 %v4815, %v4814
        %v4835 = vpack.c.b16 %v4817, %v4816
        %v4836 = vpack.c.b16 %v4819, %v4818
        %v4837 = vpack.c.b16 %v4821, %v4820
        %v4838 = vpack.c.b16 %v4823, %v4822
        %v4839 = vpack.c.b16 %v4825, %v4824
        %v4840 = vpack.c.b16 %v4827, %v4826
        %v4841 = vpack.c.b16 %v4829, %v4828
        %v4842 = vpack.c.b16 %v4831, %v4830
        %v4855 = vsel %vm4463, %v4777, 0
        %v4858 = vsel %vm4463, %v4779, 0
        %v4861 = vsel %vm4463, %v4781, 0
        %v4864 = vsel %vm4463, %v4783, 0
        %4866 = vmatprep.subr.bf16.mxu0 0
        %4867 = vmatpush1.bf16.msra.mxu0 %v4832
        %4868 = vmatprep.subr.bf16.mxu0 0
        %4869 = vmatpush1.bf16.msra.mxu0 %v4833
        %4870 = vmatprep.subr.bf16.mxu0 0
        %4871 = vmatpush1.bf16.msra.mxu0 %v4834
        %4872 = vmatprep.subr.bf16.mxu0 0
        %4873 = vmatpush1.bf16.msra.mxu0 %v4835
        %4874 = vmatprep.subr.bf16.mxu0 0
        %4875 = vmatpush1.bf16.msra.mxu0 %v4836
        %4876 = vmatprep.subr.bf16.mxu0 0
        %4877 = vmatpush1.bf16.msra.mxu0 %v4837
        %4878 = vmatprep.subr.bf16.mxu0 0
        %4879 = vmatpush1.bf16.msra.mxu0 %v4838
        %4880 = vmatprep.subr.bf16.mxu0 0
        %4881 = vmatpush1.bf16.msra.mxu0 %v4839
        %4882 = vmatprep.subr.bf16.mxu0 0
        %4883 = vmatpush1.bf16.msra.mxu0 %v4840
        %4884 = vmatprep.subr.bf16.mxu0 0
        %4885 = vmatpush1.bf16.msra.mxu0 %v4841
        %4886 = vmatprep.subr.bf16.mxu0 0
        %4887 = vmatpush1.bf16.msra.mxu0 %v4842
        %4888 = vmatprep.subr.bf16.mxu0 0
        %4889 = vmatpush1.bf16.msra.mxu0 0
        %4890 = vmatprep.subr.bf16.mxu0 0
        %4891 = vmatpush1.bf16.msra.mxu0 0
        %4892 = vmatprep.subr.bf16.mxu0 0
        %4893 = vmatpush1.bf16.msra.mxu0 0
        %4894 = vmatprep.subr.bf16.mxu0 0
        %4895 = vmatpush1.bf16.msra.mxu0 0
        %4896 = vmatprep.subr.bf16.mxu0 0
        %4897 = vmatpush1.bf16.msra.mxu0 0
        %4898 = vmatprep.mubr.bf16.mxu0 %v4855
        %4899 = vmatmul.mubr.bf16.gmra.mrb[0].mxu0 %v4776
        %v4900 = vpop.f32.mrb[0].mxu0
        %v4901 = vadd.f32 0.0, %v4900
        %v4902 = vpop.f32.mrb[0].mxu0
        %v4903 = vpop.f32.mrb[0].mxu0
        %v4904 = vadd.f32 0.0, %v4903
        %v4905 = vpop.f32.mrb[0].mxu0
        %4906 = vmatprep.mubr.bf16.mxu0 %v4858
        %4907 = vmatmul.mubr.bf16.gmra.mrb[0].mxu0 %v4778
        %v4908 = vpop.f32.mrb[0].mxu0
        %v4909 = vadd.f32 0.0, %v4908
        %v4910 = vpop.f32.mrb[0].mxu0
        %v4911 = vpop.f32.mrb[0].mxu0
        %v4912 = vadd.f32 0.0, %v4911
        %v4913 = vpop.f32.mrb[0].mxu0
        %4914 = vmatprep.mubr.bf16.mxu0 %v4861
        %4915 = vmatmul.mubr.bf16.gmra.mrb[0].mxu0 %v4780
        %v4916 = vpop.f32.mrb[0].mxu0
        %v4917 = vadd.f32 0.0, %v4916
        %v4918 = vpop.f32.mrb[0].mxu0
        %v4919 = vpop.f32.mrb[0].mxu0
        %v4920 = vadd.f32 0.0, %v4919
        %v4921 = vpop.f32.mrb[0].mxu0
        %4922 = vmatprep.mubr.bf16.mxu0 %v4864
        %4923 = vmatmul.mubr.bf16.gmra.mrb[0].mxu0 %v4782
        %v4924 = vpop.f32.mrb[0].mxu0
        %v4925 = vadd.f32 0.0, %v4924
        %v4926 = vpop.f32.mrb[0].mxu0
        %v4927 = vpop.f32.mrb[0].mxu0
        %v4928 = vadd.f32 0.0, %v4927
        %v4929 = vpop.f32.mrb[0].mxu0
        %4930 = vdwg.mxu0
        %v4931 = vadd.f32 %v4690, %v4901
        %v4932 = vadd.f32 %v4693, %v4904
        %v4933 = vadd.f32 %v4698, %v4909
        %v4934 = vadd.f32 %v4701, %v4912
        %v4935 = vadd.f32 %v4706, %v4917
        %v4936 = vadd.f32 %v4709, %v4920
        %v4937 = vadd.f32 %v4714, %v4925
        %v4938 = vadd.f32 %v4717, %v4928
        %s4939 = scalar_lea.vmem [#allocation4], 24
        %v4940 = vld [vmem:[%s4939] sm:$0xff]
        %v4941 = vld [vmem:[%s4939 + $0x8] sm:$0xff]
        %v4942 = vld [vmem:[%s4939 + $0x10] sm:$0xff]
        %v4943 = vld [vmem:[%s4939 + $0x18] sm:$0xff]
        %v4944 = vld [vmem:[%s4939 + $0x20] sm:$0xff]
        %v4945 = vld [vmem:[%s4939 + $0x28] sm:$0xff]
        %v4946 = vld [vmem:[%s4939 + $0x30] sm:$0xff]
        %v4947 = vld [vmem:[%s4939 + $0x38] sm:$0xff]
        %s4948 = scalar_lea.vmem %s1, 264
        %v4949 = vld [vmem:[%s4948] sm:$0xf]
        %v4950 = vld [vmem:[%s4948 + $0x4] sm:$0xf]
        %v4951 = vld [vmem:[%s4948 + $0x8] sm:$0xf]
        %v4952 = vld [vmem:[%s4948 + $0xc] sm:$0xf]
        %v4953 = vld [vmem:[%s4948 + $0x10] sm:$0xf]
        %v4954 = vld [vmem:[%s4948 + $0x14] sm:$0xf]
        %v4955 = vld [vmem:[%s4948 + $0x18] sm:$0xf]
        %v4956 = vld [vmem:[%s4948 + $0x1c] sm:$0xf]
        %v4957 = vld [vmem:[%s4948 + $0x20] sm:$0xf]
        %v4958 = vld [vmem:[%s4948 + $0x24] sm:$0xf]
        %v4959 = vld [vmem:[%s4948 + $0x28] sm:$0xf]
        %v4960 = vld [vmem:[%s4948 + $0x2c] sm:$0xf]
        %v4961 = vld [vmem:[%s4948 + $0x30] sm:$0xf]
        %v4962 = vld [vmem:[%s4948 + $0x34] sm:$0xf]
        %v4963 = vld [vmem:[%s4948 + $0x38] sm:$0xf]
        %v4964 = vld [vmem:[%s4948 + $0x3c] sm:$0xf]
        %v4965 = vld [vmem:[%s4948 + $0x40] sm:$0xf]
        %v4966 = vld [vmem:[%s4948 + $0x44] sm:$0xf]
        %v4967 = vld [vmem:[%s4948 + $0x48] sm:$0xf]
        %v4968 = vld [vmem:[%s4948 + $0x4c] sm:$0xf]
        %v4969 = vld [vmem:[%s4948 + $0x50] sm:$0xf]
        %v4970 = vld [vmem:[%s4948 + $0x54] sm:$0xf]
        %v4979 = vunpack.c.l.b16 %v4940
        %v4980 = vunpack.c.h.b16 %v4940
        %v4981 = vunpack.c.l.b16 %v4941
        %v4982 = vunpack.c.h.b16 %v4941
        %v4983 = vunpack.c.l.b16 %v4942
        %v4984 = vunpack.c.h.b16 %v4942
        %v4985 = vunpack.c.l.b16 %v4943
        %v4986 = vunpack.c.h.b16 %v4943
        %v4987 = vunpack.c.l.b16 %v4944
        %v4988 = vunpack.c.h.b16 %v4944
        %v4989 = vunpack.c.l.b16 %v4945
        %v4990 = vunpack.c.h.b16 %v4945
        %v4991 = vunpack.c.l.b16 %v4946
        %v4992 = vunpack.c.h.b16 %v4946
        %v4993 = vunpack.c.l.b16 %v4947
        %v4994 = vunpack.c.h.b16 %v4947
        %v4995 = vpack.c.b16 %v4981, %v4979
        %v4996 = vpack.c.b16 %v4982, %v4980
        %v4997 = vpack.c.b16 %v4985, %v4983
        %v4998 = vpack.c.b16 %v4986, %v4984
        %v4999 = vpack.c.b16 %v4989, %v4987
        %v5000 = vpack.c.b16 %v4990, %v4988
        %v5001 = vpack.c.b16 %v4993, %v4991
        %v5002 = vpack.c.b16 %v4994, %v4992
        %v5029 = vunpack.c.l.b16 %v4949
        %v5030 = vunpack.c.l.b16 %v4950
        %v5031 = vunpack.c.l.b16 %v4951
        %v5032 = vunpack.c.l.b16 %v4952
        %v5033 = vunpack.c.l.b16 %v4953
        %v5034 = vunpack.c.l.b16 %v4954
        %v5035 = vunpack.c.l.b16 %v4955
        %v5036 = vunpack.c.l.b16 %v4956
        %v5037 = vunpack.c.l.b16 %v4957
        %v5038 = vunpack.c.l.b16 %v4958
        %v5039 = vunpack.c.l.b16 %v4959
        %v5040 = vunpack.c.l.b16 %v4960
        %v5041 = vunpack.c.l.b16 %v4961
        %v5042 = vunpack.c.l.b16 %v4962
        %v5043 = vunpack.c.l.b16 %v4963
        %v5044 = vunpack.c.l.b16 %v4964
        %v5045 = vunpack.c.l.b16 %v4965
        %v5046 = vunpack.c.l.b16 %v4966
        %v5047 = vunpack.c.l.b16 %v4967
        %v5048 = vunpack.c.l.b16 %v4968
        %v5049 = vunpack.c.l.b16 %v4969
        %v5050 = vunpack.c.l.b16 %v4970
        %v5051 = vpack.c.b16 %v5030, %v5029
        %v5052 = vpack.c.b16 %v5032, %v5031
        %v5053 = vpack.c.b16 %v5034, %v5033
        %v5054 = vpack.c.b16 %v5036, %v5035
        %v5055 = vpack.c.b16 %v5038, %v5037
        %v5056 = vpack.c.b16 %v5040, %v5039
        %v5057 = vpack.c.b16 %v5042, %v5041
        %v5058 = vpack.c.b16 %v5044, %v5043
        %v5059 = vpack.c.b16 %v5046, %v5045
        %v5060 = vpack.c.b16 %v5048, %v5047
        %v5061 = vpack.c.b16 %v5050, %v5049
        %v5074 = vsel %vm4463, %v4996, 0
        %v5077 = vsel %vm4463, %v4998, 0
        %v5080 = vsel %vm4463, %v5000, 0
        %v5083 = vsel %vm4463, %v5002, 0
        %5085 = vmatprep.subr.bf16.mxu0 0
        %5086 = vmatpush1.bf16.msra.mxu0 %v5051
        %5087 = vmatprep.subr.bf16.mxu0 0
        %5088 = vmatpush1.bf16.msra.mxu0 %v5052
        %5089 = vmatprep.subr.bf16.mxu0 0
        %5090 = vmatpush1.bf16.msra.mxu0 %v5053
        %5091 = vmatprep.subr.bf16.mxu0 0
        %5092 = vmatpush1.bf16.msra.mxu0 %v5054
        %5093 = vmatprep.subr.bf16.mxu0 0
        %5094 = vmatpush1.bf16.msra.mxu0 %v5055
        %5095 = vmatprep.subr.bf16.mxu0 0
        %5096 = vmatpush1.bf16.msra.mxu0 %v5056
        %5097 = vmatprep.subr.bf16.mxu0 0
        %5098 = vmatpush1.bf16.msra.mxu0 %v5057
        %5099 = vmatprep.subr.bf16.mxu0 0
        %5100 = vmatpush1.bf16.msra.mxu0 %v5058
        %5101 = vmatprep.subr.bf16.mxu0 0
        %5102 = vmatpush1.bf16.msra.mxu0 %v5059
        %5103 = vmatprep.subr.bf16.mxu0 0
        %5104 = vmatpush1.bf16.msra.mxu0 %v5060
        %5105 = vmatprep.subr.bf16.mxu0 0
        %5106 = vmatpush1.bf16.msra.mxu0 %v5061
        %5107 = vmatprep.subr.bf16.mxu0 0
        %5108 = vmatpush1.bf16.msra.mxu0 0
        %5109 = vmatprep.subr.bf16.mxu0 0
        %5110 = vmatpush1.bf16.msra.mxu0 0
        %5111 = vmatprep.subr.bf16.mxu0 0
        %5112 = vmatpush1.bf16.msra.mxu0 0
        %5113 = vmatprep.subr.bf16.mxu0 0
        %5114 = vmatpush1.bf16.msra.mxu0 0
        %5115 = vmatprep.subr.bf16.mxu0 0
        %5116 = vmatpush1.bf16.msra.mxu0 0
        %5117 = vmatprep.mubr.bf16.mxu0 %v5074
        %5118 = vmatmul.mubr.bf16.gmra.mrb[0].mxu0 %v4995
        %v5119 = vpop.f32.mrb[0].mxu0
        %v5120 = vadd.f32 0.0, %v5119
        %v5121 = vpop.f32.mrb[0].mxu0
        %v5122 = vpop.f32.mrb[0].mxu0
        %v5123 = vadd.f32 0.0, %v5122
        %v5124 = vpop.f32.mrb[0].mxu0
        %5125 = vmatprep.mubr.bf16.mxu0 %v5077
        %5126 = vmatmul.mubr.bf16.gmra.mrb[0].mxu0 %v4997
        %v5127 = vpop.f32.mrb[0].mxu0
        %v5128 = vadd.f32 0.0, %v5127
        %v5129 = vpop.f32.mrb[0].mxu0
        %v5130 = vpop.f32.mrb[0].mxu0
        %v5131 = vadd.f32 0.0, %v5130
        %v5132 = vpop.f32.mrb[0].mxu0
        %5133 = vmatprep.mubr.bf16.mxu0 %v5080
        %5134 = vmatmul.mubr.bf16.gmra.mrb[0].mxu0 %v4999
        %v5135 = vpop.f32.mrb[0].mxu0
        %v5136 = vadd.f32 0.0, %v5135
        %v5137 = vpop.f32.mrb[0].mxu0
        %v5138 = vpop.f32.mrb[0].mxu0
        %v5139 = vadd.f32 0.0, %v5138
        %v5140 = vpop.f32.mrb[0].mxu0
        %5141 = vmatprep.mubr.bf16.mxu0 %v5083
        %5142 = vmatmul.mubr.bf16.gmra.mrb[0].mxu0 %v5001
        %v5143 = vpop.f32.mrb[0].mxu0
        %v5144 = vadd.f32 0.0, %v5143
        %v5145 = vpop.f32.mrb[0].mxu0
        %v5146 = vpop.f32.mrb[0].mxu0
        %v5147 = vadd.f32 0.0, %v5146
        %v5148 = vpop.f32.mrb[0].mxu0
        %5149 = vdwg.mxu0
        %v5150 = vadd.f32 %v4931, %v5120
        %v5151 = vadd.f32 %v4932, %v5123
        %v5152 = vadd.f32 %v4933, %v5128
        %v5153 = vadd.f32 %v4934, %v5131
        %v5154 = vadd.f32 %v4935, %v5136
        %v5155 = vadd.f32 %v4936, %v5139
        %v5156 = vadd.f32 %v4937, %v5144
        %v5157 = vadd.f32 %v4938, %v5147
        %s5158 = scalar_lea.vmem [#allocation4], 32
        %v5159 = vld [vmem:[%s5158] sm:$0xff]
        %v5160 = vld [vmem:[%s5158 + $0x8] sm:$0xff]
        %v5161 = vld [vmem:[%s5158 + $0x10] sm:$0xff]
        %v5162 = vld [vmem:[%s5158 + $0x18] sm:$0xff]
        %v5163 = vld [vmem:[%s5158 + $0x20] sm:$0xff]
        %v5164 = vld [vmem:[%s5158 + $0x28] sm:$0xff]
        %v5165 = vld [vmem:[%s5158 + $0x30] sm:$0xff]
        %v5166 = vld [vmem:[%s5158 + $0x38] sm:$0xff]
        %s5167 = scalar_lea.vmem %s1, 352
        %v5168 = vld [vmem:[%s5167] sm:$0xf]
        %v5169 = vld [vmem:[%s5167 + $0x4] sm:$0xf]
        %v5170 = vld [vmem:[%s5167 + $0x8] sm:$0xf]
        %v5171 = vld [vmem:[%s5167 + $0xc] sm:$0xf]
        %v5172 = vld [vmem:[%s5167 + $0x10] sm:$0xf]
        %v5173 = vld [vmem:[%s5167 + $0x14] sm:$0xf]
        %v5174 = vld [vmem:[%s5167 + $0x18] sm:$0xf]
        %v5175 = vld [vmem:[%s5167 + $0x1c] sm:$0xf]
        %v5176 = vld [vmem:[%s5167 + $0x20] sm:$0xf]
        %v5177 = vld [vmem:[%s5167 + $0x24] sm:$0xf]
        %v5178 = vld [vmem:[%s5167 + $0x28] sm:$0xf]
        %v5179 = vld [vmem:[%s5167 + $0x2c] sm:$0xf]
        %v5180 = vld [vmem:[%s5167 + $0x30] sm:$0xf]
        %v5181 = vld [vmem:[%s5167 + $0x34] sm:$0xf]
        %v5182 = vld [vmem:[%s5167 + $0x38] sm:$0xf]
        %v5183 = vld [vmem:[%s5167 + $0x3c] sm:$0xf]
        %v5184 = vld [vmem:[%s5167 + $0x40] sm:$0xf]
        %v5185 = vld [vmem:[%s5167 + $0x44] sm:$0xf]
        %v5186 = vld [vmem:[%s5167 + $0x48] sm:$0xf]
        %v5187 = vld [vmem:[%s5167 + $0x4c] sm:$0xf]
        %v5188 = vld [vmem:[%s5167 + $0x50] sm:$0xf]
        %v5189 = vld [vmem:[%s5167 + $0x54] sm:$0xf]
        %v5198 = vunpack.c.l.b16 %v5159
        %v5199 = vunpack.c.h.b16 %v5159
        %v5200 = vunpack.c.l.b16 %v5160
        %v5201 = vunpack.c.h.b16 %v5160
        %v5202 = vunpack.c.l.b16 %v5161
        %v5203 = vunpack.c.h.b16 %v5161
        %v5204 = vunpack.c.l.b16 %v5162
        %v5205 = vunpack.c.h.b16 %v5162
        %v5206 = vunpack.c.l.b16 %v5163
        %v5207 = vunpack.c.h.b16 %v5163
        %v5208 = vunpack.c.l.b16 %v5164
        %v5209 = vunpack.c.h.b16 %v5164
        %v5210 = vunpack.c.l.b16 %v5165
        %v5211 = vunpack.c.h.b16 %v5165
        %v5212 = vunpack.c.l.b16 %v5166
        %v5213 = vunpack.c.h.b16 %v5166
        %v5214 = vpack.c.b16 %v5200, %v5198
        %v5215 = vpack.c.b16 %v5201, %v5199
        %v5216 = vpack.c.b16 %v5204, %v5202
        %v5217 = vpack.c.b16 %v5205, %v5203
        %v5218 = vpack.c.b16 %v5208, %v5206
        %v5219 = vpack.c.b16 %v5209, %v5207
        %v5220 = vpack.c.b16 %v5212, %v5210
        %v5221 = vpack.c.b16 %v5213, %v5211
        %v5248 = vunpack.c.l.b16 %v5168
        %v5249 = vunpack.c.l.b16 %v5169
        %v5250 = vunpack.c.l.b16 %v5170
        %v5251 = vunpack.c.l.b16 %v5171
        %v5252 = vunpack.c.l.b16 %v5172
        %v5253 = vunpack.c.l.b16 %v5173
        %v5254 = vunpack.c.l.b16 %v5174
        %v5255 = vunpack.c.l.b16 %v5175
        %v5256 = vunpack.c.l.b16 %v5176
        %v5257 = vunpack.c.l.b16 %v5177
        %v5258 = vunpack.c.l.b16 %v5178
        %v5259 = vunpack.c.l.b16 %v5179
        %v5260 = vunpack.c.l.b16 %v5180
        %v5261 = vunpack.c.l.b16 %v5181
        %v5262 = vunpack.c.l.b16 %v5182
        %v5263 = vunpack.c.l.b16 %v5183
        %v5264 = vunpack.c.l.b16 %v5184
        %v5265 = vunpack.c.l.b16 %v5185
        %v5266 = vunpack.c.l.b16 %v5186
        %v5267 = vunpack.c.l.b16 %v5187
        %v5268 = vunpack.c.l.b16 %v5188
        %v5269 = vunpack.c.l.b16 %v5189
        %v5270 = vpack.c.b16 %v5249, %v5248
        %v5271 = vpack.c.b16 %v5251, %v5250
        %v5272 = vpack.c.b16 %v5253, %v5252
        %v5273 = vpack.c.b16 %v5255, %v5254
        %v5274 = vpack.c.b16 %v5257, %v5256
        %v5275 = vpack.c.b16 %v5259, %v5258
        %v5276 = vpack.c.b16 %v5261, %v5260
        %v5277 = vpack.c.b16 %v5263, %v5262
        %v5278 = vpack.c.b16 %v5265, %v5264
        %v5279 = vpack.c.b16 %v5267, %v5266
        %v5280 = vpack.c.b16 %v5269, %v5268
        %v5293 = vsel %vm4463, %v5215, 0
        %v5296 = vsel %vm4463, %v5217, 0
        %v5299 = vsel %vm4463, %v5219, 0
        %v5302 = vsel %vm4463, %v5221, 0
        %5304 = vmatprep.subr.bf16.mxu0 0
        %5305 = vmatpush1.bf16.msra.mxu0 %v5270
        %5306 = vmatprep.subr.bf16.mxu0 0
        %5307 = vmatpush1.bf16.msra.mxu0 %v5271
        %5308 = vmatprep.subr.bf16.mxu0 0
        %5309 = vmatpush1.bf16.msra.mxu0 %v5272
        %5310 = vmatprep.subr.bf16.mxu0 0
        %5311 = vmatpush1.bf16.msra.mxu0 %v5273
        %5312 = vmatprep.subr.bf16.mxu0 0
        %5313 = vmatpush1.bf16.msra.mxu0 %v5274
        %5314 = vmatprep.subr.bf16.mxu0 0
        %5315 = vmatpush1.bf16.msra.mxu0 %v5275
        %5316 = vmatprep.subr.bf16.mxu0 0
        %5317 = vmatpush1.bf16.msra.mxu0 %v5276
        %5318 = vmatprep.subr.bf16.mxu0 0
        %5319 = vmatpush1.bf16.msra.mxu0 %v5277
        %5320 = vmatprep.subr.bf16.mxu0 0
        %5321 = vmatpush1.bf16.msra.mxu0 %v5278
        %5322 = vmatprep.subr.bf16.mxu0 0
        %5323 = vmatpush1.bf16.msra.mxu0 %v5279
        %5324 = vmatprep.subr.bf16.mxu0 0
        %5325 = vmatpush1.bf16.msra.mxu0 %v5280
        %5326 = vmatprep.subr.bf16.mxu0 0
        %5327 = vmatpush1.bf16.msra.mxu0 0
        %5328 = vmatprep.subr.bf16.mxu0 0
        %5329 = vmatpush1.bf16.msra.mxu0 0
        %5330 = vmatprep.subr.bf16.mxu0 0
        %5331 = vmatpush1.bf16.msra.mxu0 0
        %5332 = vmatprep.subr.bf16.mxu0 0
        %5333 = vmatpush1.bf16.msra.mxu0 0
        %5334 = vmatprep.subr.bf16.mxu0 0
        %5335 = vmatpush1.bf16.msra.mxu0 0
        %5336 = vmatprep.mubr.bf16.mxu0 %v5293
        %5337 = vmatmul.mubr.bf16.gmra.mrb[0].mxu0 %v5214
        %v5338 = vpop.f32.mrb[0].mxu0
        %v5339 = vadd.f32 0.0, %v5338
        %v5340 = vpop.f32.mrb[0].mxu0
        %v5341 = vpop.f32.mrb[0].mxu0
        %v5342 = vadd.f32 0.0, %v5341
        %v5343 = vpop.f32.mrb[0].mxu0
        %5344 = vmatprep.mubr.bf16.mxu0 %v5296
        %5345 = vmatmul.mubr.bf16.gmra.mrb[0].mxu0 %v5216
        %v5346 = vpop.f32.mrb[0].mxu0
        %v5347 = vadd.f32 0.0, %v5346
        %v5348 = vpop.f32.mrb[0].mxu0
        %v5349 = vpop.f32.mrb[0].mxu0
        %v5350 = vadd.f32 0.0, %v5349
        %v5351 = vpop.f32.mrb[0].mxu0
        %5352 = vmatprep.mubr.bf16.mxu0 %v5299
        %5353 = vmatmul.mubr.bf16.gmra.mrb[0].mxu0 %v5218
        %v5354 = vpop.f32.mrb[0].mxu0
        %v5355 = vadd.f32 0.0, %v5354
        %v5356 = vpop.f32.mrb[0].mxu0
        %v5357 = vpop.f32.mrb[0].mxu0
        %v5358 = vadd.f32 0.0, %v5357
        %v5359 = vpop.f32.mrb[0].mxu0
        %5360 = vmatprep.mubr.bf16.mxu0 %v5302
        %5361 = vmatmul.mubr.bf16.gmra.mrb[0].mxu0 %v5220
        %v5362 = vpop.f32.mrb[0].mxu0
        %v5363 = vadd.f32 0.0, %v5362
        %v5364 = vpop.f32.mrb[0].mxu0
        %v5365 = vpop.f32.mrb[0].mxu0
        %v5366 = vadd.f32 0.0, %v5365
        %v5367 = vpop.f32.mrb[0].mxu0
        %5368 = vdwg.mxu0
        %v5369 = vadd.f32 %v5150, %v5339
        %v5370 = vadd.f32 %v5151, %v5342
        %v5371 = vadd.f32 %v5152, %v5347
        %v5372 = vadd.f32 %v5153, %v5350
        %v5373 = vadd.f32 %v5154, %v5355
        %v5374 = vadd.f32 %v5155, %v5358
        %v5375 = vadd.f32 %v5156, %v5363
        %v5376 = vadd.f32 %v5157, %v5366
        %s5377 = scalar_lea.vmem [#allocation4], 40
        %v5378 = vld [vmem:[%s5377] sm:$0xff]
        %v5379 = vld [vmem:[%s5377 + $0x8] sm:$0xff]
        %v5380 = vld [vmem:[%s5377 + $0x10] sm:$0xff]
        %v5381 = vld [vmem:[%s5377 + $0x18] sm:$0xff]
        %v5382 = vld [vmem:[%s5377 + $0x20] sm:$0xff]
        %v5383 = vld [vmem:[%s5377 + $0x28] sm:$0xff]
        %v5384 = vld [vmem:[%s5377 + $0x30] sm:$0xff]
        %v5385 = vld [vmem:[%s5377 + $0x38] sm:$0xff]
        %s5386 = scalar_lea.vmem %s1, 440
        %v5387 = vld [vmem:[%s5386] sm:$0xf]
        %v5388 = vld [vmem:[%s5386 + $0x4] sm:$0xf]
        %v5389 = vld [vmem:[%s5386 + $0x8] sm:$0xf]
        %v5390 = vld [vmem:[%s5386 + $0xc] sm:$0xf]
        %v5391 = vld [vmem:[%s5386 + $0x10] sm:$0xf]
        %v5392 = vld [vmem:[%s5386 + $0x14] sm:$0xf]
        %v5393 = vld [vmem:[%s5386 + $0x18] sm:$0xf]
        %v5394 = vld [vmem:[%s5386 + $0x1c] sm:$0xf]
        %v5395 = vld [vmem:[%s5386 + $0x20] sm:$0xf]
        %v5396 = vld [vmem:[%s5386 + $0x24] sm:$0xf]
        %v5397 = vld [vmem:[%s5386 + $0x28] sm:$0xf]
        %v5398 = vld [vmem:[%s5386 + $0x2c] sm:$0xf]
        %v5399 = vld [vmem:[%s5386 + $0x30] sm:$0xf]
        %v5400 = vld [vmem:[%s5386 + $0x34] sm:$0xf]
        %v5401 = vld [vmem:[%s5386 + $0x38] sm:$0xf]
        %v5402 = vld [vmem:[%s5386 + $0x3c] sm:$0xf]
        %v5403 = vld [vmem:[%s5386 + $0x40] sm:$0xf]
        %v5404 = vld [vmem:[%s5386 + $0x44] sm:$0xf]
        %v5405 = vld [vmem:[%s5386 + $0x48] sm:$0xf]
        %v5406 = vld [vmem:[%s5386 + $0x4c] sm:$0xf]
        %v5407 = vld [vmem:[%s5386 + $0x50] sm:$0xf]
        %v5408 = vld [vmem:[%s5386 + $0x54] sm:$0xf]
        %v5417 = vunpack.c.l.b16 %v5378
        %v5418 = vunpack.c.h.b16 %v5378
        %v5419 = vunpack.c.l.b16 %v5379
        %v5420 = vunpack.c.h.b16 %v5379
        %v5421 = vunpack.c.l.b16 %v5380
        %v5422 = vunpack.c.h.b16 %v5380
        %v5423 = vunpack.c.l.b16 %v5381
        %v5424 = vunpack.c.h.b16 %v5381
        %v5425 = vunpack.c.l.b16 %v5382
        %v5426 = vunpack.c.h.b16 %v5382
        %v5427 = vunpack.c.l.b16 %v5383
        %v5428 = vunpack.c.h.b16 %v5383
        %v5429 = vunpack.c.l.b16 %v5384
        %v5430 = vunpack.c.h.b16 %v5384
        %v5431 = vunpack.c.l.b16 %v5385
        %v5432 = vunpack.c.h.b16 %v5385
        %v5433 = vpack.c.b16 %v5419, %v5417
        %v5434 = vpack.c.b16 %v5420, %v5418
        %v5435 = vpack.c.b16 %v5423, %v5421
        %v5436 = vpack.c.b16 %v5424, %v5422
        %v5437 = vpack.c.b16 %v5427, %v5425
        %v5438 = vpack.c.b16 %v5428, %v5426
        %v5439 = vpack.c.b16 %v5431, %v5429
        %v5440 = vpack.c.b16 %v5432, %v5430
        %v5467 = vunpack.c.l.b16 %v5387
        %v5468 = vunpack.c.l.b16 %v5388
        %v5469 = vunpack.c.l.b16 %v5389
        %v5470 = vunpack.c.l.b16 %v5390
        %v5471 = vunpack.c.l.b16 %v5391
        %v5472 = vunpack.c.l.b16 %v5392
        %v5473 = vunpack.c.l.b16 %v5393
        %v5474 = vunpack.c.l.b16 %v5394
        %v5475 = vunpack.c.l.b16 %v5395
        %v5476 = vunpack.c.l.b16 %v5396
        %v5477 = vunpack.c.l.b16 %v5397
        %v5478 = vunpack.c.l.b16 %v5398
        %v5479 = vunpack.c.l.b16 %v5399
        %v5480 = vunpack.c.l.b16 %v5400
        %v5481 = vunpack.c.l.b16 %v5401
        %v5482 = vunpack.c.l.b16 %v5402
        %v5483 = vunpack.c.l.b16 %v5403
        %v5484 = vunpack.c.l.b16 %v5404
        %v5485 = vunpack.c.l.b16 %v5405
        %v5486 = vunpack.c.l.b16 %v5406
        %v5487 = vunpack.c.l.b16 %v5407
        %v5488 = vunpack.c.l.b16 %v5408
        %v5489 = vpack.c.b16 %v5468, %v5467
        %v5490 = vpack.c.b16 %v5470, %v5469
        %v5491 = vpack.c.b16 %v5472, %v5471
        %v5492 = vpack.c.b16 %v5474, %v5473
        %v5493 = vpack.c.b16 %v5476, %v5475
        %v5494 = vpack.c.b16 %v5478, %v5477
        %v5495 = vpack.c.b16 %v5480, %v5479
        %v5496 = vpack.c.b16 %v5482, %v5481
        %v5497 = vpack.c.b16 %v5484, %v5483
        %v5498 = vpack.c.b16 %v5486, %v5485
        %v5499 = vpack.c.b16 %v5488, %v5487
        %v5512 = vsel %vm4463, %v5434, 0
        %v5515 = vsel %vm4463, %v5436, 0
        %v5518 = vsel %vm4463, %v5438, 0
        %v5521 = vsel %vm4463, %v5440, 0
        %5523 = vmatprep.subr.bf16.mxu0 0
        %5524 = vmatpush1.bf16.msra.mxu0 %v5489
        %5525 = vmatprep.subr.bf16.mxu0 0
        %5526 = vmatpush1.bf16.msra.mxu0 %v5490
        %5527 = vmatprep.subr.bf16.mxu0 0
        %5528 = vmatpush1.bf16.msra.mxu0 %v5491
        %5529 = vmatprep.subr.bf16.mxu0 0
        %5530 = vmatpush1.bf16.msra.mxu0 %v5492
        %5531 = vmatprep.subr.bf16.mxu0 0
        %5532 = vmatpush1.bf16.msra.mxu0 %v5493
        %5533 = vmatprep.subr.bf16.mxu0 0
        %5534 = vmatpush1.bf16.msra.mxu0 %v5494
        %5535 = vmatprep.subr.bf16.mxu0 0
        %5536 = vmatpush1.bf16.msra.mxu0 %v5495
        %5537 = vmatprep.subr.bf16.mxu0 0
        %5538 = vmatpush1.bf16.msra.mxu0 %v5496
        %5539 = vmatprep.subr.bf16.mxu0 0
        %5540 = vmatpush1.bf16.msra.mxu0 %v5497
        %5541 = vmatprep.subr.bf16.mxu0 0
        %5542 = vmatpush1.bf16.msra.mxu0 %v5498
        %5543 = vmatprep.subr.bf16.mxu0 0
        %5544 = vmatpush1.bf16.msra.mxu0 %v5499
        %5545 = vmatprep.subr.bf16.mxu0 0
        %5546 = vmatpush1.bf16.msra.mxu0 0
        %5547 = vmatprep.subr.bf16.mxu0 0
        %5548 = vmatpush1.bf16.msra.mxu0 0
        %5549 = vmatprep.subr.bf16.mxu0 0
        %5550 = vmatpush1.bf16.msra.mxu0 0
        %5551 = vmatprep.subr.bf16.mxu0 0
        %5552 = vmatpush1.bf16.msra.mxu0 0
        %5553 = vmatprep.subr.bf16.mxu0 0
        %5554 = vmatpush1.bf16.msra.mxu0 0
        %5555 = vmatprep.mubr.bf16.mxu0 %v5512
        %5556 = vmatmul.mubr.bf16.gmra.mrb[0].mxu0 %v5433
        %v5557 = vpop.f32.mrb[0].mxu0
        %v5558 = vadd.f32 0.0, %v5557
        %v5559 = vpop.f32.mrb[0].mxu0
        %v5560 = vpop.f32.mrb[0].mxu0
        %v5561 = vadd.f32 0.0, %v5560
        %v5562 = vpop.f32.mrb[0].mxu0
        %5563 = vmatprep.mubr.bf16.mxu0 %v5515
        %5564 = vmatmul.mubr.bf16.gmra.mrb[0].mxu0 %v5435
        %v5565 = vpop.f32.mrb[0].mxu0
        %v5566 = vadd.f32 0.0, %v5565
        %v5567 = vpop.f32.mrb[0].mxu0
        %v5568 = vpop.f32.mrb[0].mxu0
        %v5569 = vadd.f32 0.0, %v5568
        %v5570 = vpop.f32.mrb[0].mxu0
        %5571 = vmatprep.mubr.bf16.mxu0 %v5518
        %5572 = vmatmul.mubr.bf16.gmra.mrb[0].mxu0 %v5437
        %v5573 = vpop.f32.mrb[0].mxu0
        %v5574 = vadd.f32 0.0, %v5573
        %v5575 = vpop.f32.mrb[0].mxu0
        %v5576 = vpop.f32.mrb[0].mxu0
        %v5577 = vadd.f32 0.0, %v5576
        %v5578 = vpop.f32.mrb[0].mxu0
        %5579 = vmatprep.mubr.bf16.mxu0 %v5521
        %5580 = vmatmul.mubr.bf16.gmra.mrb[0].mxu0 %v5439
        %v5581 = vpop.f32.mrb[0].mxu0
        %v5582 = vadd.f32 0.0, %v5581
        %v5583 = vpop.f32.mrb[0].mxu0
        %v5584 = vpop.f32.mrb[0].mxu0
        %v5585 = vadd.f32 0.0, %v5584
        %v5586 = vpop.f32.mrb[0].mxu0
        %5587 = vdwg.mxu0
        %v5588 = vadd.f32 %v5369, %v5558
        %v5589 = vadd.f32 %v5370, %v5561
        %v5590 = vadd.f32 %v5371, %v5566
        %v5591 = vadd.f32 %v5372, %v5569
        %v5592 = vadd.f32 %v5373, %v5574
        %v5593 = vadd.f32 %v5374, %v5577
        %v5594 = vadd.f32 %v5375, %v5582
        %v5595 = vadd.f32 %v5376, %v5585
        %s5596 = scalar_lea.vmem [#allocation4], 48
        %v5597 = vld [vmem:[%s5596] sm:$0xff]
        %v5598 = vld [vmem:[%s5596 + $0x8] sm:$0xff]
        %v5599 = vld [vmem:[%s5596 + $0x10] sm:$0xff]
        %v5600 = vld [vmem:[%s5596 + $0x18] sm:$0xff]
        %v5601 = vld [vmem:[%s5596 + $0x20] sm:$0xff]
        %v5602 = vld [vmem:[%s5596 + $0x28] sm:$0xff]
        %v5603 = vld [vmem:[%s5596 + $0x30] sm:$0xff]
        %v5604 = vld [vmem:[%s5596 + $0x38] sm:$0xff]
        %s5605 = scalar_lea.vmem %s1, 528
        %v5606 = vld [vmem:[%s5605] sm:$0xf]
        %v5607 = vld [vmem:[%s5605 + $0x4] sm:$0xf]
        %v5608 = vld [vmem:[%s5605 + $0x8] sm:$0xf]
        %v5609 = vld [vmem:[%s5605 + $0xc] sm:$0xf]
        %v5610 = vld [vmem:[%s5605 + $0x10] sm:$0xf]
        %v5611 = vld [vmem:[%s5605 + $0x14] sm:$0xf]
        %v5612 = vld [vmem:[%s5605 + $0x18] sm:$0xf]
        %v5613 = vld [vmem:[%s5605 + $0x1c] sm:$0xf]
        %v5614 = vld [vmem:[%s5605 + $0x20] sm:$0xf]
        %v5615 = vld [vmem:[%s5605 + $0x24] sm:$0xf]
        %v5616 = vld [vmem:[%s5605 + $0x28] sm:$0xf]
        %v5617 = vld [vmem:[%s5605 + $0x2c] sm:$0xf]
        %v5618 = vld [vmem:[%s5605 + $0x30] sm:$0xf]
        %v5619 = vld [vmem:[%s5605 + $0x34] sm:$0xf]
        %v5620 = vld [vmem:[%s5605 + $0x38] sm:$0xf]
        %v5621 = vld [vmem:[%s5605 + $0x3c] sm:$0xf]
        %v5622 = vld [vmem:[%s5605 + $0x40] sm:$0xf]
        %v5623 = vld [vmem:[%s5605 + $0x44] sm:$0xf]
        %v5624 = vld [vmem:[%s5605 + $0x48] sm:$0xf]
        %v5625 = vld [vmem:[%s5605 + $0x4c] sm:$0xf]
        %v5626 = vld [vmem:[%s5605 + $0x50] sm:$0xf]
        %v5627 = vld [vmem:[%s5605 + $0x54] sm:$0xf]
        %v5636 = vunpack.c.l.b16 %v5597
        %v5637 = vunpack.c.h.b16 %v5597
        %v5638 = vunpack.c.l.b16 %v5598
        %v5639 = vunpack.c.h.b16 %v5598
        %v5640 = vunpack.c.l.b16 %v5599
        %v5641 = vunpack.c.h.b16 %v5599
        %v5642 = vunpack.c.l.b16 %v5600
        %v5643 = vunpack.c.h.b16 %v5600
        %v5644 = vunpack.c.l.b16 %v5601
        %v5645 = vunpack.c.h.b16 %v5601
        %v5646 = vunpack.c.l.b16 %v5602
        %v5647 = vunpack.c.h.b16 %v5602
        %v5648 = vunpack.c.l.b16 %v5603
        %v5649 = vunpack.c.h.b16 %v5603
        %v5650 = vunpack.c.l.b16 %v5604
        %v5651 = vunpack.c.h.b16 %v5604
        %v5652 = vpack.c.b16 %v5638, %v5636
        %v5653 = vpack.c.b16 %v5639, %v5637
        %v5654 = vpack.c.b16 %v5642, %v5640
        %v5655 = vpack.c.b16 %v5643, %v5641
        %v5656 = vpack.c.b16 %v5646, %v5644
        %v5657 = vpack.c.b16 %v5647, %v5645
        %v5658 = vpack.c.b16 %v5650, %v5648
        %v5659 = vpack.c.b16 %v5651, %v5649
        %v5686 = vunpack.c.l.b16 %v5606
        %v5687 = vunpack.c.l.b16 %v5607
        %v5688 = vunpack.c.l.b16 %v5608
        %v5689 = vunpack.c.l.b16 %v5609
        %v5690 = vunpack.c.l.b16 %v5610
        %v5691 = vunpack.c.l.b16 %v5611
        %v5692 = vunpack.c.l.b16 %v5612
        %v5693 = vunpack.c.l.b16 %v5613
        %v5694 = vunpack.c.l.b16 %v5614
        %v5695 = vunpack.c.l.b16 %v5615
        %v5696 = vunpack.c.l.b16 %v5616
        %v5697 = vunpack.c.l.b16 %v5617
        %v5698 = vunpack.c.l.b16 %v5618
        %v5699 = vunpack.c.l.b16 %v5619
        %v5700 = vunpack.c.l.b16 %v5620
        %v5701 = vunpack.c.l.b16 %v5621
        %v5702 = vunpack.c.l.b16 %v5622
        %v5703 = vunpack.c.l.b16 %v5623
        %v5704 = vunpack.c.l.b16 %v5624
        %v5705 = vunpack.c.l.b16 %v5625
        %v5706 = vunpack.c.l.b16 %v5626
        %v5707 = vunpack.c.l.b16 %v5627
        %v5708 = vpack.c.b16 %v5687, %v5686
        %v5709 = vpack.c.b16 %v5689, %v5688
        %v5710 = vpack.c.b16 %v5691, %v5690
        %v5711 = vpack.c.b16 %v5693, %v5692
        %v5712 = vpack.c.b16 %v5695, %v5694
        %v5713 = vpack.c.b16 %v5697, %v5696
        %v5714 = vpack.c.b16 %v5699, %v5698
        %v5715 = vpack.c.b16 %v5701, %v5700
        %v5716 = vpack.c.b16 %v5703, %v5702
        %v5717 = vpack.c.b16 %v5705, %v5704
        %v5718 = vpack.c.b16 %v5707, %v5706
        %v5731 = vsel %vm4463, %v5653, 0
        %v5734 = vsel %vm4463, %v5655, 0
        %v5737 = vsel %vm4463, %v5657, 0
        %v5740 = vsel %vm4463, %v5659, 0
        %5742 = vmatprep.subr.bf16.mxu0 0
        %5743 = vmatpush1.bf16.msra.mxu0 %v5708
        %5744 = vmatprep.subr.bf16.mxu0 0
        %5745 = vmatpush1.bf16.msra.mxu0 %v5709
        %5746 = vmatprep.subr.bf16.mxu0 0
        %5747 = vmatpush1.bf16.msra.mxu0 %v5710
        %5748 = vmatprep.subr.bf16.mxu0 0
        %5749 = vmatpush1.bf16.msra.mxu0 %v5711
        %5750 = vmatprep.subr.bf16.mxu0 0
        %5751 = vmatpush1.bf16.msra.mxu0 %v5712
        %5752 = vmatprep.subr.bf16.mxu0 0
        %5753 = vmatpush1.bf16.msra.mxu0 %v5713
        %5754 = vmatprep.subr.bf16.mxu0 0
        %5755 = vmatpush1.bf16.msra.mxu0 %v5714
        %5756 = vmatprep.subr.bf16.mxu0 0
        %5757 = vmatpush1.bf16.msra.mxu0 %v5715
        %5758 = vmatprep.subr.bf16.mxu0 0
        %5759 = vmatpush1.bf16.msra.mxu0 %v5716
        %5760 = vmatprep.subr.bf16.mxu0 0
        %5761 = vmatpush1.bf16.msra.mxu0 %v5717
        %5762 = vmatprep.subr.bf16.mxu0 0
        %5763 = vmatpush1.bf16.msra.mxu0 %v5718
        %5764 = vmatprep.subr.bf16.mxu0 0
        %5765 = vmatpush1.bf16.msra.mxu0 0
        %5766 = vmatprep.subr.bf16.mxu0 0
        %5767 = vmatpush1.bf16.msra.mxu0 0
        %5768 = vmatprep.subr.bf16.mxu0 0
        %5769 = vmatpush1.bf16.msra.mxu0 0
        %5770 = vmatprep.subr.bf16.mxu0 0
        %5771 = vmatpush1.bf16.msra.mxu0 0
        %5772 = vmatprep.subr.bf16.mxu0 0
        %5773 = vmatpush1.bf16.msra.mxu0 0
        %5774 = vmatprep.mubr.bf16.mxu0 %v5731
        %5775 = vmatmul.mubr.bf16.gmra.mrb[0].mxu0 %v5652
        %v5776 = vpop.f32.mrb[0].mxu0
        %v5777 = vadd.f32 0.0, %v5776
        %v5778 = vpop.f32.mrb[0].mxu0
        %v5779 = vpop.f32.mrb[0].mxu0
        %v5780 = vadd.f32 0.0, %v5779
        %v5781 = vpop.f32.mrb[0].mxu0
        %5782 = vmatprep.mubr.bf16.mxu0 %v5734
        %5783 = vmatmul.mubr.bf16.gmra.mrb[0].mxu0 %v5654
        %v5784 = vpop.f32.mrb[0].mxu0
        %v5785 = vadd.f32 0.0, %v5784
        %v5786 = vpop.f32.mrb[0].mxu0
        %v5787 = vpop.f32.mrb[0].mxu0
        %v5788 = vadd.f32 0.0, %v5787
        %v5789 = vpop.f32.mrb[0].mxu0
        %5790 = vmatprep.mubr.bf16.mxu0 %v5737
        %5791 = vmatmul.mubr.bf16.gmra.mrb[0].mxu0 %v5656
        %v5792 = vpop.f32.mrb[0].mxu0
        %v5793 = vadd.f32 0.0, %v5792
        %v5794 = vpop.f32.mrb[0].mxu0
        %v5795 = vpop.f32.mrb[0].mxu0
        %v5796 = vadd.f32 0.0, %v5795
        %v5797 = vpop.f32.mrb[0].mxu0
        %5798 = vmatprep.mubr.bf16.mxu0 %v5740
        %5799 = vmatmul.mubr.bf16.gmra.mrb[0].mxu0 %v5658
        %v5800 = vpop.f32.mrb[0].mxu0
        %v5801 = vadd.f32 0.0, %v5800
        %v5802 = vpop.f32.mrb[0].mxu0
        %v5803 = vpop.f32.mrb[0].mxu0
        %v5804 = vadd.f32 0.0, %v5803
        %v5805 = vpop.f32.mrb[0].mxu0
        %5806 = vdwg.mxu0
        %v5807 = vadd.f32 %v5588, %v5777
        %v5808 = vadd.f32 %v5589, %v5780
        %v5809 = vadd.f32 %v5590, %v5785
        %v5810 = vadd.f32 %v5591, %v5788
        %v5811 = vadd.f32 %v5592, %v5793
        %v5812 = vadd.f32 %v5593, %v5796
        %v5813 = vadd.f32 %v5594, %v5801
        %v5814 = vadd.f32 %v5595, %v5804
        %s5815 = scalar_lea.vmem [#allocation4], 56
        %v5816 = vld [vmem:[%s5815] sm:$0xff]
        %v5817 = vld [vmem:[%s5815 + $0x8] sm:$0xff]
        %v5818 = vld [vmem:[%s5815 + $0x10] sm:$0xff]
        %v5819 = vld [vmem:[%s5815 + $0x18] sm:$0xff]
        %v5820 = vld [vmem:[%s5815 + $0x20] sm:$0xff]
        %v5821 = vld [vmem:[%s5815 + $0x28] sm:$0xff]
        %v5822 = vld [vmem:[%s5815 + $0x30] sm:$0xff]
        %v5823 = vld [vmem:[%s5815 + $0x38] sm:$0xff]
        %s5824 = scalar_lea.vmem %s1, 616
        %v5825 = vld [vmem:[%s5824] sm:$0xf]
        %v5826 = vld [vmem:[%s5824 + $0x4] sm:$0xf]
        %v5827 = vld [vmem:[%s5824 + $0x8] sm:$0xf]
        %v5828 = vld [vmem:[%s5824 + $0xc] sm:$0xf]
        %v5829 = vld [vmem:[%s5824 + $0x10] sm:$0xf]
        %v5830 = vld [vmem:[%s5824 + $0x14] sm:$0xf]
        %v5831 = vld [vmem:[%s5824 + $0x18] sm:$0xf]
        %v5832 = vld [vmem:[%s5824 + $0x1c] sm:$0xf]
        %v5833 = vld [vmem:[%s5824 + $0x20] sm:$0xf]
        %v5834 = vld [vmem:[%s5824 + $0x24] sm:$0xf]
        %v5835 = vld [vmem:[%s5824 + $0x28] sm:$0xf]
        %v5836 = vld [vmem:[%s5824 + $0x2c] sm:$0xf]
        %v5837 = vld [vmem:[%s5824 + $0x30] sm:$0xf]
        %v5838 = vld [vmem:[%s5824 + $0x34] sm:$0xf]
        %v5839 = vld [vmem:[%s5824 + $0x38] sm:$0xf]
        %v5840 = vld [vmem:[%s5824 + $0x3c] sm:$0xf]
        %v5841 = vld [vmem:[%s5824 + $0x40] sm:$0xf]
        %v5842 = vld [vmem:[%s5824 + $0x44] sm:$0xf]
        %v5843 = vld [vmem:[%s5824 + $0x48] sm:$0xf]
        %v5844 = vld [vmem:[%s5824 + $0x4c] sm:$0xf]
        %v5845 = vld [vmem:[%s5824 + $0x50] sm:$0xf]
        %v5846 = vld [vmem:[%s5824 + $0x54] sm:$0xf]
        %v5855 = vunpack.c.l.b16 %v5816
        %v5856 = vunpack.c.h.b16 %v5816
        %v5857 = vunpack.c.l.b16 %v5817
        %v5858 = vunpack.c.h.b16 %v5817
        %v5859 = vunpack.c.l.b16 %v5818
        %v5860 = vunpack.c.h.b16 %v5818
        %v5861 = vunpack.c.l.b16 %v5819
        %v5862 = vunpack.c.h.b16 %v5819
        %v5863 = vunpack.c.l.b16 %v5820
        %v5864 = vunpack.c.h.b16 %v5820
        %v5865 = vunpack.c.l.b16 %v5821
        %v5866 = vunpack.c.h.b16 %v5821
        %v5867 = vunpack.c.l.b16 %v5822
        %v5868 = vunpack.c.h.b16 %v5822
        %v5869 = vunpack.c.l.b16 %v5823
        %v5870 = vunpack.c.h.b16 %v5823
        %v5871 = vpack.c.b16 %v5857, %v5855
        %v5872 = vpack.c.b16 %v5858, %v5856
        %v5873 = vpack.c.b16 %v5861, %v5859
        %v5874 = vpack.c.b16 %v5862, %v5860
        %v5875 = vpack.c.b16 %v5865, %v5863
        %v5876 = vpack.c.b16 %v5866, %v5864
        %v5877 = vpack.c.b16 %v5869, %v5867
        %v5878 = vpack.c.b16 %v5870, %v5868
        %v5905 = vunpack.c.l.b16 %v5825
        %v5906 = vunpack.c.l.b16 %v5826
        %v5907 = vunpack.c.l.b16 %v5827
        %v5908 = vunpack.c.l.b16 %v5828
        %v5909 = vunpack.c.l.b16 %v5829
        %v5910 = vunpack.c.l.b16 %v5830
        %v5911 = vunpack.c.l.b16 %v5831
        %v5912 = vunpack.c.l.b16 %v5832
        %v5913 = vunpack.c.l.b16 %v5833
        %v5914 = vunpack.c.l.b16 %v5834
        %v5915 = vunpack.c.l.b16 %v5835
        %v5916 = vunpack.c.l.b16 %v5836
        %v5917 = vunpack.c.l.b16 %v5837
        %v5918 = vunpack.c.l.b16 %v5838
        %v5919 = vunpack.c.l.b16 %v5839
        %v5920 = vunpack.c.l.b16 %v5840
        %v5921 = vunpack.c.l.b16 %v5841
        %v5922 = vunpack.c.l.b16 %v5842
        %v5923 = vunpack.c.l.b16 %v5843
        %v5924 = vunpack.c.l.b16 %v5844
        %v5925 = vunpack.c.l.b16 %v5845
        %v5926 = vunpack.c.l.b16 %v5846
        %v5927 = vpack.c.b16 %v5906, %v5905
        %v5928 = vpack.c.b16 %v5908, %v5907
        %v5929 = vpack.c.b16 %v5910, %v5909
        %v5930 = vpack.c.b16 %v5912, %v5911
        %v5931 = vpack.c.b16 %v5914, %v5913
        %v5932 = vpack.c.b16 %v5916, %v5915
        %v5933 = vpack.c.b16 %v5918, %v5917
        %v5934 = vpack.c.b16 %v5920, %v5919
        %v5935 = vpack.c.b16 %v5922, %v5921
        %v5936 = vpack.c.b16 %v5924, %v5923
        %v5937 = vpack.c.b16 %v5926, %v5925
        %v5950 = vsel %vm4463, %v5872, 0
        %v5953 = vsel %vm4463, %v5874, 0
        %v5956 = vsel %vm4463, %v5876, 0
        %v5959 = vsel %vm4463, %v5878, 0
        %5961 = vmatprep.subr.bf16.mxu0 0
        %5962 = vmatpush1.bf16.msra.mxu0 %v5927
        %5963 = vmatprep.subr.bf16.mxu0 0
        %5964 = vmatpush1.bf16.msra.mxu0 %v5928
        %5965 = vmatprep.subr.bf16.mxu0 0
        %5966 = vmatpush1.bf16.msra.mxu0 %v5929
        %5967 = vmatprep.subr.bf16.mxu0 0
        %5968 = vmatpush1.bf16.msra.mxu0 %v5930
        %5969 = vmatprep.subr.bf16.mxu0 0
        %5970 = vmatpush1.bf16.msra.mxu0 %v5931
        %5971 = vmatprep.subr.bf16.mxu0 0
        %5972 = vmatpush1.bf16.msra.mxu0 %v5932
        %5973 = vmatprep.subr.bf16.mxu0 0
        %5974 = vmatpush1.bf16.msra.mxu0 %v5933
        %5975 = vmatprep.subr.bf16.mxu0 0
        %5976 = vmatpush1.bf16.msra.mxu0 %v5934
        %5977 = vmatprep.subr.bf16.mxu0 0
        %5978 = vmatpush1.bf16.msra.mxu0 %v5935
        %5979 = vmatprep.subr.bf16.mxu0 0
        %5980 = vmatpush1.bf16.msra.mxu0 %v5936
        %5981 = vmatprep.subr.bf16.mxu0 0
        %5982 = vmatpush1.bf16.msra.mxu0 %v5937
        %5983 = vmatprep.subr.bf16.mxu0 0
        %5984 = vmatpush1.bf16.msra.mxu0 0
        %5985 = vmatprep.subr.bf16.mxu0 0
        %5986 = vmatpush1.bf16.msra.mxu0 0
        %5987 = vmatprep.subr.bf16.mxu0 0
        %5988 = vmatpush1.bf16.msra.mxu0 0
        %5989 = vmatprep.subr.bf16.mxu0 0
        %5990 = vmatpush1.bf16.msra.mxu0 0
        %5991 = vmatprep.subr.bf16.mxu0 0
        %5992 = vmatpush1.bf16.msra.mxu0 0
        %5993 = vmatprep.mubr.bf16.mxu0 %v5950
        %5994 = vmatmul.mubr.bf16.gmra.mrb[0].mxu0 %v5871
        %v5995 = vpop.f32.mrb[0].mxu0
        %v5996 = vadd.f32 0.0, %v5995
        %v5997 = vpop.f32.mrb[0].mxu0
        %v5998 = vpop.f32.mrb[0].mxu0
        %v5999 = vadd.f32 0.0, %v5998
        %v6000 = vpop.f32.mrb[0].mxu0
        %6001 = vmatprep.mubr.bf16.mxu0 %v5953
        %6002 = vmatmul.mubr.bf16.gmra.mrb[0].mxu0 %v5873
        %v6003 = vpop.f32.mrb[0].mxu0
        %v6004 = vadd.f32 0.0, %v6003
        %v6005 = vpop.f32.mrb[0].mxu0
        %v6006 = vpop.f32.mrb[0].mxu0
        %v6007 = vadd.f32 0.0, %v6006
        %v6008 = vpop.f32.mrb[0].mxu0
        %6009 = vmatprep.mubr.bf16.mxu0 %v5956
        %6010 = vmatmul.mubr.bf16.gmra.mrb[0].mxu0 %v5875
        %v6011 = vpop.f32.mrb[0].mxu0
        %v6012 = vadd.f32 0.0, %v6011
        %v6013 = vpop.f32.mrb[0].mxu0
        %v6014 = vpop.f32.mrb[0].mxu0
        %v6015 = vadd.f32 0.0, %v6014
        %v6016 = vpop.f32.mrb[0].mxu0
        %6017 = vmatprep.mubr.bf16.mxu0 %v5959
        %6018 = vmatmul.mubr.bf16.gmra.mrb[0].mxu0 %v5877
        %v6019 = vpop.f32.mrb[0].mxu0
        %v6020 = vadd.f32 0.0, %v6019
        %v6021 = vpop.f32.mrb[0].mxu0
        %v6022 = vpop.f32.mrb[0].mxu0
        %v6023 = vadd.f32 0.0, %v6022
        %v6024 = vpop.f32.mrb[0].mxu0
        %6025 = vdwg.mxu0
        %v6026 = vadd.f32 %v5807, %v5996
        %v6027 = vadd.f32 %v5808, %v5999
        %v6028 = vadd.f32 %v5809, %v6004
        %v6029 = vadd.f32 %v5810, %v6007
        %v6030 = vadd.f32 %v5811, %v6012
        %v6031 = vadd.f32 %v5812, %v6015
        %v6032 = vadd.f32 %v5813, %v6020
        %v6033 = vadd.f32 %v5814, %v6023
        %s6034 = scalar_lea.vmem [#allocation4], 64
        %v6035 = vld [vmem:[%s6034] sm:$0xff]
        %v6036 = vld [vmem:[%s6034 + $0x8] sm:$0xff]
        %v6037 = vld [vmem:[%s6034 + $0x10] sm:$0xff]
        %v6038 = vld [vmem:[%s6034 + $0x18] sm:$0xff]
        %v6039 = vld [vmem:[%s6034 + $0x20] sm:$0xff]
        %v6040 = vld [vmem:[%s6034 + $0x28] sm:$0xff]
        %v6041 = vld [vmem:[%s6034 + $0x30] sm:$0xff]
        %v6042 = vld [vmem:[%s6034 + $0x38] sm:$0xff]
        %s6043 = scalar_lea.vmem %s1, 704
        %v6044 = vld [vmem:[%s6043] sm:$0xf]
        %v6045 = vld [vmem:[%s6043 + $0x4] sm:$0xf]
        %v6046 = vld [vmem:[%s6043 + $0x8] sm:$0xf]
        %v6047 = vld [vmem:[%s6043 + $0xc] sm:$0xf]
        %v6048 = vld [vmem:[%s6043 + $0x10] sm:$0xf]
        %v6049 = vld [vmem:[%s6043 + $0x14] sm:$0xf]
        %v6050 = vld [vmem:[%s6043 + $0x18] sm:$0xf]
        %v6051 = vld [vmem:[%s6043 + $0x1c] sm:$0xf]
        %v6052 = vld [vmem:[%s6043 + $0x20] sm:$0xf]
        %v6053 = vld [vmem:[%s6043 + $0x24] sm:$0xf]
        %v6054 = vld [vmem:[%s6043 + $0x28] sm:$0xf]
        %v6055 = vld [vmem:[%s6043 + $0x2c] sm:$0xf]
        %v6056 = vld [vmem:[%s6043 + $0x30] sm:$0xf]
        %v6057 = vld [vmem:[%s6043 + $0x34] sm:$0xf]
        %v6058 = vld [vmem:[%s6043 + $0x38] sm:$0xf]
        %v6059 = vld [vmem:[%s6043 + $0x3c] sm:$0xf]
        %v6060 = vld [vmem:[%s6043 + $0x40] sm:$0xf]
        %v6061 = vld [vmem:[%s6043 + $0x44] sm:$0xf]
        %v6062 = vld [vmem:[%s6043 + $0x48] sm:$0xf]
        %v6063 = vld [vmem:[%s6043 + $0x4c] sm:$0xf]
        %v6064 = vld [vmem:[%s6043 + $0x50] sm:$0xf]
        %v6065 = vld [vmem:[%s6043 + $0x54] sm:$0xf]
        %v6074 = vunpack.c.l.b16 %v6035
        %v6075 = vunpack.c.h.b16 %v6035
        %v6076 = vunpack.c.l.b16 %v6036
        %v6077 = vunpack.c.h.b16 %v6036
        %v6078 = vunpack.c.l.b16 %v6037
        %v6079 = vunpack.c.h.b16 %v6037
        %v6080 = vunpack.c.l.b16 %v6038
        %v6081 = vunpack.c.h.b16 %v6038
        %v6082 = vunpack.c.l.b16 %v6039
        %v6083 = vunpack.c.h.b16 %v6039
        %v6084 = vunpack.c.l.b16 %v6040
        %v6085 = vunpack.c.h.b16 %v6040
        %v6086 = vunpack.c.l.b16 %v6041
        %v6087 = vunpack.c.h.b16 %v6041
        %v6088 = vunpack.c.l.b16 %v6042
        %v6089 = vunpack.c.h.b16 %v6042
        %v6090 = vpack.c.b16 %v6076, %v6074
        %v6091 = vpack.c.b16 %v6077, %v6075
        %v6092 = vpack.c.b16 %v6080, %v6078
        %v6093 = vpack.c.b16 %v6081, %v6079
        %v6094 = vpack.c.b16 %v6084, %v6082
        %v6095 = vpack.c.b16 %v6085, %v6083
        %v6096 = vpack.c.b16 %v6088, %v6086
        %v6097 = vpack.c.b16 %v6089, %v6087
        %v6124 = vunpack.c.l.b16 %v6044
        %v6125 = vunpack.c.l.b16 %v6045
        %v6126 = vunpack.c.l.b16 %v6046
        %v6127 = vunpack.c.l.b16 %v6047
        %v6128 = vunpack.c.l.b16 %v6048
        %v6129 = vunpack.c.l.b16 %v6049
        %v6130 = vunpack.c.l.b16 %v6050
        %v6131 = vunpack.c.l.b16 %v6051
        %v6132 = vunpack.c.l.b16 %v6052
        %v6133 = vunpack.c.l.b16 %v6053
        %v6134 = vunpack.c.l.b16 %v6054
        %v6135 = vunpack.c.l.b16 %v6055
        %v6136 = vunpack.c.l.b16 %v6056
        %v6137 = vunpack.c.l.b16 %v6057
        %v6138 = vunpack.c.l.b16 %v6058
        %v6139 = vunpack.c.l.b16 %v6059
        %v6140 = vunpack.c.l.b16 %v6060
        %v6141 = vunpack.c.l.b16 %v6061
        %v6142 = vunpack.c.l.b16 %v6062
        %v6143 = vunpack.c.l.b16 %v6063
        %v6144 = vunpack.c.l.b16 %v6064
        %v6145 = vunpack.c.l.b16 %v6065
        %v6146 = vpack.c.b16 %v6125, %v6124
        %v6147 = vpack.c.b16 %v6127, %v6126
        %v6148 = vpack.c.b16 %v6129, %v6128
        %v6149 = vpack.c.b16 %v6131, %v6130
        %v6150 = vpack.c.b16 %v6133, %v6132
        %v6151 = vpack.c.b16 %v6135, %v6134
        %v6152 = vpack.c.b16 %v6137, %v6136
        %v6153 = vpack.c.b16 %v6139, %v6138
        %v6154 = vpack.c.b16 %v6141, %v6140
        %v6155 = vpack.c.b16 %v6143, %v6142
        %v6156 = vpack.c.b16 %v6145, %v6144
        %v6169 = vsel %vm4463, %v6091, 0
        %v6172 = vsel %vm4463, %v6093, 0
        %v6175 = vsel %vm4463, %v6095, 0
        %v6178 = vsel %vm4463, %v6097, 0
        %6180 = vmatprep.subr.bf16.mxu0 0
        %6181 = vmatpush1.bf16.msra.mxu0 %v6146
        %6182 = vmatprep.subr.bf16.mxu0 0
        %6183 = vmatpush1.bf16.msra.mxu0 %v6147
        %6184 = vmatprep.subr.bf16.mxu0 0
        %6185 = vmatpush1.bf16.msra.mxu0 %v6148
        %6186 = vmatprep.subr.bf16.mxu0 0
        %6187 = vmatpush1.bf16.msra.mxu0 %v6149
        %6188 = vmatprep.subr.bf16.mxu0 0
        %6189 = vmatpush1.bf16.msra.mxu0 %v6150
        %6190 = vmatprep.subr.bf16.mxu0 0
        %6191 = vmatpush1.bf16.msra.mxu0 %v6151
        %6192 = vmatprep.subr.bf16.mxu0 0
        %6193 = vmatpush1.bf16.msra.mxu0 %v6152
        %6194 = vmatprep.subr.bf16.mxu0 0
        %6195 = vmatpush1.bf16.msra.mxu0 %v6153
        %6196 = vmatprep.subr.bf16.mxu0 0
        %6197 = vmatpush1.bf16.msra.mxu0 %v6154
        %6198 = vmatprep.subr.bf16.mxu0 0
        %6199 = vmatpush1.bf16.msra.mxu0 %v6155
        %6200 = vmatprep.subr.bf16.mxu0 0
        %6201 = vmatpush1.bf16.msra.mxu0 %v6156
        %6202 = vmatprep.subr.bf16.mxu0 0
        %6203 = vmatpush1.bf16.msra.mxu0 0
        %6204 = vmatprep.subr.bf16.mxu0 0
        %6205 = vmatpush1.bf16.msra.mxu0 0
        %6206 = vmatprep.subr.bf16.mxu0 0
        %6207 = vmatpush1.bf16.msra.mxu0 0
        %6208 = vmatprep.subr.bf16.mxu0 0
        %6209 = vmatpush1.bf16.msra.mxu0 0
        %6210 = vmatprep.subr.bf16.mxu0 0
        %6211 = vmatpush1.bf16.msra.mxu0 0
        %6212 = vmatprep.mubr.bf16.mxu0 %v6169
        %6213 = vmatmul.mubr.bf16.gmra.mrb[0].mxu0 %v6090
        %v6214 = vpop.f32.mrb[0].mxu0
        %v6215 = vadd.f32 0.0, %v6214
        %v6216 = vpop.f32.mrb[0].mxu0
        %v6217 = vpop.f32.mrb[0].mxu0
        %v6218 = vadd.f32 0.0, %v6217
        %v6219 = vpop.f32.mrb[0].mxu0
        %6220 = vmatprep.mubr.bf16.mxu0 %v6172
        %6221 = vmatmul.mubr.bf16.gmra.mrb[0].mxu0 %v6092
        %v6222 = vpop.f32.mrb[0].mxu0
        %v6223 = vadd.f32 0.0, %v6222
        %v6224 = vpop.f32.mrb[0].mxu0
        %v6225 = vpop.f32.mrb[0].mxu0
        %v6226 = vadd.f32 0.0, %v6225
        %v6227 = vpop.f32.mrb[0].mxu0
        %6228 = vmatprep.mubr.bf16.mxu0 %v6175
        %6229 = vmatmul.mubr.bf16.gmra.mrb[0].mxu0 %v6094
        %v6230 = vpop.f32.mrb[0].mxu0
        %v6231 = vadd.f32 0.0, %v6230
        %v6232 = vpop.f32.mrb[0].mxu0
        %v6233 = vpop.f32.mrb[0].mxu0
        %v6234 = vadd.f32 0.0, %v6233
        %v6235 = vpop.f32.mrb[0].mxu0
        %6236 = vmatprep.mubr.bf16.mxu0 %v6178
        %6237 = vmatmul.mubr.bf16.gmra.mrb[0].mxu0 %v6096
        %v6238 = vpop.f32.mrb[0].mxu0
        %v6239 = vadd.f32 0.0, %v6238
        %v6240 = vpop.f32.mrb[0].mxu0
        %v6241 = vpop.f32.mrb[0].mxu0
        %v6242 = vadd.f32 0.0, %v6241
        %v6243 = vpop.f32.mrb[0].mxu0
        %6244 = vdwg.mxu0
        %v6245 = vadd.f32 %v6026, %v6215
        %v6246 = vadd.f32 %v6027, %v6218
        %v6247 = vadd.f32 %v6028, %v6223
        %v6248 = vadd.f32 %v6029, %v6226
        %v6249 = vadd.f32 %v6030, %v6231
        %v6250 = vadd.f32 %v6031, %v6234
        %v6251 = vadd.f32 %v6032, %v6239
        %v6252 = vadd.f32 %v6033, %v6242
        %s6253 = scalar_lea.vmem [#allocation4], 72
        %v6254 = vld [vmem:[%s6253] sm:$0xff]
        %v6255 = vld [vmem:[%s6253 + $0x8] sm:$0xff]
        %v6256 = vld [vmem:[%s6253 + $0x10] sm:$0xff]
        %v6257 = vld [vmem:[%s6253 + $0x18] sm:$0xff]
        %v6258 = vld [vmem:[%s6253 + $0x20] sm:$0xff]
        %v6259 = vld [vmem:[%s6253 + $0x28] sm:$0xff]
        %v6260 = vld [vmem:[%s6253 + $0x30] sm:$0xff]
        %v6261 = vld [vmem:[%s6253 + $0x38] sm:$0xff]
        %s6262 = scalar_lea.vmem %s1, 792
        %v6263 = vld [vmem:[%s6262] sm:$0xf]
        %v6264 = vld [vmem:[%s6262 + $0x4] sm:$0xf]
        %v6265 = vld [vmem:[%s6262 + $0x8] sm:$0xf]
        %v6266 = vld [vmem:[%s6262 + $0xc] sm:$0xf]
        %v6267 = vld [vmem:[%s6262 + $0x10] sm:$0xf]
        %v6268 = vld [vmem:[%s6262 + $0x14] sm:$0xf]
        %v6269 = vld [vmem:[%s6262 + $0x18] sm:$0xf]
        %v6270 = vld [vmem:[%s6262 + $0x1c] sm:$0xf]
        %v6271 = vld [vmem:[%s6262 + $0x20] sm:$0xf]
        %v6272 = vld [vmem:[%s6262 + $0x24] sm:$0xf]
        %v6273 = vld [vmem:[%s6262 + $0x28] sm:$0xf]
        %v6274 = vld [vmem:[%s6262 + $0x2c] sm:$0xf]
        %v6275 = vld [vmem:[%s6262 + $0x30] sm:$0xf]
        %v6276 = vld [vmem:[%s6262 + $0x34] sm:$0xf]
        %v6277 = vld [vmem:[%s6262 + $0x38] sm:$0xf]
        %v6278 = vld [vmem:[%s6262 + $0x3c] sm:$0xf]
        %v6279 = vld [vmem:[%s6262 + $0x40] sm:$0xf]
        %v6280 = vld [vmem:[%s6262 + $0x44] sm:$0xf]
        %v6281 = vld [vmem:[%s6262 + $0x48] sm:$0xf]
        %v6282 = vld [vmem:[%s6262 + $0x4c] sm:$0xf]
        %v6283 = vld [vmem:[%s6262 + $0x50] sm:$0xf]
        %v6284 = vld [vmem:[%s6262 + $0x54] sm:$0xf]
        %v6293 = vunpack.c.l.b16 %v6254
        %v6294 = vunpack.c.h.b16 %v6254
        %v6295 = vunpack.c.l.b16 %v6255
        %v6296 = vunpack.c.h.b16 %v6255
        %v6297 = vunpack.c.l.b16 %v6256
        %v6298 = vunpack.c.h.b16 %v6256
        %v6299 = vunpack.c.l.b16 %v6257
        %v6300 = vunpack.c.h.b16 %v6257
        %v6301 = vunpack.c.l.b16 %v6258
        %v6302 = vunpack.c.h.b16 %v6258
        %v6303 = vunpack.c.l.b16 %v6259
        %v6304 = vunpack.c.h.b16 %v6259
        %v6305 = vunpack.c.l.b16 %v6260
        %v6306 = vunpack.c.h.b16 %v6260
        %v6307 = vunpack.c.l.b16 %v6261
        %v6308 = vunpack.c.h.b16 %v6261
        %v6309 = vpack.c.b16 %v6295, %v6293
        %v6310 = vpack.c.b16 %v6296, %v6294
        %v6311 = vpack.c.b16 %v6299, %v6297
        %v6312 = vpack.c.b16 %v6300, %v6298
        %v6313 = vpack.c.b16 %v6303, %v6301
        %v6314 = vpack.c.b16 %v6304, %v6302
        %v6315 = vpack.c.b16 %v6307, %v6305
        %v6316 = vpack.c.b16 %v6308, %v6306
        %v6343 = vunpack.c.l.b16 %v6263
        %v6344 = vunpack.c.l.b16 %v6264
        %v6345 = vunpack.c.l.b16 %v6265
        %v6346 = vunpack.c.l.b16 %v6266
        %v6347 = vunpack.c.l.b16 %v6267
        %v6348 = vunpack.c.l.b16 %v6268
        %v6349 = vunpack.c.l.b16 %v6269
        %v6350 = vunpack.c.l.b16 %v6270
        %v6351 = vunpack.c.l.b16 %v6271
        %v6352 = vunpack.c.l.b16 %v6272
        %v6353 = vunpack.c.l.b16 %v6273
        %v6354 = vunpack.c.l.b16 %v6274
        %v6355 = vunpack.c.l.b16 %v6275
        %v6356 = vunpack.c.l.b16 %v6276
        %v6357 = vunpack.c.l.b16 %v6277
        %v6358 = vunpack.c.l.b16 %v6278
        %v6359 = vunpack.c.l.b16 %v6279
        %v6360 = vunpack.c.l.b16 %v6280
        %v6361 = vunpack.c.l.b16 %v6281
        %v6362 = vunpack.c.l.b16 %v6282
        %v6363 = vunpack.c.l.b16 %v6283
        %v6364 = vunpack.c.l.b16 %v6284
        %v6365 = vpack.c.b16 %v6344, %v6343
        %v6366 = vpack.c.b16 %v6346, %v6345
        %v6367 = vpack.c.b16 %v6348, %v6347
        %v6368 = vpack.c.b16 %v6350, %v6349
        %v6369 = vpack.c.b16 %v6352, %v6351
        %v6370 = vpack.c.b16 %v6354, %v6353
        %v6371 = vpack.c.b16 %v6356, %v6355
        %v6372 = vpack.c.b16 %v6358, %v6357
        %v6373 = vpack.c.b16 %v6360, %v6359
        %v6374 = vpack.c.b16 %v6362, %v6361
        %v6375 = vpack.c.b16 %v6364, %v6363
        %v6388 = vsel %vm4463, %v6310, 0
        %v6391 = vsel %vm4463, %v6312, 0
        %v6394 = vsel %vm4463, %v6314, 0
        %v6397 = vsel %vm4463, %v6316, 0
        %6399 = vmatprep.subr.bf16.mxu0 0
        %6400 = vmatpush1.bf16.msra.mxu0 %v6365
        %6401 = vmatprep.subr.bf16.mxu0 0
        %6402 = vmatpush1.bf16.msra.mxu0 %v6366
        %6403 = vmatprep.subr.bf16.mxu0 0
        %6404 = vmatpush1.bf16.msra.mxu0 %v6367
        %6405 = vmatprep.subr.bf16.mxu0 0
        %6406 = vmatpush1.bf16.msra.mxu0 %v6368
        %6407 = vmatprep.subr.bf16.mxu0 0
        %6408 = vmatpush1.bf16.msra.mxu0 %v6369
        %6409 = vmatprep.subr.bf16.mxu0 0
        %6410 = vmatpush1.bf16.msra.mxu0 %v6370
        %6411 = vmatprep.subr.bf16.mxu0 0
        %6412 = vmatpush1.bf16.msra.mxu0 %v6371
        %6413 = vmatprep.subr.bf16.mxu0 0
        %6414 = vmatpush1.bf16.msra.mxu0 %v6372
        %6415 = vmatprep.subr.bf16.mxu0 0
        %6416 = vmatpush1.bf16.msra.mxu0 %v6373
        %6417 = vmatprep.subr.bf16.mxu0 0
        %6418 = vmatpush1.bf16.msra.mxu0 %v6374
        %6419 = vmatprep.subr.bf16.mxu0 0
        %6420 = vmatpush1.bf16.msra.mxu0 %v6375
        %6421 = vmatprep.subr.bf16.mxu0 0
        %6422 = vmatpush1.bf16.msra.mxu0 0
        %6423 = vmatprep.subr.bf16.mxu0 0
        %6424 = vmatpush1.bf16.msra.mxu0 0
        %6425 = vmatprep.subr.bf16.mxu0 0
        %6426 = vmatpush1.bf16.msra.mxu0 0
        %6427 = vmatprep.subr.bf16.mxu0 0
        %6428 = vmatpush1.bf16.msra.mxu0 0
        %6429 = vmatprep.subr.bf16.mxu0 0
        %6430 = vmatpush1.bf16.msra.mxu0 0
        %6431 = vmatprep.mubr.bf16.mxu0 %v6388
        %6432 = vmatmul.mubr.bf16.gmra.mrb[0].mxu0 %v6309
        %v6433 = vpop.f32.mrb[0].mxu0
        %v6434 = vadd.f32 0.0, %v6433
        %v6435 = vpop.f32.mrb[0].mxu0
        %v6436 = vpop.f32.mrb[0].mxu0
        %v6437 = vadd.f32 0.0, %v6436
        %v6438 = vpop.f32.mrb[0].mxu0
        %6439 = vmatprep.mubr.bf16.mxu0 %v6391
        %6440 = vmatmul.mubr.bf16.gmra.mrb[0].mxu0 %v6311
        %v6441 = vpop.f32.mrb[0].mxu0
        %v6442 = vadd.f32 0.0, %v6441
        %v6443 = vpop.f32.mrb[0].mxu0
        %v6444 = vpop.f32.mrb[0].mxu0
        %v6445 = vadd.f32 0.0, %v6444
        %v6446 = vpop.f32.mrb[0].mxu0
        %6447 = vmatprep.mubr.bf16.mxu0 %v6394
        %6448 = vmatmul.mubr.bf16.gmra.mrb[0].mxu0 %v6313
        %v6449 = vpop.f32.mrb[0].mxu0
        %v6450 = vadd.f32 0.0, %v6449
        %v6451 = vpop.f32.mrb[0].mxu0
        %v6452 = vpop.f32.mrb[0].mxu0
        %v6453 = vadd.f32 0.0, %v6452
        %v6454 = vpop.f32.mrb[0].mxu0
        %6455 = vmatprep.mubr.bf16.mxu0 %v6397
        %6456 = vmatmul.mubr.bf16.gmra.mrb[0].mxu0 %v6315
        %v6457 = vpop.f32.mrb[0].mxu0
        %v6458 = vadd.f32 0.0, %v6457
        %v6459 = vpop.f32.mrb[0].mxu0
        %v6460 = vpop.f32.mrb[0].mxu0
        %v6461 = vadd.f32 0.0, %v6460
        %v6462 = vpop.f32.mrb[0].mxu0
        %6463 = vdwg.mxu0
        %v6464 = vadd.f32 %v6245, %v6434
        %v6465 = vadd.f32 %v6246, %v6437
        %v6466 = vadd.f32 %v6247, %v6442
        %v6467 = vadd.f32 %v6248, %v6445
        %v6468 = vadd.f32 %v6249, %v6450
        %v6469 = vadd.f32 %v6250, %v6453
        %v6470 = vadd.f32 %v6251, %v6458
        %v6471 = vadd.f32 %v6252, %v6461
        %s6472 = scalar_lea.vmem [#allocation4], 80
        %v6473 = vld [vmem:[%s6472] sm:$0xff]
        %v6474 = vld [vmem:[%s6472 + $0x8] sm:$0xff]
        %v6475 = vld [vmem:[%s6472 + $0x10] sm:$0xff]
        %v6476 = vld [vmem:[%s6472 + $0x18] sm:$0xff]
        %v6477 = vld [vmem:[%s6472 + $0x20] sm:$0xff]
        %v6478 = vld [vmem:[%s6472 + $0x28] sm:$0xff]
        %v6479 = vld [vmem:[%s6472 + $0x30] sm:$0xff]
        %v6480 = vld [vmem:[%s6472 + $0x38] sm:$0xff]
        %s6481 = scalar_lea.vmem %s1, 880
        %v6482 = vld [vmem:[%s6481] sm:$0xf]
        %v6483 = vld [vmem:[%s6481 + $0x4] sm:$0xf]
        %v6484 = vld [vmem:[%s6481 + $0x8] sm:$0xf]
        %v6485 = vld [vmem:[%s6481 + $0xc] sm:$0xf]
        %v6486 = vld [vmem:[%s6481 + $0x10] sm:$0xf]
        %v6487 = vld [vmem:[%s6481 + $0x14] sm:$0xf]
        %v6488 = vld [vmem:[%s6481 + $0x18] sm:$0xf]
        %v6489 = vld [vmem:[%s6481 + $0x1c] sm:$0xf]
        %v6490 = vld [vmem:[%s6481 + $0x20] sm:$0xf]
        %v6491 = vld [vmem:[%s6481 + $0x24] sm:$0xf]
        %v6492 = vld [vmem:[%s6481 + $0x28] sm:$0xf]
        %v6493 = vld [vmem:[%s6481 + $0x2c] sm:$0xf]
        %v6494 = vld [vmem:[%s6481 + $0x30] sm:$0xf]
        %v6495 = vld [vmem:[%s6481 + $0x34] sm:$0xf]
        %v6496 = vld [vmem:[%s6481 + $0x38] sm:$0xf]
        %v6497 = vld [vmem:[%s6481 + $0x3c] sm:$0xf]
        %v6498 = vld [vmem:[%s6481 + $0x40] sm:$0xf]
        %v6499 = vld [vmem:[%s6481 + $0x44] sm:$0xf]
        %v6500 = vld [vmem:[%s6481 + $0x48] sm:$0xf]
        %v6501 = vld [vmem:[%s6481 + $0x4c] sm:$0xf]
        %v6502 = vld [vmem:[%s6481 + $0x50] sm:$0xf]
        %v6503 = vld [vmem:[%s6481 + $0x54] sm:$0xf]
        %v6512 = vunpack.c.l.b16 %v6473
        %v6513 = vunpack.c.h.b16 %v6473
        %v6514 = vunpack.c.l.b16 %v6474
        %v6515 = vunpack.c.h.b16 %v6474
        %v6516 = vunpack.c.l.b16 %v6475
        %v6517 = vunpack.c.h.b16 %v6475
        %v6518 = vunpack.c.l.b16 %v6476
        %v6519 = vunpack.c.h.b16 %v6476
        %v6520 = vunpack.c.l.b16 %v6477
        %v6521 = vunpack.c.h.b16 %v6477
        %v6522 = vunpack.c.l.b16 %v6478
        %v6523 = vunpack.c.h.b16 %v6478
        %v6524 = vunpack.c.l.b16 %v6479
        %v6525 = vunpack.c.h.b16 %v6479
        %v6526 = vunpack.c.l.b16 %v6480
        %v6527 = vunpack.c.h.b16 %v6480
        %v6528 = vpack.c.b16 %v6514, %v6512
        %v6529 = vpack.c.b16 %v6515, %v6513
        %v6530 = vpack.c.b16 %v6518, %v6516
        %v6531 = vpack.c.b16 %v6519, %v6517
        %v6532 = vpack.c.b16 %v6522, %v6520
        %v6533 = vpack.c.b16 %v6523, %v6521
        %v6534 = vpack.c.b16 %v6526, %v6524
        %v6535 = vpack.c.b16 %v6527, %v6525
        %v6562 = vunpack.c.l.b16 %v6482
        %v6563 = vunpack.c.l.b16 %v6483
        %v6564 = vunpack.c.l.b16 %v6484
        %v6565 = vunpack.c.l.b16 %v6485
        %v6566 = vunpack.c.l.b16 %v6486
        %v6567 = vunpack.c.l.b16 %v6487
        %v6568 = vunpack.c.l.b16 %v6488
        %v6569 = vunpack.c.l.b16 %v6489
        %v6570 = vunpack.c.l.b16 %v6490
        %v6571 = vunpack.c.l.b16 %v6491
        %v6572 = vunpack.c.l.b16 %v6492
        %v6573 = vunpack.c.l.b16 %v6493
        %v6574 = vunpack.c.l.b16 %v6494
        %v6575 = vunpack.c.l.b16 %v6495
        %v6576 = vunpack.c.l.b16 %v6496
        %v6577 = vunpack.c.l.b16 %v6497
        %v6578 = vunpack.c.l.b16 %v6498
        %v6579 = vunpack.c.l.b16 %v6499
        %v6580 = vunpack.c.l.b16 %v6500
        %v6581 = vunpack.c.l.b16 %v6501
        %v6582 = vunpack.c.l.b16 %v6502
        %v6583 = vunpack.c.l.b16 %v6503
        %v6584 = vpack.c.b16 %v6563, %v6562
        %v6585 = vpack.c.b16 %v6565, %v6564
        %v6586 = vpack.c.b16 %v6567, %v6566
        %v6587 = vpack.c.b16 %v6569, %v6568
        %v6588 = vpack.c.b16 %v6571, %v6570
        %v6589 = vpack.c.b16 %v6573, %v6572
        %v6590 = vpack.c.b16 %v6575, %v6574
        %v6591 = vpack.c.b16 %v6577, %v6576
        %v6592 = vpack.c.b16 %v6579, %v6578
        %v6593 = vpack.c.b16 %v6581, %v6580
        %v6594 = vpack.c.b16 %v6583, %v6582
        %v6607 = vsel %vm4463, %v6529, 0
        %v6610 = vsel %vm4463, %v6531, 0
        %v6613 = vsel %vm4463, %v6533, 0
        %v6616 = vsel %vm4463, %v6535, 0
        %6618 = vmatprep.subr.bf16.mxu0 0
        %6619 = vmatpush1.bf16.msra.mxu0 %v6584
        %6620 = vmatprep.subr.bf16.mxu0 0
        %6621 = vmatpush1.bf16.msra.mxu0 %v6585
        %6622 = vmatprep.subr.bf16.mxu0 0
        %6623 = vmatpush1.bf16.msra.mxu0 %v6586
        %6624 = vmatprep.subr.bf16.mxu0 0
        %6625 = vmatpush1.bf16.msra.mxu0 %v6587
        %6626 = vmatprep.subr.bf16.mxu0 0
        %6627 = vmatpush1.bf16.msra.mxu0 %v6588
        %6628 = vmatprep.subr.bf16.mxu0 0
        %6629 = vmatpush1.bf16.msra.mxu0 %v6589
        %6630 = vmatprep.subr.bf16.mxu0 0
        %6631 = vmatpush1.bf16.msra.mxu0 %v6590
        %6632 = vmatprep.subr.bf16.mxu0 0
        %6633 = vmatpush1.bf16.msra.mxu0 %v6591
        %6634 = vmatprep.subr.bf16.mxu0 0
        %6635 = vmatpush1.bf16.msra.mxu0 %v6592
        %6636 = vmatprep.subr.bf16.mxu0 0
        %6637 = vmatpush1.bf16.msra.mxu0 %v6593
        %6638 = vmatprep.subr.bf16.mxu0 0
        %6639 = vmatpush1.bf16.msra.mxu0 %v6594
        %6640 = vmatprep.subr.bf16.mxu0 0
        %6641 = vmatpush1.bf16.msra.mxu0 0
        %6642 = vmatprep.subr.bf16.mxu0 0
        %6643 = vmatpush1.bf16.msra.mxu0 0
        %6644 = vmatprep.subr.bf16.mxu0 0
        %6645 = vmatpush1.bf16.msra.mxu0 0
        %6646 = vmatprep.subr.bf16.mxu0 0
        %6647 = vmatpush1.bf16.msra.mxu0 0
        %6648 = vmatprep.subr.bf16.mxu0 0
        %6649 = vmatpush1.bf16.msra.mxu0 0
        %6650 = vmatprep.mubr.bf16.mxu0 %v6607
        %6651 = vmatmul.mubr.bf16.gmra.mrb[0].mxu0 %v6528
        %v6652 = vpop.f32.mrb[0].mxu0
        %v6653 = vadd.f32 0.0, %v6652
        %v6654 = vpop.f32.mrb[0].mxu0
        %v6655 = vpop.f32.mrb[0].mxu0
        %v6656 = vadd.f32 0.0, %v6655
        %v6657 = vpop.f32.mrb[0].mxu0
        %6658 = vmatprep.mubr.bf16.mxu0 %v6610
        %6659 = vmatmul.mubr.bf16.gmra.mrb[0].mxu0 %v6530
        %v6660 = vpop.f32.mrb[0].mxu0
        %v6661 = vadd.f32 0.0, %v6660
        %v6662 = vpop.f32.mrb[0].mxu0
        %v6663 = vpop.f32.mrb[0].mxu0
        %v6664 = vadd.f32 0.0, %v6663
        %v6665 = vpop.f32.mrb[0].mxu0
        %6666 = vmatprep.mubr.bf16.mxu0 %v6613
        %6667 = vmatmul.mubr.bf16.gmra.mrb[0].mxu0 %v6532
        %v6668 = vpop.f32.mrb[0].mxu0
        %v6669 = vadd.f32 0.0, %v6668
        %v6670 = vpop.f32.mrb[0].mxu0
        %v6671 = vpop.f32.mrb[0].mxu0
        %v6672 = vadd.f32 0.0, %v6671
        %v6673 = vpop.f32.mrb[0].mxu0
        %6674 = vmatprep.mubr.bf16.mxu0 %v6616
        %6675 = vmatmul.mubr.bf16.gmra.mrb[0].mxu0 %v6534
        %v6676 = vpop.f32.mrb[0].mxu0
        %v6677 = vadd.f32 0.0, %v6676
        %v6678 = vpop.f32.mrb[0].mxu0
        %v6679 = vpop.f32.mrb[0].mxu0
        %v6680 = vadd.f32 0.0, %v6679
        %v6681 = vpop.f32.mrb[0].mxu0
        %6682 = vdwg.mxu0
        %v6683 = vadd.f32 %v6464, %v6653
        %v6684 = vadd.f32 %v6465, %v6656
        %v6685 = vadd.f32 %v6466, %v6661
        %v6686 = vadd.f32 %v6467, %v6664
        %v6687 = vadd.f32 %v6468, %v6669
        %v6688 = vadd.f32 %v6469, %v6672
        %v6689 = vadd.f32 %v6470, %v6677
        %v6690 = vadd.f32 %v6471, %v6680
        %v6692 = vlaneseq
        %v6693 = vshrl.u32 %v6692, 7
        %v6694 = vsub.s32 0, %v6693
        %v6695 = vrot.slane %v1408, %v6694
        %v6697 = vadd.f32 %v6683, %v6695
        %v6698 = vadd.f32 %v6684, %v6695
        %v6699 = vadd.f32 %v6685, %v6695
        %v6700 = vadd.f32 %v6686, %v6695
        %v6701 = vadd.f32 %v6687, %v6695
        %v6702 = vadd.f32 %v6688, %v6695
        %v6703 = vadd.f32 %v6689, %v6695
        %v6704 = vadd.f32 %v6690, %v6695
        %v6705 = vmul.f32 %v6697, 0.5
        %v6706 = vmul.f32 %v6698, 0.5
        %v6707 = vmul.f32 %v6699, 0.5
        %v6708 = vmul.f32 %v6700, 0.5
        %v6709 = vmul.f32 %v6701, 0.5
        %v6710 = vmul.f32 %v6702, 0.5
        %v6711 = vmul.f32 %v6703, 0.5
        %v6712 = vmul.f32 %v6704, 0.5
        %v6713 = vmul.f32 %v6697, 0.70710677
        %v6714 = vmul.f32 %v6698, 0.70710677
        %v6715 = vmul.f32 %v6699, 0.70710677
        %v6716 = vmul.f32 %v6700, 0.70710677
        %v6717 = vmul.f32 %v6701, 0.70710677
        %v6718 = vmul.f32 %v6702, 0.70710677
        %v6719 = vmul.f32 %v6703, 0.70710677
        %v6720 = vmul.f32 %v6704, 0.70710677
        %v6721 = verf.f32.pop %v6713
        %v6722 = verf.f32.pop %v6714
        %v6723 = verf.f32.pop %v6715
        %v6724 = verf.f32.pop %v6716
        %v6725 = verf.f32.pop %v6717
        %v6726 = verf.f32.pop %v6718
        %v6727 = verf.f32.pop %v6719
        %v6728 = verf.f32.pop %v6720
        %v6729 = vadd.f32 %v6721, 1.0
        %v6730 = vadd.f32 %v6722, 1.0
        %v6731 = vadd.f32 %v6723, 1.0
        %v6732 = vadd.f32 %v6724, 1.0
        %v6733 = vadd.f32 %v6725, 1.0
        %v6734 = vadd.f32 %v6726, 1.0
        %v6735 = vadd.f32 %v6727, 1.0
        %v6736 = vadd.f32 %v6728, 1.0
        %v6737 = vmul.f32 %v6705, %v6729
        %v6738 = vmul.f32 %v6706, %v6730
        %v6739 = vmul.f32 %v6707, %v6731
        %v6740 = vmul.f32 %v6708, %v6732
        %v6741 = vmul.f32 %v6709, %v6733
        %v6742 = vmul.f32 %v6710, %v6734
        %v6743 = vmul.f32 %v6711, %v6735
        %v6744 = vmul.f32 %v6712, %v6736
        %v6745 = vpack.c.bf16 %v6738, %v6737
        %v6746 = vpack.c.bf16 %v6740, %v6739
        %v6747 = vpack.c.bf16 %v6742, %v6741
        %v6748 = vpack.c.bf16 %v6744, %v6743
        %v6753 = vunpack.c.l.b16 %v6745
        %v6754 = vunpack.c.h.b16 %v6745
        %v6755 = vunpack.c.l.b16 %v6746
        %v6756 = vunpack.c.h.b16 %v6746
        %v6757 = vunpack.c.l.b16 %v6747
        %v6758 = vunpack.c.h.b16 %v6747
        %v6759 = vunpack.c.l.b16 %v6748
        %v6760 = vunpack.c.h.b16 %v6748
        %v6761 = vpack.c.b16 %v6753, %v6753
        %v6762 = vpack.c.b16 %v6754, %v6754
        %v6763 = vpack.c.b16 %v6755, %v6755
        %v6764 = vpack.c.b16 %v6756, %v6756
        %v6765 = vpack.c.b16 %v6757, %v6757
        %v6766 = vpack.c.b16 %v6758, %v6758
        %v6767 = vpack.c.b16 %v6759, %v6759
        %v6768 = vpack.c.b16 %v6760, %v6760
        %v6770 = vshrl.u32 %v6761, 16
        %v6772 = vrot.slane %v6770, 5
        %v6773 = vshll.u32 %v6761, 16
        %v6775 = vrot.slane %v6773, 6
        %v6776 = vor.u32 %v6772, %v6775
        %v6777 = vrot.slane %v6776, 4
        %v6779 = vshrl.u32 %v6762, 16
        %v6781 = vrot.slane %v6779, 5
        %v6782 = vshll.u32 %v6762, 16
        %v6784 = vrot.slane %v6782, 6
        %v6785 = vor.u32 %v6781, %v6784
        %v6786 = vrot.slane %v6785, 4
        %v6788 = vshrl.u32 %v6763, 16
        %v6790 = vrot.slane %v6788, 5
        %v6791 = vshll.u32 %v6763, 16
        %v6793 = vrot.slane %v6791, 6
        %v6794 = vor.u32 %v6790, %v6793
        %v6795 = vrot.slane %v6794, 4
        %v6797 = vshrl.u32 %v6764, 16
        %v6799 = vrot.slane %v6797, 5
        %v6800 = vshll.u32 %v6764, 16
        %v6802 = vrot.slane %v6800, 6
        %v6803 = vor.u32 %v6799, %v6802
        %v6804 = vrot.slane %v6803, 4
        %v6806 = vshrl.u32 %v6765, 16
        %v6808 = vrot.slane %v6806, 5
        %v6809 = vshll.u32 %v6765, 16
        %v6811 = vrot.slane %v6809, 6
        %v6812 = vor.u32 %v6808, %v6811
        %v6813 = vrot.slane %v6812, 4
        %v6815 = vshrl.u32 %v6766, 16
        %v6817 = vrot.slane %v6815, 5
        %v6818 = vshll.u32 %v6766, 16
        %v6820 = vrot.slane %v6818, 6
        %v6821 = vor.u32 %v6817, %v6820
        %v6822 = vrot.slane %v6821, 4
        %v6824 = vshrl.u32 %v6767, 16
        %v6826 = vrot.slane %v6824, 5
        %v6827 = vshll.u32 %v6767, 16
        %v6829 = vrot.slane %v6827, 6
        %v6830 = vor.u32 %v6826, %v6829
        %v6831 = vrot.slane %v6830, 4
        %v6833 = vshrl.u32 %v6768, 16
        %v6835 = vrot.slane %v6833, 5
        %v6836 = vshll.u32 %v6768, 16
        %v6838 = vrot.slane %v6836, 6
        %v6839 = vor.u32 %v6835, %v6838
        %v6840 = vrot.slane %v6839, 4
        %v6857 = vld [vmem:[%s353] sm:$0xc]
        %v6858 = vsel %vm381, %v6776, %v6857
        %6859 = vst [vmem:[%s353] sm:$0xc] %v6858
        %v6860 = vld [vmem:[%s353 + $0x4] sm:$0x7]
        %v6861 = vsel %vm355, %v6777, %v6860
        %6862 = vst [vmem:[%s353 + $0x4] sm:$0x7] %v6861
        %v6863 = vld [vmem:[%s353 + $0xc] sm:$0xc]
        %v6864 = vsel %vm381, %v6785, %v6863
        %6865 = vst [vmem:[%s353 + $0xc] sm:$0xc] %v6864
        %v6866 = vld [vmem:[%s353 + $0x10] sm:$0x7]
        %v6867 = vsel %vm355, %v6786, %v6866
        %6868 = vst [vmem:[%s353 + $0x10] sm:$0x7] %v6867
        %v6869 = vld [vmem:[%s353 + $0x18] sm:$0xc]
        %v6870 = vsel %vm381, %v6794, %v6869
        %6871 = vst [vmem:[%s353 + $0x18] sm:$0xc] %v6870
        %v6872 = vld [vmem:[%s353 + $0x1c] sm:$0x7]
        %v6873 = vsel %vm355, %v6795, %v6872
        %6874 = vst [vmem:[%s353 + $0x1c] sm:$0x7] %v6873
        %v6875 = vld [vmem:[%s353 + $0x24] sm:$0xc]
        %v6876 = vsel %vm381, %v6803, %v6875
        %6877 = vst [vmem:[%s353 + $0x24] sm:$0xc] %v6876
        %v6878 = vld [vmem:[%s353 + $0x28] sm:$0x7]
        %v6879 = vsel %vm355, %v6804, %v6878
        %6880 = vst [vmem:[%s353 + $0x28] sm:$0x7] %v6879
        %v6881 = vld [vmem:[%s353 + $0x30] sm:$0xc]
        %v6882 = vsel %vm381, %v6812, %v6881
        %6883 = vst [vmem:[%s353 + $0x30] sm:$0xc] %v6882
        %v6884 = vld [vmem:[%s353 + $0x34] sm:$0x7]
        %v6885 = vsel %vm355, %v6813, %v6884
        %6886 = vst [vmem:[%s353 + $0x34] sm:$0x7] %v6885
        %v6887 = vld [vmem:[%s353 + $0x3c] sm:$0xc]
        %v6888 = vsel %vm381, %v6821, %v6887
        %6889 = vst [vmem:[%s353 + $0x3c] sm:$0xc] %v6888
        %v6890 = vld [vmem:[%s353 + $0x40] sm:$0x7]
        %v6891 = vsel %vm355, %v6822, %v6890
        %6892 = vst [vmem:[%s353 + $0x40] sm:$0x7] %v6891
        %v6893 = vld [vmem:[%s353 + $0x48] sm:$0xc]
        %v6894 = vsel %vm381, %v6830, %v6893
        %6895 = vst [vmem:[%s353 + $0x48] sm:$0xc] %v6894
        %v6896 = vld [vmem:[%s353 + $0x4c] sm:$0x7]
        %v6897 = vsel %vm355, %v6831, %v6896
        %6898 = vst [vmem:[%s353 + $0x4c] sm:$0x7] %v6897
        %v6899 = vld [vmem:[%s353 + $0x54] sm:$0xc]
        %v6900 = vsel %vm381, %v6839, %v6899
        %6901 = vst [vmem:[%s353 + $0x54] sm:$0xc] %v6900
        %v6902 = vld [vmem:[%s353 + $0x58] sm:$0x7]
        %v6903 = vsel %vm355, %v6840, %v6902
        %6904 = vst [vmem:[%s353 + $0x58] sm:$0x7] %v6903
        %v6905 = vld [vmem:[#allocation3] sm:$0xf]
        %v6906 = vld [vmem:[#allocation3 + $0xc] sm:$0xf]
        %v6907 = vld [vmem:[#allocation3 + $0x18] sm:$0xf]
        %v6908 = vld [vmem:[#allocation3 + $0x24] sm:$0xf]
        %v6909 = vld [vmem:[#allocation3 + $0x30] sm:$0xf]
        %v6910 = vld [vmem:[#allocation3 + $0x3c] sm:$0xf]
        %v6911 = vld [vmem:[#allocation3 + $0x48] sm:$0xf]
        %v6912 = vld [vmem:[#allocation3 + $0x54] sm:$0xf]
        %v6913 = vld [vmem:[#allocation3 + $0x60] sm:$0xf]
        %v6914 = vld [vmem:[#allocation3 + $0x6c] sm:$0xf]
        %v6915 = vld [vmem:[#allocation3 + $0x78] sm:$0xf]
        %v6916 = vld [vmem:[#allocation3 + $0x84] sm:$0xf]
        %v6917 = vld [vmem:[#allocation3 + $0x90] sm:$0xf]
        %v6918 = vld [vmem:[#allocation3 + $0x9c] sm:$0xf]
        %v6919 = vld [vmem:[#allocation3 + $0xa8] sm:$0xf]
        %v6920 = vld [vmem:[#allocation3 + $0xb4] sm:$0xf]
        %v6921 = vld [vmem:[#allocation3 + $0xc0] sm:$0xf]
        %v6922 = vld [vmem:[#allocation3 + $0xcc] sm:$0xf]
        %6923 = vst.msk [vmem:[#allocation5] sm:$0xf] %vm320, %v6905
        %6924 = vst.msk [vmem:[#allocation5 + $0x4] sm:$0xf] %vm320, %v6906
        %6925 = vst.msk [vmem:[#allocation5 + $0x8] sm:$0xf] %vm320, %v6907
        %6926 = vst.msk [vmem:[#allocation5 + $0xc] sm:$0xf] %vm320, %v6908
        %6927 = vst.msk [vmem:[#allocation5 + $0x10] sm:$0xf] %vm320, %v6909
        %6928 = vst.msk [vmem:[#allocation5 + $0x14] sm:$0xf] %vm320, %v6910
        %6929 = vst.msk [vmem:[#allocation5 + $0x18] sm:$0xf] %vm320, %v6911
        %6930 = vst.msk [vmem:[#allocation5 + $0x1c] sm:$0xf] %vm320, %v6912
        %6931 = vst.msk [vmem:[#allocation5 + $0x20] sm:$0xf] %vm320, %v6913
        %6932 = vst.msk [vmem:[#allocation5 + $0x24] sm:$0xf] %vm320, %v6914
        %6933 = vst.msk [vmem:[#allocation5 + $0x28] sm:$0xf] %vm320, %v6915
        %6934 = vst.msk [vmem:[#allocation5 + $0x2c] sm:$0xf] %vm320, %v6916
        %6935 = vst.msk [vmem:[#allocation5 + $0x30] sm:$0xf] %vm320, %v6917
        %6936 = vst.msk [vmem:[#allocation5 + $0x34] sm:$0xf] %vm320, %v6918
        %6937 = vst.msk [vmem:[#allocation5 + $0x38] sm:$0xf] %vm320, %v6919
        %6938 = vst.msk [vmem:[#allocation5 + $0x3c] sm:$0xf] %vm320, %v6920
        %6939 = vst.msk [vmem:[#allocation5 + $0x40] sm:$0xf] %vm320, %v6921
        %6940 = vst.msk [vmem:[#allocation5 + $0x44] sm:$0xf] %vm320, %v6922
        %v6941 = vld [vmem:[#allocation3] sm:$0xf]
        %v6942 = vld [vmem:[#allocation3 + $0x4] sm:$0x1]
        %v6943 = vld [vmem:[#allocation3 + $0xc] sm:$0xf]
        %v6944 = vld [vmem:[#allocation3 + $0x10] sm:$0x1]
        %v6945 = vld [vmem:[#allocation3 + $0x18] sm:$0xf]
        %v6946 = vld [vmem:[#allocation3 + $0x1c] sm:$0x1]
        %v6947 = vld [vmem:[#allocation3 + $0x24] sm:$0xf]
        %v6948 = vld [vmem:[#allocation3 + $0x28] sm:$0x1]
        %v6949 = vld [vmem:[#allocation3 + $0x30] sm:$0xf]
        %v6950 = vld [vmem:[#allocation3 + $0x34] sm:$0x1]
        %v6951 = vld [vmem:[#allocation3 + $0x3c] sm:$0xf]
        %v6952 = vld [vmem:[#allocation3 + $0x40] sm:$0x1]
        %v6953 = vld [vmem:[#allocation3 + $0x48] sm:$0xf]
        %v6954 = vld [vmem:[#allocation3 + $0x4c] sm:$0x1]
        %v6955 = vld [vmem:[#allocation3 + $0x54] sm:$0xf]
        %v6956 = vld [vmem:[#allocation3 + $0x58] sm:$0x1]
        %v6957 = vld [vmem:[#allocation3 + $0x60] sm:$0xf]
        %v6958 = vld [vmem:[#allocation3 + $0x64] sm:$0x1]
        %v6959 = vld [vmem:[#allocation3 + $0x6c] sm:$0xf]
        %v6960 = vld [vmem:[#allocation3 + $0x70] sm:$0x1]
        %v6961 = vld [vmem:[#allocation3 + $0x78] sm:$0xf]
        %v6962 = vld [vmem:[#allocation3 + $0x7c] sm:$0x1]
        %v6963 = vld [vmem:[#allocation3 + $0x84] sm:$0xf]
        %v6964 = vld [vmem:[#allocation3 + $0x88] sm:$0x1]
        %v6965 = vld [vmem:[#allocation3 + $0x90] sm:$0xf]
        %v6966 = vld [vmem:[#allocation3 + $0x94] sm:$0x1]
        %v6967 = vld [vmem:[#allocation3 + $0x9c] sm:$0xf]
        %v6968 = vld [vmem:[#allocation3 + $0xa0] sm:$0x1]
        %v6969 = vld [vmem:[#allocation3 + $0xa8] sm:$0xf]
        %v6970 = vld [vmem:[#allocation3 + $0xac] sm:$0x1]
        %v6971 = vld [vmem:[#allocation3 + $0xb4] sm:$0xf]
        %v6972 = vld [vmem:[#allocation3 + $0xb8] sm:$0x1]
        %v6973 = vld [vmem:[#allocation3 + $0xc0] sm:$0xf]
        %v6974 = vld [vmem:[#allocation3 + $0xc4] sm:$0x1]
        %v6975 = vld [vmem:[#allocation3 + $0xcc] sm:$0xf]
        %v6976 = vld [vmem:[#allocation3 + $0xd0] sm:$0x1]
        %v6978 = vshrl.u32 %v6941, 16
        %v6980 = vrot.slane %v6978, 4
        %v6981 = vshll.u32 %v6941, 16
        %v6983 = vrot.slane %v6981, 5
        %v6984 = vor.u32 %v6980, %v6983
        %v6985 = vrot.slane %v6984, 4
        %v6987 = vshll.u32 %v6942, 16
        %v6989 = vrot.slane %v6987, 5
        %v6990 = vsel %vm1484, %v6985, %v6989
        %v6992 = vshrl.u32 %v6943, 16
        %v6994 = vrot.slane %v6992, 4
        %v6995 = vshll.u32 %v6943, 16
        %v6997 = vrot.slane %v6995, 5
        %v6998 = vor.u32 %v6994, %v6997
        %v6999 = vrot.slane %v6998, 4
        %v7001 = vshll.u32 %v6944, 16
        %v7003 = vrot.slane %v7001, 5
        %v7004 = vsel %vm1484, %v6999, %v7003
        %v7006 = vshrl.u32 %v6945, 16
        %v7008 = vrot.slane %v7006, 4
        %v7009 = vshll.u32 %v6945, 16
        %v7011 = vrot.slane %v7009, 5
        %v7012 = vor.u32 %v7008, %v7011
        %v7013 = vrot.slane %v7012, 4
        %v7015 = vshll.u32 %v6946, 16
        %v7017 = vrot.slane %v7015, 5
        %v7018 = vsel %vm1484, %v7013, %v7017
        %v7020 = vshrl.u32 %v6947, 16
        %v7022 = vrot.slane %v7020, 4
        %v7023 = vshll.u32 %v6947, 16
        %v7025 = vrot.slane %v7023, 5
        %v7026 = vor.u32 %v7022, %v7025
        %v7027 = vrot.slane %v7026, 4
        %v7029 = vshll.u32 %v6948, 16
        %v7031 = vrot.slane %v7029, 5
        %v7032 = vsel %vm1484, %v7027, %v7031
        %v7034 = vshrl.u32 %v6949, 16
        %v7036 = vrot.slane %v7034, 4
        %v7037 = vshll.u32 %v6949, 16
        %v7039 = vrot.slane %v7037, 5
        %v7040 = vor.u32 %v7036, %v7039
        %v7041 = vrot.slane %v7040, 4
        %v7043 = vshll.u32 %v6950, 16
        %v7045 = vrot.slane %v7043, 5
        %v7046 = vsel %vm1484, %v7041, %v7045
        %v7048 = vshrl.u32 %v6951, 16
        %v7050 = vrot.slane %v7048, 4
        %v7051 = vshll.u32 %v6951, 16
        %v7053 = vrot.slane %v7051, 5
        %v7054 = vor.u32 %v7050, %v7053
        %v7055 = vrot.slane %v7054, 4
        %v7057 = vshll.u32 %v6952, 16
        %v7059 = vrot.slane %v7057, 5
        %v7060 = vsel %vm1484, %v7055, %v7059
        %v7062 = vshrl.u32 %v6953, 16
        %v7064 = vrot.slane %v7062, 4
        %v7065 = vshll.u32 %v6953, 16
        %v7067 = vrot.slane %v7065, 5
        %v7068 = vor.u32 %v7064, %v7067
        %v7069 = vrot.slane %v7068, 4
        %v7071 = vshll.u32 %v6954, 16
        %v7073 = vrot.slane %v7071, 5
        %v7074 = vsel %vm1484, %v7069, %v7073
        %v7076 = vshrl.u32 %v6955, 16
        %v7078 = vrot.slane %v7076, 4
        %v7079 = vshll.u32 %v6955, 16
        %v7081 = vrot.slane %v7079, 5
        %v7082 = vor.u32 %v7078, %v7081
        %v7083 = vrot.slane %v7082, 4
        %v7085 = vshll.u32 %v6956, 16
        %v7087 = vrot.slane %v7085, 5
        %v7088 = vsel %vm1484, %v7083, %v7087
        %v7090 = vshrl.u32 %v6957, 16
        %v7092 = vrot.slane %v7090, 4
        %v7093 = vshll.u32 %v6957, 16
        %v7095 = vrot.slane %v7093, 5
        %v7096 = vor.u32 %v7092, %v7095
        %v7097 = vrot.slane %v7096, 4
        %v7099 = vshll.u32 %v6958, 16
        %v7101 = vrot.slane %v7099, 5
        %v7102 = vsel %vm1484, %v7097, %v7101
        %v7104 = vshrl.u32 %v6959, 16
        %v7106 = vrot.slane %v7104, 4
        %v7107 = vshll.u32 %v6959, 16
        %v7109 = vrot.slane %v7107, 5
        %v7110 = vor.u32 %v7106, %v7109
        %v7111 = vrot.slane %v7110, 4
        %v7113 = vshll.u32 %v6960, 16
        %v7115 = vrot.slane %v7113, 5
        %v7116 = vsel %vm1484, %v7111, %v7115
        %v7118 = vshrl.u32 %v6961, 16
        %v7120 = vrot.slane %v7118, 4
        %v7121 = vshll.u32 %v6961, 16
        %v7123 = vrot.slane %v7121, 5
        %v7124 = vor.u32 %v7120, %v7123
        %v7125 = vrot.slane %v7124, 4
        %v7127 = vshll.u32 %v6962, 16
        %v7129 = vrot.slane %v7127, 5
        %v7130 = vsel %vm1484, %v7125, %v7129
        %v7132 = vshrl.u32 %v6963, 16
        %v7134 = vrot.slane %v7132, 4
        %v7135 = vshll.u32 %v6963, 16
        %v7137 = vrot.slane %v7135, 5
        %v7138 = vor.u32 %v7134, %v7137
        %v7139 = vrot.slane %v7138, 4
        %v7141 = vshll.u32 %v6964, 16
        %v7143 = vrot.slane %v7141, 5
        %v7144 = vsel %vm1484, %v7139, %v7143
        %v7146 = vshrl.u32 %v6965, 16
        %v7148 = vrot.slane %v7146, 4
        %v7149 = vshll.u32 %v6965, 16
        %v7151 = vrot.slane %v7149, 5
        %v7152 = vor.u32 %v7148, %v7151
        %v7153 = vrot.slane %v7152, 4
        %v7155 = vshll.u32 %v6966, 16
        %v7157 = vrot.slane %v7155, 5
        %v7158 = vsel %vm1484, %v7153, %v7157
        %v7160 = vshrl.u32 %v6967, 16
        %v7162 = vrot.slane %v7160, 4
        %v7163 = vshll.u32 %v6967, 16
        %v7165 = vrot.slane %v7163, 5
        %v7166 = vor.u32 %v7162, %v7165
        %v7167 = vrot.slane %v7166, 4
        %v7169 = vshll.u32 %v6968, 16
        %v7171 = vrot.slane %v7169, 5
        %v7172 = vsel %vm1484, %v7167, %v7171
        %v7174 = vshrl.u32 %v6969, 16
        %v7176 = vrot.slane %v7174, 4
        %v7177 = vshll.u32 %v6969, 16
        %v7179 = vrot.slane %v7177, 5
        %v7180 = vor.u32 %v7176, %v7179
        %v7181 = vrot.slane %v7180, 4
        %v7183 = vshll.u32 %v6970, 16
        %v7185 = vrot.slane %v7183, 5
        %v7186 = vsel %vm1484, %v7181, %v7185
        %v7188 = vshrl.u32 %v6971, 16
        %v7190 = vrot.slane %v7188, 4
        %v7191 = vshll.u32 %v6971, 16
        %v7193 = vrot.slane %v7191, 5
        %v7194 = vor.u32 %v7190, %v7193
        %v7195 = vrot.slane %v7194, 4
        %v7197 = vshll.u32 %v6972, 16
        %v7199 = vrot.slane %v7197, 5
        %v7200 = vsel %vm1484, %v7195, %v7199
        %v7202 = vshrl.u32 %v6973, 16
        %v7204 = vrot.slane %v7202, 4
        %v7205 = vshll.u32 %v6973, 16
        %v7207 = vrot.slane %v7205, 5
        %v7208 = vor.u32 %v7204, %v7207
        %v7209 = vrot.slane %v7208, 4
        %v7211 = vshll.u32 %v6974, 16
        %v7213 = vrot.slane %v7211, 5
        %v7214 = vsel %vm1484, %v7209, %v7213
        %v7216 = vshrl.u32 %v6975, 16
        %v7218 = vrot.slane %v7216, 4
        %v7219 = vshll.u32 %v6975, 16
        %v7221 = vrot.slane %v7219, 5
        %v7222 = vor.u32 %v7218, %v7221
        %v7223 = vrot.slane %v7222, 4
        %v7225 = vshll.u32 %v6976, 16
        %v7227 = vrot.slane %v7225, 5
        %v7228 = vsel %vm1484, %v7223, %v7227
        %7229 = vrot.lane.b32.xlu0 %v6990, 8
        %v7230 = vpop.permute.xlu0 %7229
        %7231 = vrot.lane.b32.xlu0 %v7004, 8
        %v7232 = vpop.permute.xlu0 %7231
        %7233 = vrot.lane.b32.xlu0 %v7018, 8
        %v7234 = vpop.permute.xlu0 %7233
        %7235 = vrot.lane.b32.xlu0 %v7032, 8
        %v7236 = vpop.permute.xlu0 %7235
        %7237 = vrot.lane.b32.xlu0 %v7046, 8
        %v7238 = vpop.permute.xlu0 %7237
        %7239 = vrot.lane.b32.xlu0 %v7060, 8
        %v7240 = vpop.permute.xlu0 %7239
        %7241 = vrot.lane.b32.xlu0 %v7074, 8
        %v7242 = vpop.permute.xlu0 %7241
        %7243 = vrot.lane.b32.xlu0 %v7088, 8
        %v7244 = vpop.permute.xlu0 %7243
        %7245 = vrot.lane.b32.xlu0 %v7102, 8
        %v7246 = vpop.permute.xlu0 %7245
        %7247 = vrot.lane.b32.xlu0 %v7116, 8
        %v7248 = vpop.permute.xlu0 %7247
        %7249 = vrot.lane.b32.xlu0 %v7130, 8
        %v7250 = vpop.permute.xlu0 %7249
        %7251 = vrot.lane.b32.xlu0 %v7144, 8
        %v7252 = vpop.permute.xlu0 %7251
        %7253 = vrot.lane.b32.xlu0 %v7158, 8
        %v7254 = vpop.permute.xlu0 %7253
        %7255 = vrot.lane.b32.xlu0 %v7172, 8
        %v7256 = vpop.permute.xlu0 %7255
        %7257 = vrot.lane.b32.xlu0 %v7186, 8
        %v7258 = vpop.permute.xlu0 %7257
        %7259 = vrot.lane.b32.xlu0 %v7200, 8
        %v7260 = vpop.permute.xlu0 %7259
        %7261 = vrot.lane.b32.xlu0 %v7214, 8
        %v7262 = vpop.permute.xlu0 %7261
        %7263 = vrot.lane.b32.xlu0 %v7228, 8
        %v7264 = vpop.permute.xlu0 %7263
        %vm7283 = vcmask 126016
        %7284 = vst.msk [vmem:[#allocation5] sm:$0xf] %vm7283, %v7230
        %7285 = vst.msk [vmem:[#allocation5 + $0x4] sm:$0xf] %vm7283, %v7232
        %7286 = vst.msk [vmem:[#allocation5 + $0x8] sm:$0xf] %vm7283, %v7234
        %7287 = vst.msk [vmem:[#allocation5 + $0xc] sm:$0xf] %vm7283, %v7236
        %7288 = vst.msk [vmem:[#allocation5 + $0x10] sm:$0xf] %vm7283, %v7238
        %7289 = vst.msk [vmem:[#allocation5 + $0x14] sm:$0xf] %vm7283, %v7240
        %7290 = vst.msk [vmem:[#allocation5 + $0x18] sm:$0xf] %vm7283, %v7242
        %7291 = vst.msk [vmem:[#allocation5 + $0x1c] sm:$0xf] %vm7283, %v7244
        %7292 = vst.msk [vmem:[#allocation5 + $0x20] sm:$0xf] %vm7283, %v7246
        %7293 = vst.msk [vmem:[#allocation5 + $0x24] sm:$0xf] %vm7283, %v7248
        %7294 = vst.msk [vmem:[#allocation5 + $0x28] sm:$0xf] %vm7283, %v7250
        %7295 = vst.msk [vmem:[#allocation5 + $0x2c] sm:$0xf] %vm7283, %v7252
        %7296 = vst.msk [vmem:[#allocation5 + $0x30] sm:$0xf] %vm7283, %v7254
        %7297 = vst.msk [vmem:[#allocation5 + $0x34] sm:$0xf] %vm7283, %v7256
        %7298 = vst.msk [vmem:[#allocation5 + $0x38] sm:$0xf] %vm7283, %v7258
        %7299 = vst.msk [vmem:[#allocation5 + $0x3c] sm:$0xf] %vm7283, %v7260
        %7300 = vst.msk [vmem:[#allocation5 + $0x40] sm:$0xf] %vm7283, %v7262
        %7301 = vst.msk [vmem:[#allocation5 + $0x44] sm:$0xf] %vm7283, %v7264
        %v7302 = vld [vmem:[#allocation3] sm:$0xe]
        %v7303 = vld [vmem:[#allocation3 + $0x4] sm:$0x1]
        %v7304 = vld [vmem:[#allocation3 + $0xc] sm:$0xe]
        %v7305 = vld [vmem:[#allocation3 + $0x10] sm:$0x1]
        %v7306 = vld [vmem:[#allocation3 + $0x18] sm:$0xe]
        %v7307 = vld [vmem:[#allocation3 + $0x1c] sm:$0x1]
        %v7308 = vld [vmem:[#allocation3 + $0x24] sm:$0xe]
        %v7309 = vld [vmem:[#allocation3 + $0x28] sm:$0x1]
        %v7310 = vld [vmem:[#allocation3 + $0x30] sm:$0xe]
        %v7311 = vld [vmem:[#allocation3 + $0x34] sm:$0x1]
        %v7312 = vld [vmem:[#allocation3 + $0x3c] sm:$0xe]
        %v7313 = vld [vmem:[#allocation3 + $0x40] sm:$0x1]
        %v7314 = vld [vmem:[#allocation3 + $0x48] sm:$0xe]
        %v7315 = vld [vmem:[#allocation3 + $0x4c] sm:$0x1]
        %v7316 = vld [vmem:[#allocation3 + $0x54] sm:$0xe]
        %v7317 = vld [vmem:[#allocation3 + $0x58] sm:$0x1]
        %v7318 = vld [vmem:[#allocation3 + $0x60] sm:$0xe]
        %v7319 = vld [vmem:[#allocation3 + $0x64] sm:$0x1]
        %v7320 = vld [vmem:[#allocation3 + $0x6c] sm:$0xe]
        %v7321 = vld [vmem:[#allocation3 + $0x70] sm:$0x1]
        %v7322 = vld [vmem:[#allocation3 + $0x78] sm:$0xe]
        %v7323 = vld [vmem:[#allocation3 + $0x7c] sm:$0x1]
        %v7324 = vld [vmem:[#allocation3 + $0x84] sm:$0xe]
        %v7325 = vld [vmem:[#allocation3 + $0x88] sm:$0x1]
        %v7326 = vld [vmem:[#allocation3 + $0x90] sm:$0xe]
        %v7327 = vld [vmem:[#allocation3 + $0x94] sm:$0x1]
        %v7328 = vld [vmem:[#allocation3 + $0x9c] sm:$0xe]
        %v7329 = vld [vmem:[#allocation3 + $0xa0] sm:$0x1]
        %v7330 = vld [vmem:[#allocation3 + $0xa8] sm:$0xe]
        %v7331 = vld [vmem:[#allocation3 + $0xac] sm:$0x1]
        %v7332 = vld [vmem:[#allocation3 + $0xb4] sm:$0xe]
        %v7333 = vld [vmem:[#allocation3 + $0xb8] sm:$0x1]
        %v7334 = vld [vmem:[#allocation3 + $0xc0] sm:$0xe]
        %v7335 = vld [vmem:[#allocation3 + $0xc4] sm:$0x1]
        %v7336 = vld [vmem:[#allocation3 + $0xcc] sm:$0xe]
        %v7337 = vld [vmem:[#allocation3 + $0xd0] sm:$0x1]
        %v7374 = vrot.slane %v7302, 5
        %v7375 = vrot.slane %v7374, 4
        %v7376 = vrot.slane %v7303, 5
        %v7377 = vsel %vm1884, %v7375, %v7376
        %v7378 = vrot.slane %v7304, 5
        %v7379 = vrot.slane %v7378, 4
        %v7380 = vrot.slane %v7305, 5
        %v7381 = vsel %vm1884, %v7379, %v7380
        %v7382 = vrot.slane %v7306, 5
        %v7383 = vrot.slane %v7382, 4
        %v7384 = vrot.slane %v7307, 5
        %v7385 = vsel %vm1884, %v7383, %v7384
        %v7386 = vrot.slane %v7308, 5
        %v7387 = vrot.slane %v7386, 4
        %v7388 = vrot.slane %v7309, 5
        %v7389 = vsel %vm1884, %v7387, %v7388
        %v7390 = vrot.slane %v7310, 5
        %v7391 = vrot.slane %v7390, 4
        %v7392 = vrot.slane %v7311, 5
        %v7393 = vsel %vm1884, %v7391, %v7392
        %v7394 = vrot.slane %v7312, 5
        %v7395 = vrot.slane %v7394, 4
        %v7396 = vrot.slane %v7313, 5
        %v7397 = vsel %vm1884, %v7395, %v7396
        %v7398 = vrot.slane %v7314, 5
        %v7399 = vrot.slane %v7398, 4
        %v7400 = vrot.slane %v7315, 5
        %v7401 = vsel %vm1884, %v7399, %v7400
        %v7402 = vrot.slane %v7316, 5
        %v7403 = vrot.slane %v7402, 4
        %v7404 = vrot.slane %v7317, 5
        %v7405 = vsel %vm1884, %v7403, %v7404
        %v7406 = vrot.slane %v7318, 5
        %v7407 = vrot.slane %v7406, 4
        %v7408 = vrot.slane %v7319, 5
        %v7409 = vsel %vm1884, %v7407, %v7408
        %v7410 = vrot.slane %v7320, 5
        %v7411 = vrot.slane %v7410, 4
        %v7412 = vrot.slane %v7321, 5
        %v7413 = vsel %vm1884, %v7411, %v7412
        %v7414 = vrot.slane %v7322, 5
        %v7415 = vrot.slane %v7414, 4
        %v7416 = vrot.slane %v7323, 5
        %v7417 = vsel %vm1884, %v7415, %v7416
        %v7418 = vrot.slane %v7324, 5
        %v7419 = vrot.slane %v7418, 4
        %v7420 = vrot.slane %v7325, 5
        %v7421 = vsel %vm1884, %v7419, %v7420
        %v7422 = vrot.slane %v7326, 5
        %v7423 = vrot.slane %v7422, 4
        %v7424 = vrot.slane %v7327, 5
        %v7425 = vsel %vm1884, %v7423, %v7424
        %v7426 = vrot.slane %v7328, 5
        %v7427 = vrot.slane %v7426, 4
        %v7428 = vrot.slane %v7329, 5
        %v7429 = vsel %vm1884, %v7427, %v7428
        %v7430 = vrot.slane %v7330, 5
        %v7431 = vrot.slane %v7430, 4
        %v7432 = vrot.slane %v7331, 5
        %v7433 = vsel %vm1884, %v7431, %v7432
        %v7434 = vrot.slane %v7332, 5
        %v7435 = vrot.slane %v7434, 4
        %v7436 = vrot.slane %v7333, 5
        %v7437 = vsel %vm1884, %v7435, %v7436
        %v7438 = vrot.slane %v7334, 5
        %v7439 = vrot.slane %v7438, 4
        %v7440 = vrot.slane %v7335, 5
        %v7441 = vsel %vm1884, %v7439, %v7440
        %v7442 = vrot.slane %v7336, 5
        %v7443 = vrot.slane %v7442, 4
        %v7444 = vrot.slane %v7337, 5
        %v7445 = vsel %vm1884, %v7443, %v7444
        %7446 = vrot.lane.b32.xlu0 %v7377, 16
        %v7447 = vpop.permute.xlu0 %7446
        %7448 = vrot.lane.b32.xlu0 %v7381, 16
        %v7449 = vpop.permute.xlu0 %7448
        %7450 = vrot.lane.b32.xlu0 %v7385, 16
        %v7451 = vpop.permute.xlu0 %7450
        %7452 = vrot.lane.b32.xlu0 %v7389, 16
        %v7453 = vpop.permute.xlu0 %7452
        %7454 = vrot.lane.b32.xlu0 %v7393, 16
        %v7455 = vpop.permute.xlu0 %7454
        %7456 = vrot.lane.b32.xlu0 %v7397, 16
        %v7457 = vpop.permute.xlu0 %7456
        %7458 = vrot.lane.b32.xlu0 %v7401, 16
        %v7459 = vpop.permute.xlu0 %7458
        %7460 = vrot.lane.b32.xlu0 %v7405, 16
        %v7461 = vpop.permute.xlu0 %7460
        %7462 = vrot.lane.b32.xlu0 %v7409, 16
        %v7463 = vpop.permute.xlu0 %7462
        %7464 = vrot.lane.b32.xlu0 %v7413, 16
        %v7465 = vpop.permute.xlu0 %7464
        %7466 = vrot.lane.b32.xlu0 %v7417, 16
        %v7467 = vpop.permute.xlu0 %7466
        %7468 = vrot.lane.b32.xlu0 %v7421, 16
        %v7469 = vpop.permute.xlu0 %7468
        %7470 = vrot.lane.b32.xlu0 %v7425, 16
        %v7471 = vpop.permute.xlu0 %7470
        %7472 = vrot.lane.b32.xlu0 %v7429, 16
        %v7473 = vpop.permute.xlu0 %7472
        %7474 = vrot.lane.b32.xlu0 %v7433, 16
        %v7475 = vpop.permute.xlu0 %7474
        %7476 = vrot.lane.b32.xlu0 %v7437, 16
        %v7477 = vpop.permute.xlu0 %7476
        %7478 = vrot.lane.b32.xlu0 %v7441, 16
        %v7479 = vpop.permute.xlu0 %7478
        %7480 = vrot.lane.b32.xlu0 %v7445, 16
        %v7481 = vpop.permute.xlu0 %7480
        %vm7500 = vcmask 191616
        %7501 = vst.msk [vmem:[#allocation5] sm:$0xf] %vm7500, %v7447
        %7502 = vst.msk [vmem:[#allocation5 + $0x4] sm:$0xf] %vm7500, %v7449
        %7503 = vst.msk [vmem:[#allocation5 + $0x8] sm:$0xf] %vm7500, %v7451
        %7504 = vst.msk [vmem:[#allocation5 + $0xc] sm:$0xf] %vm7500, %v7453
        %7505 = vst.msk [vmem:[#allocation5 + $0x10] sm:$0xf] %vm7500, %v7455
        %7506 = vst.msk [vmem:[#allocation5 + $0x14] sm:$0xf] %vm7500, %v7457
        %7507 = vst.msk [vmem:[#allocation5 + $0x18] sm:$0xf] %vm7500, %v7459
        %7508 = vst.msk [vmem:[#allocation5 + $0x1c] sm:$0xf] %vm7500, %v7461
        %7509 = vst.msk [vmem:[#allocation5 + $0x20] sm:$0xf] %vm7500, %v7463
        %7510 = vst.msk [vmem:[#allocation5 + $0x24] sm:$0xf] %vm7500, %v7465
        %7511 = vst.msk [vmem:[#allocation5 + $0x28] sm:$0xf] %vm7500, %v7467
        %7512 = vst.msk [vmem:[#allocation5 + $0x2c] sm:$0xf] %vm7500, %v7469
        %7513 = vst.msk [vmem:[#allocation5 + $0x30] sm:$0xf] %vm7500, %v7471
        %7514 = vst.msk [vmem:[#allocation5 + $0x34] sm:$0xf] %vm7500, %v7473
        %7515 = vst.msk [vmem:[#allocation5 + $0x38] sm:$0xf] %vm7500, %v7475
        %7516 = vst.msk [vmem:[#allocation5 + $0x3c] sm:$0xf] %vm7500, %v7477
        %7517 = vst.msk [vmem:[#allocation5 + $0x40] sm:$0xf] %vm7500, %v7479
        %7518 = vst.msk [vmem:[#allocation5 + $0x44] sm:$0xf] %vm7500, %v7481
        %v7519 = vld [vmem:[#allocation3] sm:$0xe]
        %v7520 = vld [vmem:[#allocation3 + $0x4] sm:$0x3]
        %v7521 = vld [vmem:[#allocation3 + $0xc] sm:$0xe]
        %v7522 = vld [vmem:[#allocation3 + $0x10] sm:$0x3]
        %v7523 = vld [vmem:[#allocation3 + $0x18] sm:$0xe]
        %v7524 = vld [vmem:[#allocation3 + $0x1c] sm:$0x3]
        %v7525 = vld [vmem:[#allocation3 + $0x24] sm:$0xe]
        %v7526 = vld [vmem:[#allocation3 + $0x28] sm:$0x3]
        %v7527 = vld [vmem:[#allocation3 + $0x30] sm:$0xe]
        %v7528 = vld [vmem:[#allocation3 + $0x34] sm:$0x3]
        %v7529 = vld [vmem:[#allocation3 + $0x3c] sm:$0xe]
        %v7530 = vld [vmem:[#allocation3 + $0x40] sm:$0x3]
        %v7531 = vld [vmem:[#allocation3 + $0x48] sm:$0xe]
        %v7532 = vld [vmem:[#allocation3 + $0x4c] sm:$0x3]
        %v7533 = vld [vmem:[#allocation3 + $0x54] sm:$0xe]
        %v7534 = vld [vmem:[#allocation3 + $0x58] sm:$0x3]
        %v7535 = vld [vmem:[#allocation3 + $0x60] sm:$0xe]
        %v7536 = vld [vmem:[#allocation3 + $0x64] sm:$0x3]
        %v7537 = vld [vmem:[#allocation3 + $0x6c] sm:$0xe]
        %v7538 = vld [vmem:[#allocation3 + $0x70] sm:$0x3]
        %v7539 = vld [vmem:[#allocation3 + $0x78] sm:$0xe]
        %v7540 = vld [vmem:[#allocation3 + $0x7c] sm:$0x3]
        %v7541 = vld [vmem:[#allocation3 + $0x84] sm:$0xe]
        %v7542 = vld [vmem:[#allocation3 + $0x88] sm:$0x3]
        %v7543 = vld [vmem:[#allocation3 + $0x90] sm:$0xe]
        %v7544 = vld [vmem:[#allocation3 + $0x94] sm:$0x3]
        %v7545 = vld [vmem:[#allocation3 + $0x9c] sm:$0xe]
        %v7546 = vld [vmem:[#allocation3 + $0xa0] sm:$0x3]
        %v7547 = vld [vmem:[#allocation3 + $0xa8] sm:$0xe]
        %v7548 = vld [vmem:[#allocation3 + $0xac] sm:$0x3]
        %v7549 = vld [vmem:[#allocation3 + $0xb4] sm:$0xe]
        %v7550 = vld [vmem:[#allocation3 + $0xb8] sm:$0x3]
        %v7551 = vld [vmem:[#allocation3 + $0xc0] sm:$0xe]
        %v7552 = vld [vmem:[#allocation3 + $0xc4] sm:$0x3]
        %v7553 = vld [vmem:[#allocation3 + $0xcc] sm:$0xe]
        %v7554 = vld [vmem:[#allocation3 + $0xd0] sm:$0x3]
        %v7556 = vshrl.u32 %v7519, 16
        %v7558 = vrot.slane %v7556, 5
        %v7559 = vshll.u32 %v7519, 16
        %v7561 = vrot.slane %v7559, 6
        %v7562 = vor.u32 %v7558, %v7561
        %v7563 = vrot.slane %v7562, 4
        %v7565 = vshrl.u32 %v7520, 16
        %v7567 = vrot.slane %v7565, 5
        %v7568 = vshll.u32 %v7520, 16
        %v7570 = vrot.slane %v7568, 6
        %v7571 = vor.u32 %v7567, %v7570
        %v7572 = vsel %vm2067, %v7563, %v7571
        %v7574 = vshrl.u32 %v7521, 16
        %v7576 = vrot.slane %v7574, 5
        %v7577 = vshll.u32 %v7521, 16
        %v7579 = vrot.slane %v7577, 6
        %v7580 = vor.u32 %v7576, %v7579
        %v7581 = vrot.slane %v7580, 4
        %v7583 = vshrl.u32 %v7522, 16
        %v7585 = vrot.slane %v7583, 5
        %v7586 = vshll.u32 %v7522, 16
        %v7588 = vrot.slane %v7586, 6
        %v7589 = vor.u32 %v7585, %v7588
        %v7590 = vsel %vm2067, %v7581, %v7589
        %v7592 = vshrl.u32 %v7523, 16
        %v7594 = vrot.slane %v7592, 5
        %v7595 = vshll.u32 %v7523, 16
        %v7597 = vrot.slane %v7595, 6
        %v7598 = vor.u32 %v7594, %v7597
        %v7599 = vrot.slane %v7598, 4
        %v7601 = vshrl.u32 %v7524, 16
        %v7603 = vrot.slane %v7601, 5
        %v7604 = vshll.u32 %v7524, 16
        %v7606 = vrot.slane %v7604, 6
        %v7607 = vor.u32 %v7603, %v7606
        %v7608 = vsel %vm2067, %v7599, %v7607
        %v7610 = vshrl.u32 %v7525, 16
        %v7612 = vrot.slane %v7610, 5
        %v7613 = vshll.u32 %v7525, 16
        %v7615 = vrot.slane %v7613, 6
        %v7616 = vor.u32 %v7612, %v7615
        %v7617 = vrot.slane %v7616, 4
        %v7619 = vshrl.u32 %v7526, 16
        %v7621 = vrot.slane %v7619, 5
        %v7622 = vshll.u32 %v7526, 16
        %v7624 = vrot.slane %v7622, 6
        %v7625 = vor.u32 %v7621, %v7624
        %v7626 = vsel %vm2067, %v7617, %v7625
        %v7628 = vshrl.u32 %v7527, 16
        %v7630 = vrot.slane %v7628, 5
        %v7631 = vshll.u32 %v7527, 16
        %v7633 = vrot.slane %v7631, 6
        %v7634 = vor.u32 %v7630, %v7633
        %v7635 = vrot.slane %v7634, 4
        %v7637 = vshrl.u32 %v7528, 16
        %v7639 = vrot.slane %v7637, 5
        %v7640 = vshll.u32 %v7528, 16
        %v7642 = vrot.slane %v7640, 6
        %v7643 = vor.u32 %v7639, %v7642
        %v7644 = vsel %vm2067, %v7635, %v7643
        %v7646 = vshrl.u32 %v7529, 16
        %v7648 = vrot.slane %v7646, 5
        %v7649 = vshll.u32 %v7529, 16
        %v7651 = vrot.slane %v7649, 6
        %v7652 = vor.u32 %v7648, %v7651
        %v7653 = vrot.slane %v7652, 4
        %v7655 = vshrl.u32 %v7530, 16
        %v7657 = vrot.slane %v7655, 5
        %v7658 = vshll.u32 %v7530, 16
        %v7660 = vrot.slane %v7658, 6
        %v7661 = vor.u32 %v7657, %v7660
        %v7662 = vsel %vm2067, %v7653, %v7661
        %v7664 = vshrl.u32 %v7531, 16
        %v7666 = vrot.slane %v7664, 5
        %v7667 = vshll.u32 %v7531, 16
        %v7669 = vrot.slane %v7667, 6
        %v7670 = vor.u32 %v7666, %v7669
        %v7671 = vrot.slane %v7670, 4
        %v7673 = vshrl.u32 %v7532, 16
        %v7675 = vrot.slane %v7673, 5
        %v7676 = vshll.u32 %v7532, 16
        %v7678 = vrot.slane %v7676, 6
        %v7679 = vor.u32 %v7675, %v7678
        %v7680 = vsel %vm2067, %v7671, %v7679
        %v7682 = vshrl.u32 %v7533, 16
        %v7684 = vrot.slane %v7682, 5
        %v7685 = vshll.u32 %v7533, 16
        %v7687 = vrot.slane %v7685, 6
        %v7688 = vor.u32 %v7684, %v7687
        %v7689 = vrot.slane %v7688, 4
        %v7691 = vshrl.u32 %v7534, 16
        %v7693 = vrot.slane %v7691, 5
        %v7694 = vshll.u32 %v7534, 16
        %v7696 = vrot.slane %v7694, 6
        %v7697 = vor.u32 %v7693, %v7696
        %v7698 = vsel %vm2067, %v7689, %v7697
        %v7700 = vshrl.u32 %v7535, 16
        %v7702 = vrot.slane %v7700, 5
        %v7703 = vshll.u32 %v7535, 16
        %v7705 = vrot.slane %v7703, 6
        %v7706 = vor.u32 %v7702, %v7705
        %v7707 = vrot.slane %v7706, 4
        %v7709 = vshrl.u32 %v7536, 16
        %v7711 = vrot.slane %v7709, 5
        %v7712 = vshll.u32 %v7536, 16
        %v7714 = vrot.slane %v7712, 6
        %v7715 = vor.u32 %v7711, %v7714
        %v7716 = vsel %vm2067, %v7707, %v7715
        %v7718 = vshrl.u32 %v7537, 16
        %v7720 = vrot.slane %v7718, 5
        %v7721 = vshll.u32 %v7537, 16
        %v7723 = vrot.slane %v7721, 6
        %v7724 = vor.u32 %v7720, %v7723
        %v7725 = vrot.slane %v7724, 4
        %v7727 = vshrl.u32 %v7538, 16
        %v7729 = vrot.slane %v7727, 5
        %v7730 = vshll.u32 %v7538, 16
        %v7732 = vrot.slane %v7730, 6
        %v7733 = vor.u32 %v7729, %v7732
        %v7734 = vsel %vm2067, %v7725, %v7733
        %v7736 = vshrl.u32 %v7539, 16
        %v7738 = vrot.slane %v7736, 5
        %v7739 = vshll.u32 %v7539, 16
        %v7741 = vrot.slane %v7739, 6
        %v7742 = vor.u32 %v7738, %v7741
        %v7743 = vrot.slane %v7742, 4
        %v7745 = vshrl.u32 %v7540, 16
        %v7747 = vrot.slane %v7745, 5
        %v7748 = vshll.u32 %v7540, 16
        %v7750 = vrot.slane %v7748, 6
        %v7751 = vor.u32 %v7747, %v7750
        %v7752 = vsel %vm2067, %v7743, %v7751
        %v7754 = vshrl.u32 %v7541, 16
        %v7756 = vrot.slane %v7754, 5
        %v7757 = vshll.u32 %v7541, 16
        %v7759 = vrot.slane %v7757, 6
        %v7760 = vor.u32 %v7756, %v7759
        %v7761 = vrot.slane %v7760, 4
        %v7763 = vshrl.u32 %v7542, 16
        %v7765 = vrot.slane %v7763, 5
        %v7766 = vshll.u32 %v7542, 16
        %v7768 = vrot.slane %v7766, 6
        %v7769 = vor.u32 %v7765, %v7768
        %v7770 = vsel %vm2067, %v7761, %v7769
        %v7772 = vshrl.u32 %v7543, 16
        %v7774 = vrot.slane %v7772, 5
        %v7775 = vshll.u32 %v7543, 16
        %v7777 = vrot.slane %v7775, 6
        %v7778 = vor.u32 %v7774, %v7777
        %v7779 = vrot.slane %v7778, 4
        %v7781 = vshrl.u32 %v7544, 16
        %v7783 = vrot.slane %v7781, 5
        %v7784 = vshll.u32 %v7544, 16
        %v7786 = vrot.slane %v7784, 6
        %v7787 = vor.u32 %v7783, %v7786
        %v7788 = vsel %vm2067, %v7779, %v7787
        %v7790 = vshrl.u32 %v7545, 16
        %v7792 = vrot.slane %v7790, 5
        %v7793 = vshll.u32 %v7545, 16
        %v7795 = vrot.slane %v7793, 6
        %v7796 = vor.u32 %v7792, %v7795
        %v7797 = vrot.slane %v7796, 4
        %v7799 = vshrl.u32 %v7546, 16
        %v7801 = vrot.slane %v7799, 5
        %v7802 = vshll.u32 %v7546, 16
        %v7804 = vrot.slane %v7802, 6
        %v7805 = vor.u32 %v7801, %v7804
        %v7806 = vsel %vm2067, %v7797, %v7805
        %v7808 = vshrl.u32 %v7547, 16
        %v7810 = vrot.slane %v7808, 5
        %v7811 = vshll.u32 %v7547, 16
        %v7813 = vrot.slane %v7811, 6
        %v7814 = vor.u32 %v7810, %v7813
        %v7815 = vrot.slane %v7814, 4
        %v7817 = vshrl.u32 %v7548, 16
        %v7819 = vrot.slane %v7817, 5
        %v7820 = vshll.u32 %v7548, 16
        %v7822 = vrot.slane %v7820, 6
        %v7823 = vor.u32 %v7819, %v7822
        %v7824 = vsel %vm2067, %v7815, %v7823
        %v7826 = vshrl.u32 %v7549, 16
        %v7828 = vrot.slane %v7826, 5
        %v7829 = vshll.u32 %v7549, 16
        %v7831 = vrot.slane %v7829, 6
        %v7832 = vor.u32 %v7828, %v7831
        %v7833 = vrot.slane %v7832, 4
        %v7835 = vshrl.u32 %v7550, 16
        %v7837 = vrot.slane %v7835, 5
        %v7838 = vshll.u32 %v7550, 16
        %v7840 = vrot.slane %v7838, 6
        %v7841 = vor.u32 %v7837, %v7840
        %v7842 = vsel %vm2067, %v7833, %v7841
        %v7844 = vshrl.u32 %v7551, 16
        %v7846 = vrot.slane %v7844, 5
        %v7847 = vshll.u32 %v7551, 16
        %v7849 = vrot.slane %v7847, 6
        %v7850 = vor.u32 %v7846, %v7849
        %v7851 = vrot.slane %v7850, 4
        %v7853 = vshrl.u32 %v7552, 16
        %v7855 = vrot.slane %v7853, 5
        %v7856 = vshll.u32 %v7552, 16
        %v7858 = vrot.slane %v7856, 6
        %v7859 = vor.u32 %v7855, %v7858
        %v7860 = vsel %vm2067, %v7851, %v7859
        %v7862 = vshrl.u32 %v7553, 16
        %v7864 = vrot.slane %v7862, 5
        %v7865 = vshll.u32 %v7553, 16
        %v7867 = vrot.slane %v7865, 6
        %v7868 = vor.u32 %v7864, %v7867
        %v7869 = vrot.slane %v7868, 4
        %v7871 = vshrl.u32 %v7554, 16
        %v7873 = vrot.slane %v7871, 5
        %v7874 = vshll.u32 %v7554, 16
        %v7876 = vrot.slane %v7874, 6
        %v7877 = vor.u32 %v7873, %v7876
        %v7878 = vsel %vm2067, %v7869, %v7877
        %7879 = vrot.lane.b32.xlu0 %v7572, 24
        %v7880 = vpop.permute.xlu0 %7879
        %7881 = vrot.lane.b32.xlu0 %v7590, 24
        %v7882 = vpop.permute.xlu0 %7881
        %7883 = vrot.lane.b32.xlu0 %v7608, 24
        %v7884 = vpop.permute.xlu0 %7883
        %7885 = vrot.lane.b32.xlu0 %v7626, 24
        %v7886 = vpop.permute.xlu0 %7885
        %7887 = vrot.lane.b32.xlu0 %v7644, 24
        %v7888 = vpop.permute.xlu0 %7887
        %7889 = vrot.lane.b32.xlu0 %v7662, 24
        %v7890 = vpop.permute.xlu0 %7889
        %7891 = vrot.lane.b32.xlu0 %v7680, 24
        %v7892 = vpop.permute.xlu0 %7891
        %7893 = vrot.lane.b32.xlu0 %v7698, 24
        %v7894 = vpop.permute.xlu0 %7893
        %7895 = vrot.lane.b32.xlu0 %v7716, 24
        %v7896 = vpop.permute.xlu0 %7895
        %7897 = vrot.lane.b32.xlu0 %v7734, 24
        %v7898 = vpop.permute.xlu0 %7897
        %7899 = vrot.lane.b32.xlu0 %v7752, 24
        %v7900 = vpop.permute.xlu0 %7899
        %7901 = vrot.lane.b32.xlu0 %v7770, 24
        %v7902 = vpop.permute.xlu0 %7901
        %7903 = vrot.lane.b32.xlu0 %v7788, 24
        %v7904 = vpop.permute.xlu0 %7903
        %7905 = vrot.lane.b32.xlu0 %v7806, 24
        %v7906 = vpop.permute.xlu0 %7905
        %7907 = vrot.lane.b32.xlu0 %v7824, 24
        %v7908 = vpop.permute.xlu0 %7907
        %7909 = vrot.lane.b32.xlu0 %v7842, 24
        %v7910 = vpop.permute.xlu0 %7909
        %7911 = vrot.lane.b32.xlu0 %v7860, 24
        %v7912 = vpop.permute.xlu0 %7911
        %7913 = vrot.lane.b32.xlu0 %v7878, 24
        %v7914 = vpop.permute.xlu0 %7913
        %vm7933 = vcmask 257216
        %7934 = vst.msk [vmem:[#allocation5] sm:$0xf] %vm7933, %v7880
        %7935 = vst.msk [vmem:[#allocation5 + $0x4] sm:$0xf] %vm7933, %v7882
        %7936 = vst.msk [vmem:[#allocation5 + $0x8] sm:$0xf] %vm7933, %v7884
        %7937 = vst.msk [vmem:[#allocation5 + $0xc] sm:$0xf] %vm7933, %v7886
        %7938 = vst.msk [vmem:[#allocation5 + $0x10] sm:$0xf] %vm7933, %v7888
        %7939 = vst.msk [vmem:[#allocation5 + $0x14] sm:$0xf] %vm7933, %v7890
        %7940 = vst.msk [vmem:[#allocation5 + $0x18] sm:$0xf] %vm7933, %v7892
        %7941 = vst.msk [vmem:[#allocation5 + $0x1c] sm:$0xf] %vm7933, %v7894
        %7942 = vst.msk [vmem:[#allocation5 + $0x20] sm:$0xf] %vm7933, %v7896
        %7943 = vst.msk [vmem:[#allocation5 + $0x24] sm:$0xf] %vm7933, %v7898
        %7944 = vst.msk [vmem:[#allocation5 + $0x28] sm:$0xf] %vm7933, %v7900
        %7945 = vst.msk [vmem:[#allocation5 + $0x2c] sm:$0xf] %vm7933, %v7902
        %7946 = vst.msk [vmem:[#allocation5 + $0x30] sm:$0xf] %vm7933, %v7904
        %7947 = vst.msk [vmem:[#allocation5 + $0x34] sm:$0xf] %vm7933, %v7906
        %7948 = vst.msk [vmem:[#allocation5 + $0x38] sm:$0xf] %vm7933, %v7908
        %7949 = vst.msk [vmem:[#allocation5 + $0x3c] sm:$0xf] %vm7933, %v7910
        %7950 = vst.msk [vmem:[#allocation5 + $0x40] sm:$0xf] %vm7933, %v7912
        %7951 = vst.msk [vmem:[#allocation5 + $0x44] sm:$0xf] %vm7933, %v7914
        %v7952 = vld [vmem:[#allocation3] sm:$0xc]
        %v7953 = vld [vmem:[#allocation3 + $0x4] sm:$0x3]
        %v7954 = vld [vmem:[#allocation3 + $0xc] sm:$0xc]
        %v7955 = vld [vmem:[#allocation3 + $0x10] sm:$0x3]
        %v7956 = vld [vmem:[#allocation3 + $0x18] sm:$0xc]
        %v7957 = vld [vmem:[#allocation3 + $0x1c] sm:$0x3]
        %v7958 = vld [vmem:[#allocation3 + $0x24] sm:$0xc]
        %v7959 = vld [vmem:[#allocation3 + $0x28] sm:$0x3]
        %v7960 = vld [vmem:[#allocation3 + $0x30] sm:$0xc]
        %v7961 = vld [vmem:[#allocation3 + $0x34] sm:$0x3]
        %v7962 = vld [vmem:[#allocation3 + $0x3c] sm:$0xc]
        %v7963 = vld [vmem:[#allocation3 + $0x40] sm:$0x3]
        %v7964 = vld [vmem:[#allocation3 + $0x48] sm:$0xc]
        %v7965 = vld [vmem:[#allocation3 + $0x4c] sm:$0x3]
        %v7966 = vld [vmem:[#allocation3 + $0x54] sm:$0xc]
        %v7967 = vld [vmem:[#allocation3 + $0x58] sm:$0x3]
        %v7968 = vld [vmem:[#allocation3 + $0x60] sm:$0xc]
        %v7969 = vld [vmem:[#allocation3 + $0x64] sm:$0x3]
        %v7970 = vld [vmem:[#allocation3 + $0x6c] sm:$0xc]
        %v7971 = vld [vmem:[#allocation3 + $0x70] sm:$0x3]
        %v7972 = vld [vmem:[#allocation3 + $0x78] sm:$0xc]
        %v7973 = vld [vmem:[#allocation3 + $0x7c] sm:$0x3]
        %v7974 = vld [vmem:[#allocation3 + $0x84] sm:$0xc]
        %v7975 = vld [vmem:[#allocation3 + $0x88] sm:$0x3]
        %v7976 = vld [vmem:[#allocation3 + $0x90] sm:$0xc]
        %v7977 = vld [vmem:[#allocation3 + $0x94] sm:$0x3]
        %v7978 = vld [vmem:[#allocation3 + $0x9c] sm:$0xc]
        %v7979 = vld [vmem:[#allocation3 + $0xa0] sm:$0x3]
        %v7980 = vld [vmem:[#allocation3 + $0xa8] sm:$0xc]
        %v7981 = vld [vmem:[#allocation3 + $0xac] sm:$0x3]
        %v7982 = vld [vmem:[#allocation3 + $0xb4] sm:$0xc]
        %v7983 = vld [vmem:[#allocation3 + $0xb8] sm:$0x3]
        %v7984 = vld [vmem:[#allocation3 + $0xc0] sm:$0xc]
        %v7985 = vld [vmem:[#allocation3 + $0xc4] sm:$0x3]
        %v7986 = vld [vmem:[#allocation3 + $0xcc] sm:$0xc]
        %v7987 = vld [vmem:[#allocation3 + $0xd0] sm:$0x3]
        %v8024 = vrot.slane %v7952, 6
        %v8025 = vrot.slane %v8024, 4
        %v8026 = vrot.slane %v7953, 6
        %v8027 = vsel %vm2539, %v8025, %v8026
        %v8028 = vrot.slane %v7954, 6
        %v8029 = vrot.slane %v8028, 4
        %v8030 = vrot.slane %v7955, 6
        %v8031 = vsel %vm2539, %v8029, %v8030
        %v8032 = vrot.slane %v7956, 6
        %v8033 = vrot.slane %v8032, 4
        %v8034 = vrot.slane %v7957, 6
        %v8035 = vsel %vm2539, %v8033, %v8034
        %v8036 = vrot.slane %v7958, 6
        %v8037 = vrot.slane %v8036, 4
        %v8038 = vrot.slane %v7959, 6
        %v8039 = vsel %vm2539, %v8037, %v8038
        %v8040 = vrot.slane %v7960, 6
        %v8041 = vrot.slane %v8040, 4
        %v8042 = vrot.slane %v7961, 6
        %v8043 = vsel %vm2539, %v8041, %v8042
        %v8044 = vrot.slane %v7962, 6
        %v8045 = vrot.slane %v8044, 4
        %v8046 = vrot.slane %v7963, 6
        %v8047 = vsel %vm2539, %v8045, %v8046
        %v8048 = vrot.slane %v7964, 6
        %v8049 = vrot.slane %v8048, 4
        %v8050 = vrot.slane %v7965, 6
        %v8051 = vsel %vm2539, %v8049, %v8050
        %v8052 = vrot.slane %v7966, 6
        %v8053 = vrot.slane %v8052, 4
        %v8054 = vrot.slane %v7967, 6
        %v8055 = vsel %vm2539, %v8053, %v8054
        %v8056 = vrot.slane %v7968, 6
        %v8057 = vrot.slane %v8056, 4
        %v8058 = vrot.slane %v7969, 6
        %v8059 = vsel %vm2539, %v8057, %v8058
        %v8060 = vrot.slane %v7970, 6
        %v8061 = vrot.slane %v8060, 4
        %v8062 = vrot.slane %v7971, 6
        %v8063 = vsel %vm2539, %v8061, %v8062
        %v8064 = vrot.slane %v7972, 6
        %v8065 = vrot.slane %v8064, 4
        %v8066 = vrot.slane %v7973, 6
        %v8067 = vsel %vm2539, %v8065, %v8066
        %v8068 = vrot.slane %v7974, 6
        %v8069 = vrot.slane %v8068, 4
        %v8070 = vrot.slane %v7975, 6
        %v8071 = vsel %vm2539, %v8069, %v8070
        %v8072 = vrot.slane %v7976, 6
        %v8073 = vrot.slane %v8072, 4
        %v8074 = vrot.slane %v7977, 6
        %v8075 = vsel %vm2539, %v8073, %v8074
        %v8076 = vrot.slane %v7978, 6
        %v8077 = vrot.slane %v8076, 4
        %v8078 = vrot.slane %v7979, 6
        %v8079 = vsel %vm2539, %v8077, %v8078
        %v8080 = vrot.slane %v7980, 6
        %v8081 = vrot.slane %v8080, 4
        %v8082 = vrot.slane %v7981, 6
        %v8083 = vsel %vm2539, %v8081, %v8082
        %v8084 = vrot.slane %v7982, 6
        %v8085 = vrot.slane %v8084, 4
        %v8086 = vrot.slane %v7983, 6
        %v8087 = vsel %vm2539, %v8085, %v8086
        %v8088 = vrot.slane %v7984, 6
        %v8089 = vrot.slane %v8088, 4
        %v8090 = vrot.slane %v7985, 6
        %v8091 = vsel %vm2539, %v8089, %v8090
        %v8092 = vrot.slane %v7986, 6
        %v8093 = vrot.slane %v8092, 4
        %v8094 = vrot.slane %v7987, 6
        %v8095 = vsel %vm2539, %v8093, %v8094
        %8096 = vrot.lane.b32.xlu0 %v8027, 32
        %v8097 = vpop.permute.xlu0 %8096
        %8098 = vrot.lane.b32.xlu0 %v8031, 32
        %v8099 = vpop.permute.xlu0 %8098
        %8100 = vrot.lane.b32.xlu0 %v8035, 32
        %v8101 = vpop.permute.xlu0 %8100
        %8102 = vrot.lane.b32.xlu0 %v8039, 32
        %v8103 = vpop.permute.xlu0 %8102
        %8104 = vrot.lane.b32.xlu0 %v8043, 32
        %v8105 = vpop.permute.xlu0 %8104
        %8106 = vrot.lane.b32.xlu0 %v8047, 32
        %v8107 = vpop.permute.xlu0 %8106
        %8108 = vrot.lane.b32.xlu0 %v8051, 32
        %v8109 = vpop.permute.xlu0 %8108
        %8110 = vrot.lane.b32.xlu0 %v8055, 32
        %v8111 = vpop.permute.xlu0 %8110
        %8112 = vrot.lane.b32.xlu0 %v8059, 32
        %v8113 = vpop.permute.xlu0 %8112
        %8114 = vrot.lane.b32.xlu0 %v8063, 32
        %v8115 = vpop.permute.xlu0 %8114
        %8116 = vrot.lane.b32.xlu0 %v8067, 32
        %v8117 = vpop.permute.xlu0 %8116
        %8118 = vrot.lane.b32.xlu0 %v8071, 32
        %v8119 = vpop.permute.xlu0 %8118
        %8120 = vrot.lane.b32.xlu0 %v8075, 32
        %v8121 = vpop.permute.xlu0 %8120
        %8122 = vrot.lane.b32.xlu0 %v8079, 32
        %v8123 = vpop.permute.xlu0 %8122
        %8124 = vrot.lane.b32.xlu0 %v8083, 32
        %v8125 = vpop.permute.xlu0 %8124
        %8126 = vrot.lane.b32.xlu0 %v8087, 32
        %v8127 = vpop.permute.xlu0 %8126
        %8128 = vrot.lane.b32.xlu0 %v8091, 32
        %v8129 = vpop.permute.xlu0 %8128
        %8130 = vrot.lane.b32.xlu0 %v8095, 32
        %v8131 = vpop.permute.xlu0 %8130
        %vm8150 = vcmask 322816
        %8151 = vst.msk [vmem:[#allocation5] sm:$0xf] %vm8150, %v8097
        %8152 = vst.msk [vmem:[#allocation5 + $0x4] sm:$0xf] %vm8150, %v8099
        %8153 = vst.msk [vmem:[#allocation5 + $0x8] sm:$0xf] %vm8150, %v8101
        %8154 = vst.msk [vmem:[#allocation5 + $0xc] sm:$0xf] %vm8150, %v8103
        %8155 = vst.msk [vmem:[#allocation5 + $0x10] sm:$0xf] %vm8150, %v8105
        %8156 = vst.msk [vmem:[#allocation5 + $0x14] sm:$0xf] %vm8150, %v8107
        %8157 = vst.msk [vmem:[#allocation5 + $0x18] sm:$0xf] %vm8150, %v8109
        %8158 = vst.msk [vmem:[#allocation5 + $0x1c] sm:$0xf] %vm8150, %v8111
        %8159 = vst.msk [vmem:[#allocation5 + $0x20] sm:$0xf] %vm8150, %v8113
        %8160 = vst.msk [vmem:[#allocation5 + $0x24] sm:$0xf] %vm8150, %v8115
        %8161 = vst.msk [vmem:[#allocation5 + $0x28] sm:$0xf] %vm8150, %v8117
        %8162 = vst.msk [vmem:[#allocation5 + $0x2c] sm:$0xf] %vm8150, %v8119
        %8163 = vst.msk [vmem:[#allocation5 + $0x30] sm:$0xf] %vm8150, %v8121
        %8164 = vst.msk [vmem:[#allocation5 + $0x34] sm:$0xf] %vm8150, %v8123
        %8165 = vst.msk [vmem:[#allocation5 + $0x38] sm:$0xf] %vm8150, %v8125
        %8166 = vst.msk [vmem:[#allocation5 + $0x3c] sm:$0xf] %vm8150, %v8127
        %8167 = vst.msk [vmem:[#allocation5 + $0x40] sm:$0xf] %vm8150, %v8129
        %8168 = vst.msk [vmem:[#allocation5 + $0x44] sm:$0xf] %vm8150, %v8131
        %v8169 = vld [vmem:[#allocation3] sm:$0xc]
        %v8170 = vld [vmem:[#allocation3 + $0x4] sm:$0x7]
        %v8171 = vld [vmem:[#allocation3 + $0xc] sm:$0xc]
        %v8172 = vld [vmem:[#allocation3 + $0x10] sm:$0x7]
        %v8173 = vld [vmem:[#allocation3 + $0x18] sm:$0xc]
        %v8174 = vld [vmem:[#allocation3 + $0x1c] sm:$0x7]
        %v8175 = vld [vmem:[#allocation3 + $0x24] sm:$0xc]
        %v8176 = vld [vmem:[#allocation3 + $0x28] sm:$0x7]
        %v8177 = vld [vmem:[#allocation3 + $0x30] sm:$0xc]
        %v8178 = vld [vmem:[#allocation3 + $0x34] sm:$0x7]
        %v8179 = vld [vmem:[#allocation3 + $0x3c] sm:$0xc]
        %v8180 = vld [vmem:[#allocation3 + $0x40] sm:$0x7]
        %v8181 = vld [vmem:[#allocation3 + $0x48] sm:$0xc]
        %v8182 = vld [vmem:[#allocation3 + $0x4c] sm:$0x7]
        %v8183 = vld [vmem:[#allocation3 + $0x54] sm:$0xc]
        %v8184 = vld [vmem:[#allocation3 + $0x58] sm:$0x7]
        %v8185 = vld [vmem:[#allocation3 + $0x60] sm:$0xc]
        %v8186 = vld [vmem:[#allocation3 + $0x64] sm:$0x7]
        %v8187 = vld [vmem:[#allocation3 + $0x6c] sm:$0xc]
        %v8188 = vld [vmem:[#allocation3 + $0x70] sm:$0x7]
        %v8189 = vld [vmem:[#allocation3 + $0x78] sm:$0xc]
        %v8190 = vld [vmem:[#allocation3 + $0x7c] sm:$0x7]
        %v8191 = vld [vmem:[#allocation3 + $0x84] sm:$0xc]
        %v8192 = vld [vmem:[#allocation3 + $0x88] sm:$0x7]
        %v8193 = vld [vmem:[#allocation3 + $0x90] sm:$0xc]
        %v8194 = vld [vmem:[#allocation3 + $0x94] sm:$0x7]
        %v8195 = vld [vmem:[#allocation3 + $0x9c] sm:$0xc]
        %v8196 = vld [vmem:[#allocation3 + $0xa0] sm:$0x7]
        %v8197 = vld [vmem:[#allocation3 + $0xa8] sm:$0xc]
        %v8198 = vld [vmem:[#allocation3 + $0xac] sm:$0x7]
        %v8199 = vld [vmem:[#allocation3 + $0xb4] sm:$0xc]
        %v8200 = vld [vmem:[#allocation3 + $0xb8] sm:$0x7]
        %v8201 = vld [vmem:[#allocation3 + $0xc0] sm:$0xc]
        %v8202 = vld [vmem:[#allocation3 + $0xc4] sm:$0x7]
        %v8203 = vld [vmem:[#allocation3 + $0xcc] sm:$0xc]
        %v8204 = vld [vmem:[#allocation3 + $0xd0] sm:$0x7]
        %v8206 = vshrl.u32 %v8169, 16
        %v8208 = vrot.slane %v8206, 6
        %v8209 = vshll.u32 %v8169, 16
        %v8211 = vrot.slane %v8209, 7
        %v8212 = vor.u32 %v8208, %v8211
        %v8213 = vrot.slane %v8212, 4
        %v8215 = vshrl.u32 %v8170, 16
        %v8217 = vrot.slane %v8215, 6
        %v8218 = vshll.u32 %v8170, 16
        %v8220 = vrot.slane %v8218, 7
        %v8221 = vor.u32 %v8217, %v8220
        %v8222 = vsel %vm2723, %v8213, %v8221
        %v8224 = vshrl.u32 %v8171, 16
        %v8226 = vrot.slane %v8224, 6
        %v8227 = vshll.u32 %v8171, 16
        %v8229 = vrot.slane %v8227, 7
        %v8230 = vor.u32 %v8226, %v8229
        %v8231 = vrot.slane %v8230, 4
        %v8233 = vshrl.u32 %v8172, 16
        %v8235 = vrot.slane %v8233, 6
        %v8236 = vshll.u32 %v8172, 16
        %v8238 = vrot.slane %v8236, 7
        %v8239 = vor.u32 %v8235, %v8238
        %v8240 = vsel %vm2723, %v8231, %v8239
        %v8242 = vshrl.u32 %v8173, 16
        %v8244 = vrot.slane %v8242, 6
        %v8245 = vshll.u32 %v8173, 16
        %v8247 = vrot.slane %v8245, 7
        %v8248 = vor.u32 %v8244, %v8247
        %v8249 = vrot.slane %v8248, 4
        %v8251 = vshrl.u32 %v8174, 16
        %v8253 = vrot.slane %v8251, 6
        %v8254 = vshll.u32 %v8174, 16
        %v8256 = vrot.slane %v8254, 7
        %v8257 = vor.u32 %v8253, %v8256
        %v8258 = vsel %vm2723, %v8249, %v8257
        %v8260 = vshrl.u32 %v8175, 16
        %v8262 = vrot.slane %v8260, 6
        %v8263 = vshll.u32 %v8175, 16
        %v8265 = vrot.slane %v8263, 7
        %v8266 = vor.u32 %v8262, %v8265
        %v8267 = vrot.slane %v8266, 4
        %v8269 = vshrl.u32 %v8176, 16
        %v8271 = vrot.slane %v8269, 6
        %v8272 = vshll.u32 %v8176, 16
        %v8274 = vrot.slane %v8272, 7
        %v8275 = vor.u32 %v8271, %v8274
        %v8276 = vsel %vm2723, %v8267, %v8275
        %v8278 = vshrl.u32 %v8177, 16
        %v8280 = vrot.slane %v8278, 6
        %v8281 = vshll.u32 %v8177, 16
        %v8283 = vrot.slane %v8281, 7
        %v8284 = vor.u32 %v8280, %v8283
        %v8285 = vrot.slane %v8284, 4
        %v8287 = vshrl.u32 %v8178, 16
        %v8289 = vrot.slane %v8287, 6
        %v8290 = vshll.u32 %v8178, 16
        %v8292 = vrot.slane %v8290, 7
        %v8293 = vor.u32 %v8289, %v8292
        %v8294 = vsel %vm2723, %v8285, %v8293
        %v8296 = vshrl.u32 %v8179, 16
        %v8298 = vrot.slane %v8296, 6
        %v8299 = vshll.u32 %v8179, 16
        %v8301 = vrot.slane %v8299, 7
        %v8302 = vor.u32 %v8298, %v8301
        %v8303 = vrot.slane %v8302, 4
        %v8305 = vshrl.u32 %v8180, 16
        %v8307 = vrot.slane %v8305, 6
        %v8308 = vshll.u32 %v8180, 16
        %v8310 = vrot.slane %v8308, 7
        %v8311 = vor.u32 %v8307, %v8310
        %v8312 = vsel %vm2723, %v8303, %v8311
        %v8314 = vshrl.u32 %v8181, 16
        %v8316 = vrot.slane %v8314, 6
        %v8317 = vshll.u32 %v8181, 16
        %v8319 = vrot.slane %v8317, 7
        %v8320 = vor.u32 %v8316, %v8319
        %v8321 = vrot.slane %v8320, 4
        %v8323 = vshrl.u32 %v8182, 16
        %v8325 = vrot.slane %v8323, 6
        %v8326 = vshll.u32 %v8182, 16
        %v8328 = vrot.slane %v8326, 7
        %v8329 = vor.u32 %v8325, %v8328
        %v8330 = vsel %vm2723, %v8321, %v8329
        %v8332 = vshrl.u32 %v8183, 16
        %v8334 = vrot.slane %v8332, 6
        %v8335 = vshll.u32 %v8183, 16
        %v8337 = vrot.slane %v8335, 7
        %v8338 = vor.u32 %v8334, %v8337
        %v8339 = vrot.slane %v8338, 4
        %v8341 = vshrl.u32 %v8184, 16
        %v8343 = vrot.slane %v8341, 6
        %v8344 = vshll.u32 %v8184, 16
        %v8346 = vrot.slane %v8344, 7
        %v8347 = vor.u32 %v8343, %v8346
        %v8348 = vsel %vm2723, %v8339, %v8347
        %v8350 = vshrl.u32 %v8185, 16
        %v8352 = vrot.slane %v8350, 6
        %v8353 = vshll.u32 %v8185, 16
        %v8355 = vrot.slane %v8353, 7
        %v8356 = vor.u32 %v8352, %v8355
        %v8357 = vrot.slane %v8356, 4
        %v8359 = vshrl.u32 %v8186, 16
        %v8361 = vrot.slane %v8359, 6
        %v8362 = vshll.u32 %v8186, 16
        %v8364 = vrot.slane %v8362, 7
        %v8365 = vor.u32 %v8361, %v8364
        %v8366 = vsel %vm2723, %v8357, %v8365
        %v8368 = vshrl.u32 %v8187, 16
        %v8370 = vrot.slane %v8368, 6
        %v8371 = vshll.u32 %v8187, 16
        %v8373 = vrot.slane %v8371, 7
        %v8374 = vor.u32 %v8370, %v8373
        %v8375 = vrot.slane %v8374, 4
        %v8377 = vshrl.u32 %v8188, 16
        %v8379 = vrot.slane %v8377, 6
        %v8380 = vshll.u32 %v8188, 16
        %v8382 = vrot.slane %v8380, 7
        %v8383 = vor.u32 %v8379, %v8382
        %v8384 = vsel %vm2723, %v8375, %v8383
        %v8386 = vshrl.u32 %v8189, 16
        %v8388 = vrot.slane %v8386, 6
        %v8389 = vshll.u32 %v8189, 16
        %v8391 = vrot.slane %v8389, 7
        %v8392 = vor.u32 %v8388, %v8391
        %v8393 = vrot.slane %v8392, 4
        %v8395 = vshrl.u32 %v8190, 16
        %v8397 = vrot.slane %v8395, 6
        %v8398 = vshll.u32 %v8190, 16
        %v8400 = vrot.slane %v8398, 7
        %v8401 = vor.u32 %v8397, %v8400
        %v8402 = vsel %vm2723, %v8393, %v8401
        %v8404 = vshrl.u32 %v8191, 16
        %v8406 = vrot.slane %v8404, 6
        %v8407 = vshll.u32 %v8191, 16
        %v8409 = vrot.slane %v8407, 7
        %v8410 = vor.u32 %v8406, %v8409
        %v8411 = vrot.slane %v8410, 4
        %v8413 = vshrl.u32 %v8192, 16
        %v8415 = vrot.slane %v8413, 6
        %v8416 = vshll.u32 %v8192, 16
        %v8418 = vrot.slane %v8416, 7
        %v8419 = vor.u32 %v8415, %v8418
        %v8420 = vsel %vm2723, %v8411, %v8419
        %v8422 = vshrl.u32 %v8193, 16
        %v8424 = vrot.slane %v8422, 6
        %v8425 = vshll.u32 %v8193, 16
        %v8427 = vrot.slane %v8425, 7
        %v8428 = vor.u32 %v8424, %v8427
        %v8429 = vrot.slane %v8428, 4
        %v8431 = vshrl.u32 %v8194, 16
        %v8433 = vrot.slane %v8431, 6
        %v8434 = vshll.u32 %v8194, 16
        %v8436 = vrot.slane %v8434, 7
        %v8437 = vor.u32 %v8433, %v8436
        %v8438 = vsel %vm2723, %v8429, %v8437
        %v8440 = vshrl.u32 %v8195, 16
        %v8442 = vrot.slane %v8440, 6
        %v8443 = vshll.u32 %v8195, 16
        %v8445 = vrot.slane %v8443, 7
        %v8446 = vor.u32 %v8442, %v8445
        %v8447 = vrot.slane %v8446, 4
        %v8449 = vshrl.u32 %v8196, 16
        %v8451 = vrot.slane %v8449, 6
        %v8452 = vshll.u32 %v8196, 16
        %v8454 = vrot.slane %v8452, 7
        %v8455 = vor.u32 %v8451, %v8454
        %v8456 = vsel %vm2723, %v8447, %v8455
        %v8458 = vshrl.u32 %v8197, 16
        %v8460 = vrot.slane %v8458, 6
        %v8461 = vshll.u32 %v8197, 16
        %v8463 = vrot.slane %v8461, 7
        %v8464 = vor.u32 %v8460, %v8463
        %v8465 = vrot.slane %v8464, 4
        %v8467 = vshrl.u32 %v8198, 16
        %v8469 = vrot.slane %v8467, 6
        %v8470 = vshll.u32 %v8198, 16
        %v8472 = vrot.slane %v8470, 7
        %v8473 = vor.u32 %v8469, %v8472
        %v8474 = vsel %vm2723, %v8465, %v8473
        %v8476 = vshrl.u32 %v8199, 16
        %v8478 = vrot.slane %v8476, 6
        %v8479 = vshll.u32 %v8199, 16
        %v8481 = vrot.slane %v8479, 7
        %v8482 = vor.u32 %v8478, %v8481
        %v8483 = vrot.slane %v8482, 4
        %v8485 = vshrl.u32 %v8200, 16
        %v8487 = vrot.slane %v8485, 6
        %v8488 = vshll.u32 %v8200, 16
        %v8490 = vrot.slane %v8488, 7
        %v8491 = vor.u32 %v8487, %v8490
        %v8492 = vsel %vm2723, %v8483, %v8491
        %v8494 = vshrl.u32 %v8201, 16
        %v8496 = vrot.slane %v8494, 6
        %v8497 = vshll.u32 %v8201, 16
        %v8499 = vrot.slane %v8497, 7
        %v8500 = vor.u32 %v8496, %v8499
        %v8501 = vrot.slane %v8500, 4
        %v8503 = vshrl.u32 %v8202, 16
        %v8505 = vrot.slane %v8503, 6
        %v8506 = vshll.u32 %v8202, 16
        %v8508 = vrot.slane %v8506, 7
        %v8509 = vor.u32 %v8505, %v8508
        %v8510 = vsel %vm2723, %v8501, %v8509
        %v8512 = vshrl.u32 %v8203, 16
        %v8514 = vrot.slane %v8512, 6
        %v8515 = vshll.u32 %v8203, 16
        %v8517 = vrot.slane %v8515, 7
        %v8518 = vor.u32 %v8514, %v8517
        %v8519 = vrot.slane %v8518, 4
        %v8521 = vshrl.u32 %v8204, 16
        %v8523 = vrot.slane %v8521, 6
        %v8524 = vshll.u32 %v8204, 16
        %v8526 = vrot.slane %v8524, 7
        %v8527 = vor.u32 %v8523, %v8526
        %v8528 = vsel %vm2723, %v8519, %v8527
        %8529 = vrot.lane.b32.xlu0 %v8222, 40
        %v8530 = vpop.permute.xlu0 %8529
        %8531 = vrot.lane.b32.xlu0 %v8240, 40
        %v8532 = vpop.permute.xlu0 %8531
        %8533 = vrot.lane.b32.xlu0 %v8258, 40
        %v8534 = vpop.permute.xlu0 %8533
        %8535 = vrot.lane.b32.xlu0 %v8276, 40
        %v8536 = vpop.permute.xlu0 %8535
        %8537 = vrot.lane.b32.xlu0 %v8294, 40
        %v8538 = vpop.permute.xlu0 %8537
        %8539 = vrot.lane.b32.xlu0 %v8312, 40
        %v8540 = vpop.permute.xlu0 %8539
        %8541 = vrot.lane.b32.xlu0 %v8330, 40
        %v8542 = vpop.permute.xlu0 %8541
        %8543 = vrot.lane.b32.xlu0 %v8348, 40
        %v8544 = vpop.permute.xlu0 %8543
        %8545 = vrot.lane.b32.xlu0 %v8366, 40
        %v8546 = vpop.permute.xlu0 %8545
        %8547 = vrot.lane.b32.xlu0 %v8384, 40
        %v8548 = vpop.permute.xlu0 %8547
        %8549 = vrot.lane.b32.xlu0 %v8402, 40
        %v8550 = vpop.permute.xlu0 %8549
        %8551 = vrot.lane.b32.xlu0 %v8420, 40
        %v8552 = vpop.permute.xlu0 %8551
        %8553 = vrot.lane.b32.xlu0 %v8438, 40
        %v8554 = vpop.permute.xlu0 %8553
        %8555 = vrot.lane.b32.xlu0 %v8456, 40
        %v8556 = vpop.permute.xlu0 %8555
        %8557 = vrot.lane.b32.xlu0 %v8474, 40
        %v8558 = vpop.permute.xlu0 %8557
        %8559 = vrot.lane.b32.xlu0 %v8492, 40
        %v8560 = vpop.permute.xlu0 %8559
        %8561 = vrot.lane.b32.xlu0 %v8510, 40
        %v8562 = vpop.permute.xlu0 %8561
        %8563 = vrot.lane.b32.xlu0 %v8528, 40
        %v8564 = vpop.permute.xlu0 %8563
        %vm8583 = vcmask 388416
        %8584 = vst.msk [vmem:[#allocation5] sm:$0xf] %vm8583, %v8530
        %8585 = vst.msk [vmem:[#allocation5 + $0x4] sm:$0xf] %vm8583, %v8532
        %8586 = vst.msk [vmem:[#allocation5 + $0x8] sm:$0xf] %vm8583, %v8534
        %8587 = vst.msk [vmem:[#allocation5 + $0xc] sm:$0xf] %vm8583, %v8536
        %8588 = vst.msk [vmem:[#allocation5 + $0x10] sm:$0xf] %vm8583, %v8538
        %8589 = vst.msk [vmem:[#allocation5 + $0x14] sm:$0xf] %vm8583, %v8540
        %8590 = vst.msk [vmem:[#allocation5 + $0x18] sm:$0xf] %vm8583, %v8542
        %8591 = vst.msk [vmem:[#allocation5 + $0x1c] sm:$0xf] %vm8583, %v8544
        %8592 = vst.msk [vmem:[#allocation5 + $0x20] sm:$0xf] %vm8583, %v8546
        %8593 = vst.msk [vmem:[#allocation5 + $0x24] sm:$0xf] %vm8583, %v8548
        %8594 = vst.msk [vmem:[#allocation5 + $0x28] sm:$0xf] %vm8583, %v8550
        %8595 = vst.msk [vmem:[#allocation5 + $0x2c] sm:$0xf] %vm8583, %v8552
        %8596 = vst.msk [vmem:[#allocation5 + $0x30] sm:$0xf] %vm8583, %v8554
        %8597 = vst.msk [vmem:[#allocation5 + $0x34] sm:$0xf] %vm8583, %v8556
        %8598 = vst.msk [vmem:[#allocation5 + $0x38] sm:$0xf] %vm8583, %v8558
        %8599 = vst.msk [vmem:[#allocation5 + $0x3c] sm:$0xf] %vm8583, %v8560
        %8600 = vst.msk [vmem:[#allocation5 + $0x40] sm:$0xf] %vm8583, %v8562
        %8601 = vst.msk [vmem:[#allocation5 + $0x44] sm:$0xf] %vm8583, %v8564
        %v8602 = vld [vmem:[#allocation3] sm:$0x8]
        %v8603 = vld [vmem:[#allocation3 + $0x4] sm:$0x7]
        %v8604 = vld [vmem:[#allocation3 + $0xc] sm:$0x8]
        %v8605 = vld [vmem:[#allocation3 + $0x10] sm:$0x7]
        %v8606 = vld [vmem:[#allocation3 + $0x18] sm:$0x8]
        %v8607 = vld [vmem:[#allocation3 + $0x1c] sm:$0x7]
        %v8608 = vld [vmem:[#allocation3 + $0x24] sm:$0x8]
        %v8609 = vld [vmem:[#allocation3 + $0x28] sm:$0x7]
        %v8610 = vld [vmem:[#allocation3 + $0x30] sm:$0x8]
        %v8611 = vld [vmem:[#allocation3 + $0x34] sm:$0x7]
        %v8612 = vld [vmem:[#allocation3 + $0x3c] sm:$0x8]
        %v8613 = vld [vmem:[#allocation3 + $0x40] sm:$0x7]
        %v8614 = vld [vmem:[#allocation3 + $0x48] sm:$0x8]
        %v8615 = vld [vmem:[#allocation3 + $0x4c] sm:$0x7]
        %v8616 = vld [vmem:[#allocation3 + $0x54] sm:$0x8]
        %v8617 = vld [vmem:[#allocation3 + $0x58] sm:$0x7]
        %v8618 = vld [vmem:[#allocation3 + $0x60] sm:$0x8]
        %v8619 = vld [vmem:[#allocation3 + $0x64] sm:$0x7]
        %v8620 = vld [vmem:[#allocation3 + $0x6c] sm:$0x8]
        %v8621 = vld [vmem:[#allocation3 + $0x70] sm:$0x7]
        %v8622 = vld [vmem:[#allocation3 + $0x78] sm:$0x8]
        %v8623 = vld [vmem:[#allocation3 + $0x7c] sm:$0x7]
        %v8624 = vld [vmem:[#allocation3 + $0x84] sm:$0x8]
        %v8625 = vld [vmem:[#allocation3 + $0x88] sm:$0x7]
        %v8626 = vld [vmem:[#allocation3 + $0x90] sm:$0x8]
        %v8627 = vld [vmem:[#allocation3 + $0x94] sm:$0x7]
        %v8628 = vld [vmem:[#allocation3 + $0x9c] sm:$0x8]
        %v8629 = vld [vmem:[#allocation3 + $0xa0] sm:$0x7]
        %v8630 = vld [vmem:[#allocation3 + $0xa8] sm:$0x8]
        %v8631 = vld [vmem:[#allocation3 + $0xac] sm:$0x7]
        %v8632 = vld [vmem:[#allocation3 + $0xb4] sm:$0x8]
        %v8633 = vld [vmem:[#allocation3 + $0xb8] sm:$0x7]
        %v8634 = vld [vmem:[#allocation3 + $0xc0] sm:$0x8]
        %v8635 = vld [vmem:[#allocation3 + $0xc4] sm:$0x7]
        %v8636 = vld [vmem:[#allocation3 + $0xcc] sm:$0x8]
        %v8637 = vld [vmem:[#allocation3 + $0xd0] sm:$0x7]
        %v8674 = vrot.slane %v8602, 7
        %v8675 = vrot.slane %v8674, 4
        %v8676 = vrot.slane %v8603, 7
        %v8677 = vsel %vm3195, %v8675, %v8676
        %v8678 = vrot.slane %v8604, 7
        %v8679 = vrot.slane %v8678, 4
        %v8680 = vrot.slane %v8605, 7
        %v8681 = vsel %vm3195, %v8679, %v8680
        %v8682 = vrot.slane %v8606, 7
        %v8683 = vrot.slane %v8682, 4
        %v8684 = vrot.slane %v8607, 7
        %v8685 = vsel %vm3195, %v8683, %v8684
        %v8686 = vrot.slane %v8608, 7
        %v8687 = vrot.slane %v8686, 4
        %v8688 = vrot.slane %v8609, 7
        %v8689 = vsel %vm3195, %v8687, %v8688
        %v8690 = vrot.slane %v8610, 7
        %v8691 = vrot.slane %v8690, 4
        %v8692 = vrot.slane %v8611, 7
        %v8693 = vsel %vm3195, %v8691, %v8692
        %v8694 = vrot.slane %v8612, 7
        %v8695 = vrot.slane %v8694, 4
        %v8696 = vrot.slane %v8613, 7
        %v8697 = vsel %vm3195, %v8695, %v8696
        %v8698 = vrot.slane %v8614, 7
        %v8699 = vrot.slane %v8698, 4
        %v8700 = vrot.slane %v8615, 7
        %v8701 = vsel %vm3195, %v8699, %v8700
        %v8702 = vrot.slane %v8616, 7
        %v8703 = vrot.slane %v8702, 4
        %v8704 = vrot.slane %v8617, 7
        %v8705 = vsel %vm3195, %v8703, %v8704
        %v8706 = vrot.slane %v8618, 7
        %v8707 = vrot.slane %v8706, 4
        %v8708 = vrot.slane %v8619, 7
        %v8709 = vsel %vm3195, %v8707, %v8708
        %v8710 = vrot.slane %v8620, 7
        %v8711 = vrot.slane %v8710, 4
        %v8712 = vrot.slane %v8621, 7
        %v8713 = vsel %vm3195, %v8711, %v8712
        %v8714 = vrot.slane %v8622, 7
        %v8715 = vrot.slane %v8714, 4
        %v8716 = vrot.slane %v8623, 7
        %v8717 = vsel %vm3195, %v8715, %v8716
        %v8718 = vrot.slane %v8624, 7
        %v8719 = vrot.slane %v8718, 4
        %v8720 = vrot.slane %v8625, 7
        %v8721 = vsel %vm3195, %v8719, %v8720
        %v8722 = vrot.slane %v8626, 7
        %v8723 = vrot.slane %v8722, 4
        %v8724 = vrot.slane %v8627, 7
        %v8725 = vsel %vm3195, %v8723, %v8724
        %v8726 = vrot.slane %v8628, 7
        %v8727 = vrot.slane %v8726, 4
        %v8728 = vrot.slane %v8629, 7
        %v8729 = vsel %vm3195, %v8727, %v8728
        %v8730 = vrot.slane %v8630, 7
        %v8731 = vrot.slane %v8730, 4
        %v8732 = vrot.slane %v8631, 7
        %v8733 = vsel %vm3195, %v8731, %v8732
        %v8734 = vrot.slane %v8632, 7
        %v8735 = vrot.slane %v8734, 4
        %v8736 = vrot.slane %v8633, 7
        %v8737 = vsel %vm3195, %v8735, %v8736
        %v8738 = vrot.slane %v8634, 7
        %v8739 = vrot.slane %v8738, 4
        %v8740 = vrot.slane %v8635, 7
        %v8741 = vsel %vm3195, %v8739, %v8740
        %v8742 = vrot.slane %v8636, 7
        %v8743 = vrot.slane %v8742, 4
        %v8744 = vrot.slane %v8637, 7
        %v8745 = vsel %vm3195, %v8743, %v8744
        %8746 = vrot.lane.b32.xlu0 %v8677, 48
        %v8747 = vpop.permute.xlu0 %8746
        %8748 = vrot.lane.b32.xlu0 %v8681, 48
        %v8749 = vpop.permute.xlu0 %8748
        %8750 = vrot.lane.b32.xlu0 %v8685, 48
        %v8751 = vpop.permute.xlu0 %8750
        %8752 = vrot.lane.b32.xlu0 %v8689, 48
        %v8753 = vpop.permute.xlu0 %8752
        %8754 = vrot.lane.b32.xlu0 %v8693, 48
        %v8755 = vpop.permute.xlu0 %8754
        %8756 = vrot.lane.b32.xlu0 %v8697, 48
        %v8757 = vpop.permute.xlu0 %8756
        %8758 = vrot.lane.b32.xlu0 %v8701, 48
        %v8759 = vpop.permute.xlu0 %8758
        %8760 = vrot.lane.b32.xlu0 %v8705, 48
        %v8761 = vpop.permute.xlu0 %8760
        %8762 = vrot.lane.b32.xlu0 %v8709, 48
        %v8763 = vpop.permute.xlu0 %8762
        %8764 = vrot.lane.b32.xlu0 %v8713, 48
        %v8765 = vpop.permute.xlu0 %8764
        %8766 = vrot.lane.b32.xlu0 %v8717, 48
        %v8767 = vpop.permute.xlu0 %8766
        %8768 = vrot.lane.b32.xlu0 %v8721, 48
        %v8769 = vpop.permute.xlu0 %8768
        %8770 = vrot.lane.b32.xlu0 %v8725, 48
        %v8771 = vpop.permute.xlu0 %8770
        %8772 = vrot.lane.b32.xlu0 %v8729, 48
        %v8773 = vpop.permute.xlu0 %8772
        %8774 = vrot.lane.b32.xlu0 %v8733, 48
        %v8775 = vpop.permute.xlu0 %8774
        %8776 = vrot.lane.b32.xlu0 %v8737, 48
        %v8777 = vpop.permute.xlu0 %8776
        %8778 = vrot.lane.b32.xlu0 %v8741, 48
        %v8779 = vpop.permute.xlu0 %8778
        %8780 = vrot.lane.b32.xlu0 %v8745, 48
        %v8781 = vpop.permute.xlu0 %8780
        %vm8800 = vcmask 454016
        %8801 = vst.msk [vmem:[#allocation5] sm:$0xf] %vm8800, %v8747
        %8802 = vst.msk [vmem:[#allocation5 + $0x4] sm:$0xf] %vm8800, %v8749
        %8803 = vst.msk [vmem:[#allocation5 + $0x8] sm:$0xf] %vm8800, %v8751
        %8804 = vst.msk [vmem:[#allocation5 + $0xc] sm:$0xf] %vm8800, %v8753
        %8805 = vst.msk [vmem:[#allocation5 + $0x10] sm:$0xf] %vm8800, %v8755
        %8806 = vst.msk [vmem:[#allocation5 + $0x14] sm:$0xf] %vm8800, %v8757
        %8807 = vst.msk [vmem:[#allocation5 + $0x18] sm:$0xf] %vm8800, %v8759
        %8808 = vst.msk [vmem:[#allocation5 + $0x1c] sm:$0xf] %vm8800, %v8761
        %8809 = vst.msk [vmem:[#allocation5 + $0x20] sm:$0xf] %vm8800, %v8763
        %8810 = vst.msk [vmem:[#allocation5 + $0x24] sm:$0xf] %vm8800, %v8765
        %8811 = vst.msk [vmem:[#allocation5 + $0x28] sm:$0xf] %vm8800, %v8767
        %8812 = vst.msk [vmem:[#allocation5 + $0x2c] sm:$0xf] %vm8800, %v8769
        %8813 = vst.msk [vmem:[#allocation5 + $0x30] sm:$0xf] %vm8800, %v8771
        %8814 = vst.msk [vmem:[#allocation5 + $0x34] sm:$0xf] %vm8800, %v8773
        %8815 = vst.msk [vmem:[#allocation5 + $0x38] sm:$0xf] %vm8800, %v8775
        %8816 = vst.msk [vmem:[#allocation5 + $0x3c] sm:$0xf] %vm8800, %v8777
        %8817 = vst.msk [vmem:[#allocation5 + $0x40] sm:$0xf] %vm8800, %v8779
        %8818 = vst.msk [vmem:[#allocation5 + $0x44] sm:$0xf] %vm8800, %v8781
        %v8819 = vld [vmem:[#allocation3] sm:$0x8]
        %v8820 = vld [vmem:[#allocation3 + $0x4] sm:$0xf]
        %v8821 = vld [vmem:[#allocation3 + $0xc] sm:$0x8]
        %v8822 = vld [vmem:[#allocation3 + $0x10] sm:$0xf]
        %v8823 = vld [vmem:[#allocation3 + $0x18] sm:$0x8]
        %v8824 = vld [vmem:[#allocation3 + $0x1c] sm:$0xf]
        %v8825 = vld [vmem:[#allocation3 + $0x24] sm:$0x8]
        %v8826 = vld [vmem:[#allocation3 + $0x28] sm:$0xf]
        %v8827 = vld [vmem:[#allocation3 + $0x30] sm:$0x8]
        %v8828 = vld [vmem:[#allocation3 + $0x34] sm:$0xf]
        %v8829 = vld [vmem:[#allocation3 + $0x3c] sm:$0x8]
        %v8830 = vld [vmem:[#allocation3 + $0x40] sm:$0xf]
        %v8831 = vld [vmem:[#allocation3 + $0x48] sm:$0x8]
        %v8832 = vld [vmem:[#allocation3 + $0x4c] sm:$0xf]
        %v8833 = vld [vmem:[#allocation3 + $0x54] sm:$0x8]
        %v8834 = vld [vmem:[#allocation3 + $0x58] sm:$0xf]
        %v8835 = vld [vmem:[#allocation3 + $0x60] sm:$0x8]
        %v8836 = vld [vmem:[#allocation3 + $0x64] sm:$0xf]
        %v8837 = vld [vmem:[#allocation3 + $0x6c] sm:$0x8]
        %v8838 = vld [vmem:[#allocation3 + $0x70] sm:$0xf]
        %v8839 = vld [vmem:[#allocation3 + $0x78] sm:$0x8]
        %v8840 = vld [vmem:[#allocation3 + $0x7c] sm:$0xf]
        %v8841 = vld [vmem:[#allocation3 + $0x84] sm:$0x8]
        %v8842 = vld [vmem:[#allocation3 + $0x88] sm:$0xf]
        %v8843 = vld [vmem:[#allocation3 + $0x90] sm:$0x8]
        %v8844 = vld [vmem:[#allocation3 + $0x94] sm:$0xf]
        %v8845 = vld [vmem:[#allocation3 + $0x9c] sm:$0x8]
        %v8846 = vld [vmem:[#allocation3 + $0xa0] sm:$0xf]
        %v8847 = vld [vmem:[#allocation3 + $0xa8] sm:$0x8]
        %v8848 = vld [vmem:[#allocation3 + $0xac] sm:$0xf]
        %v8849 = vld [vmem:[#allocation3 + $0xb4] sm:$0x8]
        %v8850 = vld [vmem:[#allocation3 + $0xb8] sm:$0xf]
        %v8851 = vld [vmem:[#allocation3 + $0xc0] sm:$0x8]
        %v8852 = vld [vmem:[#allocation3 + $0xc4] sm:$0xf]
        %v8853 = vld [vmem:[#allocation3 + $0xcc] sm:$0x8]
        %v8854 = vld [vmem:[#allocation3 + $0xd0] sm:$0xf]
        %v8856 = vshrl.u32 %v8819, 16
        %v8858 = vrot.slane %v8856, 7
        %v8859 = vrot.slane %v8858, 4
        %v8861 = vshrl.u32 %v8820, 16
        %v8863 = vrot.slane %v8861, 7
        %v8864 = vshll.u32 %v8820, 16
        %v8866 = vor.u32 %v8863, %v8864
        %v8867 = vsel %vm3379, %v8859, %v8866
        %v8869 = vshrl.u32 %v8821, 16
        %v8871 = vrot.slane %v8869, 7
        %v8872 = vrot.slane %v8871, 4
        %v8874 = vshrl.u32 %v8822, 16
        %v8876 = vrot.slane %v8874, 7
        %v8877 = vshll.u32 %v8822, 16
        %v8879 = vor.u32 %v8876, %v8877
        %v8880 = vsel %vm3379, %v8872, %v8879
        %v8882 = vshrl.u32 %v8823, 16
        %v8884 = vrot.slane %v8882, 7
        %v8885 = vrot.slane %v8884, 4
        %v8887 = vshrl.u32 %v8824, 16
        %v8889 = vrot.slane %v8887, 7
        %v8890 = vshll.u32 %v8824, 16
        %v8892 = vor.u32 %v8889, %v8890
        %v8893 = vsel %vm3379, %v8885, %v8892
        %v8895 = vshrl.u32 %v8825, 16
        %v8897 = vrot.slane %v8895, 7
        %v8898 = vrot.slane %v8897, 4
        %v8900 = vshrl.u32 %v8826, 16
        %v8902 = vrot.slane %v8900, 7
        %v8903 = vshll.u32 %v8826, 16
        %v8905 = vor.u32 %v8902, %v8903
        %v8906 = vsel %vm3379, %v8898, %v8905
        %v8908 = vshrl.u32 %v8827, 16
        %v8910 = vrot.slane %v8908, 7
        %v8911 = vrot.slane %v8910, 4
        %v8913 = vshrl.u32 %v8828, 16
        %v8915 = vrot.slane %v8913, 7
        %v8916 = vshll.u32 %v8828, 16
        %v8918 = vor.u32 %v8915, %v8916
        %v8919 = vsel %vm3379, %v8911, %v8918
        %v8921 = vshrl.u32 %v8829, 16
        %v8923 = vrot.slane %v8921, 7
        %v8924 = vrot.slane %v8923, 4
        %v8926 = vshrl.u32 %v8830, 16
        %v8928 = vrot.slane %v8926, 7
        %v8929 = vshll.u32 %v8830, 16
        %v8931 = vor.u32 %v8928, %v8929
        %v8932 = vsel %vm3379, %v8924, %v8931
        %v8934 = vshrl.u32 %v8831, 16
        %v8936 = vrot.slane %v8934, 7
        %v8937 = vrot.slane %v8936, 4
        %v8939 = vshrl.u32 %v8832, 16
        %v8941 = vrot.slane %v8939, 7
        %v8942 = vshll.u32 %v8832, 16
        %v8944 = vor.u32 %v8941, %v8942
        %v8945 = vsel %vm3379, %v8937, %v8944
        %v8947 = vshrl.u32 %v8833, 16
        %v8949 = vrot.slane %v8947, 7
        %v8950 = vrot.slane %v8949, 4
        %v8952 = vshrl.u32 %v8834, 16
        %v8954 = vrot.slane %v8952, 7
        %v8955 = vshll.u32 %v8834, 16
        %v8957 = vor.u32 %v8954, %v8955
        %v8958 = vsel %vm3379, %v8950, %v8957
        %v8960 = vshrl.u32 %v8835, 16
        %v8962 = vrot.slane %v8960, 7
        %v8963 = vrot.slane %v8962, 4
        %v8965 = vshrl.u32 %v8836, 16
        %v8967 = vrot.slane %v8965, 7
        %v8968 = vshll.u32 %v8836, 16
        %v8970 = vor.u32 %v8967, %v8968
        %v8971 = vsel %vm3379, %v8963, %v8970
        %v8973 = vshrl.u32 %v8837, 16
        %v8975 = vrot.slane %v8973, 7
        %v8976 = vrot.slane %v8975, 4
        %v8978 = vshrl.u32 %v8838, 16
        %v8980 = vrot.slane %v8978, 7
        %v8981 = vshll.u32 %v8838, 16
        %v8983 = vor.u32 %v8980, %v8981
        %v8984 = vsel %vm3379, %v8976, %v8983
        %v8986 = vshrl.u32 %v8839, 16
        %v8988 = vrot.slane %v8986, 7
        %v8989 = vrot.slane %v8988, 4
        %v8991 = vshrl.u32 %v8840, 16
        %v8993 = vrot.slane %v8991, 7
        %v8994 = vshll.u32 %v8840, 16
        %v8996 = vor.u32 %v8993, %v8994
        %v8997 = vsel %vm3379, %v8989, %v8996
        %v8999 = vshrl.u32 %v8841, 16
        %v9001 = vrot.slane %v8999, 7
        %v9002 = vrot.slane %v9001, 4
        %v9004 = vshrl.u32 %v8842, 16
        %v9006 = vrot.slane %v9004, 7
        %v9007 = vshll.u32 %v8842, 16
        %v9009 = vor.u32 %v9006, %v9007
        %v9010 = vsel %vm3379, %v9002, %v9009
        %v9012 = vshrl.u32 %v8843, 16
        %v9014 = vrot.slane %v9012, 7
        %v9015 = vrot.slane %v9014, 4
        %v9017 = vshrl.u32 %v8844, 16
        %v9019 = vrot.slane %v9017, 7
        %v9020 = vshll.u32 %v8844, 16
        %v9022 = vor.u32 %v9019, %v9020
        %v9023 = vsel %vm3379, %v9015, %v9022
        %v9025 = vshrl.u32 %v8845, 16
        %v9027 = vrot.slane %v9025, 7
        %v9028 = vrot.slane %v9027, 4
        %v9030 = vshrl.u32 %v8846, 16
        %v9032 = vrot.slane %v9030, 7
        %v9033 = vshll.u32 %v8846, 16
        %v9035 = vor.u32 %v9032, %v9033
        %v9036 = vsel %vm3379, %v9028, %v9035
        %v9038 = vshrl.u32 %v8847, 16
        %v9040 = vrot.slane %v9038, 7
        %v9041 = vrot.slane %v9040, 4
        %v9043 = vshrl.u32 %v8848, 16
        %v9045 = vrot.slane %v9043, 7
        %v9046 = vshll.u32 %v8848, 16
        %v9048 = vor.u32 %v9045, %v9046
        %v9049 = vsel %vm3379, %v9041, %v9048
        %v9051 = vshrl.u32 %v8849, 16
        %v9053 = vrot.slane %v9051, 7
        %v9054 = vrot.slane %v9053, 4
        %v9056 = vshrl.u32 %v8850, 16
        %v9058 = vrot.slane %v9056, 7
        %v9059 = vshll.u32 %v8850, 16
        %v9061 = vor.u32 %v9058, %v9059
        %v9062 = vsel %vm3379, %v9054, %v9061
        %v9064 = vshrl.u32 %v8851, 16
        %v9066 = vrot.slane %v9064, 7
        %v9067 = vrot.slane %v9066, 4
        %v9069 = vshrl.u32 %v8852, 16
        %v9071 = vrot.slane %v9069, 7
        %v9072 = vshll.u32 %v8852, 16
        %v9074 = vor.u32 %v9071, %v9072
        %v9075 = vsel %vm3379, %v9067, %v9074
        %v9077 = vshrl.u32 %v8853, 16
        %v9079 = vrot.slane %v9077, 7
        %v9080 = vrot.slane %v9079, 4
        %v9082 = vshrl.u32 %v8854, 16
        %v9084 = vrot.slane %v9082, 7
        %v9085 = vshll.u32 %v8854, 16
        %v9087 = vor.u32 %v9084, %v9085
        %v9088 = vsel %vm3379, %v9080, %v9087
        %9089 = vrot.lane.b32.xlu0 %v8867, 56
        %v9090 = vpop.permute.xlu0 %9089
        %9091 = vrot.lane.b32.xlu0 %v8880, 56
        %v9092 = vpop.permute.xlu0 %9091
        %9093 = vrot.lane.b32.xlu0 %v8893, 56
        %v9094 = vpop.permute.xlu0 %9093
        %9095 = vrot.lane.b32.xlu0 %v8906, 56
        %v9096 = vpop.permute.xlu0 %9095
        %9097 = vrot.lane.b32.xlu0 %v8919, 56
        %v9098 = vpop.permute.xlu0 %9097
        %9099 = vrot.lane.b32.xlu0 %v8932, 56
        %v9100 = vpop.permute.xlu0 %9099
        %9101 = vrot.lane.b32.xlu0 %v8945, 56
        %v9102 = vpop.permute.xlu0 %9101
        %9103 = vrot.lane.b32.xlu0 %v8958, 56
        %v9104 = vpop.permute.xlu0 %9103
        %9105 = vrot.lane.b32.xlu0 %v8971, 56
        %v9106 = vpop.permute.xlu0 %9105
        %9107 = vrot.lane.b32.xlu0 %v8984, 56
        %v9108 = vpop.permute.xlu0 %9107
        %9109 = vrot.lane.b32.xlu0 %v8997, 56
        %v9110 = vpop.permute.xlu0 %9109
        %9111 = vrot.lane.b32.xlu0 %v9010, 56
        %v9112 = vpop.permute.xlu0 %9111
        %9113 = vrot.lane.b32.xlu0 %v9023, 56
        %v9114 = vpop.permute.xlu0 %9113
        %9115 = vrot.lane.b32.xlu0 %v9036, 56
        %v9116 = vpop.permute.xlu0 %9115
        %9117 = vrot.lane.b32.xlu0 %v9049, 56
        %v9118 = vpop.permute.xlu0 %9117
        %9119 = vrot.lane.b32.xlu0 %v9062, 56
        %v9120 = vpop.permute.xlu0 %9119
        %9121 = vrot.lane.b32.xlu0 %v9075, 56
        %v9122 = vpop.permute.xlu0 %9121
        %9123 = vrot.lane.b32.xlu0 %v9088, 56
        %v9124 = vpop.permute.xlu0 %9123
        %vm9143 = vcmask 519616
        %9144 = vst.msk [vmem:[#allocation5] sm:$0xf] %vm9143, %v9090
        %9145 = vst.msk [vmem:[#allocation5 + $0x4] sm:$0xf] %vm9143, %v9092
        %9146 = vst.msk [vmem:[#allocation5 + $0x8] sm:$0xf] %vm9143, %v9094
        %9147 = vst.msk [vmem:[#allocation5 + $0xc] sm:$0xf] %vm9143, %v9096
        %9148 = vst.msk [vmem:[#allocation5 + $0x10] sm:$0xf] %vm9143, %v9098
        %9149 = vst.msk [vmem:[#allocation5 + $0x14] sm:$0xf] %vm9143, %v9100
        %9150 = vst.msk [vmem:[#allocation5 + $0x18] sm:$0xf] %vm9143, %v9102
        %9151 = vst.msk [vmem:[#allocation5 + $0x1c] sm:$0xf] %vm9143, %v9104
        %9152 = vst.msk [vmem:[#allocation5 + $0x20] sm:$0xf] %vm9143, %v9106
        %9153 = vst.msk [vmem:[#allocation5 + $0x24] sm:$0xf] %vm9143, %v9108
        %9154 = vst.msk [vmem:[#allocation5 + $0x28] sm:$0xf] %vm9143, %v9110
        %9155 = vst.msk [vmem:[#allocation5 + $0x2c] sm:$0xf] %vm9143, %v9112
        %9156 = vst.msk [vmem:[#allocation5 + $0x30] sm:$0xf] %vm9143, %v9114
        %9157 = vst.msk [vmem:[#allocation5 + $0x34] sm:$0xf] %vm9143, %v9116
        %9158 = vst.msk [vmem:[#allocation5 + $0x38] sm:$0xf] %vm9143, %v9118
        %9159 = vst.msk [vmem:[#allocation5 + $0x3c] sm:$0xf] %vm9143, %v9120
        %9160 = vst.msk [vmem:[#allocation5 + $0x40] sm:$0xf] %vm9143, %v9122
        %9161 = vst.msk [vmem:[#allocation5 + $0x44] sm:$0xf] %vm9143, %v9124
        %v9162 = vld [vmem:[#allocation3 + $0x4] sm:$0xf]
        %v9163 = vld [vmem:[#allocation3 + $0x10] sm:$0xf]
        %v9164 = vld [vmem:[#allocation3 + $0x1c] sm:$0xf]
        %v9165 = vld [vmem:[#allocation3 + $0x28] sm:$0xf]
        %v9166 = vld [vmem:[#allocation3 + $0x34] sm:$0xf]
        %v9167 = vld [vmem:[#allocation3 + $0x40] sm:$0xf]
        %v9168 = vld [vmem:[#allocation3 + $0x4c] sm:$0xf]
        %v9169 = vld [vmem:[#allocation3 + $0x58] sm:$0xf]
        %v9170 = vld [vmem:[#allocation3 + $0x64] sm:$0xf]
        %v9171 = vld [vmem:[#allocation3 + $0x70] sm:$0xf]
        %v9172 = vld [vmem:[#allocation3 + $0x7c] sm:$0xf]
        %v9173 = vld [vmem:[#allocation3 + $0x88] sm:$0xf]
        %v9174 = vld [vmem:[#allocation3 + $0x94] sm:$0xf]
        %v9175 = vld [vmem:[#allocation3 + $0xa0] sm:$0xf]
        %v9176 = vld [vmem:[#allocation3 + $0xac] sm:$0xf]
        %v9177 = vld [vmem:[#allocation3 + $0xb8] sm:$0xf]
        %v9178 = vld [vmem:[#allocation3 + $0xc4] sm:$0xf]
        %v9179 = vld [vmem:[#allocation3 + $0xd0] sm:$0xf]
        %9198 = vrot.lane.b32.xlu0 %v9162, 64
        %v9199 = vpop.permute.xlu0 %9198
        %9200 = vrot.lane.b32.xlu0 %v9163, 64
        %v9201 = vpop.permute.xlu0 %9200
        %9202 = vrot.lane.b32.xlu0 %v9164, 64
        %v9203 = vpop.permute.xlu0 %9202
        %9204 = vrot.lane.b32.xlu0 %v9165, 64
        %v9205 = vpop.permute.xlu0 %9204
        %9206 = vrot.lane.b32.xlu0 %v9166, 64
        %v9207 = vpop.permute.xlu0 %9206
        %9208 = vrot.lane.b32.xlu0 %v9167, 64
        %v9209 = vpop.permute.xlu0 %9208
        %9210 = vrot.lane.b32.xlu0 %v9168, 64
        %v9211 = vpop.permute.xlu0 %9210
        %9212 = vrot.lane.b32.xlu0 %v9169, 64
        %v9213 = vpop.permute.xlu0 %9212
        %9214 = vrot.lane.b32.xlu0 %v9170, 64
        %v9215 = vpop.permute.xlu0 %9214
        %9216 = vrot.lane.b32.xlu0 %v9171, 64
        %v9217 = vpop.permute.xlu0 %9216
        %9218 = vrot.lane.b32.xlu0 %v9172, 64
        %v9219 = vpop.permute.xlu0 %9218
        %9220 = vrot.lane.b32.xlu0 %v9173, 64
        %v9221 = vpop.permute.xlu0 %9220
        %9222 = vrot.lane.b32.xlu0 %v9174, 64
        %v9223 = vpop.permute.xlu0 %9222
        %9224 = vrot.lane.b32.xlu0 %v9175, 64
        %v9225 = vpop.permute.xlu0 %9224
        %9226 = vrot.lane.b32.xlu0 %v9176, 64
        %v9227 = vpop.permute.xlu0 %9226
        %9228 = vrot.lane.b32.xlu0 %v9177, 64
        %v9229 = vpop.permute.xlu0 %9228
        %9230 = vrot.lane.b32.xlu0 %v9178, 64
        %v9231 = vpop.permute.xlu0 %9230
        %9232 = vrot.lane.b32.xlu0 %v9179, 64
        %v9233 = vpop.permute.xlu0 %9232
        %vm9252 = vcmask 585216
        %9253 = vst.msk [vmem:[#allocation5] sm:$0xf] %vm9252, %v9199
        %9254 = vst.msk [vmem:[#allocation5 + $0x4] sm:$0xf] %vm9252, %v9201
        %9255 = vst.msk [vmem:[#allocation5 + $0x8] sm:$0xf] %vm9252, %v9203
        %9256 = vst.msk [vmem:[#allocation5 + $0xc] sm:$0xf] %vm9252, %v9205
        %9257 = vst.msk [vmem:[#allocation5 + $0x10] sm:$0xf] %vm9252, %v9207
        %9258 = vst.msk [vmem:[#allocation5 + $0x14] sm:$0xf] %vm9252, %v9209
        %9259 = vst.msk [vmem:[#allocation5 + $0x18] sm:$0xf] %vm9252, %v9211
        %9260 = vst.msk [vmem:[#allocation5 + $0x1c] sm:$0xf] %vm9252, %v9213
        %9261 = vst.msk [vmem:[#allocation5 + $0x20] sm:$0xf] %vm9252, %v9215
        %9262 = vst.msk [vmem:[#allocation5 + $0x24] sm:$0xf] %vm9252, %v9217
        %9263 = vst.msk [vmem:[#allocation5 + $0x28] sm:$0xf] %vm9252, %v9219
        %9264 = vst.msk [vmem:[#allocation5 + $0x2c] sm:$0xf] %vm9252, %v9221
        %9265 = vst.msk [vmem:[#allocation5 + $0x30] sm:$0xf] %vm9252, %v9223
        %9266 = vst.msk [vmem:[#allocation5 + $0x34] sm:$0xf] %vm9252, %v9225
        %9267 = vst.msk [vmem:[#allocation5 + $0x38] sm:$0xf] %vm9252, %v9227
        %9268 = vst.msk [vmem:[#allocation5 + $0x3c] sm:$0xf] %vm9252, %v9229
        %9269 = vst.msk [vmem:[#allocation5 + $0x40] sm:$0xf] %vm9252, %v9231
        %9270 = vst.msk [vmem:[#allocation5 + $0x44] sm:$0xf] %vm9252, %v9233
        %v9271 = vld [vmem:[#allocation3 + $0x4] sm:$0xf]
        %v9272 = vld [vmem:[#allocation3 + $0x8] sm:$0x1]
        %v9273 = vld [vmem:[#allocation3 + $0x10] sm:$0xf]
        %v9274 = vld [vmem:[#allocation3 + $0x14] sm:$0x1]
        %v9275 = vld [vmem:[#allocation3 + $0x1c] sm:$0xf]
        %v9276 = vld [vmem:[#allocation3 + $0x20] sm:$0x1]
        %v9277 = vld [vmem:[#allocation3 + $0x28] sm:$0xf]
        %v9278 = vld [vmem:[#allocation3 + $0x2c] sm:$0x1]
        %v9279 = vld [vmem:[#allocation3 + $0x34] sm:$0xf]
        %v9280 = vld [vmem:[#allocation3 + $0x38] sm:$0x1]
        %v9281 = vld [vmem:[#allocation3 + $0x40] sm:$0xf]
        %v9282 = vld [vmem:[#allocation3 + $0x44] sm:$0x1]
        %v9283 = vld [vmem:[#allocation3 + $0x4c] sm:$0xf]
        %v9284 = vld [vmem:[#allocation3 + $0x50] sm:$0x1]
        %v9285 = vld [vmem:[#allocation3 + $0x58] sm:$0xf]
        %v9286 = vld [vmem:[#allocation3 + $0x5c] sm:$0x1]
        %v9287 = vld [vmem:[#allocation3 + $0x64] sm:$0xf]
        %v9288 = vld [vmem:[#allocation3 + $0x68] sm:$0x1]
        %v9289 = vld [vmem:[#allocation3 + $0x70] sm:$0xf]
        %v9290 = vld [vmem:[#allocation3 + $0x74] sm:$0x1]
        %v9291 = vld [vmem:[#allocation3 + $0x7c] sm:$0xf]
        %v9292 = vld [vmem:[#allocation3 + $0x80] sm:$0x1]
        %v9293 = vld [vmem:[#allocation3 + $0x88] sm:$0xf]
        %v9294 = vld [vmem:[#allocation3 + $0x8c] sm:$0x1]
        %v9295 = vld [vmem:[#allocation3 + $0x94] sm:$0xf]
        %v9296 = vld [vmem:[#allocation3 + $0x98] sm:$0x1]
        %v9297 = vld [vmem:[#allocation3 + $0xa0] sm:$0xf]
        %v9298 = vld [vmem:[#allocation3 + $0xa4] sm:$0x1]
        %v9299 = vld [vmem:[#allocation3 + $0xac] sm:$0xf]
        %v9300 = vld [vmem:[#allocation3 + $0xb0] sm:$0x1]
        %v9301 = vld [vmem:[#allocation3 + $0xb8] sm:$0xf]
        %v9302 = vld [vmem:[#allocation3 + $0xbc] sm:$0x1]
        %v9303 = vld [vmem:[#allocation3 + $0xc4] sm:$0xf]
        %v9304 = vld [vmem:[#allocation3 + $0xc8] sm:$0x1]
        %v9305 = vld [vmem:[#allocation3 + $0xd0] sm:$0xf]
        %v9306 = vld [vmem:[#allocation3 + $0xd4] sm:$0x1]
        %v9308 = vshrl.u32 %v9271, 16
        %v9310 = vrot.slane %v9308, 4
        %v9311 = vshll.u32 %v9271, 16
        %v9313 = vrot.slane %v9311, 5
        %v9314 = vor.u32 %v9310, %v9313
        %v9315 = vrot.slane %v9314, 4
        %v9317 = vshll.u32 %v9272, 16
        %v9319 = vrot.slane %v9317, 5
        %v9320 = vsel %vm1484, %v9315, %v9319
        %v9322 = vshrl.u32 %v9273, 16
        %v9324 = vrot.slane %v9322, 4
        %v9325 = vshll.u32 %v9273, 16
        %v9327 = vrot.slane %v9325, 5
        %v9328 = vor.u32 %v9324, %v9327
        %v9329 = vrot.slane %v9328, 4
        %v9331 = vshll.u32 %v9274, 16
        %v9333 = vrot.slane %v9331, 5
        %v9334 = vsel %vm1484, %v9329, %v9333
        %v9336 = vshrl.u32 %v9275, 16
        %v9338 = vrot.slane %v9336, 4
        %v9339 = vshll.u32 %v9275, 16
        %v9341 = vrot.slane %v9339, 5
        %v9342 = vor.u32 %v9338, %v9341
        %v9343 = vrot.slane %v9342, 4
        %v9345 = vshll.u32 %v9276, 16
        %v9347 = vrot.slane %v9345, 5
        %v9348 = vsel %vm1484, %v9343, %v9347
        %v9350 = vshrl.u32 %v9277, 16
        %v9352 = vrot.slane %v9350, 4
        %v9353 = vshll.u32 %v9277, 16
        %v9355 = vrot.slane %v9353, 5
        %v9356 = vor.u32 %v9352, %v9355
        %v9357 = vrot.slane %v9356, 4
        %v9359 = vshll.u32 %v9278, 16
        %v9361 = vrot.slane %v9359, 5
        %v9362 = vsel %vm1484, %v9357, %v9361
        %v9364 = vshrl.u32 %v9279, 16
        %v9366 = vrot.slane %v9364, 4
        %v9367 = vshll.u32 %v9279, 16
        %v9369 = vrot.slane %v9367, 5
        %v9370 = vor.u32 %v9366, %v9369
        %v9371 = vrot.slane %v9370, 4
        %v9373 = vshll.u32 %v9280, 16
        %v9375 = vrot.slane %v9373, 5
        %v9376 = vsel %vm1484, %v9371, %v9375
        %v9378 = vshrl.u32 %v9281, 16
        %v9380 = vrot.slane %v9378, 4
        %v9381 = vshll.u32 %v9281, 16
        %v9383 = vrot.slane %v9381, 5
        %v9384 = vor.u32 %v9380, %v9383
        %v9385 = vrot.slane %v9384, 4
        %v9387 = vshll.u32 %v9282, 16
        %v9389 = vrot.slane %v9387, 5
        %v9390 = vsel %vm1484, %v9385, %v9389
        %v9392 = vshrl.u32 %v9283, 16
        %v9394 = vrot.slane %v9392, 4
        %v9395 = vshll.u32 %v9283, 16
        %v9397 = vrot.slane %v9395, 5
        %v9398 = vor.u32 %v9394, %v9397
        %v9399 = vrot.slane %v9398, 4
        %v9401 = vshll.u32 %v9284, 16
        %v9403 = vrot.slane %v9401, 5
        %v9404 = vsel %vm1484, %v9399, %v9403
        %v9406 = vshrl.u32 %v9285, 16
        %v9408 = vrot.slane %v9406, 4
        %v9409 = vshll.u32 %v9285, 16
        %v9411 = vrot.slane %v9409, 5
        %v9412 = vor.u32 %v9408, %v9411
        %v9413 = vrot.slane %v9412, 4
        %v9415 = vshll.u32 %v9286, 16
        %v9417 = vrot.slane %v9415, 5
        %v9418 = vsel %vm1484, %v9413, %v9417
        %v9420 = vshrl.u32 %v9287, 16
        %v9422 = vrot.slane %v9420, 4
        %v9423 = vshll.u32 %v9287, 16
        %v9425 = vrot.slane %v9423, 5
        %v9426 = vor.u32 %v9422, %v9425
        %v9427 = vrot.slane %v9426, 4
        %v9429 = vshll.u32 %v9288, 16
        %v9431 = vrot.slane %v9429, 5
        %v9432 = vsel %vm1484, %v9427, %v9431
        %v9434 = vshrl.u32 %v9289, 16
        %v9436 = vrot.slane %v9434, 4
        %v9437 = vshll.u32 %v9289, 16
        %v9439 = vrot.slane %v9437, 5
        %v9440 = vor.u32 %v9436, %v9439
        %v9441 = vrot.slane %v9440, 4
        %v9443 = vshll.u32 %v9290, 16
        %v9445 = vrot.slane %v9443, 5
        %v9446 = vsel %vm1484, %v9441, %v9445
        %v9448 = vshrl.u32 %v9291, 16
        %v9450 = vrot.slane %v9448, 4
        %v9451 = vshll.u32 %v9291, 16
        %v9453 = vrot.slane %v9451, 5
        %v9454 = vor.u32 %v9450, %v9453
        %v9455 = vrot.slane %v9454, 4
        %v9457 = vshll.u32 %v9292, 16
        %v9459 = vrot.slane %v9457, 5
        %v9460 = vsel %vm1484, %v9455, %v9459
        %v9462 = vshrl.u32 %v9293, 16
        %v9464 = vrot.slane %v9462, 4
        %v9465 = vshll.u32 %v9293, 16
        %v9467 = vrot.slane %v9465, 5
        %v9468 = vor.u32 %v9464, %v9467
        %v9469 = vrot.slane %v9468, 4
        %v9471 = vshll.u32 %v9294, 16
        %v9473 = vrot.slane %v9471, 5
        %v9474 = vsel %vm1484, %v9469, %v9473
        %v9476 = vshrl.u32 %v9295, 16
        %v9478 = vrot.slane %v9476, 4
        %v9479 = vshll.u32 %v9295, 16
        %v9481 = vrot.slane %v9479, 5
        %v9482 = vor.u32 %v9478, %v9481
        %v9483 = vrot.slane %v9482, 4
        %v9485 = vshll.u32 %v9296, 16
        %v9487 = vrot.slane %v9485, 5
        %v9488 = vsel %vm1484, %v9483, %v9487
        %v9490 = vshrl.u32 %v9297, 16
        %v9492 = vrot.slane %v9490, 4
        %v9493 = vshll.u32 %v9297, 16
        %v9495 = vrot.slane %v9493, 5
        %v9496 = vor.u32 %v9492, %v9495
        %v9497 = vrot.slane %v9496, 4
        %v9499 = vshll.u32 %v9298, 16
        %v9501 = vrot.slane %v9499, 5
        %v9502 = vsel %vm1484, %v9497, %v9501
        %v9504 = vshrl.u32 %v9299, 16
        %v9506 = vrot.slane %v9504, 4
        %v9507 = vshll.u32 %v9299, 16
        %v9509 = vrot.slane %v9507, 5
        %v9510 = vor.u32 %v9506, %v9509
        %v9511 = vrot.slane %v9510, 4
        %v9513 = vshll.u32 %v9300, 16
        %v9515 = vrot.slane %v9513, 5
        %v9516 = vsel %vm1484, %v9511, %v9515
        %v9518 = vshrl.u32 %v9301, 16
        %v9520 = vrot.slane %v9518, 4
        %v9521 = vshll.u32 %v9301, 16
        %v9523 = vrot.slane %v9521, 5
        %v9524 = vor.u32 %v9520, %v9523
        %v9525 = vrot.slane %v9524, 4
        %v9527 = vshll.u32 %v9302, 16
        %v9529 = vrot.slane %v9527, 5
        %v9530 = vsel %vm1484, %v9525, %v9529
        %v9532 = vshrl.u32 %v9303, 16
        %v9534 = vrot.slane %v9532, 4
        %v9535 = vshll.u32 %v9303, 16
        %v9537 = vrot.slane %v9535, 5
        %v9538 = vor.u32 %v9534, %v9537
        %v9539 = vrot.slane %v9538, 4
        %v9541 = vshll.u32 %v9304, 16
        %v9543 = vrot.slane %v9541, 5
        %v9544 = vsel %vm1484, %v9539, %v9543
        %v9546 = vshrl.u32 %v9305, 16
        %v9548 = vrot.slane %v9546, 4
        %v9549 = vshll.u32 %v9305, 16
        %v9551 = vrot.slane %v9549, 5
        %v9552 = vor.u32 %v9548, %v9551
        %v9553 = vrot.slane %v9552, 4
        %v9555 = vshll.u32 %v9306, 16
        %v9557 = vrot.slane %v9555, 5
        %v9558 = vsel %vm1484, %v9553, %v9557
        %9559 = vrot.lane.b32.xlu0 %v9320, 72
        %v9560 = vpop.permute.xlu0 %9559
        %9561 = vrot.lane.b32.xlu0 %v9334, 72
        %v9562 = vpop.permute.xlu0 %9561
        %9563 = vrot.lane.b32.xlu0 %v9348, 72
        %v9564 = vpop.permute.xlu0 %9563
        %9565 = vrot.lane.b32.xlu0 %v9362, 72
        %v9566 = vpop.permute.xlu0 %9565
        %9567 = vrot.lane.b32.xlu0 %v9376, 72
        %v9568 = vpop.permute.xlu0 %9567
        %9569 = vrot.lane.b32.xlu0 %v9390, 72
        %v9570 = vpop.permute.xlu0 %9569
        %9571 = vrot.lane.b32.xlu0 %v9404, 72
        %v9572 = vpop.permute.xlu0 %9571
        %9573 = vrot.lane.b32.xlu0 %v9418, 72
        %v9574 = vpop.permute.xlu0 %9573
        %9575 = vrot.lane.b32.xlu0 %v9432, 72
        %v9576 = vpop.permute.xlu0 %9575
        %9577 = vrot.lane.b32.xlu0 %v9446, 72
        %v9578 = vpop.permute.xlu0 %9577
        %9579 = vrot.lane.b32.xlu0 %v9460, 72
        %v9580 = vpop.permute.xlu0 %9579
        %9581 = vrot.lane.b32.xlu0 %v9474, 72
        %v9582 = vpop.permute.xlu0 %9581
        %9583 = vrot.lane.b32.xlu0 %v9488, 72
        %v9584 = vpop.permute.xlu0 %9583
        %9585 = vrot.lane.b32.xlu0 %v9502, 72
        %v9586 = vpop.permute.xlu0 %9585
        %9587 = vrot.lane.b32.xlu0 %v9516, 72
        %v9588 = vpop.permute.xlu0 %9587
        %9589 = vrot.lane.b32.xlu0 %v9530, 72
        %v9590 = vpop.permute.xlu0 %9589
        %9591 = vrot.lane.b32.xlu0 %v9544, 72
        %v9592 = vpop.permute.xlu0 %9591
        %9593 = vrot.lane.b32.xlu0 %v9558, 72
        %v9594 = vpop.permute.xlu0 %9593
        %vm9613 = vcmask 650816
        %9614 = vst.msk [vmem:[#allocation5] sm:$0xf] %vm9613, %v9560
        %9615 = vst.msk [vmem:[#allocation5 + $0x4] sm:$0xf] %vm9613, %v9562
        %9616 = vst.msk [vmem:[#allocation5 + $0x8] sm:$0xf] %vm9613, %v9564
        %9617 = vst.msk [vmem:[#allocation5 + $0xc] sm:$0xf] %vm9613, %v9566
        %9618 = vst.msk [vmem:[#allocation5 + $0x10] sm:$0xf] %vm9613, %v9568
        %9619 = vst.msk [vmem:[#allocation5 + $0x14] sm:$0xf] %vm9613, %v9570
        %9620 = vst.msk [vmem:[#allocation5 + $0x18] sm:$0xf] %vm9613, %v9572
        %9621 = vst.msk [vmem:[#allocation5 + $0x1c] sm:$0xf] %vm9613, %v9574
        %9622 = vst.msk [vmem:[#allocation5 + $0x20] sm:$0xf] %vm9613, %v9576
        %9623 = vst.msk [vmem:[#allocation5 + $0x24] sm:$0xf] %vm9613, %v9578
        %9624 = vst.msk [vmem:[#allocation5 + $0x28] sm:$0xf] %vm9613, %v9580
        %9625 = vst.msk [vmem:[#allocation5 + $0x2c] sm:$0xf] %vm9613, %v9582
        %9626 = vst.msk [vmem:[#allocation5 + $0x30] sm:$0xf] %vm9613, %v9584
        %9627 = vst.msk [vmem:[#allocation5 + $0x34] sm:$0xf] %vm9613, %v9586
        %9628 = vst.msk [vmem:[#allocation5 + $0x38] sm:$0xf] %vm9613, %v9588
        %9629 = vst.msk [vmem:[#allocation5 + $0x3c] sm:$0xf] %vm9613, %v9590
        %9630 = vst.msk [vmem:[#allocation5 + $0x40] sm:$0xf] %vm9613, %v9592
        %9631 = vst.msk [vmem:[#allocation5 + $0x44] sm:$0xf] %vm9613, %v9594
        %v9632 = vld [vmem:[#allocation3 + $0x4] sm:$0xe]
        %v9633 = vld [vmem:[#allocation3 + $0x8] sm:$0x1]
        %v9634 = vld [vmem:[#allocation3 + $0x10] sm:$0xe]
        %v9635 = vld [vmem:[#allocation3 + $0x14] sm:$0x1]
        %v9636 = vld [vmem:[#allocation3 + $0x1c] sm:$0xe]
        %v9637 = vld [vmem:[#allocation3 + $0x20] sm:$0x1]
        %v9638 = vld [vmem:[#allocation3 + $0x28] sm:$0xe]
        %v9639 = vld [vmem:[#allocation3 + $0x2c] sm:$0x1]
        %v9640 = vld [vmem:[#allocation3 + $0x34] sm:$0xe]
        %v9641 = vld [vmem:[#allocation3 + $0x38] sm:$0x1]
        %v9642 = vld [vmem:[#allocation3 + $0x40] sm:$0xe]
        %v9643 = vld [vmem:[#allocation3 + $0x44] sm:$0x1]
        %v9644 = vld [vmem:[#allocation3 + $0x4c] sm:$0xe]
        %v9645 = vld [vmem:[#allocation3 + $0x50] sm:$0x1]
        %v9646 = vld [vmem:[#allocation3 + $0x58] sm:$0xe]
        %v9647 = vld [vmem:[#allocation3 + $0x5c] sm:$0x1]
        %v9648 = vld [vmem:[#allocation3 + $0x64] sm:$0xe]
        %v9649 = vld [vmem:[#allocation3 + $0x68] sm:$0x1]
        %v9650 = vld [vmem:[#allocation3 + $0x70] sm:$0xe]
        %v9651 = vld [vmem:[#allocation3 + $0x74] sm:$0x1]
        %v9652 = vld [vmem:[#allocation3 + $0x7c] sm:$0xe]
        %v9653 = vld [vmem:[#allocation3 + $0x80] sm:$0x1]
        %v9654 = vld [vmem:[#allocation3 + $0x88] sm:$0xe]
        %v9655 = vld [vmem:[#allocation3 + $0x8c] sm:$0x1]
        %v9656 = vld [vmem:[#allocation3 + $0x94] sm:$0xe]
        %v9657 = vld [vmem:[#allocation3 + $0x98] sm:$0x1]
        %v9658 = vld [vmem:[#allocation3 + $0xa0] sm:$0xe]
        %v9659 = vld [vmem:[#allocation3 + $0xa4] sm:$0x1]
        %v9660 = vld [vmem:[#allocation3 + $0xac] sm:$0xe]
        %v9661 = vld [vmem:[#allocation3 + $0xb0] sm:$0x1]
        %v9662 = vld [vmem:[#allocation3 + $0xb8] sm:$0xe]
        %v9663 = vld [vmem:[#allocation3 + $0xbc] sm:$0x1]
        %v9664 = vld [vmem:[#allocation3 + $0xc4] sm:$0xe]
        %v9665 = vld [vmem:[#allocation3 + $0xc8] sm:$0x1]
        %v9666 = vld [vmem:[#allocation3 + $0xd0] sm:$0xe]
        %v9667 = vld [vmem:[#allocation3 + $0xd4] sm:$0x1]
        %v9704 = vrot.slane %v9632, 5
        %v9705 = vrot.slane %v9704, 4
        %v9706 = vrot.slane %v9633, 5
        %v9707 = vsel %vm1884, %v9705, %v9706
        %v9708 = vrot.slane %v9634, 5
        %v9709 = vrot.slane %v9708, 4
        %v9710 = vrot.slane %v9635, 5
        %v9711 = vsel %vm1884, %v9709, %v9710
        %v9712 = vrot.slane %v9636, 5
        %v9713 = vrot.slane %v9712, 4
        %v9714 = vrot.slane %v9637, 5
        %v9715 = vsel %vm1884, %v9713, %v9714
        %v9716 = vrot.slane %v9638, 5
        %v9717 = vrot.slane %v9716, 4
        %v9718 = vrot.slane %v9639, 5
        %v9719 = vsel %vm1884, %v9717, %v9718
        %v9720 = vrot.slane %v9640, 5
        %v9721 = vrot.slane %v9720, 4
        %v9722 = vrot.slane %v9641, 5
        %v9723 = vsel %vm1884, %v9721, %v9722
        %v9724 = vrot.slane %v9642, 5
        %v9725 = vrot.slane %v9724, 4
        %v9726 = vrot.slane %v9643, 5
        %v9727 = vsel %vm1884, %v9725, %v9726
        %v9728 = vrot.slane %v9644, 5
        %v9729 = vrot.slane %v9728, 4
        %v9730 = vrot.slane %v9645, 5
        %v9731 = vsel %vm1884, %v9729, %v9730
        %v9732 = vrot.slane %v9646, 5
        %v9733 = vrot.slane %v9732, 4
        %v9734 = vrot.slane %v9647, 5
        %v9735 = vsel %vm1884, %v9733, %v9734
        %v9736 = vrot.slane %v9648, 5
        %v9737 = vrot.slane %v9736, 4
        %v9738 = vrot.slane %v9649, 5
        %v9739 = vsel %vm1884, %v9737, %v9738
        %v9740 = vrot.slane %v9650, 5
        %v9741 = vrot.slane %v9740, 4
        %v9742 = vrot.slane %v9651, 5
        %v9743 = vsel %vm1884, %v9741, %v9742
        %v9744 = vrot.slane %v9652, 5
        %v9745 = vrot.slane %v9744, 4
        %v9746 = vrot.slane %v9653, 5
        %v9747 = vsel %vm1884, %v9745, %v9746
        %v9748 = vrot.slane %v9654, 5
        %v9749 = vrot.slane %v9748, 4
        %v9750 = vrot.slane %v9655, 5
        %v9751 = vsel %vm1884, %v9749, %v9750
        %v9752 = vrot.slane %v9656, 5
        %v9753 = vrot.slane %v9752, 4
        %v9754 = vrot.slane %v9657, 5
        %v9755 = vsel %vm1884, %v9753, %v9754
        %v9756 = vrot.slane %v9658, 5
        %v9757 = vrot.slane %v9756, 4
        %v9758 = vrot.slane %v9659, 5
        %v9759 = vsel %vm1884, %v9757, %v9758
        %v9760 = vrot.slane %v9660, 5
        %v9761 = vrot.slane %v9760, 4
        %v9762 = vrot.slane %v9661, 5
        %v9763 = vsel %vm1884, %v9761, %v9762
        %v9764 = vrot.slane %v9662, 5
        %v9765 = vrot.slane %v9764, 4
        %v9766 = vrot.slane %v9663, 5
        %v9767 = vsel %vm1884, %v9765, %v9766
        %v9768 = vrot.slane %v9664, 5
        %v9769 = vrot.slane %v9768, 4
        %v9770 = vrot.slane %v9665, 5
        %v9771 = vsel %vm1884, %v9769, %v9770
        %v9772 = vrot.slane %v9666, 5
        %v9773 = vrot.slane %v9772, 4
        %v9774 = vrot.slane %v9667, 5
        %v9775 = vsel %vm1884, %v9773, %v9774
        %9776 = vrot.lane.b32.xlu0 %v9707, 80
        %v9777 = vpop.permute.xlu0 %9776
        %9778 = vrot.lane.b32.xlu0 %v9711, 80
        %v9779 = vpop.permute.xlu0 %9778
        %9780 = vrot.lane.b32.xlu0 %v9715, 80
        %v9781 = vpop.permute.xlu0 %9780
        %9782 = vrot.lane.b32.xlu0 %v9719, 80
        %v9783 = vpop.permute.xlu0 %9782
        %9784 = vrot.lane.b32.xlu0 %v9723, 80
        %v9785 = vpop.permute.xlu0 %9784
        %9786 = vrot.lane.b32.xlu0 %v9727, 80
        %v9787 = vpop.permute.xlu0 %9786
        %9788 = vrot.lane.b32.xlu0 %v9731, 80
        %v9789 = vpop.permute.xlu0 %9788
        %9790 = vrot.lane.b32.xlu0 %v9735, 80
        %v9791 = vpop.permute.xlu0 %9790
        %9792 = vrot.lane.b32.xlu0 %v9739, 80
        %v9793 = vpop.permute.xlu0 %9792
        %9794 = vrot.lane.b32.xlu0 %v9743, 80
        %v9795 = vpop.permute.xlu0 %9794
        %9796 = vrot.lane.b32.xlu0 %v9747, 80
        %v9797 = vpop.permute.xlu0 %9796
        %9798 = vrot.lane.b32.xlu0 %v9751, 80
        %v9799 = vpop.permute.xlu0 %9798
        %9800 = vrot.lane.b32.xlu0 %v9755, 80
        %v9801 = vpop.permute.xlu0 %9800
        %9802 = vrot.lane.b32.xlu0 %v9759, 80
        %v9803 = vpop.permute.xlu0 %9802
        %9804 = vrot.lane.b32.xlu0 %v9763, 80
        %v9805 = vpop.permute.xlu0 %9804
        %9806 = vrot.lane.b32.xlu0 %v9767, 80
        %v9807 = vpop.permute.xlu0 %9806
        %9808 = vrot.lane.b32.xlu0 %v9771, 80
        %v9809 = vpop.permute.xlu0 %9808
        %9810 = vrot.lane.b32.xlu0 %v9775, 80
        %v9811 = vpop.permute.xlu0 %9810
        %vm9830 = vcmask 716416
        %9831 = vst.msk [vmem:[#allocation5] sm:$0xf] %vm9830, %v9777
        %9832 = vst.msk [vmem:[#allocation5 + $0x4] sm:$0xf] %vm9830, %v9779
        %9833 = vst.msk [vmem:[#allocation5 + $0x8] sm:$0xf] %vm9830, %v9781
        %9834 = vst.msk [vmem:[#allocation5 + $0xc] sm:$0xf] %vm9830, %v9783
        %9835 = vst.msk [vmem:[#allocation5 + $0x10] sm:$0xf] %vm9830, %v9785
        %9836 = vst.msk [vmem:[#allocation5 + $0x14] sm:$0xf] %vm9830, %v9787
        %9837 = vst.msk [vmem:[#allocation5 + $0x18] sm:$0xf] %vm9830, %v9789
        %9838 = vst.msk [vmem:[#allocation5 + $0x1c] sm:$0xf] %vm9830, %v9791
        %9839 = vst.msk [vmem:[#allocation5 + $0x20] sm:$0xf] %vm9830, %v9793
        %9840 = vst.msk [vmem:[#allocation5 + $0x24] sm:$0xf] %vm9830, %v9795
        %9841 = vst.msk [vmem:[#allocation5 + $0x28] sm:$0xf] %vm9830, %v9797
        %9842 = vst.msk [vmem:[#allocation5 + $0x2c] sm:$0xf] %vm9830, %v9799
        %9843 = vst.msk [vmem:[#allocation5 + $0x30] sm:$0xf] %vm9830, %v9801
        %9844 = vst.msk [vmem:[#allocation5 + $0x34] sm:$0xf] %vm9830, %v9803
        %9845 = vst.msk [vmem:[#allocation5 + $0x38] sm:$0xf] %vm9830, %v9805
        %9846 = vst.msk [vmem:[#allocation5 + $0x3c] sm:$0xf] %vm9830, %v9807
        %9847 = vst.msk [vmem:[#allocation5 + $0x40] sm:$0xf] %vm9830, %v9809
        %9848 = vst.msk [vmem:[#allocation5 + $0x44] sm:$0xf] %vm9830, %v9811
        %v9849 = vld [vmem:[#allocation5] sm:$0xf]
        %v9850 = vld [vmem:[#allocation5 + $0x4] sm:$0xf]
        %v9851 = vld [vmem:[#allocation5 + $0x8] sm:$0xf]
        %v9852 = vld [vmem:[#allocation5 + $0xc] sm:$0xf]
        %v9853 = vld [vmem:[#allocation5 + $0x10] sm:$0xf]
        %v9854 = vld [vmem:[#allocation5 + $0x14] sm:$0xf]
        %v9855 = vld [vmem:[#allocation5 + $0x18] sm:$0xf]
        %v9856 = vld [vmem:[#allocation5 + $0x1c] sm:$0xf]
        %v9857 = vld [vmem:[%s3] sm:$0xf]
        %v9858 = vld [vmem:[%s3 + $0x4] sm:$0xf]
        %v9859 = vld [vmem:[%s3 + $0x8] sm:$0xf]
        %v9860 = vld [vmem:[%s3 + $0xc] sm:$0xf]
        %v9861 = vld [vmem:[%s3 + $0x10] sm:$0xf]
        %v9862 = vld [vmem:[%s3 + $0x14] sm:$0xf]
        %v9863 = vld [vmem:[%s3 + $0x18] sm:$0xf]
        %v9864 = vld [vmem:[%s3 + $0x1c] sm:$0xf]
        %v9865 = vld [vmem:[%s3 + $0x20] sm:$0xf]
        %v9866 = vld [vmem:[%s3 + $0x24] sm:$0xf]
        %v9867 = vld [vmem:[%s3 + $0x28] sm:$0xf]
        %s9868 = scalar_lea.vmem [#allocation5], 4
        %v9869 = vld [vmem:[%s9868] sm:$0xf]
        %v9870 = vld [vmem:[%s9868 + $0x4] sm:$0xf]
        %v9871 = vld [vmem:[%s9868 + $0x8] sm:$0xf]
        %v9872 = vld [vmem:[%s9868 + $0xc] sm:$0xf]
        %v9873 = vld [vmem:[%s9868 + $0x10] sm:$0xf]
        %v9874 = vld [vmem:[%s9868 + $0x14] sm:$0xf]
        %v9875 = vld [vmem:[%s9868 + $0x18] sm:$0xf]
        %v9876 = vld [vmem:[%s9868 + $0x1c] sm:$0xf]
        %s9877 = scalar_lea.vmem %s3, 44
        %v9878 = vld [vmem:[%s9877] sm:$0xf]
        %v9879 = vld [vmem:[%s9877 + $0x4] sm:$0xf]
        %v9880 = vld [vmem:[%s9877 + $0x8] sm:$0xf]
        %v9881 = vld [vmem:[%s9877 + $0xc] sm:$0xf]
        %v9882 = vld [vmem:[%s9877 + $0x10] sm:$0xf]
        %v9883 = vld [vmem:[%s9877 + $0x14] sm:$0xf]
        %v9884 = vld [vmem:[%s9877 + $0x18] sm:$0xf]
        %v9885 = vld [vmem:[%s9877 + $0x1c] sm:$0xf]
        %v9886 = vld [vmem:[%s9877 + $0x20] sm:$0xf]
        %v9887 = vld [vmem:[%s9877 + $0x24] sm:$0xf]
        %v9888 = vld [vmem:[%s9877 + $0x28] sm:$0xf]
        %v9897 = vunpack.c.l.b16 %v9869
        %v9898 = vunpack.c.l.b16 %v9870
        %v9899 = vunpack.c.l.b16 %v9871
        %v9900 = vunpack.c.l.b16 %v9872
        %v9901 = vunpack.c.l.b16 %v9873
        %v9902 = vunpack.c.l.b16 %v9874
        %v9903 = vunpack.c.l.b16 %v9875
        %v9904 = vunpack.c.l.b16 %v9876
        %v9905 = vpack.c.b16 %v9898, %v9897
        %v9906 = vpack.c.b16 %v9900, %v9899
        %v9907 = vpack.c.b16 %v9902, %v9901
        %v9908 = vpack.c.b16 %v9904, %v9903
        %v9920 = vunpack.c.l.b16 %v9878
        %v9921 = vunpack.c.l.b16 %v9879
        %v9922 = vunpack.c.l.b16 %v9880
        %v9923 = vunpack.c.l.b16 %v9881
        %v9924 = vunpack.c.l.b16 %v9882
        %v9925 = vunpack.c.l.b16 %v9883
        %v9926 = vunpack.c.l.b16 %v9884
        %v9927 = vunpack.c.l.b16 %v9885
        %v9928 = vunpack.c.l.b16 %v9886
        %v9929 = vunpack.c.l.b16 %v9887
        %v9930 = vunpack.c.l.b16 %v9888
        %v9931 = vpack.c.b16 %v9921, %v9920
        %v9932 = vpack.c.b16 %v9923, %v9922
        %v9933 = vpack.c.b16 %v9925, %v9924
        %v9934 = vpack.c.b16 %v9927, %v9926
        %v9935 = vpack.c.b16 %v9929, %v9928
        %v9936 = vpack.c.b16 %v9930, %v9930
        %vm9942 = vcmask 719872
        %v9944 = vsel %vm9942, %v9905, 0
        %v9947 = vsel %vm9942, %v9906, 0
        %v9950 = vsel %vm9942, %v9907, 0
        %v9953 = vsel %vm9942, %v9908, 0
        %vm9955 = vcmask 1043456
        %v9957 = vsel %vm9955, %v9936, 0
        %9959 = vmatprep.subr.bf16.mxu0 0
        %9960 = vmatpush1.bf16.msra.mxu0 %v9931
        %9961 = vmatprep.subr.bf16.mxu0 0
        %9962 = vmatpush1.bf16.msra.mxu0 %v9932
        %9963 = vmatprep.subr.bf16.mxu0 0
        %9964 = vmatpush1.bf16.msra.mxu0 %v9933
        %9965 = vmatprep.subr.bf16.mxu0 0
        %9966 = vmatpush1.bf16.msra.mxu0 %v9934
        %9967 = vmatprep.subr.bf16.mxu0 0
        %9968 = vmatpush1.bf16.msra.mxu0 %v9935
        %9969 = vmatprep.subr.bf16.mxu0 0
        %9970 = vmatpush1.bf16.msra.mxu0 %v9957
        %9971 = vmatprep.subr.bf16.mxu0 0
        %9972 = vmatpush1.bf16.msra.mxu0 0
        %9973 = vmatprep.subr.bf16.mxu0 0
        %9974 = vmatpush1.bf16.msra.mxu0 0
        %9975 = vmatprep.subr.bf16.mxu0 0
        %9976 = vmatpush1.bf16.msra.mxu0 0
        %9977 = vmatprep.subr.bf16.mxu0 0
        %9978 = vmatpush1.bf16.msra.mxu0 0
        %9979 = vmatprep.subr.bf16.mxu0 0
        %9980 = vmatpush1.bf16.msra.mxu0 0
        %9981 = vmatprep.subr.bf16.mxu0 0
        %9982 = vmatpush1.bf16.msra.mxu0 0
        %9983 = vmatprep.subr.bf16.mxu0 0
        %9984 = vmatpush1.bf16.msra.mxu0 0
        %9985 = vmatprep.subr.bf16.mxu0 0
        %9986 = vmatpush1.bf16.msra.mxu0 0
        %9987 = vmatprep.subr.bf16.mxu0 0
        %9988 = vmatpush1.bf16.msra.mxu0 0
        %9989 = vmatprep.subr.bf16.mxu0 0
        %9990 = vmatpush1.bf16.msra.mxu0 0
        %9991 = vmatprep.mubr.bf16.mxu0 0
        %9992 = vmatmul.mubr.bf16.gmra.mrb[0].mxu0 %v9944
        %v9993 = vpop.f32.mrb[0].mxu0
        %v9994 = vadd.f32 0.0, %v9993
        %v9995 = vpop.f32.mrb[0].mxu0
        %v9996 = vpop.f32.mrb[0].mxu0
        %v9997 = vadd.f32 0.0, %v9996
        %v9998 = vpop.f32.mrb[0].mxu0
        %9999 = vmatprep.mubr.bf16.mxu0 0
        %10000 = vmatmul.mubr.bf16.gmra.mrb[0].mxu0 %v9947
        %v10001 = vpop.f32.mrb[0].mxu0
        %v10002 = vadd.f32 0.0, %v10001
        %v10003 = vpop.f32.mrb[0].mxu0
        %v10004 = vpop.f32.mrb[0].mxu0
        %v10005 = vadd.f32 0.0, %v10004
        %v10006 = vpop.f32.mrb[0].mxu0
        %10007 = vmatprep.mubr.bf16.mxu0 0
        %10008 = vmatmul.mubr.bf16.gmra.mrb[0].mxu0 %v9950
        %v10009 = vpop.f32.mrb[0].mxu0
        %v10010 = vadd.f32 0.0, %v10009
        %v10011 = vpop.f32.mrb[0].mxu0
        %v10012 = vpop.f32.mrb[0].mxu0
        %v10013 = vadd.f32 0.0, %v10012
        %v10014 = vpop.f32.mrb[0].mxu0
        %10015 = vmatprep.mubr.bf16.mxu0 0
        %10016 = vmatmul.mubr.bf16.gmra.mrb[0].mxu0 %v9953
        %v10017 = vpop.f32.mrb[0].mxu0
        %v10018 = vadd.f32 0.0, %v10017
        %v10019 = vpop.f32.mrb[0].mxu0
        %v10020 = vpop.f32.mrb[0].mxu0
        %v10021 = vadd.f32 0.0, %v10020
        %v10022 = vpop.f32.mrb[0].mxu0
        %10023 = vdwg.mxu0
        %v10032 = vunpack.c.l.b16 %v9849
        %v10033 = vunpack.c.l.b16 %v9850
        %v10034 = vunpack.c.l.b16 %v9851
        %v10035 = vunpack.c.l.b16 %v9852
        %v10036 = vunpack.c.l.b16 %v9853
        %v10037 = vunpack.c.l.b16 %v9854
        %v10038 = vunpack.c.l.b16 %v9855
        %v10039 = vunpack.c.l.b16 %v9856
        %v10040 = vpack.c.b16 %v10033, %v10032
        %v10041 = vpack.c.b16 %v10035, %v10034
        %v10042 = vpack.c.b16 %v10037, %v10036
        %v10043 = vpack.c.b16 %v10039, %v10038
        %v10055 = vunpack.c.l.b16 %v9857
        %v10056 = vunpack.c.l.b16 %v9858
        %v10057 = vunpack.c.l.b16 %v9859
        %v10058 = vunpack.c.l.b16 %v9860
        %v10059 = vunpack.c.l.b16 %v9861
        %v10060 = vunpack.c.l.b16 %v9862
        %v10061 = vunpack.c.l.b16 %v9863
        %v10062 = vunpack.c.l.b16 %v9864
        %v10063 = vunpack.c.l.b16 %v9865
        %v10064 = vunpack.c.l.b16 %v9866
        %v10065 = vunpack.c.l.b16 %v9867
        %v10066 = vpack.c.b16 %v10056, %v10055
        %v10067 = vpack.c.b16 %v10058, %v10057
        %v10068 = vpack.c.b16 %v10060, %v10059
        %v10069 = vpack.c.b16 %v10062, %v10061
        %v10070 = vpack.c.b16 %v10064, %v10063
        %v10071 = vpack.c.b16 %v10065, %v10065
        %v10078 = vsel %vm9942, %v10040, 0
        %v10081 = vsel %vm9942, %v10041, 0
        %v10084 = vsel %vm9942, %v10042, 0
        %v10087 = vsel %vm9942, %v10043, 0
        %v10090 = vsel %vm9955, %v10071, 0
        %10092 = vmatprep.subr.bf16.mxu0 0
        %10093 = vmatpush1.bf16.msra.mxu0 %v10066
        %10094 = vmatprep.subr.bf16.mxu0 0
        %10095 = vmatpush1.bf16.msra.mxu0 %v10067
        %10096 = vmatprep.subr.bf16.mxu0 0
        %10097 = vmatpush1.bf16.msra.mxu0 %v10068
        %10098 = vmatprep.subr.bf16.mxu0 0
        %10099 = vmatpush1.bf16.msra.mxu0 %v10069
        %10100 = vmatprep.subr.bf16.mxu0 0
        %10101 = vmatpush1.bf16.msra.mxu0 %v10070
        %10102 = vmatprep.subr.bf16.mxu0 0
        %10103 = vmatpush1.bf16.msra.mxu0 %v10090
        %10104 = vmatprep.subr.bf16.mxu0 0
        %10105 = vmatpush1.bf16.msra.mxu0 0
        %10106 = vmatprep.subr.bf16.mxu0 0
        %10107 = vmatpush1.bf16.msra.mxu0 0
        %10108 = vmatprep.subr.bf16.mxu0 0
        %10109 = vmatpush1.bf16.msra.mxu0 0
        %10110 = vmatprep.subr.bf16.mxu0 0
        %10111 = vmatpush1.bf16.msra.mxu0 0
        %10112 = vmatprep.subr.bf16.mxu0 0
        %10113 = vmatpush1.bf16.msra.mxu0 0
        %10114 = vmatprep.subr.bf16.mxu0 0
        %10115 = vmatpush1.bf16.msra.mxu0 0
        %10116 = vmatprep.subr.bf16.mxu0 0
        %10117 = vmatpush1.bf16.msra.mxu0 0
        %10118 = vmatprep.subr.bf16.mxu0 0
        %10119 = vmatpush1.bf16.msra.mxu0 0
        %10120 = vmatprep.subr.bf16.mxu0 0
        %10121 = vmatpush1.bf16.msra.mxu0 0
        %10122 = vmatprep.subr.bf16.mxu0 0
        %10123 = vmatpush1.bf16.msra.mxu0 0
        %10124 = vmatprep.mubr.bf16.mxu0 0
        %10125 = vmatmul.mubr.bf16.gmra.mrb[0].mxu0 %v10078
        %v10126 = vpop.f32.mrb[0].mxu0
        %v10127 = vadd.f32 %v9994, %v10126
        %v10128 = vpop.f32.mrb[0].mxu0
        %v10129 = vpop.f32.mrb[0].mxu0
        %v10130 = vadd.f32 %v9997, %v10129
        %v10131 = vpop.f32.mrb[0].mxu0
        %10132 = vmatprep.mubr.bf16.mxu0 0
        %10133 = vmatmul.mubr.bf16.gmra.mrb[0].mxu0 %v10081
        %v10134 = vpop.f32.mrb[0].mxu0
        %v10135 = vadd.f32 %v10002, %v10134
        %v10136 = vpop.f32.mrb[0].mxu0
        %v10137 = vpop.f32.mrb[0].mxu0
        %v10138 = vadd.f32 %v10005, %v10137
        %v10139 = vpop.f32.mrb[0].mxu0
        %10140 = vmatprep.mubr.bf16.mxu0 0
        %10141 = vmatmul.mubr.bf16.gmra.mrb[0].mxu0 %v10084
        %v10142 = vpop.f32.mrb[0].mxu0
        %v10143 = vadd.f32 %v10010, %v10142
        %v10144 = vpop.f32.mrb[0].mxu0
        %v10145 = vpop.f32.mrb[0].mxu0
        %v10146 = vadd.f32 %v10013, %v10145
        %v10147 = vpop.f32.mrb[0].mxu0
        %10148 = vmatprep.mubr.bf16.mxu0 0
        %10149 = vmatmul.mubr.bf16.gmra.mrb[0].mxu0 %v10087
        %v10150 = vpop.f32.mrb[0].mxu0
        %v10151 = vadd.f32 %v10018, %v10150
        %v10152 = vpop.f32.mrb[0].mxu0
        %v10153 = vpop.f32.mrb[0].mxu0
        %v10154 = vadd.f32 %v10021, %v10153
        %v10155 = vpop.f32.mrb[0].mxu0
        %10156 = vdwg.mxu0
        %s10157 = scalar_lea.vmem [#allocation5], 8
        %v10158 = vld [vmem:[%s10157] sm:$0xf]
        %v10159 = vld [vmem:[%s10157 + $0x4] sm:$0xf]
        %v10160 = vld [vmem:[%s10157 + $0x8] sm:$0xf]
        %v10161 = vld [vmem:[%s10157 + $0xc] sm:$0xf]
        %v10162 = vld [vmem:[%s10157 + $0x10] sm:$0xf]
        %v10163 = vld [vmem:[%s10157 + $0x14] sm:$0xf]
        %v10164 = vld [vmem:[%s10157 + $0x18] sm:$0xf]
        %v10165 = vld [vmem:[%s10157 + $0x1c] sm:$0xf]
        %s10166 = scalar_lea.vmem %s3, 88
        %v10167 = vld [vmem:[%s10166] sm:$0xf]
        %v10168 = vld [vmem:[%s10166 + $0x4] sm:$0xf]
        %v10169 = vld [vmem:[%s10166 + $0x8] sm:$0xf]
        %v10170 = vld [vmem:[%s10166 + $0xc] sm:$0xf]
        %v10171 = vld [vmem:[%s10166 + $0x10] sm:$0xf]
        %v10172 = vld [vmem:[%s10166 + $0x14] sm:$0xf]
        %v10173 = vld [vmem:[%s10166 + $0x18] sm:$0xf]
        %v10174 = vld [vmem:[%s10166 + $0x1c] sm:$0xf]
        %v10175 = vld [vmem:[%s10166 + $0x20] sm:$0xf]
        %v10176 = vld [vmem:[%s10166 + $0x24] sm:$0xf]
        %v10177 = vld [vmem:[%s10166 + $0x28] sm:$0xf]
        %v10186 = vunpack.c.l.b16 %v10158
        %v10187 = vunpack.c.l.b16 %v10159
        %v10188 = vunpack.c.l.b16 %v10160
        %v10189 = vunpack.c.l.b16 %v10161
        %v10190 = vunpack.c.l.b16 %v10162
        %v10191 = vunpack.c.l.b16 %v10163
        %v10192 = vunpack.c.l.b16 %v10164
        %v10193 = vunpack.c.l.b16 %v10165
        %v10194 = vpack.c.b16 %v10187, %v10186
        %v10195 = vpack.c.b16 %v10189, %v10188
        %v10196 = vpack.c.b16 %v10191, %v10190
        %v10197 = vpack.c.b16 %v10193, %v10192
        %v10209 = vunpack.c.l.b16 %v10167
        %v10210 = vunpack.c.l.b16 %v10168
        %v10211 = vunpack.c.l.b16 %v10169
        %v10212 = vunpack.c.l.b16 %v10170
        %v10213 = vunpack.c.l.b16 %v10171
        %v10214 = vunpack.c.l.b16 %v10172
        %v10215 = vunpack.c.l.b16 %v10173
        %v10216 = vunpack.c.l.b16 %v10174
        %v10217 = vunpack.c.l.b16 %v10175
        %v10218 = vunpack.c.l.b16 %v10176
        %v10219 = vunpack.c.l.b16 %v10177
        %v10220 = vpack.c.b16 %v10210, %v10209
        %v10221 = vpack.c.b16 %v10212, %v10211
        %v10222 = vpack.c.b16 %v10214, %v10213
        %v10223 = vpack.c.b16 %v10216, %v10215
        %v10224 = vpack.c.b16 %v10218, %v10217
        %v10225 = vpack.c.b16 %v10219, %v10219
        %v10232 = vsel %vm9942, %v10194, 0
        %v10235 = vsel %vm9942, %v10195, 0
        %v10238 = vsel %vm9942, %v10196, 0
        %v10241 = vsel %vm9942, %v10197, 0
        %v10244 = vsel %vm9955, %v10225, 0
        %10246 = vmatprep.subr.bf16.mxu0 0
        %10247 = vmatpush1.bf16.msra.mxu0 %v10220
        %10248 = vmatprep.subr.bf16.mxu0 0
        %10249 = vmatpush1.bf16.msra.mxu0 %v10221
        %10250 = vmatprep.subr.bf16.mxu0 0
        %10251 = vmatpush1.bf16.msra.mxu0 %v10222
        %10252 = vmatprep.subr.bf16.mxu0 0
        %10253 = vmatpush1.bf16.msra.mxu0 %v10223
        %10254 = vmatprep.subr.bf16.mxu0 0
        %10255 = vmatpush1.bf16.msra.mxu0 %v10224
        %10256 = vmatprep.subr.bf16.mxu0 0
        %10257 = vmatpush1.bf16.msra.mxu0 %v10244
        %10258 = vmatprep.subr.bf16.mxu0 0
        %10259 = vmatpush1.bf16.msra.mxu0 0
        %10260 = vmatprep.subr.bf16.mxu0 0
        %10261 = vmatpush1.bf16.msra.mxu0 0
        %10262 = vmatprep.subr.bf16.mxu0 0
        %10263 = vmatpush1.bf16.msra.mxu0 0
        %10264 = vmatprep.subr.bf16.mxu0 0
        %10265 = vmatpush1.bf16.msra.mxu0 0
        %10266 = vmatprep.subr.bf16.mxu0 0
        %10267 = vmatpush1.bf16.msra.mxu0 0
        %10268 = vmatprep.subr.bf16.mxu0 0
        %10269 = vmatpush1.bf16.msra.mxu0 0
        %10270 = vmatprep.subr.bf16.mxu0 0
        %10271 = vmatpush1.bf16.msra.mxu0 0
        %10272 = vmatprep.subr.bf16.mxu0 0
        %10273 = vmatpush1.bf16.msra.mxu0 0
        %10274 = vmatprep.subr.bf16.mxu0 0
        %10275 = vmatpush1.bf16.msra.mxu0 0
        %10276 = vmatprep.subr.bf16.mxu0 0
        %10277 = vmatpush1.bf16.msra.mxu0 0
        %10278 = vmatprep.mubr.bf16.mxu0 0
        %10279 = vmatmul.mubr.bf16.gmra.mrb[0].mxu0 %v10232
        %v10280 = vpop.f32.mrb[0].mxu0
        %v10281 = vadd.f32 0.0, %v10280
        %v10282 = vpop.f32.mrb[0].mxu0
        %v10283 = vpop.f32.mrb[0].mxu0
        %v10284 = vadd.f32 0.0, %v10283
        %v10285 = vpop.f32.mrb[0].mxu0
        %10286 = vmatprep.mubr.bf16.mxu0 0
        %10287 = vmatmul.mubr.bf16.gmra.mrb[0].mxu0 %v10235
        %v10288 = vpop.f32.mrb[0].mxu0
        %v10289 = vadd.f32 0.0, %v10288
        %v10290 = vpop.f32.mrb[0].mxu0
        %v10291 = vpop.f32.mrb[0].mxu0
        %v10292 = vadd.f32 0.0, %v10291
        %v10293 = vpop.f32.mrb[0].mxu0
        %10294 = vmatprep.mubr.bf16.mxu0 0
        %10295 = vmatmul.mubr.bf16.gmra.mrb[0].mxu0 %v10238
        %v10296 = vpop.f32.mrb[0].mxu0
        %v10297 = vadd.f32 0.0, %v10296
        %v10298 = vpop.f32.mrb[0].mxu0
        %v10299 = vpop.f32.mrb[0].mxu0
        %v10300 = vadd.f32 0.0, %v10299
        %v10301 = vpop.f32.mrb[0].mxu0
        %10302 = vmatprep.mubr.bf16.mxu0 0
        %10303 = vmatmul.mubr.bf16.gmra.mrb[0].mxu0 %v10241
        %v10304 = vpop.f32.mrb[0].mxu0
        %v10305 = vadd.f32 0.0, %v10304
        %v10306 = vpop.f32.mrb[0].mxu0
        %v10307 = vpop.f32.mrb[0].mxu0
        %v10308 = vadd.f32 0.0, %v10307
        %v10309 = vpop.f32.mrb[0].mxu0
        %10310 = vdwg.mxu0
        %v10311 = vadd.f32 %v10127, %v10281
        %v10312 = vadd.f32 %v10130, %v10284
        %v10313 = vadd.f32 %v10135, %v10289
        %v10314 = vadd.f32 %v10138, %v10292
        %v10315 = vadd.f32 %v10143, %v10297
        %v10316 = vadd.f32 %v10146, %v10300
        %v10317 = vadd.f32 %v10151, %v10305
        %v10318 = vadd.f32 %v10154, %v10308
        %s10319 = scalar_lea.vmem [#allocation5], 12
        %v10320 = vld [vmem:[%s10319] sm:$0xf]
        %v10321 = vld [vmem:[%s10319 + $0x4] sm:$0xf]
        %v10322 = vld [vmem:[%s10319 + $0x8] sm:$0xf]
        %v10323 = vld [vmem:[%s10319 + $0xc] sm:$0xf]
        %v10324 = vld [vmem:[%s10319 + $0x10] sm:$0xf]
        %v10325 = vld [vmem:[%s10319 + $0x14] sm:$0xf]
        %v10326 = vld [vmem:[%s10319 + $0x18] sm:$0xf]
        %v10327 = vld [vmem:[%s10319 + $0x1c] sm:$0xf]
        %s10328 = scalar_lea.vmem %s3, 132
        %v10329 = vld [vmem:[%s10328] sm:$0xf]
        %v10330 = vld [vmem:[%s10328 + $0x4] sm:$0xf]
        %v10331 = vld [vmem:[%s10328 + $0x8] sm:$0xf]
        %v10332 = vld [vmem:[%s10328 + $0xc] sm:$0xf]
        %v10333 = vld [vmem:[%s10328 + $0x10] sm:$0xf]
        %v10334 = vld [vmem:[%s10328 + $0x14] sm:$0xf]
        %v10335 = vld [vmem:[%s10328 + $0x18] sm:$0xf]
        %v10336 = vld [vmem:[%s10328 + $0x1c] sm:$0xf]
        %v10337 = vld [vmem:[%s10328 + $0x20] sm:$0xf]
        %v10338 = vld [vmem:[%s10328 + $0x24] sm:$0xf]
        %v10339 = vld [vmem:[%s10328 + $0x28] sm:$0xf]
        %v10348 = vunpack.c.l.b16 %v10320
        %v10349 = vunpack.c.l.b16 %v10321
        %v10350 = vunpack.c.l.b16 %v10322
        %v10351 = vunpack.c.l.b16 %v10323
        %v10352 = vunpack.c.l.b16 %v10324
        %v10353 = vunpack.c.l.b16 %v10325
        %v10354 = vunpack.c.l.b16 %v10326
        %v10355 = vunpack.c.l.b16 %v10327
        %v10356 = vpack.c.b16 %v10349, %v10348
        %v10357 = vpack.c.b16 %v10351, %v10350
        %v10358 = vpack.c.b16 %v10353, %v10352
        %v10359 = vpack.c.b16 %v10355, %v10354
        %v10371 = vunpack.c.l.b16 %v10329
        %v10372 = vunpack.c.l.b16 %v10330
        %v10373 = vunpack.c.l.b16 %v10331
        %v10374 = vunpack.c.l.b16 %v10332
        %v10375 = vunpack.c.l.b16 %v10333
        %v10376 = vunpack.c.l.b16 %v10334
        %v10377 = vunpack.c.l.b16 %v10335
        %v10378 = vunpack.c.l.b16 %v10336
        %v10379 = vunpack.c.l.b16 %v10337
        %v10380 = vunpack.c.l.b16 %v10338
        %v10381 = vunpack.c.l.b16 %v10339
        %v10382 = vpack.c.b16 %v10372, %v10371
        %v10383 = vpack.c.b16 %v10374, %v10373
        %v10384 = vpack.c.b16 %v10376, %v10375
        %v10385 = vpack.c.b16 %v10378, %v10377
        %v10386 = vpack.c.b16 %v10380, %v10379
        %v10387 = vpack.c.b16 %v10381, %v10381
        %v10394 = vsel %vm9942, %v10356, 0
        %v10397 = vsel %vm9942, %v10357, 0
        %v10400 = vsel %vm9942, %v10358, 0
        %v10403 = vsel %vm9942, %v10359, 0
        %v10406 = vsel %vm9955, %v10387, 0
        %10408 = vmatprep.subr.bf16.mxu0 0
        %10409 = vmatpush1.bf16.msra.mxu0 %v10382
        %10410 = vmatprep.subr.bf16.mxu0 0
        %10411 = vmatpush1.bf16.msra.mxu0 %v10383
        %10412 = vmatprep.subr.bf16.mxu0 0
        %10413 = vmatpush1.bf16.msra.mxu0 %v10384
        %10414 = vmatprep.subr.bf16.mxu0 0
        %10415 = vmatpush1.bf16.msra.mxu0 %v10385
        %10416 = vmatprep.subr.bf16.mxu0 0
        %10417 = vmatpush1.bf16.msra.mxu0 %v10386
        %10418 = vmatprep.subr.bf16.mxu0 0
        %10419 = vmatpush1.bf16.msra.mxu0 %v10406
        %10420 = vmatprep.subr.bf16.mxu0 0
        %10421 = vmatpush1.bf16.msra.mxu0 0
        %10422 = vmatprep.subr.bf16.mxu0 0
        %10423 = vmatpush1.bf16.msra.mxu0 0
        %10424 = vmatprep.subr.bf16.mxu0 0
        %10425 = vmatpush1.bf16.msra.mxu0 0
        %10426 = vmatprep.subr.bf16.mxu0 0
        %10427 = vmatpush1.bf16.msra.mxu0 0
        %10428 = vmatprep.subr.bf16.mxu0 0
        %10429 = vmatpush1.bf16.msra.mxu0 0
        %10430 = vmatprep.subr.bf16.mxu0 0
        %10431 = vmatpush1.bf16.msra.mxu0 0
        %10432 = vmatprep.subr.bf16.mxu0 0
        %10433 = vmatpush1.bf16.msra.mxu0 0
        %10434 = vmatprep.subr.bf16.mxu0 0
        %10435 = vmatpush1.bf16.msra.mxu0 0
        %10436 = vmatprep.subr.bf16.mxu0 0
        %10437 = vmatpush1.bf16.msra.mxu0 0
        %10438 = vmatprep.subr.bf16.mxu0 0
        %10439 = vmatpush1.bf16.msra.mxu0 0
        %10440 = vmatprep.mubr.bf16.mxu0 0
        %10441 = vmatmul.mubr.bf16.gmra.mrb[0].mxu0 %v10394
        %v10442 = vpop.f32.mrb[0].mxu0
        %v10443 = vadd.f32 0.0, %v10442
        %v10444 = vpop.f32.mrb[0].mxu0
        %v10445 = vpop.f32.mrb[0].mxu0
        %v10446 = vadd.f32 0.0, %v10445
        %v10447 = vpop.f32.mrb[0].mxu0
        %10448 = vmatprep.mubr.bf16.mxu0 0
        %10449 = vmatmul.mubr.bf16.gmra.mrb[0].mxu0 %v10397
        %v10450 = vpop.f32.mrb[0].mxu0
        %v10451 = vadd.f32 0.0, %v10450
        %v10452 = vpop.f32.mrb[0].mxu0
        %v10453 = vpop.f32.mrb[0].mxu0
        %v10454 = vadd.f32 0.0, %v10453
        %v10455 = vpop.f32.mrb[0].mxu0
        %10456 = vmatprep.mubr.bf16.mxu0 0
        %10457 = vmatmul.mubr.bf16.gmra.mrb[0].mxu0 %v10400
        %v10458 = vpop.f32.mrb[0].mxu0
        %v10459 = vadd.f32 0.0, %v10458
        %v10460 = vpop.f32.mrb[0].mxu0
        %v10461 = vpop.f32.mrb[0].mxu0
        %v10462 = vadd.f32 0.0, %v10461
        %v10463 = vpop.f32.mrb[0].mxu0
        %10464 = vmatprep.mubr.bf16.mxu0 0
        %10465 = vmatmul.mubr.bf16.gmra.mrb[0].mxu0 %v10403
        %v10466 = vpop.f32.mrb[0].mxu0
        %v10467 = vadd.f32 0.0, %v10466
        %v10468 = vpop.f32.mrb[0].mxu0
        %v10469 = vpop.f32.mrb[0].mxu0
        %v10470 = vadd.f32 0.0, %v10469
        %v10471 = vpop.f32.mrb[0].mxu0
        %10472 = vdwg.mxu0
        %v10473 = vadd.f32 %v10311, %v10443
        %v10474 = vadd.f32 %v10312, %v10446
        %v10475 = vadd.f32 %v10313, %v10451
        %v10476 = vadd.f32 %v10314, %v10454
        %v10477 = vadd.f32 %v10315, %v10459
        %v10478 = vadd.f32 %v10316, %v10462
        %v10479 = vadd.f32 %v10317, %v10467
        %v10480 = vadd.f32 %v10318, %v10470
        %s10481 = scalar_lea.vmem [#allocation5], 16
        %v10482 = vld [vmem:[%s10481] sm:$0xf]
        %v10483 = vld [vmem:[%s10481 + $0x4] sm:$0xf]
        %v10484 = vld [vmem:[%s10481 + $0x8] sm:$0xf]
        %v10485 = vld [vmem:[%s10481 + $0xc] sm:$0xf]
        %v10486 = vld [vmem:[%s10481 + $0x10] sm:$0xf]
        %v10487 = vld [vmem:[%s10481 + $0x14] sm:$0xf]
        %v10488 = vld [vmem:[%s10481 + $0x18] sm:$0xf]
        %v10489 = vld [vmem:[%s10481 + $0x1c] sm:$0xf]
        %s10490 = scalar_lea.vmem %s3, 176
        %v10491 = vld [vmem:[%s10490] sm:$0xf]
        %v10492 = vld [vmem:[%s10490 + $0x4] sm:$0xf]
        %v10493 = vld [vmem:[%s10490 + $0x8] sm:$0xf]
        %v10494 = vld [vmem:[%s10490 + $0xc] sm:$0xf]
        %v10495 = vld [vmem:[%s10490 + $0x10] sm:$0xf]
        %v10496 = vld [vmem:[%s10490 + $0x14] sm:$0xf]
        %v10497 = vld [vmem:[%s10490 + $0x18] sm:$0xf]
        %v10498 = vld [vmem:[%s10490 + $0x1c] sm:$0xf]
        %v10499 = vld [vmem:[%s10490 + $0x20] sm:$0xf]
        %v10500 = vld [vmem:[%s10490 + $0x24] sm:$0xf]
        %v10501 = vld [vmem:[%s10490 + $0x28] sm:$0xf]
        %v10510 = vunpack.c.l.b16 %v10482
        %v10511 = vunpack.c.l.b16 %v10483
        %v10512 = vunpack.c.l.b16 %v10484
        %v10513 = vunpack.c.l.b16 %v10485
        %v10514 = vunpack.c.l.b16 %v10486
        %v10515 = vunpack.c.l.b16 %v10487
        %v10516 = vunpack.c.l.b16 %v10488
        %v10517 = vunpack.c.l.b16 %v10489
        %v10518 = vpack.c.b16 %v10511, %v10510
        %v10519 = vpack.c.b16 %v10513, %v10512
        %v10520 = vpack.c.b16 %v10515, %v10514
        %v10521 = vpack.c.b16 %v10517, %v10516
        %v10533 = vunpack.c.l.b16 %v10491
        %v10534 = vunpack.c.l.b16 %v10492
        %v10535 = vunpack.c.l.b16 %v10493
        %v10536 = vunpack.c.l.b16 %v10494
        %v10537 = vunpack.c.l.b16 %v10495
        %v10538 = vunpack.c.l.b16 %v10496
        %v10539 = vunpack.c.l.b16 %v10497
        %v10540 = vunpack.c.l.b16 %v10498
        %v10541 = vunpack.c.l.b16 %v10499
        %v10542 = vunpack.c.l.b16 %v10500
        %v10543 = vunpack.c.l.b16 %v10501
        %v10544 = vpack.c.b16 %v10534, %v10533
        %v10545 = vpack.c.b16 %v10536, %v10535
        %v10546 = vpack.c.b16 %v10538, %v10537
        %v10547 = vpack.c.b16 %v10540, %v10539
        %v10548 = vpack.c.b16 %v10542, %v10541
        %v10549 = vpack.c.b16 %v10543, %v10543
        %v10556 = vsel %vm9942, %v10518, 0
        %v10559 = vsel %vm9942, %v10519, 0
        %v10562 = vsel %vm9942, %v10520, 0
        %v10565 = vsel %vm9942, %v10521, 0
        %v10568 = vsel %vm9955, %v10549, 0
        %10570 = vmatprep.subr.bf16.mxu0 0
        %10571 = vmatpush1.bf16.msra.mxu0 %v10544
        %10572 = vmatprep.subr.bf16.mxu0 0
        %10573 = vmatpush1.bf16.msra.mxu0 %v10545
        %10574 = vmatprep.subr.bf16.mxu0 0
        %10575 = vmatpush1.bf16.msra.mxu0 %v10546
        %10576 = vmatprep.subr.bf16.mxu0 0
        %10577 = vmatpush1.bf16.msra.mxu0 %v10547
        %10578 = vmatprep.subr.bf16.mxu0 0
        %10579 = vmatpush1.bf16.msra.mxu0 %v10548
        %10580 = vmatprep.subr.bf16.mxu0 0
        %10581 = vmatpush1.bf16.msra.mxu0 %v10568
        %10582 = vmatprep.subr.bf16.mxu0 0
        %10583 = vmatpush1.bf16.msra.mxu0 0
        %10584 = vmatprep.subr.bf16.mxu0 0
        %10585 = vmatpush1.bf16.msra.mxu0 0
        %10586 = vmatprep.subr.bf16.mxu0 0
        %10587 = vmatpush1.bf16.msra.mxu0 0
        %10588 = vmatprep.subr.bf16.mxu0 0
        %10589 = vmatpush1.bf16.msra.mxu0 0
        %10590 = vmatprep.subr.bf16.mxu0 0
        %10591 = vmatpush1.bf16.msra.mxu0 0
        %10592 = vmatprep.subr.bf16.mxu0 0
        %10593 = vmatpush1.bf16.msra.mxu0 0
        %10594 = vmatprep.subr.bf16.mxu0 0
        %10595 = vmatpush1.bf16.msra.mxu0 0
        %10596 = vmatprep.subr.bf16.mxu0 0
        %10597 = vmatpush1.bf16.msra.mxu0 0
        %10598 = vmatprep.subr.bf16.mxu0 0
        %10599 = vmatpush1.bf16.msra.mxu0 0
        %10600 = vmatprep.subr.bf16.mxu0 0
        %10601 = vmatpush1.bf16.msra.mxu0 0
        %10602 = vmatprep.mubr.bf16.mxu0 0
        %10603 = vmatmul.mubr.bf16.gmra.mrb[0].mxu0 %v10556
        %v10604 = vpop.f32.mrb[0].mxu0
        %v10605 = vadd.f32 0.0, %v10604
        %v10606 = vpop.f32.mrb[0].mxu0
        %v10607 = vpop.f32.mrb[0].mxu0
        %v10608 = vadd.f32 0.0, %v10607
        %v10609 = vpop.f32.mrb[0].mxu0
        %10610 = vmatprep.mubr.bf16.mxu0 0
        %10611 = vmatmul.mubr.bf16.gmra.mrb[0].mxu0 %v10559
        %v10612 = vpop.f32.mrb[0].mxu0
        %v10613 = vadd.f32 0.0, %v10612
        %v10614 = vpop.f32.mrb[0].mxu0
        %v10615 = vpop.f32.mrb[0].mxu0
        %v10616 = vadd.f32 0.0, %v10615
        %v10617 = vpop.f32.mrb[0].mxu0
        %10618 = vmatprep.mubr.bf16.mxu0 0
        %10619 = vmatmul.mubr.bf16.gmra.mrb[0].mxu0 %v10562
        %v10620 = vpop.f32.mrb[0].mxu0
        %v10621 = vadd.f32 0.0, %v10620
        %v10622 = vpop.f32.mrb[0].mxu0
        %v10623 = vpop.f32.mrb[0].mxu0
        %v10624 = vadd.f32 0.0, %v10623
        %v10625 = vpop.f32.mrb[0].mxu0
        %10626 = vmatprep.mubr.bf16.mxu0 0
        %10627 = vmatmul.mubr.bf16.gmra.mrb[0].mxu0 %v10565
        %v10628 = vpop.f32.mrb[0].mxu0
        %v10629 = vadd.f32 0.0, %v10628
        %v10630 = vpop.f32.mrb[0].mxu0
        %v10631 = vpop.f32.mrb[0].mxu0
        %v10632 = vadd.f32 0.0, %v10631
        %v10633 = vpop.f32.mrb[0].mxu0
        %10634 = vdwg.mxu0
        %v10635 = vadd.f32 %v10473, %v10605
        %v10636 = vadd.f32 %v10474, %v10608
        %v10637 = vadd.f32 %v10475, %v10613
        %v10638 = vadd.f32 %v10476, %v10616
        %v10639 = vadd.f32 %v10477, %v10621
        %v10640 = vadd.f32 %v10478, %v10624
        %v10641 = vadd.f32 %v10479, %v10629
        %v10642 = vadd.f32 %v10480, %v10632
        %s10643 = scalar_lea.vmem [#allocation5], 20
        %v10644 = vld [vmem:[%s10643] sm:$0xf]
        %v10645 = vld [vmem:[%s10643 + $0x4] sm:$0xf]
        %v10646 = vld [vmem:[%s10643 + $0x8] sm:$0xf]
        %v10647 = vld [vmem:[%s10643 + $0xc] sm:$0xf]
        %v10648 = vld [vmem:[%s10643 + $0x10] sm:$0xf]
        %v10649 = vld [vmem:[%s10643 + $0x14] sm:$0xf]
        %v10650 = vld [vmem:[%s10643 + $0x18] sm:$0xf]
        %v10651 = vld [vmem:[%s10643 + $0x1c] sm:$0xf]
        %s10652 = scalar_lea.vmem %s3, 220
        %v10653 = vld [vmem:[%s10652] sm:$0xf]
        %v10654 = vld [vmem:[%s10652 + $0x4] sm:$0xf]
        %v10655 = vld [vmem:[%s10652 + $0x8] sm:$0xf]
        %v10656 = vld [vmem:[%s10652 + $0xc] sm:$0xf]
        %v10657 = vld [vmem:[%s10652 + $0x10] sm:$0xf]
        %v10658 = vld [vmem:[%s10652 + $0x14] sm:$0xf]
        %v10659 = vld [vmem:[%s10652 + $0x18] sm:$0xf]
        %v10660 = vld [vmem:[%s10652 + $0x1c] sm:$0xf]
        %v10661 = vld [vmem:[%s10652 + $0x20] sm:$0xf]
        %v10662 = vld [vmem:[%s10652 + $0x24] sm:$0xf]
        %v10663 = vld [vmem:[%s10652 + $0x28] sm:$0xf]
        %v10672 = vunpack.c.l.b16 %v10644
        %v10673 = vunpack.c.l.b16 %v10645
        %v10674 = vunpack.c.l.b16 %v10646
        %v10675 = vunpack.c.l.b16 %v10647
        %v10676 = vunpack.c.l.b16 %v10648
        %v10677 = vunpack.c.l.b16 %v10649
        %v10678 = vunpack.c.l.b16 %v10650
        %v10679 = vunpack.c.l.b16 %v10651
        %v10680 = vpack.c.b16 %v10673, %v10672
        %v10681 = vpack.c.b16 %v10675, %v10674
        %v10682 = vpack.c.b16 %v10677, %v10676
        %v10683 = vpack.c.b16 %v10679, %v10678
        %v10695 = vunpack.c.l.b16 %v10653
        %v10696 = vunpack.c.l.b16 %v10654
        %v10697 = vunpack.c.l.b16 %v10655
        %v10698 = vunpack.c.l.b16 %v10656
        %v10699 = vunpack.c.l.b16 %v10657
        %v10700 = vunpack.c.l.b16 %v10658
        %v10701 = vunpack.c.l.b16 %v10659
        %v10702 = vunpack.c.l.b16 %v10660
        %v10703 = vunpack.c.l.b16 %v10661
        %v10704 = vunpack.c.l.b16 %v10662
        %v10705 = vunpack.c.l.b16 %v10663
        %v10706 = vpack.c.b16 %v10696, %v10695
        %v10707 = vpack.c.b16 %v10698, %v10697
        %v10708 = vpack.c.b16 %v10700, %v10699
        %v10709 = vpack.c.b16 %v10702, %v10701
        %v10710 = vpack.c.b16 %v10704, %v10703
        %v10711 = vpack.c.b16 %v10705, %v10705
        %v10718 = vsel %vm9942, %v10680, 0
        %v10721 = vsel %vm9942, %v10681, 0
        %v10724 = vsel %vm9942, %v10682, 0
        %v10727 = vsel %vm9942, %v10683, 0
        %v10730 = vsel %vm9955, %v10711, 0
        %10732 = vmatprep.subr.bf16.mxu0 0
        %10733 = vmatpush1.bf16.msra.mxu0 %v10706
        %10734 = vmatprep.subr.bf16.mxu0 0
        %10735 = vmatpush1.bf16.msra.mxu0 %v10707
        %10736 = vmatprep.subr.bf16.mxu0 0
        %10737 = vmatpush1.bf16.msra.mxu0 %v10708
        %10738 = vmatprep.subr.bf16.mxu0 0
        %10739 = vmatpush1.bf16.msra.mxu0 %v10709
        %10740 = vmatprep.subr.bf16.mxu0 0
        %10741 = vmatpush1.bf16.msra.mxu0 %v10710
        %10742 = vmatprep.subr.bf16.mxu0 0
        %10743 = vmatpush1.bf16.msra.mxu0 %v10730
        %10744 = vmatprep.subr.bf16.mxu0 0
        %10745 = vmatpush1.bf16.msra.mxu0 0
        %10746 = vmatprep.subr.bf16.mxu0 0
        %10747 = vmatpush1.bf16.msra.mxu0 0
        %10748 = vmatprep.subr.bf16.mxu0 0
        %10749 = vmatpush1.bf16.msra.mxu0 0
        %10750 = vmatprep.subr.bf16.mxu0 0
        %10751 = vmatpush1.bf16.msra.mxu0 0
        %10752 = vmatprep.subr.bf16.mxu0 0
        %10753 = vmatpush1.bf16.msra.mxu0 0
        %10754 = vmatprep.subr.bf16.mxu0 0
        %10755 = vmatpush1.bf16.msra.mxu0 0
        %10756 = vmatprep.subr.bf16.mxu0 0
        %10757 = vmatpush1.bf16.msra.mxu0 0
        %10758 = vmatprep.subr.bf16.mxu0 0
        %10759 = vmatpush1.bf16.msra.mxu0 0
        %10760 = vmatprep.subr.bf16.mxu0 0
        %10761 = vmatpush1.bf16.msra.mxu0 0
        %10762 = vmatprep.subr.bf16.mxu0 0
        %10763 = vmatpush1.bf16.msra.mxu0 0
        %10764 = vmatprep.mubr.bf16.mxu0 0
        %10765 = vmatmul.mubr.bf16.gmra.mrb[0].mxu0 %v10718
        %v10766 = vpop.f32.mrb[0].mxu0
        %v10767 = vadd.f32 0.0, %v10766
        %v10768 = vpop.f32.mrb[0].mxu0
        %v10769 = vpop.f32.mrb[0].mxu0
        %v10770 = vadd.f32 0.0, %v10769
        %v10771 = vpop.f32.mrb[0].mxu0
        %10772 = vmatprep.mubr.bf16.mxu0 0
        %10773 = vmatmul.mubr.bf16.gmra.mrb[0].mxu0 %v10721
        %v10774 = vpop.f32.mrb[0].mxu0
        %v10775 = vadd.f32 0.0, %v10774
        %v10776 = vpop.f32.mrb[0].mxu0
        %v10777 = vpop.f32.mrb[0].mxu0
        %v10778 = vadd.f32 0.0, %v10777
        %v10779 = vpop.f32.mrb[0].mxu0
        %10780 = vmatprep.mubr.bf16.mxu0 0
        %10781 = vmatmul.mubr.bf16.gmra.mrb[0].mxu0 %v10724
        %v10782 = vpop.f32.mrb[0].mxu0
        %v10783 = vadd.f32 0.0, %v10782
        %v10784 = vpop.f32.mrb[0].mxu0
        %v10785 = vpop.f32.mrb[0].mxu0
        %v10786 = vadd.f32 0.0, %v10785
        %v10787 = vpop.f32.mrb[0].mxu0
        %10788 = vmatprep.mubr.bf16.mxu0 0
        %10789 = vmatmul.mubr.bf16.gmra.mrb[0].mxu0 %v10727
        %v10790 = vpop.f32.mrb[0].mxu0
        %v10791 = vadd.f32 0.0, %v10790
        %v10792 = vpop.f32.mrb[0].mxu0
        %v10793 = vpop.f32.mrb[0].mxu0
        %v10794 = vadd.f32 0.0, %v10793
        %v10795 = vpop.f32.mrb[0].mxu0
        %10796 = vdwg.mxu0
        %v10797 = vadd.f32 %v10635, %v10767
        %v10798 = vadd.f32 %v10636, %v10770
        %v10799 = vadd.f32 %v10637, %v10775
        %v10800 = vadd.f32 %v10638, %v10778
        %v10801 = vadd.f32 %v10639, %v10783
        %v10802 = vadd.f32 %v10640, %v10786
        %v10803 = vadd.f32 %v10641, %v10791
        %v10804 = vadd.f32 %v10642, %v10794
        %s10805 = scalar_lea.vmem [#allocation5], 24
        %v10806 = vld [vmem:[%s10805] sm:$0xf]
        %v10807 = vld [vmem:[%s10805 + $0x4] sm:$0xf]
        %v10808 = vld [vmem:[%s10805 + $0x8] sm:$0xf]
        %v10809 = vld [vmem:[%s10805 + $0xc] sm:$0xf]
        %v10810 = vld [vmem:[%s10805 + $0x10] sm:$0xf]
        %v10811 = vld [vmem:[%s10805 + $0x14] sm:$0xf]
        %v10812 = vld [vmem:[%s10805 + $0x18] sm:$0xf]
        %v10813 = vld [vmem:[%s10805 + $0x1c] sm:$0xf]
        %s10814 = scalar_lea.vmem %s3, 264
        %v10815 = vld [vmem:[%s10814] sm:$0xf]
        %v10816 = vld [vmem:[%s10814 + $0x4] sm:$0xf]
        %v10817 = vld [vmem:[%s10814 + $0x8] sm:$0xf]
        %v10818 = vld [vmem:[%s10814 + $0xc] sm:$0xf]
        %v10819 = vld [vmem:[%s10814 + $0x10] sm:$0xf]
        %v10820 = vld [vmem:[%s10814 + $0x14] sm:$0xf]
        %v10821 = vld [vmem:[%s10814 + $0x18] sm:$0xf]
        %v10822 = vld [vmem:[%s10814 + $0x1c] sm:$0xf]
        %v10823 = vld [vmem:[%s10814 + $0x20] sm:$0xf]
        %v10824 = vld [vmem:[%s10814 + $0x24] sm:$0xf]
        %v10825 = vld [vmem:[%s10814 + $0x28] sm:$0xf]
        %v10834 = vunpack.c.l.b16 %v10806
        %v10835 = vunpack.c.l.b16 %v10807
        %v10836 = vunpack.c.l.b16 %v10808
        %v10837 = vunpack.c.l.b16 %v10809
        %v10838 = vunpack.c.l.b16 %v10810
        %v10839 = vunpack.c.l.b16 %v10811
        %v10840 = vunpack.c.l.b16 %v10812
        %v10841 = vunpack.c.l.b16 %v10813
        %v10842 = vpack.c.b16 %v10835, %v10834
        %v10843 = vpack.c.b16 %v10837, %v10836
        %v10844 = vpack.c.b16 %v10839, %v10838
        %v10845 = vpack.c.b16 %v10841, %v10840
        %v10857 = vunpack.c.l.b16 %v10815
        %v10858 = vunpack.c.l.b16 %v10816
        %v10859 = vunpack.c.l.b16 %v10817
        %v10860 = vunpack.c.l.b16 %v10818
        %v10861 = vunpack.c.l.b16 %v10819
        %v10862 = vunpack.c.l.b16 %v10820
        %v10863 = vunpack.c.l.b16 %v10821
        %v10864 = vunpack.c.l.b16 %v10822
        %v10865 = vunpack.c.l.b16 %v10823
        %v10866 = vunpack.c.l.b16 %v10824
        %v10867 = vunpack.c.l.b16 %v10825
        %v10868 = vpack.c.b16 %v10858, %v10857
        %v10869 = vpack.c.b16 %v10860, %v10859
        %v10870 = vpack.c.b16 %v10862, %v10861
        %v10871 = vpack.c.b16 %v10864, %v10863
        %v10872 = vpack.c.b16 %v10866, %v10865
        %v10873 = vpack.c.b16 %v10867, %v10867
        %v10880 = vsel %vm9942, %v10842, 0
        %v10883 = vsel %vm9942, %v10843, 0
        %v10886 = vsel %vm9942, %v10844, 0
        %v10889 = vsel %vm9942, %v10845, 0
        %v10892 = vsel %vm9955, %v10873, 0
        %10894 = vmatprep.subr.bf16.mxu0 0
        %10895 = vmatpush1.bf16.msra.mxu0 %v10868
        %10896 = vmatprep.subr.bf16.mxu0 0
        %10897 = vmatpush1.bf16.msra.mxu0 %v10869
        %10898 = vmatprep.subr.bf16.mxu0 0
        %10899 = vmatpush1.bf16.msra.mxu0 %v10870
        %10900 = vmatprep.subr.bf16.mxu0 0
        %10901 = vmatpush1.bf16.msra.mxu0 %v10871
        %10902 = vmatprep.subr.bf16.mxu0 0
        %10903 = vmatpush1.bf16.msra.mxu0 %v10872
        %10904 = vmatprep.subr.bf16.mxu0 0
        %10905 = vmatpush1.bf16.msra.mxu0 %v10892
        %10906 = vmatprep.subr.bf16.mxu0 0
        %10907 = vmatpush1.bf16.msra.mxu0 0
        %10908 = vmatprep.subr.bf16.mxu0 0
        %10909 = vmatpush1.bf16.msra.mxu0 0
        %10910 = vmatprep.subr.bf16.mxu0 0
        %10911 = vmatpush1.bf16.msra.mxu0 0
        %10912 = vmatprep.subr.bf16.mxu0 0
        %10913 = vmatpush1.bf16.msra.mxu0 0
        %10914 = vmatprep.subr.bf16.mxu0 0
        %10915 = vmatpush1.bf16.msra.mxu0 0
        %10916 = vmatprep.subr.bf16.mxu0 0
        %10917 = vmatpush1.bf16.msra.mxu0 0
        %10918 = vmatprep.subr.bf16.mxu0 0
        %10919 = vmatpush1.bf16.msra.mxu0 0
        %10920 = vmatprep.subr.bf16.mxu0 0
        %10921 = vmatpush1.bf16.msra.mxu0 0
        %10922 = vmatprep.subr.bf16.mxu0 0
        %10923 = vmatpush1.bf16.msra.mxu0 0
        %10924 = vmatprep.subr.bf16.mxu0 0
        %10925 = vmatpush1.bf16.msra.mxu0 0
        %10926 = vmatprep.mubr.bf16.mxu0 0
        %10927 = vmatmul.mubr.bf16.gmra.mrb[0].mxu0 %v10880
        %v10928 = vpop.f32.mrb[0].mxu0
        %v10929 = vadd.f32 0.0, %v10928
        %v10930 = vpop.f32.mrb[0].mxu0
        %v10931 = vpop.f32.mrb[0].mxu0
        %v10932 = vadd.f32 0.0, %v10931
        %v10933 = vpop.f32.mrb[0].mxu0
        %10934 = vmatprep.mubr.bf16.mxu0 0
        %10935 = vmatmul.mubr.bf16.gmra.mrb[0].mxu0 %v10883
        %v10936 = vpop.f32.mrb[0].mxu0
        %v10937 = vadd.f32 0.0, %v10936
        %v10938 = vpop.f32.mrb[0].mxu0
        %v10939 = vpop.f32.mrb[0].mxu0
        %v10940 = vadd.f32 0.0, %v10939
        %v10941 = vpop.f32.mrb[0].mxu0
        %10942 = vmatprep.mubr.bf16.mxu0 0
        %10943 = vmatmul.mubr.bf16.gmra.mrb[0].mxu0 %v10886
        %v10944 = vpop.f32.mrb[0].mxu0
        %v10945 = vadd.f32 0.0, %v10944
        %v10946 = vpop.f32.mrb[0].mxu0
        %v10947 = vpop.f32.mrb[0].mxu0
        %v10948 = vadd.f32 0.0, %v10947
        %v10949 = vpop.f32.mrb[0].mxu0
        %10950 = vmatprep.mubr.bf16.mxu0 0
        %10951 = vmatmul.mubr.bf16.gmra.mrb[0].mxu0 %v10889
        %v10952 = vpop.f32.mrb[0].mxu0
        %v10953 = vadd.f32 0.0, %v10952
        %v10954 = vpop.f32.mrb[0].mxu0
        %v10955 = vpop.f32.mrb[0].mxu0
        %v10956 = vadd.f32 0.0, %v10955
        %v10957 = vpop.f32.mrb[0].mxu0
        %10958 = vdwg.mxu0
        %v10959 = vadd.f32 %v10797, %v10929
        %v10960 = vadd.f32 %v10798, %v10932
        %v10961 = vadd.f32 %v10799, %v10937
        %v10962 = vadd.f32 %v10800, %v10940
        %v10963 = vadd.f32 %v10801, %v10945
        %v10964 = vadd.f32 %v10802, %v10948
        %v10965 = vadd.f32 %v10803, %v10953
        %v10966 = vadd.f32 %v10804, %v10956
        %s10967 = scalar_lea.vmem [#allocation5], 28
        %v10968 = vld [vmem:[%s10967] sm:$0xf]
        %v10969 = vld [vmem:[%s10967 + $0x4] sm:$0xf]
        %v10970 = vld [vmem:[%s10967 + $0x8] sm:$0xf]
        %v10971 = vld [vmem:[%s10967 + $0xc] sm:$0xf]
        %v10972 = vld [vmem:[%s10967 + $0x10] sm:$0xf]
        %v10973 = vld [vmem:[%s10967 + $0x14] sm:$0xf]
        %v10974 = vld [vmem:[%s10967 + $0x18] sm:$0xf]
        %v10975 = vld [vmem:[%s10967 + $0x1c] sm:$0xf]
        %s10976 = scalar_lea.vmem %s3, 308
        %v10977 = vld [vmem:[%s10976] sm:$0xf]
        %v10978 = vld [vmem:[%s10976 + $0x4] sm:$0xf]
        %v10979 = vld [vmem:[%s10976 + $0x8] sm:$0xf]
        %v10980 = vld [vmem:[%s10976 + $0xc] sm:$0xf]
        %v10981 = vld [vmem:[%s10976 + $0x10] sm:$0xf]
        %v10982 = vld [vmem:[%s10976 + $0x14] sm:$0xf]
        %v10983 = vld [vmem:[%s10976 + $0x18] sm:$0xf]
        %v10984 = vld [vmem:[%s10976 + $0x1c] sm:$0xf]
        %v10985 = vld [vmem:[%s10976 + $0x20] sm:$0xf]
        %v10986 = vld [vmem:[%s10976 + $0x24] sm:$0xf]
        %v10987 = vld [vmem:[%s10976 + $0x28] sm:$0xf]
        %v10996 = vunpack.c.l.b16 %v10968
        %v10997 = vunpack.c.l.b16 %v10969
        %v10998 = vunpack.c.l.b16 %v10970
        %v10999 = vunpack.c.l.b16 %v10971
        %v11000 = vunpack.c.l.b16 %v10972
        %v11001 = vunpack.c.l.b16 %v10973
        %v11002 = vunpack.c.l.b16 %v10974
        %v11003 = vunpack.c.l.b16 %v10975
        %v11004 = vpack.c.b16 %v10997, %v10996
        %v11005 = vpack.c.b16 %v10999, %v10998
        %v11006 = vpack.c.b16 %v11001, %v11000
        %v11007 = vpack.c.b16 %v11003, %v11002
        %v11019 = vunpack.c.l.b16 %v10977
        %v11020 = vunpack.c.l.b16 %v10978
        %v11021 = vunpack.c.l.b16 %v10979
        %v11022 = vunpack.c.l.b16 %v10980
        %v11023 = vunpack.c.l.b16 %v10981
        %v11024 = vunpack.c.l.b16 %v10982
        %v11025 = vunpack.c.l.b16 %v10983
        %v11026 = vunpack.c.l.b16 %v10984
        %v11027 = vunpack.c.l.b16 %v10985
        %v11028 = vunpack.c.l.b16 %v10986
        %v11029 = vunpack.c.l.b16 %v10987
        %v11030 = vpack.c.b16 %v11020, %v11019
        %v11031 = vpack.c.b16 %v11022, %v11021
        %v11032 = vpack.c.b16 %v11024, %v11023
        %v11033 = vpack.c.b16 %v11026, %v11025
        %v11034 = vpack.c.b16 %v11028, %v11027
        %v11035 = vpack.c.b16 %v11029, %v11029
        %v11042 = vsel %vm9942, %v11004, 0
        %v11045 = vsel %vm9942, %v11005, 0
        %v11048 = vsel %vm9942, %v11006, 0
        %v11051 = vsel %vm9942, %v11007, 0
        %v11054 = vsel %vm9955, %v11035, 0
        %11056 = vmatprep.subr.bf16.mxu0 0
        %11057 = vmatpush1.bf16.msra.mxu0 %v11030
        %11058 = vmatprep.subr.bf16.mxu0 0
        %11059 = vmatpush1.bf16.msra.mxu0 %v11031
        %11060 = vmatprep.subr.bf16.mxu0 0
        %11061 = vmatpush1.bf16.msra.mxu0 %v11032
        %11062 = vmatprep.subr.bf16.mxu0 0
        %11063 = vmatpush1.bf16.msra.mxu0 %v11033
        %11064 = vmatprep.subr.bf16.mxu0 0
        %11065 = vmatpush1.bf16.msra.mxu0 %v11034
        %11066 = vmatprep.subr.bf16.mxu0 0
        %11067 = vmatpush1.bf16.msra.mxu0 %v11054
        %11068 = vmatprep.subr.bf16.mxu0 0
        %11069 = vmatpush1.bf16.msra.mxu0 0
        %11070 = vmatprep.subr.bf16.mxu0 0
        %11071 = vmatpush1.bf16.msra.mxu0 0
        %11072 = vmatprep.subr.bf16.mxu0 0
        %11073 = vmatpush1.bf16.msra.mxu0 0
        %11074 = vmatprep.subr.bf16.mxu0 0
        %11075 = vmatpush1.bf16.msra.mxu0 0
        %11076 = vmatprep.subr.bf16.mxu0 0
        %11077 = vmatpush1.bf16.msra.mxu0 0
        %11078 = vmatprep.subr.bf16.mxu0 0
        %11079 = vmatpush1.bf16.msra.mxu0 0
        %11080 = vmatprep.subr.bf16.mxu0 0
        %11081 = vmatpush1.bf16.msra.mxu0 0
        %11082 = vmatprep.subr.bf16.mxu0 0
        %11083 = vmatpush1.bf16.msra.mxu0 0
        %11084 = vmatprep.subr.bf16.mxu0 0
        %11085 = vmatpush1.bf16.msra.mxu0 0
        %11086 = vmatprep.subr.bf16.mxu0 0
        %11087 = vmatpush1.bf16.msra.mxu0 0
        %11088 = vmatprep.mubr.bf16.mxu0 0
        %11089 = vmatmul.mubr.bf16.gmra.mrb[0].mxu0 %v11042
        %v11090 = vpop.f32.mrb[0].mxu0
        %v11091 = vadd.f32 0.0, %v11090
        %v11092 = vpop.f32.mrb[0].mxu0
        %v11093 = vpop.f32.mrb[0].mxu0
        %v11094 = vadd.f32 0.0, %v11093
        %v11095 = vpop.f32.mrb[0].mxu0
        %11096 = vmatprep.mubr.bf16.mxu0 0
        %11097 = vmatmul.mubr.bf16.gmra.mrb[0].mxu0 %v11045
        %v11098 = vpop.f32.mrb[0].mxu0
        %v11099 = vadd.f32 0.0, %v11098
        %v11100 = vpop.f32.mrb[0].mxu0
        %v11101 = vpop.f32.mrb[0].mxu0
        %v11102 = vadd.f32 0.0, %v11101
        %v11103 = vpop.f32.mrb[0].mxu0
        %11104 = vmatprep.mubr.bf16.mxu0 0
        %11105 = vmatmul.mubr.bf16.gmra.mrb[0].mxu0 %v11048
        %v11106 = vpop.f32.mrb[0].mxu0
        %v11107 = vadd.f32 0.0, %v11106
        %v11108 = vpop.f32.mrb[0].mxu0
        %v11109 = vpop.f32.mrb[0].mxu0
        %v11110 = vadd.f32 0.0, %v11109
        %v11111 = vpop.f32.mrb[0].mxu0
        %11112 = vmatprep.mubr.bf16.mxu0 0
        %11113 = vmatmul.mubr.bf16.gmra.mrb[0].mxu0 %v11051
        %v11114 = vpop.f32.mrb[0].mxu0
        %v11115 = vadd.f32 0.0, %v11114
        %v11116 = vpop.f32.mrb[0].mxu0
        %v11117 = vpop.f32.mrb[0].mxu0
        %v11118 = vadd.f32 0.0, %v11117
        %v11119 = vpop.f32.mrb[0].mxu0
        %11120 = vdwg.mxu0
        %v11121 = vadd.f32 %v10959, %v11091
        %v11122 = vadd.f32 %v10960, %v11094
        %v11123 = vadd.f32 %v10961, %v11099
        %v11124 = vadd.f32 %v10962, %v11102
        %v11125 = vadd.f32 %v10963, %v11107
        %v11126 = vadd.f32 %v10964, %v11110
        %v11127 = vadd.f32 %v10965, %v11115
        %v11128 = vadd.f32 %v10966, %v11118
        %s11129 = scalar_lea.vmem [#allocation5], 32
        %v11130 = vld [vmem:[%s11129] sm:$0xf]
        %v11131 = vld [vmem:[%s11129 + $0x4] sm:$0xf]
        %v11132 = vld [vmem:[%s11129 + $0x8] sm:$0xf]
        %v11133 = vld [vmem:[%s11129 + $0xc] sm:$0xf]
        %v11134 = vld [vmem:[%s11129 + $0x10] sm:$0xf]
        %v11135 = vld [vmem:[%s11129 + $0x14] sm:$0xf]
        %v11136 = vld [vmem:[%s11129 + $0x18] sm:$0xf]
        %v11137 = vld [vmem:[%s11129 + $0x1c] sm:$0xf]
        %s11138 = scalar_lea.vmem %s3, 352
        %v11139 = vld [vmem:[%s11138] sm:$0xf]
        %v11140 = vld [vmem:[%s11138 + $0x4] sm:$0xf]
        %v11141 = vld [vmem:[%s11138 + $0x8] sm:$0xf]
        %v11142 = vld [vmem:[%s11138 + $0xc] sm:$0xf]
        %v11143 = vld [vmem:[%s11138 + $0x10] sm:$0xf]
        %v11144 = vld [vmem:[%s11138 + $0x14] sm:$0xf]
        %v11145 = vld [vmem:[%s11138 + $0x18] sm:$0xf]
        %v11146 = vld [vmem:[%s11138 + $0x1c] sm:$0xf]
        %v11147 = vld [vmem:[%s11138 + $0x20] sm:$0xf]
        %v11148 = vld [vmem:[%s11138 + $0x24] sm:$0xf]
        %v11149 = vld [vmem:[%s11138 + $0x28] sm:$0xf]
        %v11158 = vunpack.c.l.b16 %v11130
        %v11159 = vunpack.c.l.b16 %v11131
        %v11160 = vunpack.c.l.b16 %v11132
        %v11161 = vunpack.c.l.b16 %v11133
        %v11162 = vunpack.c.l.b16 %v11134
        %v11163 = vunpack.c.l.b16 %v11135
        %v11164 = vunpack.c.l.b16 %v11136
        %v11165 = vunpack.c.l.b16 %v11137
        %v11166 = vpack.c.b16 %v11159, %v11158
        %v11167 = vpack.c.b16 %v11161, %v11160
        %v11168 = vpack.c.b16 %v11163, %v11162
        %v11169 = vpack.c.b16 %v11165, %v11164
        %v11181 = vunpack.c.l.b16 %v11139
        %v11182 = vunpack.c.l.b16 %v11140
        %v11183 = vunpack.c.l.b16 %v11141
        %v11184 = vunpack.c.l.b16 %v11142
        %v11185 = vunpack.c.l.b16 %v11143
        %v11186 = vunpack.c.l.b16 %v11144
        %v11187 = vunpack.c.l.b16 %v11145
        %v11188 = vunpack.c.l.b16 %v11146
        %v11189 = vunpack.c.l.b16 %v11147
        %v11190 = vunpack.c.l.b16 %v11148
        %v11191 = vunpack.c.l.b16 %v11149
        %v11192 = vpack.c.b16 %v11182, %v11181
        %v11193 = vpack.c.b16 %v11184, %v11183
        %v11194 = vpack.c.b16 %v11186, %v11185
        %v11195 = vpack.c.b16 %v11188, %v11187
        %v11196 = vpack.c.b16 %v11190, %v11189
        %v11197 = vpack.c.b16 %v11191, %v11191
        %v11204 = vsel %vm9942, %v11166, 0
        %v11207 = vsel %vm9942, %v11167, 0
        %v11210 = vsel %vm9942, %v11168, 0
        %v11213 = vsel %vm9942, %v11169, 0
        %v11216 = vsel %vm9955, %v11197, 0
        %11218 = vmatprep.subr.bf16.mxu0 0
        %11219 = vmatpush1.bf16.msra.mxu0 %v11192
        %11220 = vmatprep.subr.bf16.mxu0 0
        %11221 = vmatpush1.bf16.msra.mxu0 %v11193
        %11222 = vmatprep.subr.bf16.mxu0 0
        %11223 = vmatpush1.bf16.msra.mxu0 %v11194
        %11224 = vmatprep.subr.bf16.mxu0 0
        %11225 = vmatpush1.bf16.msra.mxu0 %v11195
        %11226 = vmatprep.subr.bf16.mxu0 0
        %11227 = vmatpush1.bf16.msra.mxu0 %v11196
        %11228 = vmatprep.subr.bf16.mxu0 0
        %11229 = vmatpush1.bf16.msra.mxu0 %v11216
        %11230 = vmatprep.subr.bf16.mxu0 0
        %11231 = vmatpush1.bf16.msra.mxu0 0
        %11232 = vmatprep.subr.bf16.mxu0 0
        %11233 = vmatpush1.bf16.msra.mxu0 0
        %11234 = vmatprep.subr.bf16.mxu0 0
        %11235 = vmatpush1.bf16.msra.mxu0 0
        %11236 = vmatprep.subr.bf16.mxu0 0
        %11237 = vmatpush1.bf16.msra.mxu0 0
        %11238 = vmatprep.subr.bf16.mxu0 0
        %11239 = vmatpush1.bf16.msra.mxu0 0
        %11240 = vmatprep.subr.bf16.mxu0 0
        %11241 = vmatpush1.bf16.msra.mxu0 0
        %11242 = vmatprep.subr.bf16.mxu0 0
        %11243 = vmatpush1.bf16.msra.mxu0 0
        %11244 = vmatprep.subr.bf16.mxu0 0
        %11245 = vmatpush1.bf16.msra.mxu0 0
        %11246 = vmatprep.subr.bf16.mxu0 0
        %11247 = vmatpush1.bf16.msra.mxu0 0
        %11248 = vmatprep.subr.bf16.mxu0 0
        %11249 = vmatpush1.bf16.msra.mxu0 0
        %11250 = vmatprep.mubr.bf16.mxu0 0
        %11251 = vmatmul.mubr.bf16.gmra.mrb[0].mxu0 %v11204
        %v11252 = vpop.f32.mrb[0].mxu0
        %v11253 = vadd.f32 0.0, %v11252
        %v11254 = vpop.f32.mrb[0].mxu0
        %v11255 = vpop.f32.mrb[0].mxu0
        %v11256 = vadd.f32 0.0, %v11255
        %v11257 = vpop.f32.mrb[0].mxu0
        %11258 = vmatprep.mubr.bf16.mxu0 0
        %11259 = vmatmul.mubr.bf16.gmra.mrb[0].mxu0 %v11207
        %v11260 = vpop.f32.mrb[0].mxu0
        %v11261 = vadd.f32 0.0, %v11260
        %v11262 = vpop.f32.mrb[0].mxu0
        %v11263 = vpop.f32.mrb[0].mxu0
        %v11264 = vadd.f32 0.0, %v11263
        %v11265 = vpop.f32.mrb[0].mxu0
        %11266 = vmatprep.mubr.bf16.mxu0 0
        %11267 = vmatmul.mubr.bf16.gmra.mrb[0].mxu0 %v11210
        %v11268 = vpop.f32.mrb[0].mxu0
        %v11269 = vadd.f32 0.0, %v11268
        %v11270 = vpop.f32.mrb[0].mxu0
        %v11271 = vpop.f32.mrb[0].mxu0
        %v11272 = vadd.f32 0.0, %v11271
        %v11273 = vpop.f32.mrb[0].mxu0
        %11274 = vmatprep.mubr.bf16.mxu0 0
        %11275 = vmatmul.mubr.bf16.gmra.mrb[0].mxu0 %v11213
        %v11276 = vpop.f32.mrb[0].mxu0
        %v11277 = vadd.f32 0.0, %v11276
        %v11278 = vpop.f32.mrb[0].mxu0
        %v11279 = vpop.f32.mrb[0].mxu0
        %v11280 = vadd.f32 0.0, %v11279
        %v11281 = vpop.f32.mrb[0].mxu0
        %11282 = vdwg.mxu0
        %v11283 = vadd.f32 %v11121, %v11253
        %v11284 = vadd.f32 %v11122, %v11256
        %v11285 = vadd.f32 %v11123, %v11261
        %v11286 = vadd.f32 %v11124, %v11264
        %v11287 = vadd.f32 %v11125, %v11269
        %v11288 = vadd.f32 %v11126, %v11272
        %v11289 = vadd.f32 %v11127, %v11277
        %v11290 = vadd.f32 %v11128, %v11280
        %s11291 = scalar_lea.vmem [#allocation5], 36
        %v11292 = vld [vmem:[%s11291] sm:$0xf]
        %v11293 = vld [vmem:[%s11291 + $0x4] sm:$0xf]
        %v11294 = vld [vmem:[%s11291 + $0x8] sm:$0xf]
        %v11295 = vld [vmem:[%s11291 + $0xc] sm:$0xf]
        %v11296 = vld [vmem:[%s11291 + $0x10] sm:$0xf]
        %v11297 = vld [vmem:[%s11291 + $0x14] sm:$0xf]
        %v11298 = vld [vmem:[%s11291 + $0x18] sm:$0xf]
        %v11299 = vld [vmem:[%s11291 + $0x1c] sm:$0xf]
        %s11300 = scalar_lea.vmem %s3, 396
        %v11301 = vld [vmem:[%s11300] sm:$0xf]
        %v11302 = vld [vmem:[%s11300 + $0x4] sm:$0xf]
        %v11303 = vld [vmem:[%s11300 + $0x8] sm:$0xf]
        %v11304 = vld [vmem:[%s11300 + $0xc] sm:$0xf]
        %v11305 = vld [vmem:[%s11300 + $0x10] sm:$0xf]
        %v11306 = vld [vmem:[%s11300 + $0x14] sm:$0xf]
        %v11307 = vld [vmem:[%s11300 + $0x18] sm:$0xf]
        %v11308 = vld [vmem:[%s11300 + $0x1c] sm:$0xf]
        %v11309 = vld [vmem:[%s11300 + $0x20] sm:$0xf]
        %v11310 = vld [vmem:[%s11300 + $0x24] sm:$0xf]
        %v11311 = vld [vmem:[%s11300 + $0x28] sm:$0xf]
        %v11320 = vunpack.c.l.b16 %v11292
        %v11321 = vunpack.c.l.b16 %v11293
        %v11322 = vunpack.c.l.b16 %v11294
        %v11323 = vunpack.c.l.b16 %v11295
        %v11324 = vunpack.c.l.b16 %v11296
        %v11325 = vunpack.c.l.b16 %v11297
        %v11326 = vunpack.c.l.b16 %v11298
        %v11327 = vunpack.c.l.b16 %v11299
        %v11328 = vpack.c.b16 %v11321, %v11320
        %v11329 = vpack.c.b16 %v11323, %v11322
        %v11330 = vpack.c.b16 %v11325, %v11324
        %v11331 = vpack.c.b16 %v11327, %v11326
        %v11343 = vunpack.c.l.b16 %v11301
        %v11344 = vunpack.c.l.b16 %v11302
        %v11345 = vunpack.c.l.b16 %v11303
        %v11346 = vunpack.c.l.b16 %v11304
        %v11347 = vunpack.c.l.b16 %v11305
        %v11348 = vunpack.c.l.b16 %v11306
        %v11349 = vunpack.c.l.b16 %v11307
        %v11350 = vunpack.c.l.b16 %v11308
        %v11351 = vunpack.c.l.b16 %v11309
        %v11352 = vunpack.c.l.b16 %v11310
        %v11353 = vunpack.c.l.b16 %v11311
        %v11354 = vpack.c.b16 %v11344, %v11343
        %v11355 = vpack.c.b16 %v11346, %v11345
        %v11356 = vpack.c.b16 %v11348, %v11347
        %v11357 = vpack.c.b16 %v11350, %v11349
        %v11358 = vpack.c.b16 %v11352, %v11351
        %v11359 = vpack.c.b16 %v11353, %v11353
        %v11366 = vsel %vm9942, %v11328, 0
        %v11369 = vsel %vm9942, %v11329, 0
        %v11372 = vsel %vm9942, %v11330, 0
        %v11375 = vsel %vm9942, %v11331, 0
        %v11378 = vsel %vm9955, %v11359, 0
        %11380 = vmatprep.subr.bf16.mxu0 0
        %11381 = vmatpush1.bf16.msra.mxu0 %v11354
        %11382 = vmatprep.subr.bf16.mxu0 0
        %11383 = vmatpush1.bf16.msra.mxu0 %v11355
        %11384 = vmatprep.subr.bf16.mxu0 0
        %11385 = vmatpush1.bf16.msra.mxu0 %v11356
        %11386 = vmatprep.subr.bf16.mxu0 0
        %11387 = vmatpush1.bf16.msra.mxu0 %v11357
        %11388 = vmatprep.subr.bf16.mxu0 0
        %11389 = vmatpush1.bf16.msra.mxu0 %v11358
        %11390 = vmatprep.subr.bf16.mxu0 0
        %11391 = vmatpush1.bf16.msra.mxu0 %v11378
        %11392 = vmatprep.subr.bf16.mxu0 0
        %11393 = vmatpush1.bf16.msra.mxu0 0
        %11394 = vmatprep.subr.bf16.mxu0 0
        %11395 = vmatpush1.bf16.msra.mxu0 0
        %11396 = vmatprep.subr.bf16.mxu0 0
        %11397 = vmatpush1.bf16.msra.mxu0 0
        %11398 = vmatprep.subr.bf16.mxu0 0
        %11399 = vmatpush1.bf16.msra.mxu0 0
        %11400 = vmatprep.subr.bf16.mxu0 0
        %11401 = vmatpush1.bf16.msra.mxu0 0
        %11402 = vmatprep.subr.bf16.mxu0 0
        %11403 = vmatpush1.bf16.msra.mxu0 0
        %11404 = vmatprep.subr.bf16.mxu0 0
        %11405 = vmatpush1.bf16.msra.mxu0 0
        %11406 = vmatprep.subr.bf16.mxu0 0
        %11407 = vmatpush1.bf16.msra.mxu0 0
        %11408 = vmatprep.subr.bf16.mxu0 0
        %11409 = vmatpush1.bf16.msra.mxu0 0
        %11410 = vmatprep.subr.bf16.mxu0 0
        %11411 = vmatpush1.bf16.msra.mxu0 0
        %11412 = vmatprep.mubr.bf16.mxu0 0
        %11413 = vmatmul.mubr.bf16.gmra.mrb[0].mxu0 %v11366
        %v11414 = vpop.f32.mrb[0].mxu0
        %v11415 = vadd.f32 0.0, %v11414
        %v11416 = vpop.f32.mrb[0].mxu0
        %v11417 = vpop.f32.mrb[0].mxu0
        %v11418 = vadd.f32 0.0, %v11417
        %v11419 = vpop.f32.mrb[0].mxu0
        %11420 = vmatprep.mubr.bf16.mxu0 0
        %11421 = vmatmul.mubr.bf16.gmra.mrb[0].mxu0 %v11369
        %v11422 = vpop.f32.mrb[0].mxu0
        %v11423 = vadd.f32 0.0, %v11422
        %v11424 = vpop.f32.mrb[0].mxu0
        %v11425 = vpop.f32.mrb[0].mxu0
        %v11426 = vadd.f32 0.0, %v11425
        %v11427 = vpop.f32.mrb[0].mxu0
        %11428 = vmatprep.mubr.bf16.mxu0 0
        %11429 = vmatmul.mubr.bf16.gmra.mrb[0].mxu0 %v11372
        %v11430 = vpop.f32.mrb[0].mxu0
        %v11431 = vadd.f32 0.0, %v11430
        %v11432 = vpop.f32.mrb[0].mxu0
        %v11433 = vpop.f32.mrb[0].mxu0
        %v11434 = vadd.f32 0.0, %v11433
        %v11435 = vpop.f32.mrb[0].mxu0
        %11436 = vmatprep.mubr.bf16.mxu0 0
        %11437 = vmatmul.mubr.bf16.gmra.mrb[0].mxu0 %v11375
        %v11438 = vpop.f32.mrb[0].mxu0
        %v11439 = vadd.f32 0.0, %v11438
        %v11440 = vpop.f32.mrb[0].mxu0
        %v11441 = vpop.f32.mrb[0].mxu0
        %v11442 = vadd.f32 0.0, %v11441
        %v11443 = vpop.f32.mrb[0].mxu0
        %11444 = vdwg.mxu0
        %v11445 = vadd.f32 %v11283, %v11415
        %v11446 = vadd.f32 %v11284, %v11418
        %v11447 = vadd.f32 %v11285, %v11423
        %v11448 = vadd.f32 %v11286, %v11426
        %v11449 = vadd.f32 %v11287, %v11431
        %v11450 = vadd.f32 %v11288, %v11434
        %v11451 = vadd.f32 %v11289, %v11439
        %v11452 = vadd.f32 %v11290, %v11442
        %s11453 = scalar_lea.vmem [#allocation5], 40
        %v11454 = vld [vmem:[%s11453] sm:$0xf]
        %v11455 = vld [vmem:[%s11453 + $0x4] sm:$0xf]
        %v11456 = vld [vmem:[%s11453 + $0x8] sm:$0xf]
        %v11457 = vld [vmem:[%s11453 + $0xc] sm:$0xf]
        %v11458 = vld [vmem:[%s11453 + $0x10] sm:$0xf]
        %v11459 = vld [vmem:[%s11453 + $0x14] sm:$0xf]
        %v11460 = vld [vmem:[%s11453 + $0x18] sm:$0xf]
        %v11461 = vld [vmem:[%s11453 + $0x1c] sm:$0xf]
        %s11462 = scalar_lea.vmem %s3, 440
        %v11463 = vld [vmem:[%s11462] sm:$0xf]
        %v11464 = vld [vmem:[%s11462 + $0x4] sm:$0xf]
        %v11465 = vld [vmem:[%s11462 + $0x8] sm:$0xf]
        %v11466 = vld [vmem:[%s11462 + $0xc] sm:$0xf]
        %v11467 = vld [vmem:[%s11462 + $0x10] sm:$0xf]
        %v11468 = vld [vmem:[%s11462 + $0x14] sm:$0xf]
        %v11469 = vld [vmem:[%s11462 + $0x18] sm:$0xf]
        %v11470 = vld [vmem:[%s11462 + $0x1c] sm:$0xf]
        %v11471 = vld [vmem:[%s11462 + $0x20] sm:$0xf]
        %v11472 = vld [vmem:[%s11462 + $0x24] sm:$0xf]
        %v11473 = vld [vmem:[%s11462 + $0x28] sm:$0xf]
        %v11482 = vunpack.c.l.b16 %v11454
        %v11483 = vunpack.c.l.b16 %v11455
        %v11484 = vunpack.c.l.b16 %v11456
        %v11485 = vunpack.c.l.b16 %v11457
        %v11486 = vunpack.c.l.b16 %v11458
        %v11487 = vunpack.c.l.b16 %v11459
        %v11488 = vunpack.c.l.b16 %v11460
        %v11489 = vunpack.c.l.b16 %v11461
        %v11490 = vpack.c.b16 %v11483, %v11482
        %v11491 = vpack.c.b16 %v11485, %v11484
        %v11492 = vpack.c.b16 %v11487, %v11486
        %v11493 = vpack.c.b16 %v11489, %v11488
        %v11505 = vunpack.c.l.b16 %v11463
        %v11506 = vunpack.c.l.b16 %v11464
        %v11507 = vunpack.c.l.b16 %v11465
        %v11508 = vunpack.c.l.b16 %v11466
        %v11509 = vunpack.c.l.b16 %v11467
        %v11510 = vunpack.c.l.b16 %v11468
        %v11511 = vunpack.c.l.b16 %v11469
        %v11512 = vunpack.c.l.b16 %v11470
        %v11513 = vunpack.c.l.b16 %v11471
        %v11514 = vunpack.c.l.b16 %v11472
        %v11515 = vunpack.c.l.b16 %v11473
        %v11516 = vpack.c.b16 %v11506, %v11505
        %v11517 = vpack.c.b16 %v11508, %v11507
        %v11518 = vpack.c.b16 %v11510, %v11509
        %v11519 = vpack.c.b16 %v11512, %v11511
        %v11520 = vpack.c.b16 %v11514, %v11513
        %v11521 = vpack.c.b16 %v11515, %v11515
        %v11528 = vsel %vm9942, %v11490, 0
        %v11531 = vsel %vm9942, %v11491, 0
        %v11534 = vsel %vm9942, %v11492, 0
        %v11537 = vsel %vm9942, %v11493, 0
        %v11540 = vsel %vm9955, %v11521, 0
        %11542 = vmatprep.subr.bf16.mxu0 0
        %11543 = vmatpush1.bf16.msra.mxu0 %v11516
        %11544 = vmatprep.subr.bf16.mxu0 0
        %11545 = vmatpush1.bf16.msra.mxu0 %v11517
        %11546 = vmatprep.subr.bf16.mxu0 0
        %11547 = vmatpush1.bf16.msra.mxu0 %v11518
        %11548 = vmatprep.subr.bf16.mxu0 0
        %11549 = vmatpush1.bf16.msra.mxu0 %v11519
        %11550 = vmatprep.subr.bf16.mxu0 0
        %11551 = vmatpush1.bf16.msra.mxu0 %v11520
        %11552 = vmatprep.subr.bf16.mxu0 0
        %11553 = vmatpush1.bf16.msra.mxu0 %v11540
        %11554 = vmatprep.subr.bf16.mxu0 0
        %11555 = vmatpush1.bf16.msra.mxu0 0
        %11556 = vmatprep.subr.bf16.mxu0 0
        %11557 = vmatpush1.bf16.msra.mxu0 0
        %11558 = vmatprep.subr.bf16.mxu0 0
        %11559 = vmatpush1.bf16.msra.mxu0 0
        %11560 = vmatprep.subr.bf16.mxu0 0
        %11561 = vmatpush1.bf16.msra.mxu0 0
        %11562 = vmatprep.subr.bf16.mxu0 0
        %11563 = vmatpush1.bf16.msra.mxu0 0
        %11564 = vmatprep.subr.bf16.mxu0 0
        %11565 = vmatpush1.bf16.msra.mxu0 0
        %11566 = vmatprep.subr.bf16.mxu0 0
        %11567 = vmatpush1.bf16.msra.mxu0 0
        %11568 = vmatprep.subr.bf16.mxu0 0
        %11569 = vmatpush1.bf16.msra.mxu0 0
        %11570 = vmatprep.subr.bf16.mxu0 0
        %11571 = vmatpush1.bf16.msra.mxu0 0
        %11572 = vmatprep.subr.bf16.mxu0 0
        %11573 = vmatpush1.bf16.msra.mxu0 0
        %11574 = vmatprep.mubr.bf16.mxu0 0
        %11575 = vmatmul.mubr.bf16.gmra.mrb[0].mxu0 %v11528
        %v11576 = vpop.f32.mrb[0].mxu0
        %v11577 = vadd.f32 0.0, %v11576
        %v11578 = vpop.f32.mrb[0].mxu0
        %v11579 = vpop.f32.mrb[0].mxu0
        %v11580 = vadd.f32 0.0, %v11579
        %v11581 = vpop.f32.mrb[0].mxu0
        %11582 = vmatprep.mubr.bf16.mxu0 0
        %11583 = vmatmul.mubr.bf16.gmra.mrb[0].mxu0 %v11531
        %v11584 = vpop.f32.mrb[0].mxu0
        %v11585 = vadd.f32 0.0, %v11584
        %v11586 = vpop.f32.mrb[0].mxu0
        %v11587 = vpop.f32.mrb[0].mxu0
        %v11588 = vadd.f32 0.0, %v11587
        %v11589 = vpop.f32.mrb[0].mxu0
        %11590 = vmatprep.mubr.bf16.mxu0 0
        %11591 = vmatmul.mubr.bf16.gmra.mrb[0].mxu0 %v11534
        %v11592 = vpop.f32.mrb[0].mxu0
        %v11593 = vadd.f32 0.0, %v11592
        %v11594 = vpop.f32.mrb[0].mxu0
        %v11595 = vpop.f32.mrb[0].mxu0
        %v11596 = vadd.f32 0.0, %v11595
        %v11597 = vpop.f32.mrb[0].mxu0
        %11598 = vmatprep.mubr.bf16.mxu0 0
        %11599 = vmatmul.mubr.bf16.gmra.mrb[0].mxu0 %v11537
        %v11600 = vpop.f32.mrb[0].mxu0
        %v11601 = vadd.f32 0.0, %v11600
        %v11602 = vpop.f32.mrb[0].mxu0
        %v11603 = vpop.f32.mrb[0].mxu0
        %v11604 = vadd.f32 0.0, %v11603
        %v11605 = vpop.f32.mrb[0].mxu0
        %11606 = vdwg.mxu0
        %v11607 = vadd.f32 %v11445, %v11577
        %v11608 = vadd.f32 %v11446, %v11580
        %v11609 = vadd.f32 %v11447, %v11585
        %v11610 = vadd.f32 %v11448, %v11588
        %v11611 = vadd.f32 %v11449, %v11593
        %v11612 = vadd.f32 %v11450, %v11596
        %v11613 = vadd.f32 %v11451, %v11601
        %v11614 = vadd.f32 %v11452, %v11604
        %v11616 = vlaneseq
        %v11617 = vshrl.u32 %v11616, 7
        %v11618 = vsub.s32 0, %v11617
        %v11619 = vrot.slane %v1409, %v11618
        %v11621 = vadd.f32 %v11607, %v11619
        %v11622 = vadd.f32 %v11608, %v11619
        %v11623 = vadd.f32 %v11609, %v11619
        %v11624 = vadd.f32 %v11610, %v11619
        %v11625 = vadd.f32 %v11611, %v11619
        %v11626 = vadd.f32 %v11612, %v11619
        %v11627 = vadd.f32 %v11613, %v11619
        %v11628 = vadd.f32 %v11614, %v11619
        %11629 = vxpose.xlu0.b32.start [1/16] %v11621, 128
        %11630 = vxpose.xlu0.b32.cont [2/16] %v11622, 128
        %11631 = vxpose.xlu0.b32.cont [3/16] %v11623, 128
        %11632 = vxpose.xlu0.b32.cont [4/16] %v11624, 128
        %11633 = vxpose.xlu0.b32.cont [5/16] %v11625, 128
        %11634 = vxpose.xlu0.b32.cont [6/16] %v11626, 128
        %11635 = vxpose.xlu0.b32.cont [7/16] %v11627, 128
        %11636 = vxpose.xlu0.b32.cont [8/16] %v11628, 128
        %11637 = vxpose.xlu0.b32.cont [9/16] 0.0, 128
        %11638 = vxpose.xlu0.b32.cont [10/16] 0.0, 128
        %11639 = vxpose.xlu0.b32.cont [11/16] 0.0, 128
        %11640 = vxpose.xlu0.b32.cont [12/16] 0.0, 128
        %11641 = vxpose.xlu0.b32.cont [13/16] 0.0, 128
        %11642 = vxpose.xlu0.b32.cont [14/16] 0.0, 128
        %11643 = vxpose.xlu0.b32.cont [15/16] 0.0, 128
        %11644 = vxpose.xlu0.b32.end [16/16] 0.0, 128
        %v11645 = vpop.trf.xlu0
        %v11646 = vpop.trf.xlu0
        %v11647 = vpop.trf.xlu0
        %v11648 = vpop.trf.xlu0
        %v11649 = vpop.trf.xlu0
        %v11650 = vpop.trf.xlu0
        %v11651 = vpop.trf.xlu0
        %v11652 = vpop.trf.xlu0
        %v11653 = vpop.trf.xlu0
        %v11654 = vpop.trf.xlu0
        %v11655 = vpop.trf.xlu0
        %v11656 = vpop.trf.xlu0
        %v11657 = vpop.trf.xlu0
        %v11658 = vpop.trf.xlu0
        %v11659 = vpop.trf.xlu0
        %v11660 = vpop.trf.xlu0
        %vm11661 = vcmask 523264
        %11662 = vst.msk [vmem:[%s217] sm:$0xff] %vm11661, %v11645
        %s11663 = sand.u32 %s137, 1
        %s11664 = scalar_lea.sflag [#allocation7], %s11663
        %s11665 = sand.u32 %s137, 1
        %s11666 = smul.addr %s11665, 8
        %s11667 = scalar_lea.vmem [#allocation6], %s11666
        // Predicated region
        $region41: #{down_wt_forward.1} parent=39 // pred_check
          %p11668 = pneg %p147
        $region42: #{down_wt_forward.1} parent=39 // pred_check_branch
          %11670 = sbr.rel (%p11668) target = $region44
        $region43: #{down_wt_forward.1} parent=39 // pred_region
          %s11672 = ssub.s32 128, 128
          %11673 = vsyncadd %s11664, %s11672
          %s11674 = smul.addr %s19, 128
          %s11675 = scalar_lea.hbm %s5, %s11674
          %s11677 = sshll.u32 %s11667, 4
          %s11678 = int_to_ptr.vmem [resolvable:$true] %s11677
          %11680 = dma.vmem_to_hbm [thread:$0]  %s11678, 128, %s11675, %s11664
        $region44: #{down_wt_forward.1} parent=39 // pred_fallthru
          _
      $region40: #{down_wt_forward.1} parent=5 // pred_fallthru
        _
      %p11681 = scmp.le.s32.totalorder 2, %s14
      // Predicated region
      $region45: #{down_wt_forward.1} parent=5 // pred_check
        %p11682 = pneg %p11681
      $region46: #{down_wt_forward.1} parent=5 // pred_check_branch
        %11684 = sbr.rel (%p11682) target = $region48
      $region47: #{down_wt_forward.1} parent=5 // pred_region
        %s11685 = ssub.s32 %s14, 2
        // Predicated region
        $region49: #{down_wt_forward.1} parent=47 // pred_check
          %p11686 = pneg %p153
        $region50: #{down_wt_forward.1} parent=47 // pred_check_branch
          %11688 = sbr.rel (%p11686) target = $region52
        $region51: #{down_wt_forward.1} parent=47 // pred_region
          %s11689 = sand.u32 %s138, 1
          %s11690 = scalar_lea.sflag [#allocation7], %s11689
          %s11691 = sand.u32 %s138, 1
          %s11692 = smul.addr %s11691, 8
          %s11693 = scalar_lea.vmem [#allocation6], %s11692
          %11694 = dma.done %s11690, 128
        $region52: #{down_wt_forward.1} parent=47 // pred_fallthru
          _
      $region48: #{down_wt_forward.1} parent=5 // pred_fallthru
        _
    $region6: #{down_wt_forward.1} parent=1 // loop_footer
      %s18 = sadd.s32 1, %s14
    $region7: #{down_wt_forward.1} parent=1 // loop_footer_branch
      %13 = sbr.rel target = $region3
    $region8: #{down_wt_forward.1} parent=1 // loop_exit
      _
    %11695 = vsyncpa [#allocation7], 1
    %s11696 = scalar_lea.sflag [#allocation7], 1
    %11697 = vsyncpa %s11696, 1

</llo_original>
